<compile_context>
chip_gen: v5e
topology: v5e:2x2
jax: 0.10.0
libtpu: 0.0.40
codegen_flags: <defaults>
</compile_context>

<pallas_src>
import functools

import numpy as np

import jax
import jax.numpy as jnp
from jax import lax
from jax.experimental import pallas as pl
from jax.experimental.pallas import tpu as pltpu


def _round_up(a, b):
    return (a + b - 1) // b * b


# ----------------------------------------------------------------------------
# The fused Pallas kernel (one batch block of NB samples per grid step)
# ----------------------------------------------------------------------------
def _simple_cnn_kernel(x_ref, w_ref, p_ref, affine_ref, out_ref, *,
                       nb, cin, crp, c1_off, c2_off, fc1_off, fc2_off, fc3_off,
                       restrict):
    """Whole SimpleCNN forward for one block of `nb` samples, all VMEM resident.

    x_ref rows are ordered R(a, b, hh, ww, n) = ((a*2+b)*25 + hh*5 + ww)*nb + n,
    where (a, b) = (h%2, w%2) and (hh, ww) = (h//2, w//2) of the 10x10 NHWC input.
    All derived activations keep the "(spatial slot)*nb + n" row structure, so every
    conv tap / fc gather is a static, nb-aligned (i.e. bf16-tile aligned) row slice.
    """
    f32, bf16 = jnp.float32, jnp.bfloat16
    rows = x_ref.shape[0]                        # 100 * nb
    m1 = 19 * nb                                 # conv1+pool rows (slots 0..18)
    m2 = 7 * nb                                  # conv2 rows (slots 0..6)

    # ---- dimensionality_reduction: 1x1 conv + ReLU as cin broadcast FMAs (VPU, f32) ----
    x = x_ref[...]                               # (rows, cin) f32
    dr_w = p_ref[0:cin, 0:crp]                   # (cin, crp) f32
    acc = jnp.broadcast_to(p_ref[cin:cin + 1, 0:crp], (rows, crp))
    for c in range(cin):
        acc = acc + x[:, c:c + 1] * dr_w[c:c + 1, :]
    y = jnp.maximum(acc, 0.0).astype(bf16)       # (rows, crp) bf16 -> MXU LHS

    # ---- conv1 (3x3 valid) fused with 2x2/2 maxpool: 4 pooling phases ----
    # Per-tap single-pass bf16 dots from nb-aligned slices; accumulate in f32.
    pooled = None
    for py in range(2):
        for px in range(2):
            z = None
            for dy in range(3):
                for dx in range(3):
                    sh, sw = py + dy, px + dx
                    off = (((sh % 2) * 2 + (sw % 2)) * 25
                           + (sh // 2) * 5 + (sw // 2)) * nb
                    t = dy * 3 + dx
                    wtap = w_ref[c1_off + t * crp:c1_off + (t + 1) * crp, 0:64]
                    d = jnp.dot(y[off:off + m1, :], wtap,
                                preferred_element_type=f32)
                    z = d if z is None else z + d
            pooled = z if pooled is None else jnp.maximum(pooled, z)
    # Bias is phase-invariant: add once after the max; relu(max(z)+b) == max(relu(z+b)).
    pooled = jnp.maximum(pooled + p_ref[cin + 1:cin + 2, 0:64], 0.0).astype(bf16)

    # ---- conv2 (3x3 valid) + ReLU ----
    z2 = None
    for dy in range(3):
        for dx in range(3):
            off = (dy * 5 + dx) * nb
            t = dy * 3 + dx
            wtap = w_ref[c2_off + t * 64:c2_off + (t + 1) * 64, :]
            d = jnp.dot(pooled[off:off + m2, :], wtap, preferred_element_type=f32)
            z2 = d if z2 is None else z2 + d
    z2 = jnp.maximum(z2 + p_ref[cin + 2:cin + 3, :], 0.0).astype(bf16)   # (m2, 128)

    # ---- fc1 -> fc2 -> fc3, batched over the whole block ----
    # conv2 spatial positions (oh,ow) live at row slots {0,1,5,6}; the PyTorch NCHW
    # flatten is folded into the (512,128) fc1 weight layout (K order = (oh, ow, c)).
    f1 = jnp.concatenate([z2[0 * nb:1 * nb, :], z2[1 * nb:2 * nb, :],
                          z2[5 * nb:6 * nb, :], z2[6 * nb:7 * nb, :]], axis=1)
    h = jnp.dot(f1, w_ref[fc1_off:fc1_off + 512, :], preferred_element_type=f32)
    h = jnp.maximum(h + p_ref[cin + 3:cin + 4, :], 0.0).astype(bf16)
    h = jnp.dot(h, w_ref[fc2_off:fc2_off + 128, :], preferred_element_type=f32)
    h = jnp.maximum(h + p_ref[cin + 4:cin + 5, :], 0.0).astype(bf16)
    o = jnp.dot(h, w_ref[fc3_off:fc3_off + 128, :], preferred_element_type=f32)
    o = o + p_ref[cin + 5:cin + 6, :]
    if restrict:  # static flag; scale/mean are dynamic SMEM scalars
        o = jnp.tanh(o) * affine_ref[0] + affine_ref[1]
    out_ref[...] = o.astype(out_ref.dtype)       # one unmasked full-block store


# ----------------------------------------------------------------------------
# Wrapper: host-side input layout + one grid-over-batch-blocks pallas_call
# ----------------------------------------------------------------------------
def simple_cnn_forward(x_nchw, kp, output_dim, min_output=None, max_output=None):
    restrict = (min_output is not None) and (max_output is not None)
    n, cin, hh, ww = x_nchw.shape
    if (hh, ww) != (10, 10):
        raise ValueError("SimpleCNN requires 10x10 spatial input (fc1 = 128*2*2).")
    if cin != kp["cin"]:
        raise ValueError("input channel mismatch")

    # NB samples per grid step; multiple of 16 keeps every row slice bf16-tile
    # aligned. The batch-block grid axis is "parallel" (v7x: both TensorCores).
    NB = min(_round_up(n, 16), 64)
    G = pl.cdiv(n, NB)
    n_pad = G * NB
    RPB = 100 * NB           # rows per block: 4 pooling phases * 5*5 positions * NB

    # One-time host-side layout op: NCHW -> 4 pooling-phase 5x5 grids, rows ordered
    # (phase, hh, ww, sample) so every in-kernel conv tap is an NB-aligned slice.
    x = jnp.transpose(x_nchw, (0, 2, 3, 1)).astype(jnp.float32)
    x = jnp.pad(x, ((0, n_pad - n), (0, 0), (0, 0), (0, 0)))
    ph = jnp.stack([x[:, a::2, b::2, :] for a in range(2) for b in range(2)], axis=1)
    ph = ph.reshape(G, NB, 4, 5, 5, cin)
    x2 = jnp.transpose(ph, (0, 2, 3, 4, 1, 5)).reshape(G, RPB, cin)

    if restrict:
        mx = jnp.asarray(max_output, jnp.float32)
        mn = jnp.asarray(min_output, jnp.float32)
        affine = jnp.stack([(mx - mn) / 2.0, (mx + mn) / 2.0])
    else:
        affine = jnp.zeros((2,), jnp.float32)

    kernel = functools.partial(
        _simple_cnn_kernel, nb=NB, cin=cin, crp=kp["crp"],
        c1_off=kp["c1_off"], c2_off=kp["c2_off"], fc1_off=kp["fc1_off"],
        fc2_off=kp["fc2_off"], fc3_off=kp["fc3_off"], restrict=restrict)

    w_rows = kp["W"].shape[0]
    p_rows = kp["P"].shape[0]
    out = pl.pallas_call(
        kernel,
        out_shape=jax.ShapeDtypeStruct((G, NB, 128), jnp.float32),
        grid=(G,),
        in_specs=[
            pl.BlockSpec((None, RPB, cin), lambda g: (g, 0, 0)),    # activations
            pl.BlockSpec((w_rows, 128), lambda g: (0, 0)),          # bf16 weights (1 DMA)
            pl.BlockSpec((p_rows, 128), lambda g: (0, 0)),          # f32 dr_w + biases
            pl.BlockSpec(memory_space=pltpu.MemorySpace.SMEM),      # tanh affine scalars
        ],
        out_specs=pl.BlockSpec((None, NB, 128), lambda g: (g, 0, 0)),
        compiler_params=pltpu.CompilerParams(
            dimension_semantics=("parallel",)),
    )(x2, kp["W"], kp["P"], affine)
    return out.reshape(n_pad, 128)[:n, :output_dim]


# ----------------------------------------------------------------------------
# Parameters: PyTorch-layout synthetic weights + conversion to kernel layouts
# ----------------------------------------------------------------------------
def init_torch_params(key, input_channels, output_dim, reduced_channels=43):
    """Synthetic weights in PyTorch layouts (Conv2d: (out,in,kh,kw); Linear: (out,in))."""
    ks = jax.random.split(key, 12)

    def w(k, shape, fan_in):
        return (jax.random.normal(k, shape, jnp.float32) /
                jnp.sqrt(jnp.float32(fan_in)))

    p = {
        "dr_w": w(ks[0], (reduced_channels, input_channels, 1, 1), input_channels),
        "dr_b": w(ks[1], (reduced_channels,), input_channels),
        "c1_w": w(ks[2], (64, reduced_channels, 3, 3), 9 * reduced_channels),
        "c1_b": w(ks[3], (64,), 9 * reduced_channels),
        "c2_w": w(ks[4], (128, 64, 3, 3), 9 * 64),
        "c2_b": w(ks[5], (128,), 9 * 64),
        "fc1_w": w(ks[6], (128, 128 * 2 * 2), 512),
        "fc1_b": w(ks[7], (128,), 512),
        "fc2_w": w(ks[8], (32, 128), 128),
        "fc2_b": w(ks[9], (32,), 128),
        "fc3_w": w(ks[10], (output_dim, 32), 32),
        "fc3_b": w(ks[11], (output_dim,), 32),
    }
    # Pre-round MXU-side weights to bf16 so kernel and f32 reference share values.
    for k in ("c1_w", "c2_w", "fc1_w", "fc2_w", "fc3_w"):
        p[k] = p[k].astype(jnp.bfloat16).astype(jnp.float32)
    return p


def pack_params(tp, input_channels, output_dim, reduced_channels=43):
    """PyTorch layouts -> fused-kernel layouts: one bf16 MXU-weight buffer, one f32
    small-parameter buffer (1x1 weights + all biases); NCHW flatten folded into fc1."""
    f32, bf16 = jnp.float32, jnp.bfloat16
    cin, cr = input_channels, reduced_channels
    if cr > 128 or output_dim > 128:
        raise ValueError("kernel assumes reduced_channels <= 128 and output_dim <= 128")
    crp = _round_up(cr, 64)                       # lane width of conv1's input

    # bf16 weight buffer rows: [conv1 taps | conv2 taps | fc1 | fc2 | fc3]
    c1_off = 0
    c2_off = c1_off + 9 * crp
    fc1_off = c2_off + 9 * 64
    fc2_off = fc1_off + 512
    fc3_off = fc2_off + 128
    w_rows = fc3_off + 128
    W = jnp.zeros((w_rows, 128), f32)

    c1 = jnp.transpose(tp["c1_w"], (2, 3, 1, 0)).reshape(9, cr, 64)   # (tap, cin, cout)
    c1 = jnp.zeros((9, crp, 64), f32).at[:, :cr, :].set(c1).reshape(9 * crp, 64)
    W = W.at[c1_off:c1_off + 9 * crp, 0:64].set(c1)

    c2 = jnp.transpose(tp["c2_w"], (2, 3, 1, 0)).reshape(9 * 64, 128)
    W = W.at[c2_off:c2_off + 9 * 64, :].set(c2)

    # fc1: PyTorch NCHW flatten order is (c, oh, ow); kernel K order is (oh, ow, c).
    fc1 = jnp.transpose(tp["fc1_w"].T.reshape(128, 4, 128), (1, 0, 2)).reshape(512, 128)
    W = W.at[fc1_off:fc1_off + 512, :].set(fc1)

    W = W.at[fc2_off:fc2_off + 128, 0:tp["fc2_w"].shape[0]].set(tp["fc2_w"].T)
    W = W.at[fc3_off:fc3_off + tp["fc3_w"].shape[1], 0:output_dim].set(tp["fc3_w"].T)
    W = W.astype(bf16)

    # f32 small-parameter buffer: 1x1-reduction weights + every bias (one DMA).
    p_rows = _round_up(cin + 6, 8)
    P = jnp.zeros((p_rows, 128), f32)
    P = P.at[0:cin, 0:cr].set(tp["dr_w"][:, :, 0, 0].T)
    P = P.at[cin, 0:cr].set(tp["dr_b"])
    P = P.at[cin + 1, 0:64].set(tp["c1_b"])
    P = P.at[cin + 2, 0:128].set(tp["c2_b"])
    P = P.at[cin + 3, 0:128].set(tp["fc1_b"])
    P = P.at[cin + 4, 0:tp["fc2_b"].shape[0]].set(tp["fc2_b"])
    P = P.at[cin + 5, 0:output_dim].set(tp["fc3_b"])

    return dict(W=W, P=P, cin=cin, crp=crp, c1_off=c1_off, c2_off=c2_off,
                fc1_off=fc1_off, fc2_off=fc2_off, fc3_off=fc3_off)


# ----------------------------------------------------------------------------
# Pure-JAX f32 reference (mirrors the PyTorch module) for a correctness self-check
# ----------------------------------------------------------------------------
def reference_forward(x_nchw, tp, min_output=None, max_output=None):
    hi = lax.Precision.HIGHEST
    x = jnp.transpose(x_nchw, (0, 2, 3, 1))
    y = jax.nn.relu(jnp.einsum("nhwc,rc->nhwr", x, tp["dr_w"][:, :, 0, 0],
                               precision=hi) + tp["dr_b"])

    def conv(a, w):
        return lax.conv_general_dilated(a, jnp.transpose(w, (2, 3, 1, 0)), (1, 1),
                                        "VALID",
                                        dimension_numbers=("NHWC", "HWIO", "NHWC"),
                                        precision=hi)

    y = jax.nn.relu(conv(y, tp["c1_w"]) + tp["c1_b"])
    n, h, w, c = y.shape
    y = y.reshape(n, h // 2, 2, w // 2, 2, c).max(axis=(2, 4))
    y = jax.nn.relu(conv(y, tp["c2_w"]) + tp["c2_b"])
    y = jnp.transpose(y, (0, 3, 1, 2)).reshape(n, -1)          # PyTorch NCHW flatten
    y = jax.nn.relu(jnp.matmul(y, tp["fc1_w"].T, precision=hi) + tp["fc1_b"])
    y = jax.nn.relu(jnp.matmul(y, tp["fc2_w"].T, precision=hi) + tp["fc2_b"])
    y = jnp.matmul(y, tp["fc3_w"].T, precision=hi) + tp["fc3_b"]
    if min_output is not None and max_output is not None:
        y = jnp.tanh(y) * ((max_output - min_output) / 2.0) + \
            ((max_output + min_output) / 2.0)
    return y


# ----------------------------------------------------------------------------
if __name__ == "__main__":
    INPUT_CHANNELS, OUTPUT_DIM, BATCH = 4, 8, 2
    H = W = 10   # fc1 expects 128*2*2 -> 10 -> conv1 -> 8 -> pool -> 4 -> conv2 -> 2

    root = jax.random.PRNGKey(0)
    kx, kp = jax.random.split(root)
    x = jax.random.normal(kx, (BATCH, INPUT_CHANNELS, H, W), dtype=jnp.float32)

    torch_p = init_torch_params(kp, INPUT_CHANNELS, OUTPUT_DIM)
    kern_p = pack_params(torch_p, INPUT_CHANNELS, OUTPUT_DIM)

    # Plain forward (no output restriction, like the default constructor).
    fwd = jax.jit(lambda xx: simple_cnn_forward(xx, kern_p, OUTPUT_DIM))
    out = jax.block_until_ready(fwd(x))
    assert out.shape == (BATCH, OUTPUT_DIM) and out.dtype == jnp.float32
    ref = reference_forward(x, torch_p)
    # bf16 activations at each MXU stage -> slightly looser tolerance than pure f32.
    np.testing.assert_allclose(np.asarray(out), np.asarray(ref), rtol=2e-2, atol=1e-2)

    # Restricted-output forward (tanh * scale + mean), exercises the SMEM scalars.
    fwd_r = jax.jit(lambda xx: simple_cnn_forward(xx, kern_p, OUTPUT_DIM,
                                                  min_output=-1.0, max_output=1.0))
    out_r = jax.block_until_ready(fwd_r(x))
    ref_r = reference_forward(x, torch_p, min_output=-1.0, max_output=1.0)
    np.testing.assert_allclose(np.asarray(out_r), np.asarray(ref_r),
                               rtol=2e-2, atol=1e-2)

    assert bool(jnp.all(jnp.isfinite(out))) and bool(jnp.all(jnp.isfinite(out_r)))
    print("KERNEL_OK")
</pallas_src>

<mosaic_0001>
module attributes {stable_mosaic.version = 11 : i64} {
  func.func @_simple_cnn_kernel(%arg0: i32, %arg1: memref<1x1600x4xf32, #tpu.memory_space<vmem>>, %arg2: memref<1920x128xbf16, #tpu.memory_space<vmem>>, %arg3: memref<16x128xf32, #tpu.memory_space<vmem>>, %arg4: memref<2xf32, #tpu.memory_space<smem>>, %arg5: memref<1x16x128xf32, #tpu.memory_space<vmem>>) attributes {dimension_semantics = [#tpu.dimension_semantics<parallel>], iteration_bounds = array<i64: 1>, scalar_prefetch = 0 : i64, scratch_operands = 0 : i64, tpu.core_type = #tpu.core_type<tc>, window_params = [{transform_indices = @transform_0, window_bounds = array<i64: 1, 1600, 4>}, {pipeline_mode = #tpu.pipeline_mode<synchronous>, transform_indices = @transform_1, window_bounds = array<i64: 1920, 128>}, {pipeline_mode = #tpu.pipeline_mode<synchronous>, transform_indices = @transform_2, window_bounds = array<i64: 16, 128>}, {transform_indices = @transform_3, window_bounds = array<i64: 2>}, {transform_indices = @transform_4, window_bounds = array<i64: 1, 16, 128>}]} {
    %c0 = arith.constant 0 : index
    %c0_0 = arith.constant 0 : index
    %c0_1 = arith.constant 0 : index
    %0 = vector.load %arg1[%c0, %c0_0, %c0_1] : memref<1x1600x4xf32, #tpu.memory_space<vmem>>, vector<1x1600x4xf32>
    %1 = vector.shape_cast %0 : vector<1x1600x4xf32> to vector<1600x4xf32>
    %c0_2 = arith.constant 0 : index
    %c0_3 = arith.constant 0 : index
    %2 = vector.load %arg3[%c0_2, %c0_3] : memref<16x128xf32, #tpu.memory_space<vmem>>, vector<4x64xf32>
    %c4 = arith.constant 4 : index
    %c0_4 = arith.constant 0 : index
    %3 = vector.load %arg3[%c4, %c0_4] : memref<16x128xf32, #tpu.memory_space<vmem>>, vector<1x64xf32>
    %4 = vector.shape_cast %3 : vector<1x64xf32> to vector<1x64xf32>
    %5 = vector.broadcast %4 : vector<1x64xf32> to vector<1600x64xf32>
    %6 = vector.extract_strided_slice %1 {offsets = [0, 0], sizes = [1600, 1], strides = [1, 1]} : vector<1600x4xf32> to vector<1600x1xf32>
    %7 = vector.extract_strided_slice %2 {offsets = [0, 0], sizes = [1, 64], strides = [1, 1]} : vector<4x64xf32> to vector<1x64xf32>
    %8 = vector.broadcast %6 : vector<1600x1xf32> to vector<1600x64xf32>
    %9 = vector.broadcast %7 : vector<1x64xf32> to vector<1600x64xf32>
    %10 = arith.mulf %8, %9 : vector<1600x64xf32>
    %11 = arith.addf %5, %10 : vector<1600x64xf32>
    %12 = vector.extract_strided_slice %1 {offsets = [0, 1], sizes = [1600, 1], strides = [1, 1]} : vector<1600x4xf32> to vector<1600x1xf32>
    %13 = vector.extract_strided_slice %2 {offsets = [1, 0], sizes = [1, 64], strides = [1, 1]} : vector<4x64xf32> to vector<1x64xf32>
    %14 = vector.broadcast %12 : vector<1600x1xf32> to vector<1600x64xf32>
    %15 = vector.broadcast %13 : vector<1x64xf32> to vector<1600x64xf32>
    %16 = arith.mulf %14, %15 : vector<1600x64xf32>
    %17 = arith.addf %11, %16 : vector<1600x64xf32>
    %18 = vector.extract_strided_slice %1 {offsets = [0, 2], sizes = [1600, 1], strides = [1, 1]} : vector<1600x4xf32> to vector<1600x1xf32>
    %19 = vector.extract_strided_slice %2 {offsets = [2, 0], sizes = [1, 64], strides = [1, 1]} : vector<4x64xf32> to vector<1x64xf32>
    %20 = vector.broadcast %18 : vector<1600x1xf32> to vector<1600x64xf32>
    %21 = vector.broadcast %19 : vector<1x64xf32> to vector<1600x64xf32>
    %22 = arith.mulf %20, %21 : vector<1600x64xf32>
    %23 = arith.addf %17, %22 : vector<1600x64xf32>
    %24 = vector.extract_strided_slice %1 {offsets = [0, 3], sizes = [1600, 1], strides = [1, 1]} : vector<1600x4xf32> to vector<1600x1xf32>
    %25 = vector.extract_strided_slice %2 {offsets = [3, 0], sizes = [1, 64], strides = [1, 1]} : vector<4x64xf32> to vector<1x64xf32>
    %26 = vector.broadcast %24 : vector<1600x1xf32> to vector<1600x64xf32>
    %27 = vector.broadcast %25 : vector<1x64xf32> to vector<1600x64xf32>
    %28 = arith.mulf %26, %27 : vector<1600x64xf32>
    %29 = arith.addf %23, %28 : vector<1600x64xf32>
    %cst = arith.constant 0.000000e+00 : f32
    %30 = vector.broadcast %cst : f32 to vector<1600x64xf32>
    %31 = arith.maximumf %29, %30 : vector<1600x64xf32>
    %32 = arith.truncf %31 : vector<1600x64xf32> to vector<1600x64xbf16>
    %c0_5 = arith.constant 0 : index
    %c0_6 = arith.constant 0 : index
    %33 = vector.load %arg2[%c0_5, %c0_6] : memref<1920x128xbf16, #tpu.memory_space<vmem>>, vector<64x64xbf16>
    %34 = vector.extract_strided_slice %32 {offsets = [0, 0], sizes = [304, 64], strides = [1, 1]} : vector<1600x64xbf16> to vector<304x64xbf16>
    %cst_7 = arith.constant dense<0.000000e+00> : vector<304x64xf32>
    %35 = tpu.matmul %34, %33, %cst_7 {dimension_numbers = #tpu.dot_dimension_numbers<[1], [0], [0], [1], [0, 0, 1, 1], [], []>} : vector<304x64xbf16>, vector<64x64xbf16>, vector<304x64xf32> -> vector<304x64xf32>
    %c64 = arith.constant 64 : index
    %c0_8 = arith.constant 0 : index
    %36 = vector.load %arg2[%c64, %c0_8] : memref<1920x128xbf16, #tpu.memory_space<vmem>>, vector<64x64xbf16>
    %37 = vector.extract_strided_slice %32 {offsets = [400, 0], sizes = [304, 64], strides = [1, 1]} : vector<1600x64xbf16> to vector<304x64xbf16>
    %cst_9 = arith.constant dense<0.000000e+00> : vector<304x64xf32>
    %38 = tpu.matmul %37, %36, %cst_9 {dimension_numbers = #tpu.dot_dimension_numbers<[1], [0], [0], [1], [0, 0, 1, 1], [], []>} : vector<304x64xbf16>, vector<64x64xbf16>, vector<304x64xf32> -> vector<304x64xf32>
    %39 = arith.addf %35, %38 : vector<304x64xf32>
    %c128 = arith.constant 128 : index
    %c0_10 = arith.constant 0 : index
    %40 = vector.load %arg2[%c128, %c0_10] : memref<1920x128xbf16, #tpu.memory_space<vmem>>, vector<64x64xbf16>
    %41 = vector.extract_strided_slice %32 {offsets = [16, 0], sizes = [304, 64], strides = [1, 1]} : vector<1600x64xbf16> to vector<304x64xbf16>
    %cst_11 = arith.constant dense<0.000000e+00> : vector<304x64xf32>
    %42 = tpu.matmul %41, %40, %cst_11 {dimension_numbers = #tpu.dot_dimension_numbers<[1], [0], [0], [1], [0, 0, 1, 1], [], []>} : vector<304x64xbf16>, vector<64x64xbf16>, vector<304x64xf32> -> vector<304x64xf32>
    %43 = arith.addf %39, %42 : vector<304x64xf32>
    %c192 = arith.constant 192 : index
    %c0_12 = arith.constant 0 : index
    %44 = vector.load %arg2[%c192, %c0_12] : memref<1920x128xbf16, #tpu.memory_space<vmem>>, vector<64x64xbf16>
    %45 = vector.extract_strided_slice %32 {offsets = [800, 0], sizes = [304, 64], strides = [1, 1]} : vector<1600x64xbf16> to vector<304x64xbf16>
    %cst_13 = arith.constant dense<0.000000e+00> : vector<304x64xf32>
    %46 = tpu.matmul %45, %44, %cst_13 {dimension_numbers = #tpu.dot_dimension_numbers<[1], [0], [0], [1], [0, 0, 1, 1], [], []>} : vector<304x64xbf16>, vector<64x64xbf16>, vector<304x64xf32> -> vector<304x64xf32>
    %47 = arith.addf %43, %46 : vector<304x64xf32>
    %c256 = arith.constant 256 : index
    %c0_14 = arith.constant 0 : index
    %48 = vector.load %arg2[%c256, %c0_14] : memref<1920x128xbf16, #tpu.memory_space<vmem>>, vector<64x64xbf16>
    %49 = vector.extract_strided_slice %32 {offsets = [1200, 0], sizes = [304, 64], strides = [1, 1]} : vector<1600x64xbf16> to vector<304x64xbf16>
    %cst_15 = arith.constant dense<0.000000e+00> : vector<304x64xf32>
    %50 = tpu.matmul %49, %48, %cst_15 {dimension_numbers = #tpu.dot_dimension_numbers<[1], [0], [0], [1], [0, 0, 1, 1], [], []>} : vector<304x64xbf16>, vector<64x64xbf16>, vector<304x64xf32> -> vector<304x64xf32>
    %51 = arith.addf %47, %50 : vector<304x64xf32>
    %c320 = arith.constant 320 : index
    %c0_16 = arith.constant 0 : index
    %52 = vector.load %arg2[%c320, %c0_16] : memref<1920x128xbf16, #tpu.memory_space<vmem>>, vector<64x64xbf16>
    %53 = vector.extract_strided_slice %32 {offsets = [816, 0], sizes = [304, 64], strides = [1, 1]} : vector<1600x64xbf16> to vector<304x64xbf16>
    %cst_17 = arith.constant dense<0.000000e+00> : vector<304x64xf32>
    %54 = tpu.matmul %53, %52, %cst_17 {dimension_numbers = #tpu.dot_dimension_numbers<[1], [0], [0], [1], [0, 0, 1, 1], [], []>} : vector<304x64xbf16>, vector<64x64xbf16>, vector<304x64xf32> -> vector<304x64xf32>
    %55 = arith.addf %51, %54 : vector<304x64xf32>
    %c384 = arith.constant 384 : index
    %c0_18 = arith.constant 0 : index
    %56 = vector.load %arg2[%c384, %c0_18] : memref<1920x128xbf16, #tpu.memory_space<vmem>>, vector<64x64xbf16>
    %57 = vector.extract_strided_slice %32 {offsets = [80, 0], sizes = [304, 64], strides = [1, 1]} : vector<1600x64xbf16> to vector<304x64xbf16>
    %cst_19 = arith.constant dense<0.000000e+00> : vector<304x64xf32>
    %58 = tpu.matmul %57, %56, %cst_19 {dimension_numbers = #tpu.dot_dimension_numbers<[1], [0], [0], [1], [0, 0, 1, 1], [], []>} : vector<304x64xbf16>, vector<64x64xbf16>, vector<304x64xf32> -> vector<304x64xf32>
    %59 = arith.addf %55, %58 : vector<304x64xf32>
    %c448 = arith.constant 448 : index
    %c0_20 = arith.constant 0 : index
    %60 = vector.load %arg2[%c448, %c0_20] : memref<1920x128xbf16, #tpu.memory_space<vmem>>, vector<64x64xbf16>
    %61 = vector.extract_strided_slice %32 {offsets = [480, 0], sizes = [304, 64], strides = [1, 1]} : vector<1600x64xbf16> to vector<304x64xbf16>
    %cst_21 = arith.constant dense<0.000000e+00> : vector<304x64xf32>
    %62 = tpu.matmul %61, %60, %cst_21 {dimension_numbers = #tpu.dot_dimension_numbers<[1], [0], [0], [1], [0, 0, 1, 1], [], []>} : vector<304x64xbf16>, vector<64x64xbf16>, vector<304x64xf32> -> vector<304x64xf32>
    %63 = arith.addf %59, %62 : vector<304x64xf32>
    %c512 = arith.constant 512 : index
    %c0_22 = arith.constant 0 : index
    %64 = vector.load %arg2[%c512, %c0_22] : memref<1920x128xbf16, #tpu.memory_space<vmem>>, vector<64x64xbf16>
    %65 = vector.extract_strided_slice %32 {offsets = [96, 0], sizes = [304, 64], strides = [1, 1]} : vector<1600x64xbf16> to vector<304x64xbf16>
    %cst_23 = arith.constant dense<0.000000e+00> : vector<304x64xf32>
    %66 = tpu.matmul %65, %64, %cst_23 {dimension_numbers = #tpu.dot_dimension_numbers<[1], [0], [0], [1], [0, 0, 1, 1], [], []>} : vector<304x64xbf16>, vector<64x64xbf16>, vector<304x64xf32> -> vector<304x64xf32>
    %67 = arith.addf %63, %66 : vector<304x64xf32>
    %c0_24 = arith.constant 0 : index
    %c0_25 = arith.constant 0 : index
    %68 = vector.load %arg2[%c0_24, %c0_25] : memref<1920x128xbf16, #tpu.memory_space<vmem>>, vector<64x64xbf16>
    %69 = vector.extract_strided_slice %32 {offsets = [400, 0], sizes = [304, 64], strides = [1, 1]} : vector<1600x64xbf16> to vector<304x64xbf16>
    %cst_26 = arith.constant dense<0.000000e+00> : vector<304x64xf32>
    %70 = tpu.matmul %69, %68, %cst_26 {dimension_numbers = #tpu.dot_dimension_numbers<[1], [0], [0], [1], [0, 0, 1, 1], [], []>} : vector<304x64xbf16>, vector<64x64xbf16>, vector<304x64xf32> -> vector<304x64xf32>
    %c64_27 = arith.constant 64 : index
    %c0_28 = arith.constant 0 : index
    %71 = vector.load %arg2[%c64_27, %c0_28] : memref<1920x128xbf16, #tpu.memory_space<vmem>>, vector<64x64xbf16>
    %72 = vector.extract_strided_slice %32 {offsets = [16, 0], sizes = [304, 64], strides = [1, 1]} : vector<1600x64xbf16> to vector<304x64xbf16>
    %cst_29 = arith.constant dense<0.000000e+00> : vector<304x64xf32>
    %73 = tpu.matmul %72, %71, %cst_29 {dimension_numbers = #tpu.dot_dimension_numbers<[1], [0], [0], [1], [0, 0, 1, 1], [], []>} : vector<304x64xbf16>, vector<64x64xbf16>, vector<304x64xf32> -> vector<304x64xf32>
    %74 = arith.addf %70, %73 : vector<304x64xf32>
    %c128_30 = arith.constant 128 : index
    %c0_31 = arith.constant 0 : index
    %75 = vector.load %arg2[%c128_30, %c0_31] : memref<1920x128xbf16, #tpu.memory_space<vmem>>, vector<64x64xbf16>
    %76 = vector.extract_strided_slice %32 {offsets = [416, 0], sizes = [304, 64], strides = [1, 1]} : vector<1600x64xbf16> to vector<304x64xbf16>
    %cst_32 = arith.constant dense<0.000000e+00> : vector<304x64xf32>
    %77 = tpu.matmul %76, %75, %cst_32 {dimension_numbers = #tpu.dot_dimension_numbers<[1], [0], [0], [1], [0, 0, 1, 1], [], []>} : vector<304x64xbf16>, vector<64x64xbf16>, vector<304x64xf32> -> vector<304x64xf32>
    %78 = arith.addf %74, %77 : vector<304x64xf32>
    %c192_33 = arith.constant 192 : index
    %c0_34 = arith.constant 0 : index
    %79 = vector.load %arg2[%c192_33, %c0_34] : memref<1920x128xbf16, #tpu.memory_space<vmem>>, vector<64x64xbf16>
    %80 = vector.extract_strided_slice %32 {offsets = [1200, 0], sizes = [304, 64], strides = [1, 1]} : vector<1600x64xbf16> to vector<304x64xbf16>
    %cst_35 = arith.constant dense<0.000000e+00> : vector<304x64xf32>
    %81 = tpu.matmul %80, %79, %cst_35 {dimension_numbers = #tpu.dot_dimension_numbers<[1], [0], [0], [1], [0, 0, 1, 1], [], []>} : vector<304x64xbf16>, vector<64x64xbf16>, vector<304x64xf32> -> vector<304x64xf32>
    %82 = arith.addf %78, %81 : vector<304x64xf32>
    %c256_36 = arith.constant 256 : index
    %c0_37 = arith.constant 0 : index
    %83 = vector.load %arg2[%c256_36, %c0_37] : memref<1920x128xbf16, #tpu.memory_space<vmem>>, vector<64x64xbf16>
    %84 = vector.extract_strided_slice %32 {offsets = [816, 0], sizes = [304, 64], strides = [1, 1]} : vector<1600x64xbf16> to vector<304x64xbf16>
    %cst_38 = arith.constant dense<0.000000e+00> : vector<304x64xf32>
    %85 = tpu.matmul %84, %83, %cst_38 {dimension_numbers = #tpu.dot_dimension_numbers<[1], [0], [0], [1], [0, 0, 1, 1], [], []>} : vector<304x64xbf16>, vector<64x64xbf16>, vector<304x64xf32> -> vector<304x64xf32>
    %86 = arith.addf %82, %85 : vector<304x64xf32>
    %c320_39 = arith.constant 320 : index
    %c0_40 = arith.constant 0 : index
    %87 = vector.load %arg2[%c320_39, %c0_40] : memref<1920x128xbf16, #tpu.memory_space<vmem>>, vector<64x64xbf16>
    %88 = vector.extract_strided_slice %32 {offsets = [1216, 0], sizes = [304, 64], strides = [1, 1]} : vector<1600x64xbf16> to vector<304x64xbf16>
    %cst_41 = arith.constant dense<0.000000e+00> : vector<304x64xf32>
    %89 = tpu.matmul %88, %87, %cst_41 {dimension_numbers = #tpu.dot_dimension_numbers<[1], [0], [0], [1], [0, 0, 1, 1], [], []>} : vector<304x64xbf16>, vector<64x64xbf16>, vector<304x64xf32> -> vector<304x64xf32>
    %90 = arith.addf %86, %89 : vector<304x64xf32>
    %c384_42 = arith.constant 384 : index
    %c0_43 = arith.constant 0 : index
    %91 = vector.load %arg2[%c384_42, %c0_43] : memref<1920x128xbf16, #tpu.memory_space<vmem>>, vector<64x64xbf16>
    %92 = vector.extract_strided_slice %32 {offsets = [480, 0], sizes = [304, 64], strides = [1, 1]} : vector<1600x64xbf16> to vector<304x64xbf16>
    %cst_44 = arith.constant dense<0.000000e+00> : vector<304x64xf32>
    %93 = tpu.matmul %92, %91, %cst_44 {dimension_numbers = #tpu.dot_dimension_numbers<[1], [0], [0], [1], [0, 0, 1, 1], [], []>} : vector<304x64xbf16>, vector<64x64xbf16>, vector<304x64xf32> -> vector<304x64xf32>
    %94 = arith.addf %90, %93 : vector<304x64xf32>
    %c448_45 = arith.constant 448 : index
    %c0_46 = arith.constant 0 : index
    %95 = vector.load %arg2[%c448_45, %c0_46] : memref<1920x128xbf16, #tpu.memory_space<vmem>>, vector<64x64xbf16>
    %96 = vector.extract_strided_slice %32 {offsets = [96, 0], sizes = [304, 64], strides = [1, 1]} : vector<1600x64xbf16> to vector<304x64xbf16>
    %cst_47 = arith.constant dense<0.000000e+00> : vector<304x64xf32>
    %97 = tpu.matmul %96, %95, %cst_47 {dimension_numbers = #tpu.dot_dimension_numbers<[1], [0], [0], [1], [0, 0, 1, 1], [], []>} : vector<304x64xbf16>, vector<64x64xbf16>, vector<304x64xf32> -> vector<304x64xf32>
    %98 = arith.addf %94, %97 : vector<304x64xf32>
    %c512_48 = arith.constant 512 : index
    %c0_49 = arith.constant 0 : index
    %99 = vector.load %arg2[%c512_48, %c0_49] : memref<1920x128xbf16, #tpu.memory_space<vmem>>, vector<64x64xbf16>
    %100 = vector.extract_strided_slice %32 {offsets = [496, 0], sizes = [304, 64], strides = [1, 1]} : vector<1600x64xbf16> to vector<304x64xbf16>
    %cst_50 = arith.constant dense<0.000000e+00> : vector<304x64xf32>
    %101 = tpu.matmul %100, %99, %cst_50 {dimension_numbers = #tpu.dot_dimension_numbers<[1], [0], [0], [1], [0, 0, 1, 1], [], []>} : vector<304x64xbf16>, vector<64x64xbf16>, vector<304x64xf32> -> vector<304x64xf32>
    %102 = arith.addf %98, %101 : vector<304x64xf32>
    %103 = arith.maximumf %67, %102 : vector<304x64xf32>
    %c0_51 = arith.constant 0 : index
    %c0_52 = arith.constant 0 : index
    %104 = vector.load %arg2[%c0_51, %c0_52] : memref<1920x128xbf16, #tpu.memory_space<vmem>>, vector<64x64xbf16>
    %105 = vector.extract_strided_slice %32 {offsets = [800, 0], sizes = [304, 64], strides = [1, 1]} : vector<1600x64xbf16> to vector<304x64xbf16>
    %cst_53 = arith.constant dense<0.000000e+00> : vector<304x64xf32>
    %106 = tpu.matmul %105, %104, %cst_53 {dimension_numbers = #tpu.dot_dimension_numbers<[1], [0], [0], [1], [0, 0, 1, 1], [], []>} : vector<304x64xbf16>, vector<64x64xbf16>, vector<304x64xf32> -> vector<304x64xf32>
    %c64_54 = arith.constant 64 : index
    %c0_55 = arith.constant 0 : index
    %107 = vector.load %arg2[%c64_54, %c0_55] : memref<1920x128xbf16, #tpu.memory_space<vmem>>, vector<64x64xbf16>
    %108 = vector.extract_strided_slice %32 {offsets = [1200, 0], sizes = [304, 64], strides = [1, 1]} : vector<1600x64xbf16> to vector<304x64xbf16>
    %cst_56 = arith.constant dense<0.000000e+00> : vector<304x64xf32>
    %109 = tpu.matmul %108, %107, %cst_56 {dimension_numbers = #tpu.dot_dimension_numbers<[1], [0], [0], [1], [0, 0, 1, 1], [], []>} : vector<304x64xbf16>, vector<64x64xbf16>, vector<304x64xf32> -> vector<304x64xf32>
    %110 = arith.addf %106, %109 : vector<304x64xf32>
    %c128_57 = arith.constant 128 : index
    %c0_58 = arith.constant 0 : index
    %111 = vector.load %arg2[%c128_57, %c0_58] : memref<1920x128xbf16, #tpu.memory_space<vmem>>, vector<64x64xbf16>
    %112 = vector.extract_strided_slice %32 {offsets = [816, 0], sizes = [304, 64], strides = [1, 1]} : vector<1600x64xbf16> to vector<304x64xbf16>
    %cst_59 = arith.constant dense<0.000000e+00> : vector<304x64xf32>
    %113 = tpu.matmul %112, %111, %cst_59 {dimension_numbers = #tpu.dot_dimension_numbers<[1], [0], [0], [1], [0, 0, 1, 1], [], []>} : vector<304x64xbf16>, vector<64x64xbf16>, vector<304x64xf32> -> vector<304x64xf32>
    %114 = arith.addf %110, %113 : vector<304x64xf32>
    %c192_60 = arith.constant 192 : index
    %c0_61 = arith.constant 0 : index
    %115 = vector.load %arg2[%c192_60, %c0_61] : memref<1920x128xbf16, #tpu.memory_space<vmem>>, vector<64x64xbf16>
    %116 = vector.extract_strided_slice %32 {offsets = [80, 0], sizes = [304, 64], strides = [1, 1]} : vector<1600x64xbf16> to vector<304x64xbf16>
    %cst_62 = arith.constant dense<0.000000e+00> : vector<304x64xf32>
    %117 = tpu.matmul %116, %115, %cst_62 {dimension_numbers = #tpu.dot_dimension_numbers<[1], [0], [0], [1], [0, 0, 1, 1], [], []>} : vector<304x64xbf16>, vector<64x64xbf16>, vector<304x64xf32> -> vector<304x64xf32>
    %118 = arith.addf %114, %117 : vector<304x64xf32>
    %c256_63 = arith.constant 256 : index
    %c0_64 = arith.constant 0 : index
    %119 = vector.load %arg2[%c256_63, %c0_64] : memref<1920x128xbf16, #tpu.memory_space<vmem>>, vector<64x64xbf16>
    %120 = vector.extract_strided_slice %32 {offsets = [480, 0], sizes = [304, 64], strides = [1, 1]} : vector<1600x64xbf16> to vector<304x64xbf16>
    %cst_65 = arith.constant dense<0.000000e+00> : vector<304x64xf32>
    %121 = tpu.matmul %120, %119, %cst_65 {dimension_numbers = #tpu.dot_dimension_numbers<[1], [0], [0], [1], [0, 0, 1, 1], [], []>} : vector<304x64xbf16>, vector<64x64xbf16>, vector<304x64xf32> -> vector<304x64xf32>
    %122 = arith.addf %118, %121 : vector<304x64xf32>
    %c320_66 = arith.constant 320 : index
    %c0_67 = arith.constant 0 : index
    %123 = vector.load %arg2[%c320_66, %c0_67] : memref<1920x128xbf16, #tpu.memory_space<vmem>>, vector<64x64xbf16>
    %124 = vector.extract_strided_slice %32 {offsets = [96, 0], sizes = [304, 64], strides = [1, 1]} : vector<1600x64xbf16> to vector<304x64xbf16>
    %cst_68 = arith.constant dense<0.000000e+00> : vector<304x64xf32>
    %125 = tpu.matmul %124, %123, %cst_68 {dimension_numbers = #tpu.dot_dimension_numbers<[1], [0], [0], [1], [0, 0, 1, 1], [], []>} : vector<304x64xbf16>, vector<64x64xbf16>, vector<304x64xf32> -> vector<304x64xf32>
    %126 = arith.addf %122, %125 : vector<304x64xf32>
    %c384_69 = arith.constant 384 : index
    %c0_70 = arith.constant 0 : index
    %127 = vector.load %arg2[%c384_69, %c0_70] : memref<1920x128xbf16, #tpu.memory_space<vmem>>, vector<64x64xbf16>
    %128 = vector.extract_strided_slice %32 {offsets = [880, 0], sizes = [304, 64], strides = [1, 1]} : vector<1600x64xbf16> to vector<304x64xbf16>
    %cst_71 = arith.constant dense<0.000000e+00> : vector<304x64xf32>
    %129 = tpu.matmul %128, %127, %cst_71 {dimension_numbers = #tpu.dot_dimension_numbers<[1], [0], [0], [1], [0, 0, 1, 1], [], []>} : vector<304x64xbf16>, vector<64x64xbf16>, vector<304x64xf32> -> vector<304x64xf32>
    %130 = arith.addf %126, %129 : vector<304x64xf32>
    %c448_72 = arith.constant 448 : index
    %c0_73 = arith.constant 0 : index
    %131 = vector.load %arg2[%c448_72, %c0_73] : memref<1920x128xbf16, #tpu.memory_space<vmem>>, vector<64x64xbf16>
    %132 = vector.extract_strided_slice %32 {offsets = [1280, 0], sizes = [304, 64], strides = [1, 1]} : vector<1600x64xbf16> to vector<304x64xbf16>
    %cst_74 = arith.constant dense<0.000000e+00> : vector<304x64xf32>
    %133 = tpu.matmul %132, %131, %cst_74 {dimension_numbers = #tpu.dot_dimension_numbers<[1], [0], [0], [1], [0, 0, 1, 1], [], []>} : vector<304x64xbf16>, vector<64x64xbf16>, vector<304x64xf32> -> vector<304x64xf32>
    %134 = arith.addf %130, %133 : vector<304x64xf32>
    %c512_75 = arith.constant 512 : index
    %c0_76 = arith.constant 0 : index
    %135 = vector.load %arg2[%c512_75, %c0_76] : memref<1920x128xbf16, #tpu.memory_space<vmem>>, vector<64x64xbf16>
    %136 = vector.extract_strided_slice %32 {offsets = [896, 0], sizes = [304, 64], strides = [1, 1]} : vector<1600x64xbf16> to vector<304x64xbf16>
    %cst_77 = arith.constant dense<0.000000e+00> : vector<304x64xf32>
    %137 = tpu.matmul %136, %135, %cst_77 {dimension_numbers = #tpu.dot_dimension_numbers<[1], [0], [0], [1], [0, 0, 1, 1], [], []>} : vector<304x64xbf16>, vector<64x64xbf16>, vector<304x64xf32> -> vector<304x64xf32>
    %138 = arith.addf %134, %137 : vector<304x64xf32>
    %139 = arith.maximumf %103, %138 : vector<304x64xf32>
    %c0_78 = arith.constant 0 : index
    %c0_79 = arith.constant 0 : index
    %140 = vector.load %arg2[%c0_78, %c0_79] : memref<1920x128xbf16, #tpu.memory_space<vmem>>, vector<64x64xbf16>
    %141 = vector.extract_strided_slice %32 {offsets = [1200, 0], sizes = [304, 64], strides = [1, 1]} : vector<1600x64xbf16> to vector<304x64xbf16>
    %cst_80 = arith.constant dense<0.000000e+00> : vector<304x64xf32>
    %142 = tpu.matmul %141, %140, %cst_80 {dimension_numbers = #tpu.dot_dimension_numbers<[1], [0], [0], [1], [0, 0, 1, 1], [], []>} : vector<304x64xbf16>, vector<64x64xbf16>, vector<304x64xf32> -> vector<304x64xf32>
    %c64_81 = arith.constant 64 : index
    %c0_82 = arith.constant 0 : index
    %143 = vector.load %arg2[%c64_81, %c0_82] : memref<1920x128xbf16, #tpu.memory_space<vmem>>, vector<64x64xbf16>
    %144 = vector.extract_strided_slice %32 {offsets = [816, 0], sizes = [304, 64], strides = [1, 1]} : vector<1600x64xbf16> to vector<304x64xbf16>
    %cst_83 = arith.constant dense<0.000000e+00> : vector<304x64xf32>
    %145 = tpu.matmul %144, %143, %cst_83 {dimension_numbers = #tpu.dot_dimension_numbers<[1], [0], [0], [1], [0, 0, 1, 1], [], []>} : vector<304x64xbf16>, vector<64x64xbf16>, vector<304x64xf32> -> vector<304x64xf32>
    %146 = arith.addf %142, %145 : vector<304x64xf32>
    %c128_84 = arith.constant 128 : index
    %c0_85 = arith.constant 0 : index
    %147 = vector.load %arg2[%c128_84, %c0_85] : memref<1920x128xbf16, #tpu.memory_space<vmem>>, vector<64x64xbf16>
    %148 = vector.extract_strided_slice %32 {offsets = [1216, 0], sizes = [304, 64], strides = [1, 1]} : vector<1600x64xbf16> to vector<304x64xbf16>
    %cst_86 = arith.constant dense<0.000000e+00> : vector<304x64xf32>
    %149 = tpu.matmul %148, %147, %cst_86 {dimension_numbers = #tpu.dot_dimension_numbers<[1], [0], [0], [1], [0, 0, 1, 1], [], []>} : vector<304x64xbf16>, vector<64x64xbf16>, vector<304x64xf32> -> vector<304x64xf32>
    %150 = arith.addf %146, %149 : vector<304x64xf32>
    %c192_87 = arith.constant 192 : index
    %c0_88 = arith.constant 0 : index
    %151 = vector.load %arg2[%c192_87, %c0_88] : memref<1920x128xbf16, #tpu.memory_space<vmem>>, vector<64x64xbf16>
    %152 = vector.extract_strided_slice %32 {offsets = [480, 0], sizes = [304, 64], strides = [1, 1]} : vector<1600x64xbf16> to vector<304x64xbf16>
    %cst_89 = arith.constant dense<0.000000e+00> : vector<304x64xf32>
    %153 = tpu.matmul %152, %151, %cst_89 {dimension_numbers = #tpu.dot_dimension_numbers<[1], [0], [0], [1], [0, 0, 1, 1], [], []>} : vector<304x64xbf16>, vector<64x64xbf16>, vector<304x64xf32> -> vector<304x64xf32>
    %154 = arith.addf %150, %153 : vector<304x64xf32>
    %c256_90 = arith.constant 256 : index
    %c0_91 = arith.constant 0 : index
    %155 = vector.load %arg2[%c256_90, %c0_91] : memref<1920x128xbf16, #tpu.memory_space<vmem>>, vector<64x64xbf16>
    %156 = vector.extract_strided_slice %32 {offsets = [96, 0], sizes = [304, 64], strides = [1, 1]} : vector<1600x64xbf16> to vector<304x64xbf16>
    %cst_92 = arith.constant dense<0.000000e+00> : vector<304x64xf32>
    %157 = tpu.matmul %156, %155, %cst_92 {dimension_numbers = #tpu.dot_dimension_numbers<[1], [0], [0], [1], [0, 0, 1, 1], [], []>} : vector<304x64xbf16>, vector<64x64xbf16>, vector<304x64xf32> -> vector<304x64xf32>
    %158 = arith.addf %154, %157 : vector<304x64xf32>
    %c320_93 = arith.constant 320 : index
    %c0_94 = arith.constant 0 : index
    %159 = vector.load %arg2[%c320_93, %c0_94] : memref<1920x128xbf16, #tpu.memory_space<vmem>>, vector<64x64xbf16>
    %160 = vector.extract_strided_slice %32 {offsets = [496, 0], sizes = [304, 64], strides = [1, 1]} : vector<1600x64xbf16> to vector<304x64xbf16>
    %cst_95 = arith.constant dense<0.000000e+00> : vector<304x64xf32>
    %161 = tpu.matmul %160, %159, %cst_95 {dimension_numbers = #tpu.dot_dimension_numbers<[1], [0], [0], [1], [0, 0, 1, 1], [], []>} : vector<304x64xbf16>, vector<64x64xbf16>, vector<304x64xf32> -> vector<304x64xf32>
    %162 = arith.addf %158, %161 : vector<304x64xf32>
    %c384_96 = arith.constant 384 : index
    %c0_97 = arith.constant 0 : index
    %163 = vector.load %arg2[%c384_96, %c0_97] : memref<1920x128xbf16, #tpu.memory_space<vmem>>, vector<64x64xbf16>
    %164 = vector.extract_strided_slice %32 {offsets = [1280, 0], sizes = [304, 64], strides = [1, 1]} : vector<1600x64xbf16> to vector<304x64xbf16>
    %cst_98 = arith.constant dense<0.000000e+00> : vector<304x64xf32>
    %165 = tpu.matmul %164, %163, %cst_98 {dimension_numbers = #tpu.dot_dimension_numbers<[1], [0], [0], [1], [0, 0, 1, 1], [], []>} : vector<304x64xbf16>, vector<64x64xbf16>, vector<304x64xf32> -> vector<304x64xf32>
    %166 = arith.addf %162, %165 : vector<304x64xf32>
    %c448_99 = arith.constant 448 : index
    %c0_100 = arith.constant 0 : index
    %167 = vector.load %arg2[%c448_99, %c0_100] : memref<1920x128xbf16, #tpu.memory_space<vmem>>, vector<64x64xbf16>
    %168 = vector.extract_strided_slice %32 {offsets = [896, 0], sizes = [304, 64], strides = [1, 1]} : vector<1600x64xbf16> to vector<304x64xbf16>
    %cst_101 = arith.constant dense<0.000000e+00> : vector<304x64xf32>
    %169 = tpu.matmul %168, %167, %cst_101 {dimension_numbers = #tpu.dot_dimension_numbers<[1], [0], [0], [1], [0, 0, 1, 1], [], []>} : vector<304x64xbf16>, vector<64x64xbf16>, vector<304x64xf32> -> vector<304x64xf32>
    %170 = arith.addf %166, %169 : vector<304x64xf32>
    %c512_102 = arith.constant 512 : index
    %c0_103 = arith.constant 0 : index
    %171 = vector.load %arg2[%c512_102, %c0_103] : memref<1920x128xbf16, #tpu.memory_space<vmem>>, vector<64x64xbf16>
    %172 = vector.extract_strided_slice %32 {offsets = [1296, 0], sizes = [304, 64], strides = [1, 1]} : vector<1600x64xbf16> to vector<304x64xbf16>
    %cst_104 = arith.constant dense<0.000000e+00> : vector<304x64xf32>
    %173 = tpu.matmul %172, %171, %cst_104 {dimension_numbers = #tpu.dot_dimension_numbers<[1], [0], [0], [1], [0, 0, 1, 1], [], []>} : vector<304x64xbf16>, vector<64x64xbf16>, vector<304x64xf32> -> vector<304x64xf32>
    %174 = arith.addf %170, %173 : vector<304x64xf32>
    %175 = arith.maximumf %139, %174 : vector<304x64xf32>
    %c5 = arith.constant 5 : index
    %c0_105 = arith.constant 0 : index
    %176 = vector.load %arg3[%c5, %c0_105] : memref<16x128xf32, #tpu.memory_space<vmem>>, vector<1x64xf32>
    %177 = vector.broadcast %176 : vector<1x64xf32> to vector<304x64xf32>
    %178 = arith.addf %175, %177 : vector<304x64xf32>
    %cst_106 = arith.constant 0.000000e+00 : f32
    %179 = vector.broadcast %cst_106 : f32 to vector<304x64xf32>
    %180 = arith.maximumf %178, %179 : vector<304x64xf32>
    %181 = arith.truncf %180 : vector<304x64xf32> to vector<304x64xbf16>
    %c576 = arith.constant 576 : index
    %c0_107 = arith.constant 0 : index
    %182 = vector.load %arg2[%c576, %c0_107] : memref<1920x128xbf16, #tpu.memory_space<vmem>>, vector<64x128xbf16>
    %183 = vector.extract_strided_slice %181 {offsets = [0, 0], sizes = [112, 64], strides = [1, 1]} : vector<304x64xbf16> to vector<112x64xbf16>
    %cst_108 = arith.constant dense<0.000000e+00> : vector<112x128xf32>
    %184 = tpu.matmul %183, %182, %cst_108 {dimension_numbers = #tpu.dot_dimension_numbers<[1], [0], [0], [1], [0, 0, 1, 1], [], []>} : vector<112x64xbf16>, vector<64x128xbf16>, vector<112x128xf32> -> vector<112x128xf32>
    %c640 = arith.constant 640 : index
    %c0_109 = arith.constant 0 : index
    %185 = vector.load %arg2[%c640, %c0_109] : memref<1920x128xbf16, #tpu.memory_space<vmem>>, vector<64x128xbf16>
    %186 = vector.extract_strided_slice %181 {offsets = [16, 0], sizes = [112, 64], strides = [1, 1]} : vector<304x64xbf16> to vector<112x64xbf16>
    %cst_110 = arith.constant dense<0.000000e+00> : vector<112x128xf32>
    %187 = tpu.matmul %186, %185, %cst_110 {dimension_numbers = #tpu.dot_dimension_numbers<[1], [0], [0], [1], [0, 0, 1, 1], [], []>} : vector<112x64xbf16>, vector<64x128xbf16>, vector<112x128xf32> -> vector<112x128xf32>
    %188 = arith.addf %184, %187 : vector<112x128xf32>
    %c704 = arith.constant 704 : index
    %c0_111 = arith.constant 0 : index
    %189 = vector.load %arg2[%c704, %c0_111] : memref<1920x128xbf16, #tpu.memory_space<vmem>>, vector<64x128xbf16>
    %190 = vector.extract_strided_slice %181 {offsets = [32, 0], sizes = [112, 64], strides = [1, 1]} : vector<304x64xbf16> to vector<112x64xbf16>
    %cst_112 = arith.constant dense<0.000000e+00> : vector<112x128xf32>
    %191 = tpu.matmul %190, %189, %cst_112 {dimension_numbers = #tpu.dot_dimension_numbers<[1], [0], [0], [1], [0, 0, 1, 1], [], []>} : vector<112x64xbf16>, vector<64x128xbf16>, vector<112x128xf32> -> vector<112x128xf32>
    %192 = arith.addf %188, %191 : vector<112x128xf32>
    %c768 = arith.constant 768 : index
    %c0_113 = arith.constant 0 : index
    %193 = vector.load %arg2[%c768, %c0_113] : memref<1920x128xbf16, #tpu.memory_space<vmem>>, vector<64x128xbf16>
    %194 = vector.extract_strided_slice %181 {offsets = [80, 0], sizes = [112, 64], strides = [1, 1]} : vector<304x64xbf16> to vector<112x64xbf16>
    %cst_114 = arith.constant dense<0.000000e+00> : vector<112x128xf32>
    %195 = tpu.matmul %194, %193, %cst_114 {dimension_numbers = #tpu.dot_dimension_numbers<[1], [0], [0], [1], [0, 0, 1, 1], [], []>} : vector<112x64xbf16>, vector<64x128xbf16>, vector<112x128xf32> -> vector<112x128xf32>
    %196 = arith.addf %192, %195 : vector<112x128xf32>
    %c832 = arith.constant 832 : index
    %c0_115 = arith.constant 0 : index
    %197 = vector.load %arg2[%c832, %c0_115] : memref<1920x128xbf16, #tpu.memory_space<vmem>>, vector<64x128xbf16>
    %198 = vector.extract_strided_slice %181 {offsets = [96, 0], sizes = [112, 64], strides = [1, 1]} : vector<304x64xbf16> to vector<112x64xbf16>
    %cst_116 = arith.constant dense<0.000000e+00> : vector<112x128xf32>
    %199 = tpu.matmul %198, %197, %cst_116 {dimension_numbers = #tpu.dot_dimension_numbers<[1], [0], [0], [1], [0, 0, 1, 1], [], []>} : vector<112x64xbf16>, vector<64x128xbf16>, vector<112x128xf32> -> vector<112x128xf32>
    %200 = arith.addf %196, %199 : vector<112x128xf32>
    %c896 = arith.constant 896 : index
    %c0_117 = arith.constant 0 : index
    %201 = vector.load %arg2[%c896, %c0_117] : memref<1920x128xbf16, #tpu.memory_space<vmem>>, vector<64x128xbf16>
    %202 = vector.extract_strided_slice %181 {offsets = [112, 0], sizes = [112, 64], strides = [1, 1]} : vector<304x64xbf16> to vector<112x64xbf16>
    %cst_118 = arith.constant dense<0.000000e+00> : vector<112x128xf32>
    %203 = tpu.matmul %202, %201, %cst_118 {dimension_numbers = #tpu.dot_dimension_numbers<[1], [0], [0], [1], [0, 0, 1, 1], [], []>} : vector<112x64xbf16>, vector<64x128xbf16>, vector<112x128xf32> -> vector<112x128xf32>
    %204 = arith.addf %200, %203 : vector<112x128xf32>
    %c960 = arith.constant 960 : index
    %c0_119 = arith.constant 0 : index
    %205 = vector.load %arg2[%c960, %c0_119] : memref<1920x128xbf16, #tpu.memory_space<vmem>>, vector<64x128xbf16>
    %206 = vector.extract_strided_slice %181 {offsets = [160, 0], sizes = [112, 64], strides = [1, 1]} : vector<304x64xbf16> to vector<112x64xbf16>
    %cst_120 = arith.constant dense<0.000000e+00> : vector<112x128xf32>
    %207 = tpu.matmul %206, %205, %cst_120 {dimension_numbers = #tpu.dot_dimension_numbers<[1], [0], [0], [1], [0, 0, 1, 1], [], []>} : vector<112x64xbf16>, vector<64x128xbf16>, vector<112x128xf32> -> vector<112x128xf32>
    %208 = arith.addf %204, %207 : vector<112x128xf32>
    %c1024 = arith.constant 1024 : index
    %c0_121 = arith.constant 0 : index
    %209 = vector.load %arg2[%c1024, %c0_121] : memref<1920x128xbf16, #tpu.memory_space<vmem>>, vector<64x128xbf16>
    %210 = vector.extract_strided_slice %181 {offsets = [176, 0], sizes = [112, 64], strides = [1, 1]} : vector<304x64xbf16> to vector<112x64xbf16>
    %cst_122 = arith.constant dense<0.000000e+00> : vector<112x128xf32>
    %211 = tpu.matmul %210, %209, %cst_122 {dimension_numbers = #tpu.dot_dimension_numbers<[1], [0], [0], [1], [0, 0, 1, 1], [], []>} : vector<112x64xbf16>, vector<64x128xbf16>, vector<112x128xf32> -> vector<112x128xf32>
    %212 = arith.addf %208, %211 : vector<112x128xf32>
    %c1088 = arith.constant 1088 : index
    %c0_123 = arith.constant 0 : index
    %213 = vector.load %arg2[%c1088, %c0_123] : memref<1920x128xbf16, #tpu.memory_space<vmem>>, vector<64x128xbf16>
    %214 = vector.extract_strided_slice %181 {offsets = [192, 0], sizes = [112, 64], strides = [1, 1]} : vector<304x64xbf16> to vector<112x64xbf16>
    %cst_124 = arith.constant dense<0.000000e+00> : vector<112x128xf32>
    %215 = tpu.matmul %214, %213, %cst_124 {dimension_numbers = #tpu.dot_dimension_numbers<[1], [0], [0], [1], [0, 0, 1, 1], [], []>} : vector<112x64xbf16>, vector<64x128xbf16>, vector<112x128xf32> -> vector<112x128xf32>
    %216 = arith.addf %212, %215 : vector<112x128xf32>
    %c6 = arith.constant 6 : index
    %c0_125 = arith.constant 0 : index
    %217 = vector.load %arg3[%c6, %c0_125] : memref<16x128xf32, #tpu.memory_space<vmem>>, vector<1x128xf32>
    %218 = vector.broadcast %217 : vector<1x128xf32> to vector<112x128xf32>
    %219 = arith.addf %216, %218 : vector<112x128xf32>
    %cst_126 = arith.constant 0.000000e+00 : f32
    %220 = vector.broadcast %cst_126 : f32 to vector<112x128xf32>
    %221 = arith.maximumf %219, %220 : vector<112x128xf32>
    %222 = arith.truncf %221 : vector<112x128xf32> to vector<112x128xbf16>
    %223 = vector.extract_strided_slice %222 {offsets = [0, 0], sizes = [16, 128], strides = [1, 1]} : vector<112x128xbf16> to vector<16x128xbf16>
    %224 = vector.extract_strided_slice %222 {offsets = [16, 0], sizes = [16, 128], strides = [1, 1]} : vector<112x128xbf16> to vector<16x128xbf16>
    %225 = vector.extract_strided_slice %222 {offsets = [80, 0], sizes = [16, 128], strides = [1, 1]} : vector<112x128xbf16> to vector<16x128xbf16>
    %226 = vector.extract_strided_slice %222 {offsets = [96, 0], sizes = [16, 128], strides = [1, 1]} : vector<112x128xbf16> to vector<16x128xbf16>
    %227 = tpu.concatenate %223, %224, %225, %226 in 1 : vector<16x128xbf16>, vector<16x128xbf16>, vector<16x128xbf16>, vector<16x128xbf16> -> vector<16x512xbf16>
    %c1152 = arith.constant 1152 : index
    %c0_127 = arith.constant 0 : index
    %228 = vector.load %arg2[%c1152, %c0_127] : memref<1920x128xbf16, #tpu.memory_space<vmem>>, vector<512x128xbf16>
    %cst_128 = arith.constant dense<0.000000e+00> : vector<16x128xf32>
    %229 = tpu.matmul %227, %228, %cst_128 {dimension_numbers = #tpu.dot_dimension_numbers<[1], [0], [0], [1], [0, 0, 1, 1], [], []>} : vector<16x512xbf16>, vector<512x128xbf16>, vector<16x128xf32> -> vector<16x128xf32>
    %c7 = arith.constant 7 : index
    %c0_129 = arith.constant 0 : index
    %230 = vector.load %arg3[%c7, %c0_129] : memref<16x128xf32, #tpu.memory_space<vmem>>, vector<1x128xf32>
    %231 = vector.broadcast %230 : vector<1x128xf32> to vector<16x128xf32>
    %232 = arith.addf %229, %231 : vector<16x128xf32>
    %cst_130 = arith.constant 0.000000e+00 : f32
    %233 = vector.broadcast %cst_130 : f32 to vector<16x128xf32>
    %234 = arith.maximumf %232, %233 : vector<16x128xf32>
    %235 = arith.truncf %234 : vector<16x128xf32> to vector<16x128xbf16>
    %c1664 = arith.constant 1664 : index
    %c0_131 = arith.constant 0 : index
    %236 = vector.load %arg2[%c1664, %c0_131] : memref<1920x128xbf16, #tpu.memory_space<vmem>>, vector<128x128xbf16>
    %cst_132 = arith.constant dense<0.000000e+00> : vector<16x128xf32>
    %237 = tpu.matmul %235, %236, %cst_132 {dimension_numbers = #tpu.dot_dimension_numbers<[1], [0], [0], [1], [0, 0, 1, 1], [], []>} : vector<16x128xbf16>, vector<128x128xbf16>, vector<16x128xf32> -> vector<16x128xf32>
    %c8 = arith.constant 8 : index
    %c0_133 = arith.constant 0 : index
    %238 = vector.load %arg3[%c8, %c0_133] : memref<16x128xf32, #tpu.memory_space<vmem>>, vector<1x128xf32>
    %239 = vector.broadcast %238 : vector<1x128xf32> to vector<16x128xf32>
    %240 = arith.addf %237, %239 : vector<16x128xf32>
    %cst_134 = arith.constant 0.000000e+00 : f32
    %241 = vector.broadcast %cst_134 : f32 to vector<16x128xf32>
    %242 = arith.maximumf %240, %241 : vector<16x128xf32>
    %243 = arith.truncf %242 : vector<16x128xf32> to vector<16x128xbf16>
    %c1792 = arith.constant 1792 : index
    %c0_135 = arith.constant 0 : index
    %244 = vector.load %arg2[%c1792, %c0_135] : memref<1920x128xbf16, #tpu.memory_space<vmem>>, vector<128x128xbf16>
    %cst_136 = arith.constant dense<0.000000e+00> : vector<16x128xf32>
    %245 = tpu.matmul %243, %244, %cst_136 {dimension_numbers = #tpu.dot_dimension_numbers<[1], [0], [0], [1], [0, 0, 1, 1], [], []>} : vector<16x128xbf16>, vector<128x128xbf16>, vector<16x128xf32> -> vector<16x128xf32>
    %c9 = arith.constant 9 : index
    %c0_137 = arith.constant 0 : index
    %246 = vector.load %arg3[%c9, %c0_137] : memref<16x128xf32, #tpu.memory_space<vmem>>, vector<1x128xf32>
    %247 = vector.broadcast %246 : vector<1x128xf32> to vector<16x128xf32>
    %248 = arith.addf %245, %247 : vector<16x128xf32>
    %c0_138 = arith.constant 0 : index
    %c0_139 = arith.constant 0 : index
    %c0_140 = arith.constant 0 : index
    %249 = vector.load %arg5[%c0_138, %c0_139, %c0_140] : memref<1x16x128xf32, #tpu.memory_space<vmem>>, vector<1x16x128xf32>
    %250 = vector.shape_cast %249 : vector<1x16x128xf32> to vector<16x128xf32>
    %251 = vector.shape_cast %248 : vector<16x128xf32> to vector<1x16x128xf32>
    tpu.vector_store %arg5[%c0_138, %c0_139, %c0_140], %251 {strides = array<i32>} : memref<1x16x128xf32, #tpu.memory_space<vmem>>, vector<1x16x128xf32>,
    return
  }
  func.func @transform_0(%arg0: i32) -> (i32, i32, i32) {
    %c0_i32 = arith.constant 0 : i32
    %c0_i32_0 = arith.constant 0 : i32
    %c0_i32_1 = arith.constant 0 : i32
    return %arg0, %c0_i32, %c0_i32_0 : i32, i32, i32
  }
  func.func @transform_1(%arg0: i32) -> (i32, i32) {
    %c0_i32 = arith.constant 0 : i32
    %c0_i32_0 = arith.constant 0 : i32
    %c0_i32_1 = arith.constant 0 : i32
    return %c0_i32, %c0_i32_0 : i32, i32
  }
  func.func @transform_2(%arg0: i32) -> (i32, i32) {
    %c0_i32 = arith.constant 0 : i32
    %c0_i32_0 = arith.constant 0 : i32
    %c0_i32_1 = arith.constant 0 : i32
    return %c0_i32, %c0_i32_0 : i32, i32
  }
  func.func @transform_3(%arg0: i32) -> i32 {
    %c0_i32 = arith.constant 0 : i32
    %c0_i32_0 = arith.constant 0 : i32
    return %c0_i32 : i32
  }
  func.func @transform_4(%arg0: i32) -> (i32, i32, i32) {
    %c0_i32 = arith.constant 0 : i32
    %c0_i32_0 = arith.constant 0 : i32
    %c0_i32_1 = arith.constant 0 : i32
    return %arg0, %c0_i32, %c0_i32_0 : i32, i32, i32
  }
}

</mosaic_0001>

<llo_original>
// kernel: _lambda_.1
$region0: #{_lambda_.1}
  #allocation0 [shape = 'u32[]', space=smem, size = 0x4, offset = 0x4, fixed_abs, tag = 'smem constant byte address 0x4 - core index']
  #allocation1 [shape = 'u32[72,128]{1,0:T(1,128)}', space=vmem, size = 0x9000, scoped, tag = 'internal scratch']
  %s0 = inlined_call_operand.vmem [shape: f32[1,1600,4], index: 0, kind: input, shape index: {}]
  %s1 = inlined_call_operand.vmem [shape: bf16[1920,128], index: 1, kind: input, shape index: {}]
  %s2 = inlined_call_operand.vmem [shape: f32[16,128], index: 2, kind: input, shape index: {}]
  %s3 = inlined_call_operand.vmem [shape: f32[2], index: 3, kind: input, shape index: {}]
  %s4 = inlined_call_operand.vmem [shape: f32[1,16,128], index: 4, kind: output, shape index: {}]
  %s5 = sld [smem:[#allocation0]]
  $region30: #{_lambda_.1} parent=0
    _
  %s7 = ssub.s32 1, %s5
  %s8 = scalar_select 0, %s7, %s5
  $region1: #{_lambda_.1} parent=0
    #allocation2 [shape = 'u8[512]{0}', space=smem, size = 0x200, scoped, tag = 'input window, operand 3, single buffered']
    #allocation3 [shape = 's32[1]{0}', space=sflag, size = 0x4, scoped, tag = 'scoped memory for _lambda_.1']
    %9 = vsyncpa [#allocation3], 0
    // Predicated region
    $region2: #{_lambda_.1} parent=1 // pred_check
      _
    $region3: #{_lambda_.1} parent=1 // pred_check_branch
      %11 = sbr.rel (0) target = $region5
    $region4: #{_lambda_.1} parent=1 // pred_region
      _
    $region5: #{_lambda_.1} parent=1 // pred_fallthru
      _
    // Predicated region
    $region6: #{_lambda_.1} parent=1 // pred_check
      _
    $region7: #{_lambda_.1} parent=1 // pred_check_branch
      %13 = sbr.rel (0) target = $region9
    $region8: #{_lambda_.1} parent=1 // pred_region
      _
    $region9: #{_lambda_.1} parent=1 // pred_fallthru
      _
    // Predicated region
    $region10: #{_lambda_.1} parent=1 // pred_check
      _
    $region11: #{_lambda_.1} parent=1 // pred_check_branch
      %15 = sbr.rel (0) target = $region13
    $region12: #{_lambda_.1} parent=1 // pred_region
      _
    $region13: #{_lambda_.1} parent=1 // pred_fallthru
      _
    // Predicated region
    $region14: #{_lambda_.1} parent=1 // pred_check
      _
    $region15: #{_lambda_.1} parent=1 // pred_check_branch
      %17 = sbr.rel (0) target = $region17
    $region16: #{_lambda_.1} parent=1 // pred_region
      %19 = vsyncadd [#allocation3], 0
      %s21 = sshll.u32 %s3, 4
      %s22 = int_to_ptr.vmem [resolvable:$true] %s21
      %24 = dma.vmem_to_smem %s22, 16, [#allocation2], [#allocation3]
    $region17: #{_lambda_.1} parent=1 // pred_fallthru
      _
    // Predicated region
    $region18: #{_lambda_.1} parent=1 // pred_check
      _
    $region19: #{_lambda_.1} parent=1 // pred_check_branch
      %26 = sbr.rel (0) target = $region21
    $region20: #{_lambda_.1} parent=1 // pred_region
      %28 = dma.done [#allocation3], 16
    $region21: #{_lambda_.1} parent=1 // pred_fallthru
      _
    %29 = sfence
    %v31 = vld [vmem:[%s0] sm:$0xff]
    %v32 = vld [vmem:[%s0 + $0x8] sm:$0xff]
    %v33 = vld [vmem:[%s0 + $0x10] sm:$0xff]
    %v34 = vld [vmem:[%s0 + $0x18] sm:$0xff]
    %v35 = vld [vmem:[%s0 + $0x20] sm:$0xff]
    %v36 = vld [vmem:[%s0 + $0x28] sm:$0xff]
    %v37 = vld [vmem:[%s0 + $0x30] sm:$0xff]
    %v38 = vld [vmem:[%s0 + $0x38] sm:$0xff]
    %v39 = vld [vmem:[%s0 + $0x40] sm:$0xff]
    %v40 = vld [vmem:[%s0 + $0x48] sm:$0xff]
    %v41 = vld [vmem:[%s0 + $0x50] sm:$0xff]
    %v42 = vld [vmem:[%s0 + $0x58] sm:$0xff]
    %v43 = vld [vmem:[%s0 + $0x60] sm:$0xff]
    %v44 = vld [vmem:[%s0 + $0x68] sm:$0xff]
    %v45 = vld [vmem:[%s0 + $0x70] sm:$0xff]
    %v46 = vld [vmem:[%s0 + $0x78] sm:$0xff]
    %v47 = vld [vmem:[%s0 + $0x80] sm:$0xff]
    %v48 = vld [vmem:[%s0 + $0x88] sm:$0xff]
    %v49 = vld [vmem:[%s0 + $0x90] sm:$0xff]
    %v50 = vld [vmem:[%s0 + $0x98] sm:$0xff]
    %v51 = vld [vmem:[%s0 + $0xa0] sm:$0xff]
    %v52 = vld [vmem:[%s0 + $0xa8] sm:$0xff]
    %v53 = vld [vmem:[%s0 + $0xb0] sm:$0xff]
    %v54 = vld [vmem:[%s0 + $0xb8] sm:$0xff]
    %v55 = vld [vmem:[%s0 + $0xc0] sm:$0xff]
    %v56 = vld [vmem:[%s0 + $0xc8] sm:$0xff]
    %v57 = vld [vmem:[%s0 + $0xd0] sm:$0xff]
    %v58 = vld [vmem:[%s0 + $0xd8] sm:$0xff]
    %v59 = vld [vmem:[%s0 + $0xe0] sm:$0xff]
    %v60 = vld [vmem:[%s0 + $0xe8] sm:$0xff]
    %v61 = vld [vmem:[%s0 + $0xf0] sm:$0xff]
    %v62 = vld [vmem:[%s0 + $0xf8] sm:$0xff]
    %v63 = vld [vmem:[%s0 + $0x100] sm:$0xff]
    %v64 = vld [vmem:[%s0 + $0x108] sm:$0xff]
    %v65 = vld [vmem:[%s0 + $0x110] sm:$0xff]
    %v66 = vld [vmem:[%s0 + $0x118] sm:$0xff]
    %v67 = vld [vmem:[%s0 + $0x120] sm:$0xff]
    %v68 = vld [vmem:[%s0 + $0x128] sm:$0xff]
    %v69 = vld [vmem:[%s0 + $0x130] sm:$0xff]
    %v70 = vld [vmem:[%s0 + $0x138] sm:$0xff]
    %v71 = vld [vmem:[%s0 + $0x140] sm:$0xff]
    %v72 = vld [vmem:[%s0 + $0x148] sm:$0xff]
    %v73 = vld [vmem:[%s0 + $0x150] sm:$0xff]
    %v74 = vld [vmem:[%s0 + $0x158] sm:$0xff]
    %v75 = vld [vmem:[%s0 + $0x160] sm:$0xff]
    %v76 = vld [vmem:[%s0 + $0x168] sm:$0xff]
    %v77 = vld [vmem:[%s0 + $0x170] sm:$0xff]
    %v78 = vld [vmem:[%s0 + $0x178] sm:$0xff]
    %v79 = vld [vmem:[%s0 + $0x180] sm:$0xff]
    %v80 = vld [vmem:[%s0 + $0x188] sm:$0xff]
    %v81 = vld [vmem:[%s0 + $0x190] sm:$0xff]
    %v82 = vld [vmem:[%s0 + $0x198] sm:$0xff]
    %v83 = vld [vmem:[%s0 + $0x1a0] sm:$0xff]
    %v84 = vld [vmem:[%s0 + $0x1a8] sm:$0xff]
    %v85 = vld [vmem:[%s0 + $0x1b0] sm:$0xff]
    %v86 = vld [vmem:[%s0 + $0x1b8] sm:$0xff]
    %v87 = vld [vmem:[%s0 + $0x1c0] sm:$0xff]
    %v88 = vld [vmem:[%s0 + $0x1c8] sm:$0xff]
    %v89 = vld [vmem:[%s0 + $0x1d0] sm:$0xff]
    %v90 = vld [vmem:[%s0 + $0x1d8] sm:$0xff]
    %v91 = vld [vmem:[%s0 + $0x1e0] sm:$0xff]
    %v92 = vld [vmem:[%s0 + $0x1e8] sm:$0xff]
    %v93 = vld [vmem:[%s0 + $0x1f0] sm:$0xff]
    %v94 = vld [vmem:[%s0 + $0x1f8] sm:$0xff]
    %v95 = vld [vmem:[%s0 + $0x200] sm:$0xff]
    %v96 = vld [vmem:[%s0 + $0x208] sm:$0xff]
    %v97 = vld [vmem:[%s0 + $0x210] sm:$0xff]
    %v98 = vld [vmem:[%s0 + $0x218] sm:$0xff]
    %v99 = vld [vmem:[%s0 + $0x220] sm:$0xff]
    %v100 = vld [vmem:[%s0 + $0x228] sm:$0xff]
    %v101 = vld [vmem:[%s0 + $0x230] sm:$0xff]
    %v102 = vld [vmem:[%s0 + $0x238] sm:$0xff]
    %v103 = vld [vmem:[%s0 + $0x240] sm:$0xff]
    %v104 = vld [vmem:[%s0 + $0x248] sm:$0xff]
    %v105 = vld [vmem:[%s0 + $0x250] sm:$0xff]
    %v106 = vld [vmem:[%s0 + $0x258] sm:$0xff]
    %v107 = vld [vmem:[%s0 + $0x260] sm:$0xff]
    %v108 = vld [vmem:[%s0 + $0x268] sm:$0xff]
    %v109 = vld [vmem:[%s0 + $0x270] sm:$0xff]
    %v110 = vld [vmem:[%s0 + $0x278] sm:$0xff]
    %v111 = vld [vmem:[%s0 + $0x280] sm:$0xff]
    %v112 = vld [vmem:[%s0 + $0x288] sm:$0xff]
    %v113 = vld [vmem:[%s0 + $0x290] sm:$0xff]
    %v114 = vld [vmem:[%s0 + $0x298] sm:$0xff]
    %v115 = vld [vmem:[%s0 + $0x2a0] sm:$0xff]
    %v116 = vld [vmem:[%s0 + $0x2a8] sm:$0xff]
    %v117 = vld [vmem:[%s0 + $0x2b0] sm:$0xff]
    %v118 = vld [vmem:[%s0 + $0x2b8] sm:$0xff]
    %v119 = vld [vmem:[%s0 + $0x2c0] sm:$0xff]
    %v120 = vld [vmem:[%s0 + $0x2c8] sm:$0xff]
    %v121 = vld [vmem:[%s0 + $0x2d0] sm:$0xff]
    %v122 = vld [vmem:[%s0 + $0x2d8] sm:$0xff]
    %v123 = vld [vmem:[%s0 + $0x2e0] sm:$0xff]
    %v124 = vld [vmem:[%s0 + $0x2e8] sm:$0xff]
    %v125 = vld [vmem:[%s0 + $0x2f0] sm:$0xff]
    %v126 = vld [vmem:[%s0 + $0x2f8] sm:$0xff]
    %v127 = vld [vmem:[%s0 + $0x300] sm:$0xff]
    %v128 = vld [vmem:[%s0 + $0x308] sm:$0xff]
    %v129 = vld [vmem:[%s0 + $0x310] sm:$0xff]
    %v130 = vld [vmem:[%s0 + $0x318] sm:$0xff]
    %v131 = vld [vmem:[%s0 + $0x320] sm:$0xff]
    %v132 = vld [vmem:[%s0 + $0x328] sm:$0xff]
    %v133 = vld [vmem:[%s0 + $0x330] sm:$0xff]
    %v134 = vld [vmem:[%s0 + $0x338] sm:$0xff]
    %v135 = vld [vmem:[%s0 + $0x340] sm:$0xff]
    %v136 = vld [vmem:[%s0 + $0x348] sm:$0xff]
    %v137 = vld [vmem:[%s0 + $0x350] sm:$0xff]
    %v138 = vld [vmem:[%s0 + $0x358] sm:$0xff]
    %v139 = vld [vmem:[%s0 + $0x360] sm:$0xff]
    %v140 = vld [vmem:[%s0 + $0x368] sm:$0xff]
    %v141 = vld [vmem:[%s0 + $0x370] sm:$0xff]
    %v142 = vld [vmem:[%s0 + $0x378] sm:$0xff]
    %v143 = vld [vmem:[%s0 + $0x380] sm:$0xff]
    %v144 = vld [vmem:[%s0 + $0x388] sm:$0xff]
    %v145 = vld [vmem:[%s0 + $0x390] sm:$0xff]
    %v146 = vld [vmem:[%s0 + $0x398] sm:$0xff]
    %v147 = vld [vmem:[%s0 + $0x3a0] sm:$0xff]
    %v148 = vld [vmem:[%s0 + $0x3a8] sm:$0xff]
    %v149 = vld [vmem:[%s0 + $0x3b0] sm:$0xff]
    %v150 = vld [vmem:[%s0 + $0x3b8] sm:$0xff]
    %v151 = vld [vmem:[%s0 + $0x3c0] sm:$0xff]
    %v152 = vld [vmem:[%s0 + $0x3c8] sm:$0xff]
    %v153 = vld [vmem:[%s0 + $0x3d0] sm:$0xff]
    %v154 = vld [vmem:[%s0 + $0x3d8] sm:$0xff]
    %v155 = vld [vmem:[%s0 + $0x3e0] sm:$0xff]
    %v156 = vld [vmem:[%s0 + $0x3e8] sm:$0xff]
    %v157 = vld [vmem:[%s0 + $0x3f0] sm:$0xff]
    %v158 = vld [vmem:[%s0 + $0x3f8] sm:$0xff]
    %v159 = vld [vmem:[%s0 + $0x400] sm:$0xff]
    %v160 = vld [vmem:[%s0 + $0x408] sm:$0xff]
    %v161 = vld [vmem:[%s0 + $0x410] sm:$0xff]
    %v162 = vld [vmem:[%s0 + $0x418] sm:$0xff]
    %v163 = vld [vmem:[%s0 + $0x420] sm:$0xff]
    %v164 = vld [vmem:[%s0 + $0x428] sm:$0xff]
    %v165 = vld [vmem:[%s0 + $0x430] sm:$0xff]
    %v166 = vld [vmem:[%s0 + $0x438] sm:$0xff]
    %v167 = vld [vmem:[%s0 + $0x440] sm:$0xff]
    %v168 = vld [vmem:[%s0 + $0x448] sm:$0xff]
    %v169 = vld [vmem:[%s0 + $0x450] sm:$0xff]
    %v170 = vld [vmem:[%s0 + $0x458] sm:$0xff]
    %v171 = vld [vmem:[%s0 + $0x460] sm:$0xff]
    %v172 = vld [vmem:[%s0 + $0x468] sm:$0xff]
    %v173 = vld [vmem:[%s0 + $0x470] sm:$0xff]
    %v174 = vld [vmem:[%s0 + $0x478] sm:$0xff]
    %v175 = vld [vmem:[%s0 + $0x480] sm:$0xff]
    %v176 = vld [vmem:[%s0 + $0x488] sm:$0xff]
    %v177 = vld [vmem:[%s0 + $0x490] sm:$0xff]
    %v178 = vld [vmem:[%s0 + $0x498] sm:$0xff]
    %v179 = vld [vmem:[%s0 + $0x4a0] sm:$0xff]
    %v180 = vld [vmem:[%s0 + $0x4a8] sm:$0xff]
    %v181 = vld [vmem:[%s0 + $0x4b0] sm:$0xff]
    %v182 = vld [vmem:[%s0 + $0x4b8] sm:$0xff]
    %v183 = vld [vmem:[%s0 + $0x4c0] sm:$0xff]
    %v184 = vld [vmem:[%s0 + $0x4c8] sm:$0xff]
    %v185 = vld [vmem:[%s0 + $0x4d0] sm:$0xff]
    %v186 = vld [vmem:[%s0 + $0x4d8] sm:$0xff]
    %v187 = vld [vmem:[%s0 + $0x4e0] sm:$0xff]
    %v188 = vld [vmem:[%s0 + $0x4e8] sm:$0xff]
    %v189 = vld [vmem:[%s0 + $0x4f0] sm:$0xff]
    %v190 = vld [vmem:[%s0 + $0x4f8] sm:$0xff]
    %v191 = vld [vmem:[%s0 + $0x500] sm:$0xff]
    %v192 = vld [vmem:[%s0 + $0x508] sm:$0xff]
    %v193 = vld [vmem:[%s0 + $0x510] sm:$0xff]
    %v194 = vld [vmem:[%s0 + $0x518] sm:$0xff]
    %v195 = vld [vmem:[%s0 + $0x520] sm:$0xff]
    %v196 = vld [vmem:[%s0 + $0x528] sm:$0xff]
    %v197 = vld [vmem:[%s0 + $0x530] sm:$0xff]
    %v198 = vld [vmem:[%s0 + $0x538] sm:$0xff]
    %v199 = vld [vmem:[%s0 + $0x540] sm:$0xff]
    %v200 = vld [vmem:[%s0 + $0x548] sm:$0xff]
    %v201 = vld [vmem:[%s0 + $0x550] sm:$0xff]
    %v202 = vld [vmem:[%s0 + $0x558] sm:$0xff]
    %v203 = vld [vmem:[%s0 + $0x560] sm:$0xff]
    %v204 = vld [vmem:[%s0 + $0x568] sm:$0xff]
    %v205 = vld [vmem:[%s0 + $0x570] sm:$0xff]
    %v206 = vld [vmem:[%s0 + $0x578] sm:$0xff]
    %v207 = vld [vmem:[%s0 + $0x580] sm:$0xff]
    %v208 = vld [vmem:[%s0 + $0x588] sm:$0xff]
    %v209 = vld [vmem:[%s0 + $0x590] sm:$0xff]
    %v210 = vld [vmem:[%s0 + $0x598] sm:$0xff]
    %v211 = vld [vmem:[%s0 + $0x5a0] sm:$0xff]
    %v212 = vld [vmem:[%s0 + $0x5a8] sm:$0xff]
    %v213 = vld [vmem:[%s0 + $0x5b0] sm:$0xff]
    %v214 = vld [vmem:[%s0 + $0x5b8] sm:$0xff]
    %v215 = vld [vmem:[%s0 + $0x5c0] sm:$0xff]
    %v216 = vld [vmem:[%s0 + $0x5c8] sm:$0xff]
    %v217 = vld [vmem:[%s0 + $0x5d0] sm:$0xff]
    %v218 = vld [vmem:[%s0 + $0x5d8] sm:$0xff]
    %v219 = vld [vmem:[%s0 + $0x5e0] sm:$0xff]
    %v220 = vld [vmem:[%s0 + $0x5e8] sm:$0xff]
    %v221 = vld [vmem:[%s0 + $0x5f0] sm:$0xff]
    %v222 = vld [vmem:[%s0 + $0x5f8] sm:$0xff]
    %v223 = vld [vmem:[%s0 + $0x600] sm:$0xff]
    %v224 = vld [vmem:[%s0 + $0x608] sm:$0xff]
    %v225 = vld [vmem:[%s0 + $0x610] sm:$0xff]
    %v226 = vld [vmem:[%s0 + $0x618] sm:$0xff]
    %v227 = vld [vmem:[%s0 + $0x620] sm:$0xff]
    %v228 = vld [vmem:[%s0 + $0x628] sm:$0xff]
    %v229 = vld [vmem:[%s0 + $0x630] sm:$0xff]
    %v230 = vld [vmem:[%s0 + $0x638] sm:$0xff]
    %v231 = vld [vmem:[%s2] sm:$0xf]
    %v232 = vld [vmem:[%s2 + $0x4] sm:$0x1]
    %v233 = vperm.slane %v232, 0
    %235 = vset.pattern.permute.xlu0 0
    %236 = vperm.xlu0 %235, %v31
    %v237 = vpop.permute.xlu0 %236
    %240 = vset.pattern.permute.xlu0 0
    %241 = vperm.xlu0 %240, %v32
    %v242 = vpop.permute.xlu0 %241
    %245 = vset.pattern.permute.xlu0 0
    %246 = vperm.xlu0 %245, %v33
    %v247 = vpop.permute.xlu0 %246
    %250 = vset.pattern.permute.xlu0 0
    %251 = vperm.xlu0 %250, %v34
    %v252 = vpop.permute.xlu0 %251
    %255 = vset.pattern.permute.xlu0 0
    %256 = vperm.xlu0 %255, %v35
    %v257 = vpop.permute.xlu0 %256
    %260 = vset.pattern.permute.xlu0 0
    %261 = vperm.xlu0 %260, %v36
    %v262 = vpop.permute.xlu0 %261
    %265 = vset.pattern.permute.xlu0 0
    %266 = vperm.xlu0 %265, %v37
    %v267 = vpop.permute.xlu0 %266
    %270 = vset.pattern.permute.xlu0 0
    %271 = vperm.xlu0 %270, %v38
    %v272 = vpop.permute.xlu0 %271
    %275 = vset.pattern.permute.xlu0 0
    %276 = vperm.xlu0 %275, %v39
    %v277 = vpop.permute.xlu0 %276
    %280 = vset.pattern.permute.xlu0 0
    %281 = vperm.xlu0 %280, %v40
    %v282 = vpop.permute.xlu0 %281
    %285 = vset.pattern.permute.xlu0 0
    %286 = vperm.xlu0 %285, %v41
    %v287 = vpop.permute.xlu0 %286
    %290 = vset.pattern.permute.xlu0 0
    %291 = vperm.xlu0 %290, %v42
    %v292 = vpop.permute.xlu0 %291
    %295 = vset.pattern.permute.xlu0 0
    %296 = vperm.xlu0 %295, %v43
    %v297 = vpop.permute.xlu0 %296
    %300 = vset.pattern.permute.xlu0 0
    %301 = vperm.xlu0 %300, %v44
    %v302 = vpop.permute.xlu0 %301
    %305 = vset.pattern.permute.xlu0 0
    %306 = vperm.xlu0 %305, %v45
    %v307 = vpop.permute.xlu0 %306
    %310 = vset.pattern.permute.xlu0 0
    %311 = vperm.xlu0 %310, %v46
    %v312 = vpop.permute.xlu0 %311
    %315 = vset.pattern.permute.xlu0 0
    %316 = vperm.xlu0 %315, %v47
    %v317 = vpop.permute.xlu0 %316
    %320 = vset.pattern.permute.xlu0 0
    %321 = vperm.xlu0 %320, %v48
    %v322 = vpop.permute.xlu0 %321
    %325 = vset.pattern.permute.xlu0 0
    %326 = vperm.xlu0 %325, %v49
    %v327 = vpop.permute.xlu0 %326
    %330 = vset.pattern.permute.xlu0 0
    %331 = vperm.xlu0 %330, %v50
    %v332 = vpop.permute.xlu0 %331
    %335 = vset.pattern.permute.xlu0 0
    %336 = vperm.xlu0 %335, %v51
    %v337 = vpop.permute.xlu0 %336
    %340 = vset.pattern.permute.xlu0 0
    %341 = vperm.xlu0 %340, %v52
    %v342 = vpop.permute.xlu0 %341
    %345 = vset.pattern.permute.xlu0 0
    %346 = vperm.xlu0 %345, %v53
    %v347 = vpop.permute.xlu0 %346
    %350 = vset.pattern.permute.xlu0 0
    %351 = vperm.xlu0 %350, %v54
    %v352 = vpop.permute.xlu0 %351
    %355 = vset.pattern.permute.xlu0 0
    %356 = vperm.xlu0 %355, %v55
    %v357 = vpop.permute.xlu0 %356
    %360 = vset.pattern.permute.xlu0 0
    %361 = vperm.xlu0 %360, %v56
    %v362 = vpop.permute.xlu0 %361
    %365 = vset.pattern.permute.xlu0 0
    %366 = vperm.xlu0 %365, %v57
    %v367 = vpop.permute.xlu0 %366
    %370 = vset.pattern.permute.xlu0 0
    %371 = vperm.xlu0 %370, %v58
    %v372 = vpop.permute.xlu0 %371
    %375 = vset.pattern.permute.xlu0 0
    %376 = vperm.xlu0 %375, %v59
    %v377 = vpop.permute.xlu0 %376
    %380 = vset.pattern.permute.xlu0 0
    %381 = vperm.xlu0 %380, %v60
    %v382 = vpop.permute.xlu0 %381
    %385 = vset.pattern.permute.xlu0 0
    %386 = vperm.xlu0 %385, %v61
    %v387 = vpop.permute.xlu0 %386
    %390 = vset.pattern.permute.xlu0 0
    %391 = vperm.xlu0 %390, %v62
    %v392 = vpop.permute.xlu0 %391
    %395 = vset.pattern.permute.xlu0 0
    %396 = vperm.xlu0 %395, %v63
    %v397 = vpop.permute.xlu0 %396
    %400 = vset.pattern.permute.xlu0 0
    %401 = vperm.xlu0 %400, %v64
    %v402 = vpop.permute.xlu0 %401
    %405 = vset.pattern.permute.xlu0 0
    %406 = vperm.xlu0 %405, %v65
    %v407 = vpop.permute.xlu0 %406
    %410 = vset.pattern.permute.xlu0 0
    %411 = vperm.xlu0 %410, %v66
    %v412 = vpop.permute.xlu0 %411
    %415 = vset.pattern.permute.xlu0 0
    %416 = vperm.xlu0 %415, %v67
    %v417 = vpop.permute.xlu0 %416
    %420 = vset.pattern.permute.xlu0 0
    %421 = vperm.xlu0 %420, %v68
    %v422 = vpop.permute.xlu0 %421
    %425 = vset.pattern.permute.xlu0 0
    %426 = vperm.xlu0 %425, %v69
    %v427 = vpop.permute.xlu0 %426
    %430 = vset.pattern.permute.xlu0 0
    %431 = vperm.xlu0 %430, %v70
    %v432 = vpop.permute.xlu0 %431
    %435 = vset.pattern.permute.xlu0 0
    %436 = vperm.xlu0 %435, %v71
    %v437 = vpop.permute.xlu0 %436
    %440 = vset.pattern.permute.xlu0 0
    %441 = vperm.xlu0 %440, %v72
    %v442 = vpop.permute.xlu0 %441
    %445 = vset.pattern.permute.xlu0 0
    %446 = vperm.xlu0 %445, %v73
    %v447 = vpop.permute.xlu0 %446
    %450 = vset.pattern.permute.xlu0 0
    %451 = vperm.xlu0 %450, %v74
    %v452 = vpop.permute.xlu0 %451
    %455 = vset.pattern.permute.xlu0 0
    %456 = vperm.xlu0 %455, %v75
    %v457 = vpop.permute.xlu0 %456
    %460 = vset.pattern.permute.xlu0 0
    %461 = vperm.xlu0 %460, %v76
    %v462 = vpop.permute.xlu0 %461
    %465 = vset.pattern.permute.xlu0 0
    %466 = vperm.xlu0 %465, %v77
    %v467 = vpop.permute.xlu0 %466
    %470 = vset.pattern.permute.xlu0 0
    %471 = vperm.xlu0 %470, %v78
    %v472 = vpop.permute.xlu0 %471
    %475 = vset.pattern.permute.xlu0 0
    %476 = vperm.xlu0 %475, %v79
    %v477 = vpop.permute.xlu0 %476
    %480 = vset.pattern.permute.xlu0 0
    %481 = vperm.xlu0 %480, %v80
    %v482 = vpop.permute.xlu0 %481
    %485 = vset.pattern.permute.xlu0 0
    %486 = vperm.xlu0 %485, %v81
    %v487 = vpop.permute.xlu0 %486
    %490 = vset.pattern.permute.xlu0 0
    %491 = vperm.xlu0 %490, %v82
    %v492 = vpop.permute.xlu0 %491
    %495 = vset.pattern.permute.xlu0 0
    %496 = vperm.xlu0 %495, %v83
    %v497 = vpop.permute.xlu0 %496
    %500 = vset.pattern.permute.xlu0 0
    %501 = vperm.xlu0 %500, %v84
    %v502 = vpop.permute.xlu0 %501
    %505 = vset.pattern.permute.xlu0 0
    %506 = vperm.xlu0 %505, %v85
    %v507 = vpop.permute.xlu0 %506
    %510 = vset.pattern.permute.xlu0 0
    %511 = vperm.xlu0 %510, %v86
    %v512 = vpop.permute.xlu0 %511
    %515 = vset.pattern.permute.xlu0 0
    %516 = vperm.xlu0 %515, %v87
    %v517 = vpop.permute.xlu0 %516
    %520 = vset.pattern.permute.xlu0 0
    %521 = vperm.xlu0 %520, %v88
    %v522 = vpop.permute.xlu0 %521
    %525 = vset.pattern.permute.xlu0 0
    %526 = vperm.xlu0 %525, %v89
    %v527 = vpop.permute.xlu0 %526
    %530 = vset.pattern.permute.xlu0 0
    %531 = vperm.xlu0 %530, %v90
    %v532 = vpop.permute.xlu0 %531
    %535 = vset.pattern.permute.xlu0 0
    %536 = vperm.xlu0 %535, %v91
    %v537 = vpop.permute.xlu0 %536
    %540 = vset.pattern.permute.xlu0 0
    %541 = vperm.xlu0 %540, %v92
    %v542 = vpop.permute.xlu0 %541
    %545 = vset.pattern.permute.xlu0 0
    %546 = vperm.xlu0 %545, %v93
    %v547 = vpop.permute.xlu0 %546
    %550 = vset.pattern.permute.xlu0 0
    %551 = vperm.xlu0 %550, %v94
    %v552 = vpop.permute.xlu0 %551
    %555 = vset.pattern.permute.xlu0 0
    %556 = vperm.xlu0 %555, %v95
    %v557 = vpop.permute.xlu0 %556
    %560 = vset.pattern.permute.xlu0 0
    %561 = vperm.xlu0 %560, %v96
    %v562 = vpop.permute.xlu0 %561
    %565 = vset.pattern.permute.xlu0 0
    %566 = vperm.xlu0 %565, %v97
    %v567 = vpop.permute.xlu0 %566
    %570 = vset.pattern.permute.xlu0 0
    %571 = vperm.xlu0 %570, %v98
    %v572 = vpop.permute.xlu0 %571
    %575 = vset.pattern.permute.xlu0 0
    %576 = vperm.xlu0 %575, %v99
    %v577 = vpop.permute.xlu0 %576
    %580 = vset.pattern.permute.xlu0 0
    %581 = vperm.xlu0 %580, %v100
    %v582 = vpop.permute.xlu0 %581
    %585 = vset.pattern.permute.xlu0 0
    %586 = vperm.xlu0 %585, %v101
    %v587 = vpop.permute.xlu0 %586
    %590 = vset.pattern.permute.xlu0 0
    %591 = vperm.xlu0 %590, %v102
    %v592 = vpop.permute.xlu0 %591
    %595 = vset.pattern.permute.xlu0 0
    %596 = vperm.xlu0 %595, %v103
    %v597 = vpop.permute.xlu0 %596
    %600 = vset.pattern.permute.xlu0 0
    %601 = vperm.xlu0 %600, %v104
    %v602 = vpop.permute.xlu0 %601
    %605 = vset.pattern.permute.xlu0 0
    %606 = vperm.xlu0 %605, %v105
    %v607 = vpop.permute.xlu0 %606
    %610 = vset.pattern.permute.xlu0 0
    %611 = vperm.xlu0 %610, %v106
    %v612 = vpop.permute.xlu0 %611
    %615 = vset.pattern.permute.xlu0 0
    %616 = vperm.xlu0 %615, %v107
    %v617 = vpop.permute.xlu0 %616
    %620 = vset.pattern.permute.xlu0 0
    %621 = vperm.xlu0 %620, %v108
    %v622 = vpop.permute.xlu0 %621
    %625 = vset.pattern.permute.xlu0 0
    %626 = vperm.xlu0 %625, %v109
    %v627 = vpop.permute.xlu0 %626
    %630 = vset.pattern.permute.xlu0 0
    %631 = vperm.xlu0 %630, %v110
    %v632 = vpop.permute.xlu0 %631
    %635 = vset.pattern.permute.xlu0 0
    %636 = vperm.xlu0 %635, %v111
    %v637 = vpop.permute.xlu0 %636
    %640 = vset.pattern.permute.xlu0 0
    %641 = vperm.xlu0 %640, %v112
    %v642 = vpop.permute.xlu0 %641
    %645 = vset.pattern.permute.xlu0 0
    %646 = vperm.xlu0 %645, %v113
    %v647 = vpop.permute.xlu0 %646
    %650 = vset.pattern.permute.xlu0 0
    %651 = vperm.xlu0 %650, %v114
    %v652 = vpop.permute.xlu0 %651
    %655 = vset.pattern.permute.xlu0 0
    %656 = vperm.xlu0 %655, %v115
    %v657 = vpop.permute.xlu0 %656
    %660 = vset.pattern.permute.xlu0 0
    %661 = vperm.xlu0 %660, %v116
    %v662 = vpop.permute.xlu0 %661
    %665 = vset.pattern.permute.xlu0 0
    %666 = vperm.xlu0 %665, %v117
    %v667 = vpop.permute.xlu0 %666
    %670 = vset.pattern.permute.xlu0 0
    %671 = vperm.xlu0 %670, %v118
    %v672 = vpop.permute.xlu0 %671
    %675 = vset.pattern.permute.xlu0 0
    %676 = vperm.xlu0 %675, %v119
    %v677 = vpop.permute.xlu0 %676
    %680 = vset.pattern.permute.xlu0 0
    %681 = vperm.xlu0 %680, %v120
    %v682 = vpop.permute.xlu0 %681
    %685 = vset.pattern.permute.xlu0 0
    %686 = vperm.xlu0 %685, %v121
    %v687 = vpop.permute.xlu0 %686
    %690 = vset.pattern.permute.xlu0 0
    %691 = vperm.xlu0 %690, %v122
    %v692 = vpop.permute.xlu0 %691
    %695 = vset.pattern.permute.xlu0 0
    %696 = vperm.xlu0 %695, %v123
    %v697 = vpop.permute.xlu0 %696
    %700 = vset.pattern.permute.xlu0 0
    %701 = vperm.xlu0 %700, %v124
    %v702 = vpop.permute.xlu0 %701
    %705 = vset.pattern.permute.xlu0 0
    %706 = vperm.xlu0 %705, %v125
    %v707 = vpop.permute.xlu0 %706
    %710 = vset.pattern.permute.xlu0 0
    %711 = vperm.xlu0 %710, %v126
    %v712 = vpop.permute.xlu0 %711
    %715 = vset.pattern.permute.xlu0 0
    %716 = vperm.xlu0 %715, %v127
    %v717 = vpop.permute.xlu0 %716
    %720 = vset.pattern.permute.xlu0 0
    %721 = vperm.xlu0 %720, %v128
    %v722 = vpop.permute.xlu0 %721
    %725 = vset.pattern.permute.xlu0 0
    %726 = vperm.xlu0 %725, %v129
    %v727 = vpop.permute.xlu0 %726
    %730 = vset.pattern.permute.xlu0 0
    %731 = vperm.xlu0 %730, %v130
    %v732 = vpop.permute.xlu0 %731
    %735 = vset.pattern.permute.xlu0 0
    %736 = vperm.xlu0 %735, %v131
    %v737 = vpop.permute.xlu0 %736
    %740 = vset.pattern.permute.xlu0 0
    %741 = vperm.xlu0 %740, %v132
    %v742 = vpop.permute.xlu0 %741
    %745 = vset.pattern.permute.xlu0 0
    %746 = vperm.xlu0 %745, %v133
    %v747 = vpop.permute.xlu0 %746
    %750 = vset.pattern.permute.xlu0 0
    %751 = vperm.xlu0 %750, %v134
    %v752 = vpop.permute.xlu0 %751
    %755 = vset.pattern.permute.xlu0 0
    %756 = vperm.xlu0 %755, %v135
    %v757 = vpop.permute.xlu0 %756
    %760 = vset.pattern.permute.xlu0 0
    %761 = vperm.xlu0 %760, %v136
    %v762 = vpop.permute.xlu0 %761
    %765 = vset.pattern.permute.xlu0 0
    %766 = vperm.xlu0 %765, %v137
    %v767 = vpop.permute.xlu0 %766
    %770 = vset.pattern.permute.xlu0 0
    %771 = vperm.xlu0 %770, %v138
    %v772 = vpop.permute.xlu0 %771
    %775 = vset.pattern.permute.xlu0 0
    %776 = vperm.xlu0 %775, %v139
    %v777 = vpop.permute.xlu0 %776
    %780 = vset.pattern.permute.xlu0 0
    %781 = vperm.xlu0 %780, %v140
    %v782 = vpop.permute.xlu0 %781
    %785 = vset.pattern.permute.xlu0 0
    %786 = vperm.xlu0 %785, %v141
    %v787 = vpop.permute.xlu0 %786
    %790 = vset.pattern.permute.xlu0 0
    %791 = vperm.xlu0 %790, %v142
    %v792 = vpop.permute.xlu0 %791
    %795 = vset.pattern.permute.xlu0 0
    %796 = vperm.xlu0 %795, %v143
    %v797 = vpop.permute.xlu0 %796
    %800 = vset.pattern.permute.xlu0 0
    %801 = vperm.xlu0 %800, %v144
    %v802 = vpop.permute.xlu0 %801
    %805 = vset.pattern.permute.xlu0 0
    %806 = vperm.xlu0 %805, %v145
    %v807 = vpop.permute.xlu0 %806
    %810 = vset.pattern.permute.xlu0 0
    %811 = vperm.xlu0 %810, %v146
    %v812 = vpop.permute.xlu0 %811
    %815 = vset.pattern.permute.xlu0 0
    %816 = vperm.xlu0 %815, %v147
    %v817 = vpop.permute.xlu0 %816
    %820 = vset.pattern.permute.xlu0 0
    %821 = vperm.xlu0 %820, %v148
    %v822 = vpop.permute.xlu0 %821
    %825 = vset.pattern.permute.xlu0 0
    %826 = vperm.xlu0 %825, %v149
    %v827 = vpop.permute.xlu0 %826
    %830 = vset.pattern.permute.xlu0 0
    %831 = vperm.xlu0 %830, %v150
    %v832 = vpop.permute.xlu0 %831
    %835 = vset.pattern.permute.xlu0 0
    %836 = vperm.xlu0 %835, %v151
    %v837 = vpop.permute.xlu0 %836
    %840 = vset.pattern.permute.xlu0 0
    %841 = vperm.xlu0 %840, %v152
    %v842 = vpop.permute.xlu0 %841
    %845 = vset.pattern.permute.xlu0 0
    %846 = vperm.xlu0 %845, %v153
    %v847 = vpop.permute.xlu0 %846
    %850 = vset.pattern.permute.xlu0 0
    %851 = vperm.xlu0 %850, %v154
    %v852 = vpop.permute.xlu0 %851
    %855 = vset.pattern.permute.xlu0 0
    %856 = vperm.xlu0 %855, %v155
    %v857 = vpop.permute.xlu0 %856
    %860 = vset.pattern.permute.xlu0 0
    %861 = vperm.xlu0 %860, %v156
    %v862 = vpop.permute.xlu0 %861
    %865 = vset.pattern.permute.xlu0 0
    %866 = vperm.xlu0 %865, %v157
    %v867 = vpop.permute.xlu0 %866
    %870 = vset.pattern.permute.xlu0 0
    %871 = vperm.xlu0 %870, %v158
    %v872 = vpop.permute.xlu0 %871
    %875 = vset.pattern.permute.xlu0 0
    %876 = vperm.xlu0 %875, %v159
    %v877 = vpop.permute.xlu0 %876
    %880 = vset.pattern.permute.xlu0 0
    %881 = vperm.xlu0 %880, %v160
    %v882 = vpop.permute.xlu0 %881
    %885 = vset.pattern.permute.xlu0 0
    %886 = vperm.xlu0 %885, %v161
    %v887 = vpop.permute.xlu0 %886
    %890 = vset.pattern.permute.xlu0 0
    %891 = vperm.xlu0 %890, %v162
    %v892 = vpop.permute.xlu0 %891
    %895 = vset.pattern.permute.xlu0 0
    %896 = vperm.xlu0 %895, %v163
    %v897 = vpop.permute.xlu0 %896
    %900 = vset.pattern.permute.xlu0 0
    %901 = vperm.xlu0 %900, %v164
    %v902 = vpop.permute.xlu0 %901
    %905 = vset.pattern.permute.xlu0 0
    %906 = vperm.xlu0 %905, %v165
    %v907 = vpop.permute.xlu0 %906
    %910 = vset.pattern.permute.xlu0 0
    %911 = vperm.xlu0 %910, %v166
    %v912 = vpop.permute.xlu0 %911
    %915 = vset.pattern.permute.xlu0 0
    %916 = vperm.xlu0 %915, %v167
    %v917 = vpop.permute.xlu0 %916
    %920 = vset.pattern.permute.xlu0 0
    %921 = vperm.xlu0 %920, %v168
    %v922 = vpop.permute.xlu0 %921
    %925 = vset.pattern.permute.xlu0 0
    %926 = vperm.xlu0 %925, %v169
    %v927 = vpop.permute.xlu0 %926
    %930 = vset.pattern.permute.xlu0 0
    %931 = vperm.xlu0 %930, %v170
    %v932 = vpop.permute.xlu0 %931
    %935 = vset.pattern.permute.xlu0 0
    %936 = vperm.xlu0 %935, %v171
    %v937 = vpop.permute.xlu0 %936
    %940 = vset.pattern.permute.xlu0 0
    %941 = vperm.xlu0 %940, %v172
    %v942 = vpop.permute.xlu0 %941
    %945 = vset.pattern.permute.xlu0 0
    %946 = vperm.xlu0 %945, %v173
    %v947 = vpop.permute.xlu0 %946
    %950 = vset.pattern.permute.xlu0 0
    %951 = vperm.xlu0 %950, %v174
    %v952 = vpop.permute.xlu0 %951
    %955 = vset.pattern.permute.xlu0 0
    %956 = vperm.xlu0 %955, %v175
    %v957 = vpop.permute.xlu0 %956
    %960 = vset.pattern.permute.xlu0 0
    %961 = vperm.xlu0 %960, %v176
    %v962 = vpop.permute.xlu0 %961
    %965 = vset.pattern.permute.xlu0 0
    %966 = vperm.xlu0 %965, %v177
    %v967 = vpop.permute.xlu0 %966
    %970 = vset.pattern.permute.xlu0 0
    %971 = vperm.xlu0 %970, %v178
    %v972 = vpop.permute.xlu0 %971
    %975 = vset.pattern.permute.xlu0 0
    %976 = vperm.xlu0 %975, %v179
    %v977 = vpop.permute.xlu0 %976
    %980 = vset.pattern.permute.xlu0 0
    %981 = vperm.xlu0 %980, %v180
    %v982 = vpop.permute.xlu0 %981
    %985 = vset.pattern.permute.xlu0 0
    %986 = vperm.xlu0 %985, %v181
    %v987 = vpop.permute.xlu0 %986
    %990 = vset.pattern.permute.xlu0 0
    %991 = vperm.xlu0 %990, %v182
    %v992 = vpop.permute.xlu0 %991
    %995 = vset.pattern.permute.xlu0 0
    %996 = vperm.xlu0 %995, %v183
    %v997 = vpop.permute.xlu0 %996
    %1000 = vset.pattern.permute.xlu0 0
    %1001 = vperm.xlu0 %1000, %v184
    %v1002 = vpop.permute.xlu0 %1001
    %1005 = vset.pattern.permute.xlu0 0
    %1006 = vperm.xlu0 %1005, %v185
    %v1007 = vpop.permute.xlu0 %1006
    %1010 = vset.pattern.permute.xlu0 0
    %1011 = vperm.xlu0 %1010, %v186
    %v1012 = vpop.permute.xlu0 %1011
    %1015 = vset.pattern.permute.xlu0 0
    %1016 = vperm.xlu0 %1015, %v187
    %v1017 = vpop.permute.xlu0 %1016
    %1020 = vset.pattern.permute.xlu0 0
    %1021 = vperm.xlu0 %1020, %v188
    %v1022 = vpop.permute.xlu0 %1021
    %1025 = vset.pattern.permute.xlu0 0
    %1026 = vperm.xlu0 %1025, %v189
    %v1027 = vpop.permute.xlu0 %1026
    %1030 = vset.pattern.permute.xlu0 0
    %1031 = vperm.xlu0 %1030, %v190
    %v1032 = vpop.permute.xlu0 %1031
    %1035 = vset.pattern.permute.xlu0 0
    %1036 = vperm.xlu0 %1035, %v191
    %v1037 = vpop.permute.xlu0 %1036
    %1040 = vset.pattern.permute.xlu0 0
    %1041 = vperm.xlu0 %1040, %v192
    %v1042 = vpop.permute.xlu0 %1041
    %1045 = vset.pattern.permute.xlu0 0
    %1046 = vperm.xlu0 %1045, %v193
    %v1047 = vpop.permute.xlu0 %1046
    %1050 = vset.pattern.permute.xlu0 0
    %1051 = vperm.xlu0 %1050, %v194
    %v1052 = vpop.permute.xlu0 %1051
    %1055 = vset.pattern.permute.xlu0 0
    %1056 = vperm.xlu0 %1055, %v195
    %v1057 = vpop.permute.xlu0 %1056
    %1060 = vset.pattern.permute.xlu0 0
    %1061 = vperm.xlu0 %1060, %v196
    %v1062 = vpop.permute.xlu0 %1061
    %1065 = vset.pattern.permute.xlu0 0
    %1066 = vperm.xlu0 %1065, %v197
    %v1067 = vpop.permute.xlu0 %1066
    %1070 = vset.pattern.permute.xlu0 0
    %1071 = vperm.xlu0 %1070, %v198
    %v1072 = vpop.permute.xlu0 %1071
    %1075 = vset.pattern.permute.xlu0 0
    %1076 = vperm.xlu0 %1075, %v199
    %v1077 = vpop.permute.xlu0 %1076
    %1080 = vset.pattern.permute.xlu0 0
    %1081 = vperm.xlu0 %1080, %v200
    %v1082 = vpop.permute.xlu0 %1081
    %1085 = vset.pattern.permute.xlu0 0
    %1086 = vperm.xlu0 %1085, %v201
    %v1087 = vpop.permute.xlu0 %1086
    %1090 = vset.pattern.permute.xlu0 0
    %1091 = vperm.xlu0 %1090, %v202
    %v1092 = vpop.permute.xlu0 %1091
    %1095 = vset.pattern.permute.xlu0 0
    %1096 = vperm.xlu0 %1095, %v203
    %v1097 = vpop.permute.xlu0 %1096
    %1100 = vset.pattern.permute.xlu0 0
    %1101 = vperm.xlu0 %1100, %v204
    %v1102 = vpop.permute.xlu0 %1101
    %1105 = vset.pattern.permute.xlu0 0
    %1106 = vperm.xlu0 %1105, %v205
    %v1107 = vpop.permute.xlu0 %1106
    %1110 = vset.pattern.permute.xlu0 0
    %1111 = vperm.xlu0 %1110, %v206
    %v1112 = vpop.permute.xlu0 %1111
    %1115 = vset.pattern.permute.xlu0 0
    %1116 = vperm.xlu0 %1115, %v207
    %v1117 = vpop.permute.xlu0 %1116
    %1120 = vset.pattern.permute.xlu0 0
    %1121 = vperm.xlu0 %1120, %v208
    %v1122 = vpop.permute.xlu0 %1121
    %1125 = vset.pattern.permute.xlu0 0
    %1126 = vperm.xlu0 %1125, %v209
    %v1127 = vpop.permute.xlu0 %1126
    %1130 = vset.pattern.permute.xlu0 0
    %1131 = vperm.xlu0 %1130, %v210
    %v1132 = vpop.permute.xlu0 %1131
    %1135 = vset.pattern.permute.xlu0 0
    %1136 = vperm.xlu0 %1135, %v211
    %v1137 = vpop.permute.xlu0 %1136
    %1140 = vset.pattern.permute.xlu0 0
    %1141 = vperm.xlu0 %1140, %v212
    %v1142 = vpop.permute.xlu0 %1141
    %1145 = vset.pattern.permute.xlu0 0
    %1146 = vperm.xlu0 %1145, %v213
    %v1147 = vpop.permute.xlu0 %1146
    %1150 = vset.pattern.permute.xlu0 0
    %1151 = vperm.xlu0 %1150, %v214
    %v1152 = vpop.permute.xlu0 %1151
    %1155 = vset.pattern.permute.xlu0 0
    %1156 = vperm.xlu0 %1155, %v215
    %v1157 = vpop.permute.xlu0 %1156
    %1160 = vset.pattern.permute.xlu0 0
    %1161 = vperm.xlu0 %1160, %v216
    %v1162 = vpop.permute.xlu0 %1161
    %1165 = vset.pattern.permute.xlu0 0
    %1166 = vperm.xlu0 %1165, %v217
    %v1167 = vpop.permute.xlu0 %1166
    %1170 = vset.pattern.permute.xlu0 0
    %1171 = vperm.xlu0 %1170, %v218
    %v1172 = vpop.permute.xlu0 %1171
    %1175 = vset.pattern.permute.xlu0 0
    %1176 = vperm.xlu0 %1175, %v219
    %v1177 = vpop.permute.xlu0 %1176
    %1180 = vset.pattern.permute.xlu0 0
    %1181 = vperm.xlu0 %1180, %v220
    %v1182 = vpop.permute.xlu0 %1181
    %1185 = vset.pattern.permute.xlu0 0
    %1186 = vperm.xlu0 %1185, %v221
    %v1187 = vpop.permute.xlu0 %1186
    %1190 = vset.pattern.permute.xlu0 0
    %1191 = vperm.xlu0 %1190, %v222
    %v1192 = vpop.permute.xlu0 %1191
    %1195 = vset.pattern.permute.xlu0 0
    %1196 = vperm.xlu0 %1195, %v223
    %v1197 = vpop.permute.xlu0 %1196
    %1200 = vset.pattern.permute.xlu0 0
    %1201 = vperm.xlu0 %1200, %v224
    %v1202 = vpop.permute.xlu0 %1201
    %1205 = vset.pattern.permute.xlu0 0
    %1206 = vperm.xlu0 %1205, %v225
    %v1207 = vpop.permute.xlu0 %1206
    %1210 = vset.pattern.permute.xlu0 0
    %1211 = vperm.xlu0 %1210, %v226
    %v1212 = vpop.permute.xlu0 %1211
    %1215 = vset.pattern.permute.xlu0 0
    %1216 = vperm.xlu0 %1215, %v227
    %v1217 = vpop.permute.xlu0 %1216
    %1220 = vset.pattern.permute.xlu0 0
    %1221 = vperm.xlu0 %1220, %v228
    %v1222 = vpop.permute.xlu0 %1221
    %1225 = vset.pattern.permute.xlu0 0
    %1226 = vperm.xlu0 %1225, %v229
    %v1227 = vpop.permute.xlu0 %1226
    %1230 = vset.pattern.permute.xlu0 0
    %1231 = vperm.xlu0 %1230, %v230
    %v1232 = vpop.permute.xlu0 %1231
    %v1234 = vperm.slane %v231, 0
    %v1235 = vmul.f32 %v237, %v1234
    %v1236 = vmul.f32 %v242, %v1234
    %v1237 = vmul.f32 %v247, %v1234
    %v1238 = vmul.f32 %v252, %v1234
    %v1239 = vmul.f32 %v257, %v1234
    %v1240 = vmul.f32 %v262, %v1234
    %v1241 = vmul.f32 %v267, %v1234
    %v1242 = vmul.f32 %v272, %v1234
    %v1243 = vmul.f32 %v277, %v1234
    %v1244 = vmul.f32 %v282, %v1234
    %v1245 = vmul.f32 %v287, %v1234
    %v1246 = vmul.f32 %v292, %v1234
    %v1247 = vmul.f32 %v297, %v1234
    %v1248 = vmul.f32 %v302, %v1234
    %v1249 = vmul.f32 %v307, %v1234
    %v1250 = vmul.f32 %v312, %v1234
    %v1251 = vmul.f32 %v317, %v1234
    %v1252 = vmul.f32 %v322, %v1234
    %v1253 = vmul.f32 %v327, %v1234
    %v1254 = vmul.f32 %v332, %v1234
    %v1255 = vmul.f32 %v337, %v1234
    %v1256 = vmul.f32 %v342, %v1234
    %v1257 = vmul.f32 %v347, %v1234
    %v1258 = vmul.f32 %v352, %v1234
    %v1259 = vmul.f32 %v357, %v1234
    %v1260 = vmul.f32 %v362, %v1234
    %v1261 = vmul.f32 %v367, %v1234
    %v1262 = vmul.f32 %v372, %v1234
    %v1263 = vmul.f32 %v377, %v1234
    %v1264 = vmul.f32 %v382, %v1234
    %v1265 = vmul.f32 %v387, %v1234
    %v1266 = vmul.f32 %v392, %v1234
    %v1267 = vmul.f32 %v397, %v1234
    %v1268 = vmul.f32 %v402, %v1234
    %v1269 = vmul.f32 %v407, %v1234
    %v1270 = vmul.f32 %v412, %v1234
    %v1271 = vmul.f32 %v417, %v1234
    %v1272 = vmul.f32 %v422, %v1234
    %v1273 = vmul.f32 %v427, %v1234
    %v1274 = vmul.f32 %v432, %v1234
    %v1275 = vmul.f32 %v437, %v1234
    %v1276 = vmul.f32 %v442, %v1234
    %v1277 = vmul.f32 %v447, %v1234
    %v1278 = vmul.f32 %v452, %v1234
    %v1279 = vmul.f32 %v457, %v1234
    %v1280 = vmul.f32 %v462, %v1234
    %v1281 = vmul.f32 %v467, %v1234
    %v1282 = vmul.f32 %v472, %v1234
    %v1283 = vmul.f32 %v477, %v1234
    %v1284 = vmul.f32 %v482, %v1234
    %v1285 = vmul.f32 %v487, %v1234
    %v1286 = vmul.f32 %v492, %v1234
    %v1287 = vmul.f32 %v497, %v1234
    %v1288 = vmul.f32 %v502, %v1234
    %v1289 = vmul.f32 %v507, %v1234
    %v1290 = vmul.f32 %v512, %v1234
    %v1291 = vmul.f32 %v517, %v1234
    %v1292 = vmul.f32 %v522, %v1234
    %v1293 = vmul.f32 %v527, %v1234
    %v1294 = vmul.f32 %v532, %v1234
    %v1295 = vmul.f32 %v537, %v1234
    %v1296 = vmul.f32 %v542, %v1234
    %v1297 = vmul.f32 %v547, %v1234
    %v1298 = vmul.f32 %v552, %v1234
    %v1299 = vmul.f32 %v557, %v1234
    %v1300 = vmul.f32 %v562, %v1234
    %v1301 = vmul.f32 %v567, %v1234
    %v1302 = vmul.f32 %v572, %v1234
    %v1303 = vmul.f32 %v577, %v1234
    %v1304 = vmul.f32 %v582, %v1234
    %v1305 = vmul.f32 %v587, %v1234
    %v1306 = vmul.f32 %v592, %v1234
    %v1307 = vmul.f32 %v597, %v1234
    %v1308 = vmul.f32 %v602, %v1234
    %v1309 = vmul.f32 %v607, %v1234
    %v1310 = vmul.f32 %v612, %v1234
    %v1311 = vmul.f32 %v617, %v1234
    %v1312 = vmul.f32 %v622, %v1234
    %v1313 = vmul.f32 %v627, %v1234
    %v1314 = vmul.f32 %v632, %v1234
    %v1315 = vmul.f32 %v637, %v1234
    %v1316 = vmul.f32 %v642, %v1234
    %v1317 = vmul.f32 %v647, %v1234
    %v1318 = vmul.f32 %v652, %v1234
    %v1319 = vmul.f32 %v657, %v1234
    %v1320 = vmul.f32 %v662, %v1234
    %v1321 = vmul.f32 %v667, %v1234
    %v1322 = vmul.f32 %v672, %v1234
    %v1323 = vmul.f32 %v677, %v1234
    %v1324 = vmul.f32 %v682, %v1234
    %v1325 = vmul.f32 %v687, %v1234
    %v1326 = vmul.f32 %v692, %v1234
    %v1327 = vmul.f32 %v697, %v1234
    %v1328 = vmul.f32 %v702, %v1234
    %v1329 = vmul.f32 %v707, %v1234
    %v1330 = vmul.f32 %v712, %v1234
    %v1331 = vmul.f32 %v717, %v1234
    %v1332 = vmul.f32 %v722, %v1234
    %v1333 = vmul.f32 %v727, %v1234
    %v1334 = vmul.f32 %v732, %v1234
    %v1335 = vmul.f32 %v737, %v1234
    %v1336 = vmul.f32 %v742, %v1234
    %v1337 = vmul.f32 %v747, %v1234
    %v1338 = vmul.f32 %v752, %v1234
    %v1339 = vmul.f32 %v757, %v1234
    %v1340 = vmul.f32 %v762, %v1234
    %v1341 = vmul.f32 %v767, %v1234
    %v1342 = vmul.f32 %v772, %v1234
    %v1343 = vmul.f32 %v777, %v1234
    %v1344 = vmul.f32 %v782, %v1234
    %v1345 = vmul.f32 %v787, %v1234
    %v1346 = vmul.f32 %v792, %v1234
    %v1347 = vmul.f32 %v797, %v1234
    %v1348 = vmul.f32 %v802, %v1234
    %v1349 = vmul.f32 %v807, %v1234
    %v1350 = vmul.f32 %v812, %v1234
    %v1351 = vmul.f32 %v817, %v1234
    %v1352 = vmul.f32 %v822, %v1234
    %v1353 = vmul.f32 %v827, %v1234
    %v1354 = vmul.f32 %v832, %v1234
    %v1355 = vmul.f32 %v837, %v1234
    %v1356 = vmul.f32 %v842, %v1234
    %v1357 = vmul.f32 %v847, %v1234
    %v1358 = vmul.f32 %v852, %v1234
    %v1359 = vmul.f32 %v857, %v1234
    %v1360 = vmul.f32 %v862, %v1234
    %v1361 = vmul.f32 %v867, %v1234
    %v1362 = vmul.f32 %v872, %v1234
    %v1363 = vmul.f32 %v877, %v1234
    %v1364 = vmul.f32 %v882, %v1234
    %v1365 = vmul.f32 %v887, %v1234
    %v1366 = vmul.f32 %v892, %v1234
    %v1367 = vmul.f32 %v897, %v1234
    %v1368 = vmul.f32 %v902, %v1234
    %v1369 = vmul.f32 %v907, %v1234
    %v1370 = vmul.f32 %v912, %v1234
    %v1371 = vmul.f32 %v917, %v1234
    %v1372 = vmul.f32 %v922, %v1234
    %v1373 = vmul.f32 %v927, %v1234
    %v1374 = vmul.f32 %v932, %v1234
    %v1375 = vmul.f32 %v937, %v1234
    %v1376 = vmul.f32 %v942, %v1234
    %v1377 = vmul.f32 %v947, %v1234
    %v1378 = vmul.f32 %v952, %v1234
    %v1379 = vmul.f32 %v957, %v1234
    %v1380 = vmul.f32 %v962, %v1234
    %v1381 = vmul.f32 %v967, %v1234
    %v1382 = vmul.f32 %v972, %v1234
    %v1383 = vmul.f32 %v977, %v1234
    %v1384 = vmul.f32 %v982, %v1234
    %v1385 = vmul.f32 %v987, %v1234
    %v1386 = vmul.f32 %v992, %v1234
    %v1387 = vmul.f32 %v997, %v1234
    %v1388 = vmul.f32 %v1002, %v1234
    %v1389 = vmul.f32 %v1007, %v1234
    %v1390 = vmul.f32 %v1012, %v1234
    %v1391 = vmul.f32 %v1017, %v1234
    %v1392 = vmul.f32 %v1022, %v1234
    %v1393 = vmul.f32 %v1027, %v1234
    %v1394 = vmul.f32 %v1032, %v1234
    %v1395 = vmul.f32 %v1037, %v1234
    %v1396 = vmul.f32 %v1042, %v1234
    %v1397 = vmul.f32 %v1047, %v1234
    %v1398 = vmul.f32 %v1052, %v1234
    %v1399 = vmul.f32 %v1057, %v1234
    %v1400 = vmul.f32 %v1062, %v1234
    %v1401 = vmul.f32 %v1067, %v1234
    %v1402 = vmul.f32 %v1072, %v1234
    %v1403 = vmul.f32 %v1077, %v1234
    %v1404 = vmul.f32 %v1082, %v1234
    %v1405 = vmul.f32 %v1087, %v1234
    %v1406 = vmul.f32 %v1092, %v1234
    %v1407 = vmul.f32 %v1097, %v1234
    %v1408 = vmul.f32 %v1102, %v1234
    %v1409 = vmul.f32 %v1107, %v1234
    %v1410 = vmul.f32 %v1112, %v1234
    %v1411 = vmul.f32 %v1117, %v1234
    %v1412 = vmul.f32 %v1122, %v1234
    %v1413 = vmul.f32 %v1127, %v1234
    %v1414 = vmul.f32 %v1132, %v1234
    %v1415 = vmul.f32 %v1137, %v1234
    %v1416 = vmul.f32 %v1142, %v1234
    %v1417 = vmul.f32 %v1147, %v1234
    %v1418 = vmul.f32 %v1152, %v1234
    %v1419 = vmul.f32 %v1157, %v1234
    %v1420 = vmul.f32 %v1162, %v1234
    %v1421 = vmul.f32 %v1167, %v1234
    %v1422 = vmul.f32 %v1172, %v1234
    %v1423 = vmul.f32 %v1177, %v1234
    %v1424 = vmul.f32 %v1182, %v1234
    %v1425 = vmul.f32 %v1187, %v1234
    %v1426 = vmul.f32 %v1192, %v1234
    %v1427 = vmul.f32 %v1197, %v1234
    %v1428 = vmul.f32 %v1202, %v1234
    %v1429 = vmul.f32 %v1207, %v1234
    %v1430 = vmul.f32 %v1212, %v1234
    %v1431 = vmul.f32 %v1217, %v1234
    %v1432 = vmul.f32 %v1222, %v1234
    %v1433 = vmul.f32 %v1227, %v1234
    %v1434 = vmul.f32 %v1232, %v1234
    %v1435 = vadd.f32 %v233, %v1235
    %v1436 = vadd.f32 %v233, %v1236
    %v1437 = vadd.f32 %v233, %v1237
    %v1438 = vadd.f32 %v233, %v1238
    %v1439 = vadd.f32 %v233, %v1239
    %v1440 = vadd.f32 %v233, %v1240
    %v1441 = vadd.f32 %v233, %v1241
    %v1442 = vadd.f32 %v233, %v1242
    %v1443 = vadd.f32 %v233, %v1243
    %v1444 = vadd.f32 %v233, %v1244
    %v1445 = vadd.f32 %v233, %v1245
    %v1446 = vadd.f32 %v233, %v1246
    %v1447 = vadd.f32 %v233, %v1247
    %v1448 = vadd.f32 %v233, %v1248
    %v1449 = vadd.f32 %v233, %v1249
    %v1450 = vadd.f32 %v233, %v1250
    %v1451 = vadd.f32 %v233, %v1251
    %v1452 = vadd.f32 %v233, %v1252
    %v1453 = vadd.f32 %v233, %v1253
    %v1454 = vadd.f32 %v233, %v1254
    %v1455 = vadd.f32 %v233, %v1255
    %v1456 = vadd.f32 %v233, %v1256
    %v1457 = vadd.f32 %v233, %v1257
    %v1458 = vadd.f32 %v233, %v1258
    %v1459 = vadd.f32 %v233, %v1259
    %v1460 = vadd.f32 %v233, %v1260
    %v1461 = vadd.f32 %v233, %v1261
    %v1462 = vadd.f32 %v233, %v1262
    %v1463 = vadd.f32 %v233, %v1263
    %v1464 = vadd.f32 %v233, %v1264
    %v1465 = vadd.f32 %v233, %v1265
    %v1466 = vadd.f32 %v233, %v1266
    %v1467 = vadd.f32 %v233, %v1267
    %v1468 = vadd.f32 %v233, %v1268
    %v1469 = vadd.f32 %v233, %v1269
    %v1470 = vadd.f32 %v233, %v1270
    %v1471 = vadd.f32 %v233, %v1271
    %v1472 = vadd.f32 %v233, %v1272
    %v1473 = vadd.f32 %v233, %v1273
    %v1474 = vadd.f32 %v233, %v1274
    %v1475 = vadd.f32 %v233, %v1275
    %v1476 = vadd.f32 %v233, %v1276
    %v1477 = vadd.f32 %v233, %v1277
    %v1478 = vadd.f32 %v233, %v1278
    %v1479 = vadd.f32 %v233, %v1279
    %v1480 = vadd.f32 %v233, %v1280
    %v1481 = vadd.f32 %v233, %v1281
    %v1482 = vadd.f32 %v233, %v1282
    %v1483 = vadd.f32 %v233, %v1283
    %v1484 = vadd.f32 %v233, %v1284
    %v1485 = vadd.f32 %v233, %v1285
    %v1486 = vadd.f32 %v233, %v1286
    %v1487 = vadd.f32 %v233, %v1287
    %v1488 = vadd.f32 %v233, %v1288
    %v1489 = vadd.f32 %v233, %v1289
    %v1490 = vadd.f32 %v233, %v1290
    %v1491 = vadd.f32 %v233, %v1291
    %v1492 = vadd.f32 %v233, %v1292
    %v1493 = vadd.f32 %v233, %v1293
    %v1494 = vadd.f32 %v233, %v1294
    %v1495 = vadd.f32 %v233, %v1295
    %v1496 = vadd.f32 %v233, %v1296
    %v1497 = vadd.f32 %v233, %v1297
    %v1498 = vadd.f32 %v233, %v1298
    %v1499 = vadd.f32 %v233, %v1299
    %v1500 = vadd.f32 %v233, %v1300
    %v1501 = vadd.f32 %v233, %v1301
    %v1502 = vadd.f32 %v233, %v1302
    %v1503 = vadd.f32 %v233, %v1303
    %v1504 = vadd.f32 %v233, %v1304
    %v1505 = vadd.f32 %v233, %v1305
    %v1506 = vadd.f32 %v233, %v1306
    %v1507 = vadd.f32 %v233, %v1307
    %v1508 = vadd.f32 %v233, %v1308
    %v1509 = vadd.f32 %v233, %v1309
    %v1510 = vadd.f32 %v233, %v1310
    %v1511 = vadd.f32 %v233, %v1311
    %v1512 = vadd.f32 %v233, %v1312
    %v1513 = vadd.f32 %v233, %v1313
    %v1514 = vadd.f32 %v233, %v1314
    %v1515 = vadd.f32 %v233, %v1315
    %v1516 = vadd.f32 %v233, %v1316
    %v1517 = vadd.f32 %v233, %v1317
    %v1518 = vadd.f32 %v233, %v1318
    %v1519 = vadd.f32 %v233, %v1319
    %v1520 = vadd.f32 %v233, %v1320
    %v1521 = vadd.f32 %v233, %v1321
    %v1522 = vadd.f32 %v233, %v1322
    %v1523 = vadd.f32 %v233, %v1323
    %v1524 = vadd.f32 %v233, %v1324
    %v1525 = vadd.f32 %v233, %v1325
    %v1526 = vadd.f32 %v233, %v1326
    %v1527 = vadd.f32 %v233, %v1327
    %v1528 = vadd.f32 %v233, %v1328
    %v1529 = vadd.f32 %v233, %v1329
    %v1530 = vadd.f32 %v233, %v1330
    %v1531 = vadd.f32 %v233, %v1331
    %v1532 = vadd.f32 %v233, %v1332
    %v1533 = vadd.f32 %v233, %v1333
    %v1534 = vadd.f32 %v233, %v1334
    %v1535 = vadd.f32 %v233, %v1335
    %v1536 = vadd.f32 %v233, %v1336
    %v1537 = vadd.f32 %v233, %v1337
    %v1538 = vadd.f32 %v233, %v1338
    %v1539 = vadd.f32 %v233, %v1339
    %v1540 = vadd.f32 %v233, %v1340
    %v1541 = vadd.f32 %v233, %v1341
    %v1542 = vadd.f32 %v233, %v1342
    %v1543 = vadd.f32 %v233, %v1343
    %v1544 = vadd.f32 %v233, %v1344
    %v1545 = vadd.f32 %v233, %v1345
    %v1546 = vadd.f32 %v233, %v1346
    %v1547 = vadd.f32 %v233, %v1347
    %v1548 = vadd.f32 %v233, %v1348
    %v1549 = vadd.f32 %v233, %v1349
    %v1550 = vadd.f32 %v233, %v1350
    %v1551 = vadd.f32 %v233, %v1351
    %v1552 = vadd.f32 %v233, %v1352
    %v1553 = vadd.f32 %v233, %v1353
    %v1554 = vadd.f32 %v233, %v1354
    %v1555 = vadd.f32 %v233, %v1355
    %v1556 = vadd.f32 %v233, %v1356
    %v1557 = vadd.f32 %v233, %v1357
    %v1558 = vadd.f32 %v233, %v1358
    %v1559 = vadd.f32 %v233, %v1359
    %v1560 = vadd.f32 %v233, %v1360
    %v1561 = vadd.f32 %v233, %v1361
    %v1562 = vadd.f32 %v233, %v1362
    %v1563 = vadd.f32 %v233, %v1363
    %v1564 = vadd.f32 %v233, %v1364
    %v1565 = vadd.f32 %v233, %v1365
    %v1566 = vadd.f32 %v233, %v1366
    %v1567 = vadd.f32 %v233, %v1367
    %v1568 = vadd.f32 %v233, %v1368
    %v1569 = vadd.f32 %v233, %v1369
    %v1570 = vadd.f32 %v233, %v1370
    %v1571 = vadd.f32 %v233, %v1371
    %v1572 = vadd.f32 %v233, %v1372
    %v1573 = vadd.f32 %v233, %v1373
    %v1574 = vadd.f32 %v233, %v1374
    %v1575 = vadd.f32 %v233, %v1375
    %v1576 = vadd.f32 %v233, %v1376
    %v1577 = vadd.f32 %v233, %v1377
    %v1578 = vadd.f32 %v233, %v1378
    %v1579 = vadd.f32 %v233, %v1379
    %v1580 = vadd.f32 %v233, %v1380
    %v1581 = vadd.f32 %v233, %v1381
    %v1582 = vadd.f32 %v233, %v1382
    %v1583 = vadd.f32 %v233, %v1383
    %v1584 = vadd.f32 %v233, %v1384
    %v1585 = vadd.f32 %v233, %v1385
    %v1586 = vadd.f32 %v233, %v1386
    %v1587 = vadd.f32 %v233, %v1387
    %v1588 = vadd.f32 %v233, %v1388
    %v1589 = vadd.f32 %v233, %v1389
    %v1590 = vadd.f32 %v233, %v1390
    %v1591 = vadd.f32 %v233, %v1391
    %v1592 = vadd.f32 %v233, %v1392
    %v1593 = vadd.f32 %v233, %v1393
    %v1594 = vadd.f32 %v233, %v1394
    %v1595 = vadd.f32 %v233, %v1395
    %v1596 = vadd.f32 %v233, %v1396
    %v1597 = vadd.f32 %v233, %v1397
    %v1598 = vadd.f32 %v233, %v1398
    %v1599 = vadd.f32 %v233, %v1399
    %v1600 = vadd.f32 %v233, %v1400
    %v1601 = vadd.f32 %v233, %v1401
    %v1602 = vadd.f32 %v233, %v1402
    %v1603 = vadd.f32 %v233, %v1403
    %v1604 = vadd.f32 %v233, %v1404
    %v1605 = vadd.f32 %v233, %v1405
    %v1606 = vadd.f32 %v233, %v1406
    %v1607 = vadd.f32 %v233, %v1407
    %v1608 = vadd.f32 %v233, %v1408
    %v1609 = vadd.f32 %v233, %v1409
    %v1610 = vadd.f32 %v233, %v1410
    %v1611 = vadd.f32 %v233, %v1411
    %v1612 = vadd.f32 %v233, %v1412
    %v1613 = vadd.f32 %v233, %v1413
    %v1614 = vadd.f32 %v233, %v1414
    %v1615 = vadd.f32 %v233, %v1415
    %v1616 = vadd.f32 %v233, %v1416
    %v1617 = vadd.f32 %v233, %v1417
    %v1618 = vadd.f32 %v233, %v1418
    %v1619 = vadd.f32 %v233, %v1419
    %v1620 = vadd.f32 %v233, %v1420
    %v1621 = vadd.f32 %v233, %v1421
    %v1622 = vadd.f32 %v233, %v1422
    %v1623 = vadd.f32 %v233, %v1423
    %v1624 = vadd.f32 %v233, %v1424
    %v1625 = vadd.f32 %v233, %v1425
    %v1626 = vadd.f32 %v233, %v1426
    %v1627 = vadd.f32 %v233, %v1427
    %v1628 = vadd.f32 %v233, %v1428
    %v1629 = vadd.f32 %v233, %v1429
    %v1630 = vadd.f32 %v233, %v1430
    %v1631 = vadd.f32 %v233, %v1431
    %v1632 = vadd.f32 %v233, %v1432
    %v1633 = vadd.f32 %v233, %v1433
    %v1634 = vadd.f32 %v233, %v1434
    %1635 = vset.pattern.permute.xlu0 1
    %1636 = vperm.xlu0 %1635, %v31
    %v1637 = vpop.permute.xlu0 %1636
    %1639 = vset.pattern.permute.xlu0 1
    %1640 = vperm.xlu0 %1639, %v32
    %v1641 = vpop.permute.xlu0 %1640
    %1643 = vset.pattern.permute.xlu0 1
    %1644 = vperm.xlu0 %1643, %v33
    %v1645 = vpop.permute.xlu0 %1644
    %1647 = vset.pattern.permute.xlu0 1
    %1648 = vperm.xlu0 %1647, %v34
    %v1649 = vpop.permute.xlu0 %1648
    %1651 = vset.pattern.permute.xlu0 1
    %1652 = vperm.xlu0 %1651, %v35
    %v1653 = vpop.permute.xlu0 %1652
    %1655 = vset.pattern.permute.xlu0 1
    %1656 = vperm.xlu0 %1655, %v36
    %v1657 = vpop.permute.xlu0 %1656
    %1659 = vset.pattern.permute.xlu0 1
    %1660 = vperm.xlu0 %1659, %v37
    %v1661 = vpop.permute.xlu0 %1660
    %1663 = vset.pattern.permute.xlu0 1
    %1664 = vperm.xlu0 %1663, %v38
    %v1665 = vpop.permute.xlu0 %1664
    %1667 = vset.pattern.permute.xlu0 1
    %1668 = vperm.xlu0 %1667, %v39
    %v1669 = vpop.permute.xlu0 %1668
    %1671 = vset.pattern.permute.xlu0 1
    %1672 = vperm.xlu0 %1671, %v40
    %v1673 = vpop.permute.xlu0 %1672
    %1675 = vset.pattern.permute.xlu0 1
    %1676 = vperm.xlu0 %1675, %v41
    %v1677 = vpop.permute.xlu0 %1676
    %1679 = vset.pattern.permute.xlu0 1
    %1680 = vperm.xlu0 %1679, %v42
    %v1681 = vpop.permute.xlu0 %1680
    %1683 = vset.pattern.permute.xlu0 1
    %1684 = vperm.xlu0 %1683, %v43
    %v1685 = vpop.permute.xlu0 %1684
    %1687 = vset.pattern.permute.xlu0 1
    %1688 = vperm.xlu0 %1687, %v44
    %v1689 = vpop.permute.xlu0 %1688
    %1691 = vset.pattern.permute.xlu0 1
    %1692 = vperm.xlu0 %1691, %v45
    %v1693 = vpop.permute.xlu0 %1692
    %1695 = vset.pattern.permute.xlu0 1
    %1696 = vperm.xlu0 %1695, %v46
    %v1697 = vpop.permute.xlu0 %1696
    %1699 = vset.pattern.permute.xlu0 1
    %1700 = vperm.xlu0 %1699, %v47
    %v1701 = vpop.permute.xlu0 %1700
    %1703 = vset.pattern.permute.xlu0 1
    %1704 = vperm.xlu0 %1703, %v48
    %v1705 = vpop.permute.xlu0 %1704
    %1707 = vset.pattern.permute.xlu0 1
    %1708 = vperm.xlu0 %1707, %v49
    %v1709 = vpop.permute.xlu0 %1708
    %1711 = vset.pattern.permute.xlu0 1
    %1712 = vperm.xlu0 %1711, %v50
    %v1713 = vpop.permute.xlu0 %1712
    %1715 = vset.pattern.permute.xlu0 1
    %1716 = vperm.xlu0 %1715, %v51
    %v1717 = vpop.permute.xlu0 %1716
    %1719 = vset.pattern.permute.xlu0 1
    %1720 = vperm.xlu0 %1719, %v52
    %v1721 = vpop.permute.xlu0 %1720
    %1723 = vset.pattern.permute.xlu0 1
    %1724 = vperm.xlu0 %1723, %v53
    %v1725 = vpop.permute.xlu0 %1724
    %1727 = vset.pattern.permute.xlu0 1
    %1728 = vperm.xlu0 %1727, %v54
    %v1729 = vpop.permute.xlu0 %1728
    %1731 = vset.pattern.permute.xlu0 1
    %1732 = vperm.xlu0 %1731, %v55
    %v1733 = vpop.permute.xlu0 %1732
    %1735 = vset.pattern.permute.xlu0 1
    %1736 = vperm.xlu0 %1735, %v56
    %v1737 = vpop.permute.xlu0 %1736
    %1739 = vset.pattern.permute.xlu0 1
    %1740 = vperm.xlu0 %1739, %v57
    %v1741 = vpop.permute.xlu0 %1740
    %1743 = vset.pattern.permute.xlu0 1
    %1744 = vperm.xlu0 %1743, %v58
    %v1745 = vpop.permute.xlu0 %1744
    %1747 = vset.pattern.permute.xlu0 1
    %1748 = vperm.xlu0 %1747, %v59
    %v1749 = vpop.permute.xlu0 %1748
    %1751 = vset.pattern.permute.xlu0 1
    %1752 = vperm.xlu0 %1751, %v60
    %v1753 = vpop.permute.xlu0 %1752
    %1755 = vset.pattern.permute.xlu0 1
    %1756 = vperm.xlu0 %1755, %v61
    %v1757 = vpop.permute.xlu0 %1756
    %1759 = vset.pattern.permute.xlu0 1
    %1760 = vperm.xlu0 %1759, %v62
    %v1761 = vpop.permute.xlu0 %1760
    %1763 = vset.pattern.permute.xlu0 1
    %1764 = vperm.xlu0 %1763, %v63
    %v1765 = vpop.permute.xlu0 %1764
    %1767 = vset.pattern.permute.xlu0 1
    %1768 = vperm.xlu0 %1767, %v64
    %v1769 = vpop.permute.xlu0 %1768
    %1771 = vset.pattern.permute.xlu0 1
    %1772 = vperm.xlu0 %1771, %v65
    %v1773 = vpop.permute.xlu0 %1772
    %1775 = vset.pattern.permute.xlu0 1
    %1776 = vperm.xlu0 %1775, %v66
    %v1777 = vpop.permute.xlu0 %1776
    %1779 = vset.pattern.permute.xlu0 1
    %1780 = vperm.xlu0 %1779, %v67
    %v1781 = vpop.permute.xlu0 %1780
    %1783 = vset.pattern.permute.xlu0 1
    %1784 = vperm.xlu0 %1783, %v68
    %v1785 = vpop.permute.xlu0 %1784
    %1787 = vset.pattern.permute.xlu0 1
    %1788 = vperm.xlu0 %1787, %v69
    %v1789 = vpop.permute.xlu0 %1788
    %1791 = vset.pattern.permute.xlu0 1
    %1792 = vperm.xlu0 %1791, %v70
    %v1793 = vpop.permute.xlu0 %1792
    %1795 = vset.pattern.permute.xlu0 1
    %1796 = vperm.xlu0 %1795, %v71
    %v1797 = vpop.permute.xlu0 %1796
    %1799 = vset.pattern.permute.xlu0 1
    %1800 = vperm.xlu0 %1799, %v72
    %v1801 = vpop.permute.xlu0 %1800
    %1803 = vset.pattern.permute.xlu0 1
    %1804 = vperm.xlu0 %1803, %v73
    %v1805 = vpop.permute.xlu0 %1804
    %1807 = vset.pattern.permute.xlu0 1
    %1808 = vperm.xlu0 %1807, %v74
    %v1809 = vpop.permute.xlu0 %1808
    %1811 = vset.pattern.permute.xlu0 1
    %1812 = vperm.xlu0 %1811, %v75
    %v1813 = vpop.permute.xlu0 %1812
    %1815 = vset.pattern.permute.xlu0 1
    %1816 = vperm.xlu0 %1815, %v76
    %v1817 = vpop.permute.xlu0 %1816
    %1819 = vset.pattern.permute.xlu0 1
    %1820 = vperm.xlu0 %1819, %v77
    %v1821 = vpop.permute.xlu0 %1820
    %1823 = vset.pattern.permute.xlu0 1
    %1824 = vperm.xlu0 %1823, %v78
    %v1825 = vpop.permute.xlu0 %1824
    %1827 = vset.pattern.permute.xlu0 1
    %1828 = vperm.xlu0 %1827, %v79
    %v1829 = vpop.permute.xlu0 %1828
    %1831 = vset.pattern.permute.xlu0 1
    %1832 = vperm.xlu0 %1831, %v80
    %v1833 = vpop.permute.xlu0 %1832
    %1835 = vset.pattern.permute.xlu0 1
    %1836 = vperm.xlu0 %1835, %v81
    %v1837 = vpop.permute.xlu0 %1836
    %1839 = vset.pattern.permute.xlu0 1
    %1840 = vperm.xlu0 %1839, %v82
    %v1841 = vpop.permute.xlu0 %1840
    %1843 = vset.pattern.permute.xlu0 1
    %1844 = vperm.xlu0 %1843, %v83
    %v1845 = vpop.permute.xlu0 %1844
    %1847 = vset.pattern.permute.xlu0 1
    %1848 = vperm.xlu0 %1847, %v84
    %v1849 = vpop.permute.xlu0 %1848
    %1851 = vset.pattern.permute.xlu0 1
    %1852 = vperm.xlu0 %1851, %v85
    %v1853 = vpop.permute.xlu0 %1852
    %1855 = vset.pattern.permute.xlu0 1
    %1856 = vperm.xlu0 %1855, %v86
    %v1857 = vpop.permute.xlu0 %1856
    %1859 = vset.pattern.permute.xlu0 1
    %1860 = vperm.xlu0 %1859, %v87
    %v1861 = vpop.permute.xlu0 %1860
    %1863 = vset.pattern.permute.xlu0 1
    %1864 = vperm.xlu0 %1863, %v88
    %v1865 = vpop.permute.xlu0 %1864
    %1867 = vset.pattern.permute.xlu0 1
    %1868 = vperm.xlu0 %1867, %v89
    %v1869 = vpop.permute.xlu0 %1868
    %1871 = vset.pattern.permute.xlu0 1
    %1872 = vperm.xlu0 %1871, %v90
    %v1873 = vpop.permute.xlu0 %1872
    %1875 = vset.pattern.permute.xlu0 1
    %1876 = vperm.xlu0 %1875, %v91
    %v1877 = vpop.permute.xlu0 %1876
    %1879 = vset.pattern.permute.xlu0 1
    %1880 = vperm.xlu0 %1879, %v92
    %v1881 = vpop.permute.xlu0 %1880
    %1883 = vset.pattern.permute.xlu0 1
    %1884 = vperm.xlu0 %1883, %v93
    %v1885 = vpop.permute.xlu0 %1884
    %1887 = vset.pattern.permute.xlu0 1
    %1888 = vperm.xlu0 %1887, %v94
    %v1889 = vpop.permute.xlu0 %1888
    %1891 = vset.pattern.permute.xlu0 1
    %1892 = vperm.xlu0 %1891, %v95
    %v1893 = vpop.permute.xlu0 %1892
    %1895 = vset.pattern.permute.xlu0 1
    %1896 = vperm.xlu0 %1895, %v96
    %v1897 = vpop.permute.xlu0 %1896
    %1899 = vset.pattern.permute.xlu0 1
    %1900 = vperm.xlu0 %1899, %v97
    %v1901 = vpop.permute.xlu0 %1900
    %1903 = vset.pattern.permute.xlu0 1
    %1904 = vperm.xlu0 %1903, %v98
    %v1905 = vpop.permute.xlu0 %1904
    %1907 = vset.pattern.permute.xlu0 1
    %1908 = vperm.xlu0 %1907, %v99
    %v1909 = vpop.permute.xlu0 %1908
    %1911 = vset.pattern.permute.xlu0 1
    %1912 = vperm.xlu0 %1911, %v100
    %v1913 = vpop.permute.xlu0 %1912
    %1915 = vset.pattern.permute.xlu0 1
    %1916 = vperm.xlu0 %1915, %v101
    %v1917 = vpop.permute.xlu0 %1916
    %1919 = vset.pattern.permute.xlu0 1
    %1920 = vperm.xlu0 %1919, %v102
    %v1921 = vpop.permute.xlu0 %1920
    %1923 = vset.pattern.permute.xlu0 1
    %1924 = vperm.xlu0 %1923, %v103
    %v1925 = vpop.permute.xlu0 %1924
    %1927 = vset.pattern.permute.xlu0 1
    %1928 = vperm.xlu0 %1927, %v104
    %v1929 = vpop.permute.xlu0 %1928
    %1931 = vset.pattern.permute.xlu0 1
    %1932 = vperm.xlu0 %1931, %v105
    %v1933 = vpop.permute.xlu0 %1932
    %1935 = vset.pattern.permute.xlu0 1
    %1936 = vperm.xlu0 %1935, %v106
    %v1937 = vpop.permute.xlu0 %1936
    %1939 = vset.pattern.permute.xlu0 1
    %1940 = vperm.xlu0 %1939, %v107
    %v1941 = vpop.permute.xlu0 %1940
    %1943 = vset.pattern.permute.xlu0 1
    %1944 = vperm.xlu0 %1943, %v108
    %v1945 = vpop.permute.xlu0 %1944
    %1947 = vset.pattern.permute.xlu0 1
    %1948 = vperm.xlu0 %1947, %v109
    %v1949 = vpop.permute.xlu0 %1948
    %1951 = vset.pattern.permute.xlu0 1
    %1952 = vperm.xlu0 %1951, %v110
    %v1953 = vpop.permute.xlu0 %1952
    %1955 = vset.pattern.permute.xlu0 1
    %1956 = vperm.xlu0 %1955, %v111
    %v1957 = vpop.permute.xlu0 %1956
    %1959 = vset.pattern.permute.xlu0 1
    %1960 = vperm.xlu0 %1959, %v112
    %v1961 = vpop.permute.xlu0 %1960
    %1963 = vset.pattern.permute.xlu0 1
    %1964 = vperm.xlu0 %1963, %v113
    %v1965 = vpop.permute.xlu0 %1964
    %1967 = vset.pattern.permute.xlu0 1
    %1968 = vperm.xlu0 %1967, %v114
    %v1969 = vpop.permute.xlu0 %1968
    %1971 = vset.pattern.permute.xlu0 1
    %1972 = vperm.xlu0 %1971, %v115
    %v1973 = vpop.permute.xlu0 %1972
    %1975 = vset.pattern.permute.xlu0 1
    %1976 = vperm.xlu0 %1975, %v116
    %v1977 = vpop.permute.xlu0 %1976
    %1979 = vset.pattern.permute.xlu0 1
    %1980 = vperm.xlu0 %1979, %v117
    %v1981 = vpop.permute.xlu0 %1980
    %1983 = vset.pattern.permute.xlu0 1
    %1984 = vperm.xlu0 %1983, %v118
    %v1985 = vpop.permute.xlu0 %1984
    %1987 = vset.pattern.permute.xlu0 1
    %1988 = vperm.xlu0 %1987, %v119
    %v1989 = vpop.permute.xlu0 %1988
    %1991 = vset.pattern.permute.xlu0 1
    %1992 = vperm.xlu0 %1991, %v120
    %v1993 = vpop.permute.xlu0 %1992
    %1995 = vset.pattern.permute.xlu0 1
    %1996 = vperm.xlu0 %1995, %v121
    %v1997 = vpop.permute.xlu0 %1996
    %1999 = vset.pattern.permute.xlu0 1
    %2000 = vperm.xlu0 %1999, %v122
    %v2001 = vpop.permute.xlu0 %2000
    %2003 = vset.pattern.permute.xlu0 1
    %2004 = vperm.xlu0 %2003, %v123
    %v2005 = vpop.permute.xlu0 %2004
    %2007 = vset.pattern.permute.xlu0 1
    %2008 = vperm.xlu0 %2007, %v124
    %v2009 = vpop.permute.xlu0 %2008
    %2011 = vset.pattern.permute.xlu0 1
    %2012 = vperm.xlu0 %2011, %v125
    %v2013 = vpop.permute.xlu0 %2012
    %2015 = vset.pattern.permute.xlu0 1
    %2016 = vperm.xlu0 %2015, %v126
    %v2017 = vpop.permute.xlu0 %2016
    %2019 = vset.pattern.permute.xlu0 1
    %2020 = vperm.xlu0 %2019, %v127
    %v2021 = vpop.permute.xlu0 %2020
    %2023 = vset.pattern.permute.xlu0 1
    %2024 = vperm.xlu0 %2023, %v128
    %v2025 = vpop.permute.xlu0 %2024
    %2027 = vset.pattern.permute.xlu0 1
    %2028 = vperm.xlu0 %2027, %v129
    %v2029 = vpop.permute.xlu0 %2028
    %2031 = vset.pattern.permute.xlu0 1
    %2032 = vperm.xlu0 %2031, %v130
    %v2033 = vpop.permute.xlu0 %2032
    %2035 = vset.pattern.permute.xlu0 1
    %2036 = vperm.xlu0 %2035, %v131
    %v2037 = vpop.permute.xlu0 %2036
    %2039 = vset.pattern.permute.xlu0 1
    %2040 = vperm.xlu0 %2039, %v132
    %v2041 = vpop.permute.xlu0 %2040
    %2043 = vset.pattern.permute.xlu0 1
    %2044 = vperm.xlu0 %2043, %v133
    %v2045 = vpop.permute.xlu0 %2044
    %2047 = vset.pattern.permute.xlu0 1
    %2048 = vperm.xlu0 %2047, %v134
    %v2049 = vpop.permute.xlu0 %2048
    %2051 = vset.pattern.permute.xlu0 1
    %2052 = vperm.xlu0 %2051, %v135
    %v2053 = vpop.permute.xlu0 %2052
    %2055 = vset.pattern.permute.xlu0 1
    %2056 = vperm.xlu0 %2055, %v136
    %v2057 = vpop.permute.xlu0 %2056
    %2059 = vset.pattern.permute.xlu0 1
    %2060 = vperm.xlu0 %2059, %v137
    %v2061 = vpop.permute.xlu0 %2060
    %2063 = vset.pattern.permute.xlu0 1
    %2064 = vperm.xlu0 %2063, %v138
    %v2065 = vpop.permute.xlu0 %2064
    %2067 = vset.pattern.permute.xlu0 1
    %2068 = vperm.xlu0 %2067, %v139
    %v2069 = vpop.permute.xlu0 %2068
    %2071 = vset.pattern.permute.xlu0 1
    %2072 = vperm.xlu0 %2071, %v140
    %v2073 = vpop.permute.xlu0 %2072
    %2075 = vset.pattern.permute.xlu0 1
    %2076 = vperm.xlu0 %2075, %v141
    %v2077 = vpop.permute.xlu0 %2076
    %2079 = vset.pattern.permute.xlu0 1
    %2080 = vperm.xlu0 %2079, %v142
    %v2081 = vpop.permute.xlu0 %2080
    %2083 = vset.pattern.permute.xlu0 1
    %2084 = vperm.xlu0 %2083, %v143
    %v2085 = vpop.permute.xlu0 %2084
    %2087 = vset.pattern.permute.xlu0 1
    %2088 = vperm.xlu0 %2087, %v144
    %v2089 = vpop.permute.xlu0 %2088
    %2091 = vset.pattern.permute.xlu0 1
    %2092 = vperm.xlu0 %2091, %v145
    %v2093 = vpop.permute.xlu0 %2092
    %2095 = vset.pattern.permute.xlu0 1
    %2096 = vperm.xlu0 %2095, %v146
    %v2097 = vpop.permute.xlu0 %2096
    %2099 = vset.pattern.permute.xlu0 1
    %2100 = vperm.xlu0 %2099, %v147
    %v2101 = vpop.permute.xlu0 %2100
    %2103 = vset.pattern.permute.xlu0 1
    %2104 = vperm.xlu0 %2103, %v148
    %v2105 = vpop.permute.xlu0 %2104
    %2107 = vset.pattern.permute.xlu0 1
    %2108 = vperm.xlu0 %2107, %v149
    %v2109 = vpop.permute.xlu0 %2108
    %2111 = vset.pattern.permute.xlu0 1
    %2112 = vperm.xlu0 %2111, %v150
    %v2113 = vpop.permute.xlu0 %2112
    %2115 = vset.pattern.permute.xlu0 1
    %2116 = vperm.xlu0 %2115, %v151
    %v2117 = vpop.permute.xlu0 %2116
    %2119 = vset.pattern.permute.xlu0 1
    %2120 = vperm.xlu0 %2119, %v152
    %v2121 = vpop.permute.xlu0 %2120
    %2123 = vset.pattern.permute.xlu0 1
    %2124 = vperm.xlu0 %2123, %v153
    %v2125 = vpop.permute.xlu0 %2124
    %2127 = vset.pattern.permute.xlu0 1
    %2128 = vperm.xlu0 %2127, %v154
    %v2129 = vpop.permute.xlu0 %2128
    %2131 = vset.pattern.permute.xlu0 1
    %2132 = vperm.xlu0 %2131, %v155
    %v2133 = vpop.permute.xlu0 %2132
    %2135 = vset.pattern.permute.xlu0 1
    %2136 = vperm.xlu0 %2135, %v156
    %v2137 = vpop.permute.xlu0 %2136
    %2139 = vset.pattern.permute.xlu0 1
    %2140 = vperm.xlu0 %2139, %v157
    %v2141 = vpop.permute.xlu0 %2140
    %2143 = vset.pattern.permute.xlu0 1
    %2144 = vperm.xlu0 %2143, %v158
    %v2145 = vpop.permute.xlu0 %2144
    %2147 = vset.pattern.permute.xlu0 1
    %2148 = vperm.xlu0 %2147, %v159
    %v2149 = vpop.permute.xlu0 %2148
    %2151 = vset.pattern.permute.xlu0 1
    %2152 = vperm.xlu0 %2151, %v160
    %v2153 = vpop.permute.xlu0 %2152
    %2155 = vset.pattern.permute.xlu0 1
    %2156 = vperm.xlu0 %2155, %v161
    %v2157 = vpop.permute.xlu0 %2156
    %2159 = vset.pattern.permute.xlu0 1
    %2160 = vperm.xlu0 %2159, %v162
    %v2161 = vpop.permute.xlu0 %2160
    %2163 = vset.pattern.permute.xlu0 1
    %2164 = vperm.xlu0 %2163, %v163
    %v2165 = vpop.permute.xlu0 %2164
    %2167 = vset.pattern.permute.xlu0 1
    %2168 = vperm.xlu0 %2167, %v164
    %v2169 = vpop.permute.xlu0 %2168
    %2171 = vset.pattern.permute.xlu0 1
    %2172 = vperm.xlu0 %2171, %v165
    %v2173 = vpop.permute.xlu0 %2172
    %2175 = vset.pattern.permute.xlu0 1
    %2176 = vperm.xlu0 %2175, %v166
    %v2177 = vpop.permute.xlu0 %2176
    %2179 = vset.pattern.permute.xlu0 1
    %2180 = vperm.xlu0 %2179, %v167
    %v2181 = vpop.permute.xlu0 %2180
    %2183 = vset.pattern.permute.xlu0 1
    %2184 = vperm.xlu0 %2183, %v168
    %v2185 = vpop.permute.xlu0 %2184
    %2187 = vset.pattern.permute.xlu0 1
    %2188 = vperm.xlu0 %2187, %v169
    %v2189 = vpop.permute.xlu0 %2188
    %2191 = vset.pattern.permute.xlu0 1
    %2192 = vperm.xlu0 %2191, %v170
    %v2193 = vpop.permute.xlu0 %2192
    %2195 = vset.pattern.permute.xlu0 1
    %2196 = vperm.xlu0 %2195, %v171
    %v2197 = vpop.permute.xlu0 %2196
    %2199 = vset.pattern.permute.xlu0 1
    %2200 = vperm.xlu0 %2199, %v172
    %v2201 = vpop.permute.xlu0 %2200
    %2203 = vset.pattern.permute.xlu0 1
    %2204 = vperm.xlu0 %2203, %v173
    %v2205 = vpop.permute.xlu0 %2204
    %2207 = vset.pattern.permute.xlu0 1
    %2208 = vperm.xlu0 %2207, %v174
    %v2209 = vpop.permute.xlu0 %2208
    %2211 = vset.pattern.permute.xlu0 1
    %2212 = vperm.xlu0 %2211, %v175
    %v2213 = vpop.permute.xlu0 %2212
    %2215 = vset.pattern.permute.xlu0 1
    %2216 = vperm.xlu0 %2215, %v176
    %v2217 = vpop.permute.xlu0 %2216
    %2219 = vset.pattern.permute.xlu0 1
    %2220 = vperm.xlu0 %2219, %v177
    %v2221 = vpop.permute.xlu0 %2220
    %2223 = vset.pattern.permute.xlu0 1
    %2224 = vperm.xlu0 %2223, %v178
    %v2225 = vpop.permute.xlu0 %2224
    %2227 = vset.pattern.permute.xlu0 1
    %2228 = vperm.xlu0 %2227, %v179
    %v2229 = vpop.permute.xlu0 %2228
    %2231 = vset.pattern.permute.xlu0 1
    %2232 = vperm.xlu0 %2231, %v180
    %v2233 = vpop.permute.xlu0 %2232
    %2235 = vset.pattern.permute.xlu0 1
    %2236 = vperm.xlu0 %2235, %v181
    %v2237 = vpop.permute.xlu0 %2236
    %2239 = vset.pattern.permute.xlu0 1
    %2240 = vperm.xlu0 %2239, %v182
    %v2241 = vpop.permute.xlu0 %2240
    %2243 = vset.pattern.permute.xlu0 1
    %2244 = vperm.xlu0 %2243, %v183
    %v2245 = vpop.permute.xlu0 %2244
    %2247 = vset.pattern.permute.xlu0 1
    %2248 = vperm.xlu0 %2247, %v184
    %v2249 = vpop.permute.xlu0 %2248
    %2251 = vset.pattern.permute.xlu0 1
    %2252 = vperm.xlu0 %2251, %v185
    %v2253 = vpop.permute.xlu0 %2252
    %2255 = vset.pattern.permute.xlu0 1
    %2256 = vperm.xlu0 %2255, %v186
    %v2257 = vpop.permute.xlu0 %2256
    %2259 = vset.pattern.permute.xlu0 1
    %2260 = vperm.xlu0 %2259, %v187
    %v2261 = vpop.permute.xlu0 %2260
    %2263 = vset.pattern.permute.xlu0 1
    %2264 = vperm.xlu0 %2263, %v188
    %v2265 = vpop.permute.xlu0 %2264
    %2267 = vset.pattern.permute.xlu0 1
    %2268 = vperm.xlu0 %2267, %v189
    %v2269 = vpop.permute.xlu0 %2268
    %2271 = vset.pattern.permute.xlu0 1
    %2272 = vperm.xlu0 %2271, %v190
    %v2273 = vpop.permute.xlu0 %2272
    %2275 = vset.pattern.permute.xlu0 1
    %2276 = vperm.xlu0 %2275, %v191
    %v2277 = vpop.permute.xlu0 %2276
    %2279 = vset.pattern.permute.xlu0 1
    %2280 = vperm.xlu0 %2279, %v192
    %v2281 = vpop.permute.xlu0 %2280
    %2283 = vset.pattern.permute.xlu0 1
    %2284 = vperm.xlu0 %2283, %v193
    %v2285 = vpop.permute.xlu0 %2284
    %2287 = vset.pattern.permute.xlu0 1
    %2288 = vperm.xlu0 %2287, %v194
    %v2289 = vpop.permute.xlu0 %2288
    %2291 = vset.pattern.permute.xlu0 1
    %2292 = vperm.xlu0 %2291, %v195
    %v2293 = vpop.permute.xlu0 %2292
    %2295 = vset.pattern.permute.xlu0 1
    %2296 = vperm.xlu0 %2295, %v196
    %v2297 = vpop.permute.xlu0 %2296
    %2299 = vset.pattern.permute.xlu0 1
    %2300 = vperm.xlu0 %2299, %v197
    %v2301 = vpop.permute.xlu0 %2300
    %2303 = vset.pattern.permute.xlu0 1
    %2304 = vperm.xlu0 %2303, %v198
    %v2305 = vpop.permute.xlu0 %2304
    %2307 = vset.pattern.permute.xlu0 1
    %2308 = vperm.xlu0 %2307, %v199
    %v2309 = vpop.permute.xlu0 %2308
    %2311 = vset.pattern.permute.xlu0 1
    %2312 = vperm.xlu0 %2311, %v200
    %v2313 = vpop.permute.xlu0 %2312
    %2315 = vset.pattern.permute.xlu0 1
    %2316 = vperm.xlu0 %2315, %v201
    %v2317 = vpop.permute.xlu0 %2316
    %2319 = vset.pattern.permute.xlu0 1
    %2320 = vperm.xlu0 %2319, %v202
    %v2321 = vpop.permute.xlu0 %2320
    %2323 = vset.pattern.permute.xlu0 1
    %2324 = vperm.xlu0 %2323, %v203
    %v2325 = vpop.permute.xlu0 %2324
    %2327 = vset.pattern.permute.xlu0 1
    %2328 = vperm.xlu0 %2327, %v204
    %v2329 = vpop.permute.xlu0 %2328
    %2331 = vset.pattern.permute.xlu0 1
    %2332 = vperm.xlu0 %2331, %v205
    %v2333 = vpop.permute.xlu0 %2332
    %2335 = vset.pattern.permute.xlu0 1
    %2336 = vperm.xlu0 %2335, %v206
    %v2337 = vpop.permute.xlu0 %2336
    %2339 = vset.pattern.permute.xlu0 1
    %2340 = vperm.xlu0 %2339, %v207
    %v2341 = vpop.permute.xlu0 %2340
    %2343 = vset.pattern.permute.xlu0 1
    %2344 = vperm.xlu0 %2343, %v208
    %v2345 = vpop.permute.xlu0 %2344
    %2347 = vset.pattern.permute.xlu0 1
    %2348 = vperm.xlu0 %2347, %v209
    %v2349 = vpop.permute.xlu0 %2348
    %2351 = vset.pattern.permute.xlu0 1
    %2352 = vperm.xlu0 %2351, %v210
    %v2353 = vpop.permute.xlu0 %2352
    %2355 = vset.pattern.permute.xlu0 1
    %2356 = vperm.xlu0 %2355, %v211
    %v2357 = vpop.permute.xlu0 %2356
    %2359 = vset.pattern.permute.xlu0 1
    %2360 = vperm.xlu0 %2359, %v212
    %v2361 = vpop.permute.xlu0 %2360
    %2363 = vset.pattern.permute.xlu0 1
    %2364 = vperm.xlu0 %2363, %v213
    %v2365 = vpop.permute.xlu0 %2364
    %2367 = vset.pattern.permute.xlu0 1
    %2368 = vperm.xlu0 %2367, %v214
    %v2369 = vpop.permute.xlu0 %2368
    %2371 = vset.pattern.permute.xlu0 1
    %2372 = vperm.xlu0 %2371, %v215
    %v2373 = vpop.permute.xlu0 %2372
    %2375 = vset.pattern.permute.xlu0 1
    %2376 = vperm.xlu0 %2375, %v216
    %v2377 = vpop.permute.xlu0 %2376
    %2379 = vset.pattern.permute.xlu0 1
    %2380 = vperm.xlu0 %2379, %v217
    %v2381 = vpop.permute.xlu0 %2380
    %2383 = vset.pattern.permute.xlu0 1
    %2384 = vperm.xlu0 %2383, %v218
    %v2385 = vpop.permute.xlu0 %2384
    %2387 = vset.pattern.permute.xlu0 1
    %2388 = vperm.xlu0 %2387, %v219
    %v2389 = vpop.permute.xlu0 %2388
    %2391 = vset.pattern.permute.xlu0 1
    %2392 = vperm.xlu0 %2391, %v220
    %v2393 = vpop.permute.xlu0 %2392
    %2395 = vset.pattern.permute.xlu0 1
    %2396 = vperm.xlu0 %2395, %v221
    %v2397 = vpop.permute.xlu0 %2396
    %2399 = vset.pattern.permute.xlu0 1
    %2400 = vperm.xlu0 %2399, %v222
    %v2401 = vpop.permute.xlu0 %2400
    %2403 = vset.pattern.permute.xlu0 1
    %2404 = vperm.xlu0 %2403, %v223
    %v2405 = vpop.permute.xlu0 %2404
    %2407 = vset.pattern.permute.xlu0 1
    %2408 = vperm.xlu0 %2407, %v224
    %v2409 = vpop.permute.xlu0 %2408
    %2411 = vset.pattern.permute.xlu0 1
    %2412 = vperm.xlu0 %2411, %v225
    %v2413 = vpop.permute.xlu0 %2412
    %2415 = vset.pattern.permute.xlu0 1
    %2416 = vperm.xlu0 %2415, %v226
    %v2417 = vpop.permute.xlu0 %2416
    %2419 = vset.pattern.permute.xlu0 1
    %2420 = vperm.xlu0 %2419, %v227
    %v2421 = vpop.permute.xlu0 %2420
    %2423 = vset.pattern.permute.xlu0 1
    %2424 = vperm.xlu0 %2423, %v228
    %v2425 = vpop.permute.xlu0 %2424
    %2427 = vset.pattern.permute.xlu0 1
    %2428 = vperm.xlu0 %2427, %v229
    %v2429 = vpop.permute.xlu0 %2428
    %2431 = vset.pattern.permute.xlu0 1
    %2432 = vperm.xlu0 %2431, %v230
    %v2433 = vpop.permute.xlu0 %2432
    %v2435 = vperm.slane %v231, 1
    %v2436 = vmul.f32 %v1637, %v2435
    %v2437 = vmul.f32 %v1641, %v2435
    %v2438 = vmul.f32 %v1645, %v2435
    %v2439 = vmul.f32 %v1649, %v2435
    %v2440 = vmul.f32 %v1653, %v2435
    %v2441 = vmul.f32 %v1657, %v2435
    %v2442 = vmul.f32 %v1661, %v2435
    %v2443 = vmul.f32 %v1665, %v2435
    %v2444 = vmul.f32 %v1669, %v2435
    %v2445 = vmul.f32 %v1673, %v2435
    %v2446 = vmul.f32 %v1677, %v2435
    %v2447 = vmul.f32 %v1681, %v2435
    %v2448 = vmul.f32 %v1685, %v2435
    %v2449 = vmul.f32 %v1689, %v2435
    %v2450 = vmul.f32 %v1693, %v2435
    %v2451 = vmul.f32 %v1697, %v2435
    %v2452 = vmul.f32 %v1701, %v2435
    %v2453 = vmul.f32 %v1705, %v2435
    %v2454 = vmul.f32 %v1709, %v2435
    %v2455 = vmul.f32 %v1713, %v2435
    %v2456 = vmul.f32 %v1717, %v2435
    %v2457 = vmul.f32 %v1721, %v2435
    %v2458 = vmul.f32 %v1725, %v2435
    %v2459 = vmul.f32 %v1729, %v2435
    %v2460 = vmul.f32 %v1733, %v2435
    %v2461 = vmul.f32 %v1737, %v2435
    %v2462 = vmul.f32 %v1741, %v2435
    %v2463 = vmul.f32 %v1745, %v2435
    %v2464 = vmul.f32 %v1749, %v2435
    %v2465 = vmul.f32 %v1753, %v2435
    %v2466 = vmul.f32 %v1757, %v2435
    %v2467 = vmul.f32 %v1761, %v2435
    %v2468 = vmul.f32 %v1765, %v2435
    %v2469 = vmul.f32 %v1769, %v2435
    %v2470 = vmul.f32 %v1773, %v2435
    %v2471 = vmul.f32 %v1777, %v2435
    %v2472 = vmul.f32 %v1781, %v2435
    %v2473 = vmul.f32 %v1785, %v2435
    %v2474 = vmul.f32 %v1789, %v2435
    %v2475 = vmul.f32 %v1793, %v2435
    %v2476 = vmul.f32 %v1797, %v2435
    %v2477 = vmul.f32 %v1801, %v2435
    %v2478 = vmul.f32 %v1805, %v2435
    %v2479 = vmul.f32 %v1809, %v2435
    %v2480 = vmul.f32 %v1813, %v2435
    %v2481 = vmul.f32 %v1817, %v2435
    %v2482 = vmul.f32 %v1821, %v2435
    %v2483 = vmul.f32 %v1825, %v2435
    %v2484 = vmul.f32 %v1829, %v2435
    %v2485 = vmul.f32 %v1833, %v2435
    %v2486 = vmul.f32 %v1837, %v2435
    %v2487 = vmul.f32 %v1841, %v2435
    %v2488 = vmul.f32 %v1845, %v2435
    %v2489 = vmul.f32 %v1849, %v2435
    %v2490 = vmul.f32 %v1853, %v2435
    %v2491 = vmul.f32 %v1857, %v2435
    %v2492 = vmul.f32 %v1861, %v2435
    %v2493 = vmul.f32 %v1865, %v2435
    %v2494 = vmul.f32 %v1869, %v2435
    %v2495 = vmul.f32 %v1873, %v2435
    %v2496 = vmul.f32 %v1877, %v2435
    %v2497 = vmul.f32 %v1881, %v2435
    %v2498 = vmul.f32 %v1885, %v2435
    %v2499 = vmul.f32 %v1889, %v2435
    %v2500 = vmul.f32 %v1893, %v2435
    %v2501 = vmul.f32 %v1897, %v2435
    %v2502 = vmul.f32 %v1901, %v2435
    %v2503 = vmul.f32 %v1905, %v2435
    %v2504 = vmul.f32 %v1909, %v2435
    %v2505 = vmul.f32 %v1913, %v2435
    %v2506 = vmul.f32 %v1917, %v2435
    %v2507 = vmul.f32 %v1921, %v2435
    %v2508 = vmul.f32 %v1925, %v2435
    %v2509 = vmul.f32 %v1929, %v2435
    %v2510 = vmul.f32 %v1933, %v2435
    %v2511 = vmul.f32 %v1937, %v2435
    %v2512 = vmul.f32 %v1941, %v2435
    %v2513 = vmul.f32 %v1945, %v2435
    %v2514 = vmul.f32 %v1949, %v2435
    %v2515 = vmul.f32 %v1953, %v2435
    %v2516 = vmul.f32 %v1957, %v2435
    %v2517 = vmul.f32 %v1961, %v2435
    %v2518 = vmul.f32 %v1965, %v2435
    %v2519 = vmul.f32 %v1969, %v2435
    %v2520 = vmul.f32 %v1973, %v2435
    %v2521 = vmul.f32 %v1977, %v2435
    %v2522 = vmul.f32 %v1981, %v2435
    %v2523 = vmul.f32 %v1985, %v2435
    %v2524 = vmul.f32 %v1989, %v2435
    %v2525 = vmul.f32 %v1993, %v2435
    %v2526 = vmul.f32 %v1997, %v2435
    %v2527 = vmul.f32 %v2001, %v2435
    %v2528 = vmul.f32 %v2005, %v2435
    %v2529 = vmul.f32 %v2009, %v2435
    %v2530 = vmul.f32 %v2013, %v2435
    %v2531 = vmul.f32 %v2017, %v2435
    %v2532 = vmul.f32 %v2021, %v2435
    %v2533 = vmul.f32 %v2025, %v2435
    %v2534 = vmul.f32 %v2029, %v2435
    %v2535 = vmul.f32 %v2033, %v2435
    %v2536 = vmul.f32 %v2037, %v2435
    %v2537 = vmul.f32 %v2041, %v2435
    %v2538 = vmul.f32 %v2045, %v2435
    %v2539 = vmul.f32 %v2049, %v2435
    %v2540 = vmul.f32 %v2053, %v2435
    %v2541 = vmul.f32 %v2057, %v2435
    %v2542 = vmul.f32 %v2061, %v2435
    %v2543 = vmul.f32 %v2065, %v2435
    %v2544 = vmul.f32 %v2069, %v2435
    %v2545 = vmul.f32 %v2073, %v2435
    %v2546 = vmul.f32 %v2077, %v2435
    %v2547 = vmul.f32 %v2081, %v2435
    %v2548 = vmul.f32 %v2085, %v2435
    %v2549 = vmul.f32 %v2089, %v2435
    %v2550 = vmul.f32 %v2093, %v2435
    %v2551 = vmul.f32 %v2097, %v2435
    %v2552 = vmul.f32 %v2101, %v2435
    %v2553 = vmul.f32 %v2105, %v2435
    %v2554 = vmul.f32 %v2109, %v2435
    %v2555 = vmul.f32 %v2113, %v2435
    %v2556 = vmul.f32 %v2117, %v2435
    %v2557 = vmul.f32 %v2121, %v2435
    %v2558 = vmul.f32 %v2125, %v2435
    %v2559 = vmul.f32 %v2129, %v2435
    %v2560 = vmul.f32 %v2133, %v2435
    %v2561 = vmul.f32 %v2137, %v2435
    %v2562 = vmul.f32 %v2141, %v2435
    %v2563 = vmul.f32 %v2145, %v2435
    %v2564 = vmul.f32 %v2149, %v2435
    %v2565 = vmul.f32 %v2153, %v2435
    %v2566 = vmul.f32 %v2157, %v2435
    %v2567 = vmul.f32 %v2161, %v2435
    %v2568 = vmul.f32 %v2165, %v2435
    %v2569 = vmul.f32 %v2169, %v2435
    %v2570 = vmul.f32 %v2173, %v2435
    %v2571 = vmul.f32 %v2177, %v2435
    %v2572 = vmul.f32 %v2181, %v2435
    %v2573 = vmul.f32 %v2185, %v2435
    %v2574 = vmul.f32 %v2189, %v2435
    %v2575 = vmul.f32 %v2193, %v2435
    %v2576 = vmul.f32 %v2197, %v2435
    %v2577 = vmul.f32 %v2201, %v2435
    %v2578 = vmul.f32 %v2205, %v2435
    %v2579 = vmul.f32 %v2209, %v2435
    %v2580 = vmul.f32 %v2213, %v2435
    %v2581 = vmul.f32 %v2217, %v2435
    %v2582 = vmul.f32 %v2221, %v2435
    %v2583 = vmul.f32 %v2225, %v2435
    %v2584 = vmul.f32 %v2229, %v2435
    %v2585 = vmul.f32 %v2233, %v2435
    %v2586 = vmul.f32 %v2237, %v2435
    %v2587 = vmul.f32 %v2241, %v2435
    %v2588 = vmul.f32 %v2245, %v2435
    %v2589 = vmul.f32 %v2249, %v2435
    %v2590 = vmul.f32 %v2253, %v2435
    %v2591 = vmul.f32 %v2257, %v2435
    %v2592 = vmul.f32 %v2261, %v2435
    %v2593 = vmul.f32 %v2265, %v2435
    %v2594 = vmul.f32 %v2269, %v2435
    %v2595 = vmul.f32 %v2273, %v2435
    %v2596 = vmul.f32 %v2277, %v2435
    %v2597 = vmul.f32 %v2281, %v2435
    %v2598 = vmul.f32 %v2285, %v2435
    %v2599 = vmul.f32 %v2289, %v2435
    %v2600 = vmul.f32 %v2293, %v2435
    %v2601 = vmul.f32 %v2297, %v2435
    %v2602 = vmul.f32 %v2301, %v2435
    %v2603 = vmul.f32 %v2305, %v2435
    %v2604 = vmul.f32 %v2309, %v2435
    %v2605 = vmul.f32 %v2313, %v2435
    %v2606 = vmul.f32 %v2317, %v2435
    %v2607 = vmul.f32 %v2321, %v2435
    %v2608 = vmul.f32 %v2325, %v2435
    %v2609 = vmul.f32 %v2329, %v2435
    %v2610 = vmul.f32 %v2333, %v2435
    %v2611 = vmul.f32 %v2337, %v2435
    %v2612 = vmul.f32 %v2341, %v2435
    %v2613 = vmul.f32 %v2345, %v2435
    %v2614 = vmul.f32 %v2349, %v2435
    %v2615 = vmul.f32 %v2353, %v2435
    %v2616 = vmul.f32 %v2357, %v2435
    %v2617 = vmul.f32 %v2361, %v2435
    %v2618 = vmul.f32 %v2365, %v2435
    %v2619 = vmul.f32 %v2369, %v2435
    %v2620 = vmul.f32 %v2373, %v2435
    %v2621 = vmul.f32 %v2377, %v2435
    %v2622 = vmul.f32 %v2381, %v2435
    %v2623 = vmul.f32 %v2385, %v2435
    %v2624 = vmul.f32 %v2389, %v2435
    %v2625 = vmul.f32 %v2393, %v2435
    %v2626 = vmul.f32 %v2397, %v2435
    %v2627 = vmul.f32 %v2401, %v2435
    %v2628 = vmul.f32 %v2405, %v2435
    %v2629 = vmul.f32 %v2409, %v2435
    %v2630 = vmul.f32 %v2413, %v2435
    %v2631 = vmul.f32 %v2417, %v2435
    %v2632 = vmul.f32 %v2421, %v2435
    %v2633 = vmul.f32 %v2425, %v2435
    %v2634 = vmul.f32 %v2429, %v2435
    %v2635 = vmul.f32 %v2433, %v2435
    %v2636 = vadd.f32 %v1435, %v2436
    %v2637 = vadd.f32 %v1436, %v2437
    %v2638 = vadd.f32 %v1437, %v2438
    %v2639 = vadd.f32 %v1438, %v2439
    %v2640 = vadd.f32 %v1439, %v2440
    %v2641 = vadd.f32 %v1440, %v2441
    %v2642 = vadd.f32 %v1441, %v2442
    %v2643 = vadd.f32 %v1442, %v2443
    %v2644 = vadd.f32 %v1443, %v2444
    %v2645 = vadd.f32 %v1444, %v2445
    %v2646 = vadd.f32 %v1445, %v2446
    %v2647 = vadd.f32 %v1446, %v2447
    %v2648 = vadd.f32 %v1447, %v2448
    %v2649 = vadd.f32 %v1448, %v2449
    %v2650 = vadd.f32 %v1449, %v2450
    %v2651 = vadd.f32 %v1450, %v2451
    %v2652 = vadd.f32 %v1451, %v2452
    %v2653 = vadd.f32 %v1452, %v2453
    %v2654 = vadd.f32 %v1453, %v2454
    %v2655 = vadd.f32 %v1454, %v2455
    %v2656 = vadd.f32 %v1455, %v2456
    %v2657 = vadd.f32 %v1456, %v2457
    %v2658 = vadd.f32 %v1457, %v2458
    %v2659 = vadd.f32 %v1458, %v2459
    %v2660 = vadd.f32 %v1459, %v2460
    %v2661 = vadd.f32 %v1460, %v2461
    %v2662 = vadd.f32 %v1461, %v2462
    %v2663 = vadd.f32 %v1462, %v2463
    %v2664 = vadd.f32 %v1463, %v2464
    %v2665 = vadd.f32 %v1464, %v2465
    %v2666 = vadd.f32 %v1465, %v2466
    %v2667 = vadd.f32 %v1466, %v2467
    %v2668 = vadd.f32 %v1467, %v2468
    %v2669 = vadd.f32 %v1468, %v2469
    %v2670 = vadd.f32 %v1469, %v2470
    %v2671 = vadd.f32 %v1470, %v2471
    %v2672 = vadd.f32 %v1471, %v2472
    %v2673 = vadd.f32 %v1472, %v2473
    %v2674 = vadd.f32 %v1473, %v2474
    %v2675 = vadd.f32 %v1474, %v2475
    %v2676 = vadd.f32 %v1475, %v2476
    %v2677 = vadd.f32 %v1476, %v2477
    %v2678 = vadd.f32 %v1477, %v2478
    %v2679 = vadd.f32 %v1478, %v2479
    %v2680 = vadd.f32 %v1479, %v2480
    %v2681 = vadd.f32 %v1480, %v2481
    %v2682 = vadd.f32 %v1481, %v2482
    %v2683 = vadd.f32 %v1482, %v2483
    %v2684 = vadd.f32 %v1483, %v2484
    %v2685 = vadd.f32 %v1484, %v2485
    %v2686 = vadd.f32 %v1485, %v2486
    %v2687 = vadd.f32 %v1486, %v2487
    %v2688 = vadd.f32 %v1487, %v2488
    %v2689 = vadd.f32 %v1488, %v2489
    %v2690 = vadd.f32 %v1489, %v2490
    %v2691 = vadd.f32 %v1490, %v2491
    %v2692 = vadd.f32 %v1491, %v2492
    %v2693 = vadd.f32 %v1492, %v2493
    %v2694 = vadd.f32 %v1493, %v2494
    %v2695 = vadd.f32 %v1494, %v2495
    %v2696 = vadd.f32 %v1495, %v2496
    %v2697 = vadd.f32 %v1496, %v2497
    %v2698 = vadd.f32 %v1497, %v2498
    %v2699 = vadd.f32 %v1498, %v2499
    %v2700 = vadd.f32 %v1499, %v2500
    %v2701 = vadd.f32 %v1500, %v2501
    %v2702 = vadd.f32 %v1501, %v2502
    %v2703 = vadd.f32 %v1502, %v2503
    %v2704 = vadd.f32 %v1503, %v2504
    %v2705 = vadd.f32 %v1504, %v2505
    %v2706 = vadd.f32 %v1505, %v2506
    %v2707 = vadd.f32 %v1506, %v2507
    %v2708 = vadd.f32 %v1507, %v2508
    %v2709 = vadd.f32 %v1508, %v2509
    %v2710 = vadd.f32 %v1509, %v2510
    %v2711 = vadd.f32 %v1510, %v2511
    %v2712 = vadd.f32 %v1511, %v2512
    %v2713 = vadd.f32 %v1512, %v2513
    %v2714 = vadd.f32 %v1513, %v2514
    %v2715 = vadd.f32 %v1514, %v2515
    %v2716 = vadd.f32 %v1515, %v2516
    %v2717 = vadd.f32 %v1516, %v2517
    %v2718 = vadd.f32 %v1517, %v2518
    %v2719 = vadd.f32 %v1518, %v2519
    %v2720 = vadd.f32 %v1519, %v2520
    %v2721 = vadd.f32 %v1520, %v2521
    %v2722 = vadd.f32 %v1521, %v2522
    %v2723 = vadd.f32 %v1522, %v2523
    %v2724 = vadd.f32 %v1523, %v2524
    %v2725 = vadd.f32 %v1524, %v2525
    %v2726 = vadd.f32 %v1525, %v2526
    %v2727 = vadd.f32 %v1526, %v2527
    %v2728 = vadd.f32 %v1527, %v2528
    %v2729 = vadd.f32 %v1528, %v2529
    %v2730 = vadd.f32 %v1529, %v2530
    %v2731 = vadd.f32 %v1530, %v2531
    %v2732 = vadd.f32 %v1531, %v2532
    %v2733 = vadd.f32 %v1532, %v2533
    %v2734 = vadd.f32 %v1533, %v2534
    %v2735 = vadd.f32 %v1534, %v2535
    %v2736 = vadd.f32 %v1535, %v2536
    %v2737 = vadd.f32 %v1536, %v2537
    %v2738 = vadd.f32 %v1537, %v2538
    %v2739 = vadd.f32 %v1538, %v2539
    %v2740 = vadd.f32 %v1539, %v2540
    %v2741 = vadd.f32 %v1540, %v2541
    %v2742 = vadd.f32 %v1541, %v2542
    %v2743 = vadd.f32 %v1542, %v2543
    %v2744 = vadd.f32 %v1543, %v2544
    %v2745 = vadd.f32 %v1544, %v2545
    %v2746 = vadd.f32 %v1545, %v2546
    %v2747 = vadd.f32 %v1546, %v2547
    %v2748 = vadd.f32 %v1547, %v2548
    %v2749 = vadd.f32 %v1548, %v2549
    %v2750 = vadd.f32 %v1549, %v2550
    %v2751 = vadd.f32 %v1550, %v2551
    %v2752 = vadd.f32 %v1551, %v2552
    %v2753 = vadd.f32 %v1552, %v2553
    %v2754 = vadd.f32 %v1553, %v2554
    %v2755 = vadd.f32 %v1554, %v2555
    %v2756 = vadd.f32 %v1555, %v2556
    %v2757 = vadd.f32 %v1556, %v2557
    %v2758 = vadd.f32 %v1557, %v2558
    %v2759 = vadd.f32 %v1558, %v2559
    %v2760 = vadd.f32 %v1559, %v2560
    %v2761 = vadd.f32 %v1560, %v2561
    %v2762 = vadd.f32 %v1561, %v2562
    %v2763 = vadd.f32 %v1562, %v2563
    %v2764 = vadd.f32 %v1563, %v2564
    %v2765 = vadd.f32 %v1564, %v2565
    %v2766 = vadd.f32 %v1565, %v2566
    %v2767 = vadd.f32 %v1566, %v2567
    %v2768 = vadd.f32 %v1567, %v2568
    %v2769 = vadd.f32 %v1568, %v2569
    %v2770 = vadd.f32 %v1569, %v2570
    %v2771 = vadd.f32 %v1570, %v2571
    %v2772 = vadd.f32 %v1571, %v2572
    %v2773 = vadd.f32 %v1572, %v2573
    %v2774 = vadd.f32 %v1573, %v2574
    %v2775 = vadd.f32 %v1574, %v2575
    %v2776 = vadd.f32 %v1575, %v2576
    %v2777 = vadd.f32 %v1576, %v2577
    %v2778 = vadd.f32 %v1577, %v2578
    %v2779 = vadd.f32 %v1578, %v2579
    %v2780 = vadd.f32 %v1579, %v2580
    %v2781 = vadd.f32 %v1580, %v2581
    %v2782 = vadd.f32 %v1581, %v2582
    %v2783 = vadd.f32 %v1582, %v2583
    %v2784 = vadd.f32 %v1583, %v2584
    %v2785 = vadd.f32 %v1584, %v2585
    %v2786 = vadd.f32 %v1585, %v2586
    %v2787 = vadd.f32 %v1586, %v2587
    %v2788 = vadd.f32 %v1587, %v2588
    %v2789 = vadd.f32 %v1588, %v2589
    %v2790 = vadd.f32 %v1589, %v2590
    %v2791 = vadd.f32 %v1590, %v2591
    %v2792 = vadd.f32 %v1591, %v2592
    %v2793 = vadd.f32 %v1592, %v2593
    %v2794 = vadd.f32 %v1593, %v2594
    %v2795 = vadd.f32 %v1594, %v2595
    %v2796 = vadd.f32 %v1595, %v2596
    %v2797 = vadd.f32 %v1596, %v2597
    %v2798 = vadd.f32 %v1597, %v2598
    %v2799 = vadd.f32 %v1598, %v2599
    %v2800 = vadd.f32 %v1599, %v2600
    %v2801 = vadd.f32 %v1600, %v2601
    %v2802 = vadd.f32 %v1601, %v2602
    %v2803 = vadd.f32 %v1602, %v2603
    %v2804 = vadd.f32 %v1603, %v2604
    %v2805 = vadd.f32 %v1604, %v2605
    %v2806 = vadd.f32 %v1605, %v2606
    %v2807 = vadd.f32 %v1606, %v2607
    %v2808 = vadd.f32 %v1607, %v2608
    %v2809 = vadd.f32 %v1608, %v2609
    %v2810 = vadd.f32 %v1609, %v2610
    %v2811 = vadd.f32 %v1610, %v2611
    %v2812 = vadd.f32 %v1611, %v2612
    %v2813 = vadd.f32 %v1612, %v2613
    %v2814 = vadd.f32 %v1613, %v2614
    %v2815 = vadd.f32 %v1614, %v2615
    %v2816 = vadd.f32 %v1615, %v2616
    %v2817 = vadd.f32 %v1616, %v2617
    %v2818 = vadd.f32 %v1617, %v2618
    %v2819 = vadd.f32 %v1618, %v2619
    %v2820 = vadd.f32 %v1619, %v2620
    %v2821 = vadd.f32 %v1620, %v2621
    %v2822 = vadd.f32 %v1621, %v2622
    %v2823 = vadd.f32 %v1622, %v2623
    %v2824 = vadd.f32 %v1623, %v2624
    %v2825 = vadd.f32 %v1624, %v2625
    %v2826 = vadd.f32 %v1625, %v2626
    %v2827 = vadd.f32 %v1626, %v2627
    %v2828 = vadd.f32 %v1627, %v2628
    %v2829 = vadd.f32 %v1628, %v2629
    %v2830 = vadd.f32 %v1629, %v2630
    %v2831 = vadd.f32 %v1630, %v2631
    %v2832 = vadd.f32 %v1631, %v2632
    %v2833 = vadd.f32 %v1632, %v2633
    %v2834 = vadd.f32 %v1633, %v2634
    %v2835 = vadd.f32 %v1634, %v2635
    %2836 = vset.pattern.permute.xlu0 2
    %2837 = vperm.xlu0 %2836, %v31
    %v2838 = vpop.permute.xlu0 %2837
    %2840 = vset.pattern.permute.xlu0 2
    %2841 = vperm.xlu0 %2840, %v32
    %v2842 = vpop.permute.xlu0 %2841
    %2844 = vset.pattern.permute.xlu0 2
    %2845 = vperm.xlu0 %2844, %v33
    %v2846 = vpop.permute.xlu0 %2845
    %2848 = vset.pattern.permute.xlu0 2
    %2849 = vperm.xlu0 %2848, %v34
    %v2850 = vpop.permute.xlu0 %2849
    %2852 = vset.pattern.permute.xlu0 2
    %2853 = vperm.xlu0 %2852, %v35
    %v2854 = vpop.permute.xlu0 %2853
    %2856 = vset.pattern.permute.xlu0 2
    %2857 = vperm.xlu0 %2856, %v36
    %v2858 = vpop.permute.xlu0 %2857
    %2860 = vset.pattern.permute.xlu0 2
    %2861 = vperm.xlu0 %2860, %v37
    %v2862 = vpop.permute.xlu0 %2861
    %2864 = vset.pattern.permute.xlu0 2
    %2865 = vperm.xlu0 %2864, %v38
    %v2866 = vpop.permute.xlu0 %2865
    %2868 = vset.pattern.permute.xlu0 2
    %2869 = vperm.xlu0 %2868, %v39
    %v2870 = vpop.permute.xlu0 %2869
    %2872 = vset.pattern.permute.xlu0 2
    %2873 = vperm.xlu0 %2872, %v40
    %v2874 = vpop.permute.xlu0 %2873
    %2876 = vset.pattern.permute.xlu0 2
    %2877 = vperm.xlu0 %2876, %v41
    %v2878 = vpop.permute.xlu0 %2877
    %2880 = vset.pattern.permute.xlu0 2
    %2881 = vperm.xlu0 %2880, %v42
    %v2882 = vpop.permute.xlu0 %2881
    %2884 = vset.pattern.permute.xlu0 2
    %2885 = vperm.xlu0 %2884, %v43
    %v2886 = vpop.permute.xlu0 %2885
    %2888 = vset.pattern.permute.xlu0 2
    %2889 = vperm.xlu0 %2888, %v44
    %v2890 = vpop.permute.xlu0 %2889
    %2892 = vset.pattern.permute.xlu0 2
    %2893 = vperm.xlu0 %2892, %v45
    %v2894 = vpop.permute.xlu0 %2893
    %2896 = vset.pattern.permute.xlu0 2
    %2897 = vperm.xlu0 %2896, %v46
    %v2898 = vpop.permute.xlu0 %2897
    %2900 = vset.pattern.permute.xlu0 2
    %2901 = vperm.xlu0 %2900, %v47
    %v2902 = vpop.permute.xlu0 %2901
    %2904 = vset.pattern.permute.xlu0 2
    %2905 = vperm.xlu0 %2904, %v48
    %v2906 = vpop.permute.xlu0 %2905
    %2908 = vset.pattern.permute.xlu0 2
    %2909 = vperm.xlu0 %2908, %v49
    %v2910 = vpop.permute.xlu0 %2909
    %2912 = vset.pattern.permute.xlu0 2
    %2913 = vperm.xlu0 %2912, %v50
    %v2914 = vpop.permute.xlu0 %2913
    %2916 = vset.pattern.permute.xlu0 2
    %2917 = vperm.xlu0 %2916, %v51
    %v2918 = vpop.permute.xlu0 %2917
    %2920 = vset.pattern.permute.xlu0 2
    %2921 = vperm.xlu0 %2920, %v52
    %v2922 = vpop.permute.xlu0 %2921
    %2924 = vset.pattern.permute.xlu0 2
    %2925 = vperm.xlu0 %2924, %v53
    %v2926 = vpop.permute.xlu0 %2925
    %2928 = vset.pattern.permute.xlu0 2
    %2929 = vperm.xlu0 %2928, %v54
    %v2930 = vpop.permute.xlu0 %2929
    %2932 = vset.pattern.permute.xlu0 2
    %2933 = vperm.xlu0 %2932, %v55
    %v2934 = vpop.permute.xlu0 %2933
    %2936 = vset.pattern.permute.xlu0 2
    %2937 = vperm.xlu0 %2936, %v56
    %v2938 = vpop.permute.xlu0 %2937
    %2940 = vset.pattern.permute.xlu0 2
    %2941 = vperm.xlu0 %2940, %v57
    %v2942 = vpop.permute.xlu0 %2941
    %2944 = vset.pattern.permute.xlu0 2
    %2945 = vperm.xlu0 %2944, %v58
    %v2946 = vpop.permute.xlu0 %2945
    %2948 = vset.pattern.permute.xlu0 2
    %2949 = vperm.xlu0 %2948, %v59
    %v2950 = vpop.permute.xlu0 %2949
    %2952 = vset.pattern.permute.xlu0 2
    %2953 = vperm.xlu0 %2952, %v60
    %v2954 = vpop.permute.xlu0 %2953
    %2956 = vset.pattern.permute.xlu0 2
    %2957 = vperm.xlu0 %2956, %v61
    %v2958 = vpop.permute.xlu0 %2957
    %2960 = vset.pattern.permute.xlu0 2
    %2961 = vperm.xlu0 %2960, %v62
    %v2962 = vpop.permute.xlu0 %2961
    %2964 = vset.pattern.permute.xlu0 2
    %2965 = vperm.xlu0 %2964, %v63
    %v2966 = vpop.permute.xlu0 %2965
    %2968 = vset.pattern.permute.xlu0 2
    %2969 = vperm.xlu0 %2968, %v64
    %v2970 = vpop.permute.xlu0 %2969
    %2972 = vset.pattern.permute.xlu0 2
    %2973 = vperm.xlu0 %2972, %v65
    %v2974 = vpop.permute.xlu0 %2973
    %2976 = vset.pattern.permute.xlu0 2
    %2977 = vperm.xlu0 %2976, %v66
    %v2978 = vpop.permute.xlu0 %2977
    %2980 = vset.pattern.permute.xlu0 2
    %2981 = vperm.xlu0 %2980, %v67
    %v2982 = vpop.permute.xlu0 %2981
    %2984 = vset.pattern.permute.xlu0 2
    %2985 = vperm.xlu0 %2984, %v68
    %v2986 = vpop.permute.xlu0 %2985
    %2988 = vset.pattern.permute.xlu0 2
    %2989 = vperm.xlu0 %2988, %v69
    %v2990 = vpop.permute.xlu0 %2989
    %2992 = vset.pattern.permute.xlu0 2
    %2993 = vperm.xlu0 %2992, %v70
    %v2994 = vpop.permute.xlu0 %2993
    %2996 = vset.pattern.permute.xlu0 2
    %2997 = vperm.xlu0 %2996, %v71
    %v2998 = vpop.permute.xlu0 %2997
    %3000 = vset.pattern.permute.xlu0 2
    %3001 = vperm.xlu0 %3000, %v72
    %v3002 = vpop.permute.xlu0 %3001
    %3004 = vset.pattern.permute.xlu0 2
    %3005 = vperm.xlu0 %3004, %v73
    %v3006 = vpop.permute.xlu0 %3005
    %3008 = vset.pattern.permute.xlu0 2
    %3009 = vperm.xlu0 %3008, %v74
    %v3010 = vpop.permute.xlu0 %3009
    %3012 = vset.pattern.permute.xlu0 2
    %3013 = vperm.xlu0 %3012, %v75
    %v3014 = vpop.permute.xlu0 %3013
    %3016 = vset.pattern.permute.xlu0 2
    %3017 = vperm.xlu0 %3016, %v76
    %v3018 = vpop.permute.xlu0 %3017
    %3020 = vset.pattern.permute.xlu0 2
    %3021 = vperm.xlu0 %3020, %v77
    %v3022 = vpop.permute.xlu0 %3021
    %3024 = vset.pattern.permute.xlu0 2
    %3025 = vperm.xlu0 %3024, %v78
    %v3026 = vpop.permute.xlu0 %3025
    %3028 = vset.pattern.permute.xlu0 2
    %3029 = vperm.xlu0 %3028, %v79
    %v3030 = vpop.permute.xlu0 %3029
    %3032 = vset.pattern.permute.xlu0 2
    %3033 = vperm.xlu0 %3032, %v80
    %v3034 = vpop.permute.xlu0 %3033
    %3036 = vset.pattern.permute.xlu0 2
    %3037 = vperm.xlu0 %3036, %v81
    %v3038 = vpop.permute.xlu0 %3037
    %3040 = vset.pattern.permute.xlu0 2
    %3041 = vperm.xlu0 %3040, %v82
    %v3042 = vpop.permute.xlu0 %3041
    %3044 = vset.pattern.permute.xlu0 2
    %3045 = vperm.xlu0 %3044, %v83
    %v3046 = vpop.permute.xlu0 %3045
    %3048 = vset.pattern.permute.xlu0 2
    %3049 = vperm.xlu0 %3048, %v84
    %v3050 = vpop.permute.xlu0 %3049
    %3052 = vset.pattern.permute.xlu0 2
    %3053 = vperm.xlu0 %3052, %v85
    %v3054 = vpop.permute.xlu0 %3053
    %3056 = vset.pattern.permute.xlu0 2
    %3057 = vperm.xlu0 %3056, %v86
    %v3058 = vpop.permute.xlu0 %3057
    %3060 = vset.pattern.permute.xlu0 2
    %3061 = vperm.xlu0 %3060, %v87
    %v3062 = vpop.permute.xlu0 %3061
    %3064 = vset.pattern.permute.xlu0 2
    %3065 = vperm.xlu0 %3064, %v88
    %v3066 = vpop.permute.xlu0 %3065
    %3068 = vset.pattern.permute.xlu0 2
    %3069 = vperm.xlu0 %3068, %v89
    %v3070 = vpop.permute.xlu0 %3069
    %3072 = vset.pattern.permute.xlu0 2
    %3073 = vperm.xlu0 %3072, %v90
    %v3074 = vpop.permute.xlu0 %3073
    %3076 = vset.pattern.permute.xlu0 2
    %3077 = vperm.xlu0 %3076, %v91
    %v3078 = vpop.permute.xlu0 %3077
    %3080 = vset.pattern.permute.xlu0 2
    %3081 = vperm.xlu0 %3080, %v92
    %v3082 = vpop.permute.xlu0 %3081
    %3084 = vset.pattern.permute.xlu0 2
    %3085 = vperm.xlu0 %3084, %v93
    %v3086 = vpop.permute.xlu0 %3085
    %3088 = vset.pattern.permute.xlu0 2
    %3089 = vperm.xlu0 %3088, %v94
    %v3090 = vpop.permute.xlu0 %3089
    %3092 = vset.pattern.permute.xlu0 2
    %3093 = vperm.xlu0 %3092, %v95
    %v3094 = vpop.permute.xlu0 %3093
    %3096 = vset.pattern.permute.xlu0 2
    %3097 = vperm.xlu0 %3096, %v96
    %v3098 = vpop.permute.xlu0 %3097
    %3100 = vset.pattern.permute.xlu0 2
    %3101 = vperm.xlu0 %3100, %v97
    %v3102 = vpop.permute.xlu0 %3101
    %3104 = vset.pattern.permute.xlu0 2
    %3105 = vperm.xlu0 %3104, %v98
    %v3106 = vpop.permute.xlu0 %3105
    %3108 = vset.pattern.permute.xlu0 2
    %3109 = vperm.xlu0 %3108, %v99
    %v3110 = vpop.permute.xlu0 %3109
    %3112 = vset.pattern.permute.xlu0 2
    %3113 = vperm.xlu0 %3112, %v100
    %v3114 = vpop.permute.xlu0 %3113
    %3116 = vset.pattern.permute.xlu0 2
    %3117 = vperm.xlu0 %3116, %v101
    %v3118 = vpop.permute.xlu0 %3117
    %3120 = vset.pattern.permute.xlu0 2
    %3121 = vperm.xlu0 %3120, %v102
    %v3122 = vpop.permute.xlu0 %3121
    %3124 = vset.pattern.permute.xlu0 2
    %3125 = vperm.xlu0 %3124, %v103
    %v3126 = vpop.permute.xlu0 %3125
    %3128 = vset.pattern.permute.xlu0 2
    %3129 = vperm.xlu0 %3128, %v104
    %v3130 = vpop.permute.xlu0 %3129
    %3132 = vset.pattern.permute.xlu0 2
    %3133 = vperm.xlu0 %3132, %v105
    %v3134 = vpop.permute.xlu0 %3133
    %3136 = vset.pattern.permute.xlu0 2
    %3137 = vperm.xlu0 %3136, %v106
    %v3138 = vpop.permute.xlu0 %3137
    %3140 = vset.pattern.permute.xlu0 2
    %3141 = vperm.xlu0 %3140, %v107
    %v3142 = vpop.permute.xlu0 %3141
    %3144 = vset.pattern.permute.xlu0 2
    %3145 = vperm.xlu0 %3144, %v108
    %v3146 = vpop.permute.xlu0 %3145
    %3148 = vset.pattern.permute.xlu0 2
    %3149 = vperm.xlu0 %3148, %v109
    %v3150 = vpop.permute.xlu0 %3149
    %3152 = vset.pattern.permute.xlu0 2
    %3153 = vperm.xlu0 %3152, %v110
    %v3154 = vpop.permute.xlu0 %3153
    %3156 = vset.pattern.permute.xlu0 2
    %3157 = vperm.xlu0 %3156, %v111
    %v3158 = vpop.permute.xlu0 %3157
    %3160 = vset.pattern.permute.xlu0 2
    %3161 = vperm.xlu0 %3160, %v112
    %v3162 = vpop.permute.xlu0 %3161
    %3164 = vset.pattern.permute.xlu0 2
    %3165 = vperm.xlu0 %3164, %v113
    %v3166 = vpop.permute.xlu0 %3165
    %3168 = vset.pattern.permute.xlu0 2
    %3169 = vperm.xlu0 %3168, %v114
    %v3170 = vpop.permute.xlu0 %3169
    %3172 = vset.pattern.permute.xlu0 2
    %3173 = vperm.xlu0 %3172, %v115
    %v3174 = vpop.permute.xlu0 %3173
    %3176 = vset.pattern.permute.xlu0 2
    %3177 = vperm.xlu0 %3176, %v116
    %v3178 = vpop.permute.xlu0 %3177
    %3180 = vset.pattern.permute.xlu0 2
    %3181 = vperm.xlu0 %3180, %v117
    %v3182 = vpop.permute.xlu0 %3181
    %3184 = vset.pattern.permute.xlu0 2
    %3185 = vperm.xlu0 %3184, %v118
    %v3186 = vpop.permute.xlu0 %3185
    %3188 = vset.pattern.permute.xlu0 2
    %3189 = vperm.xlu0 %3188, %v119
    %v3190 = vpop.permute.xlu0 %3189
    %3192 = vset.pattern.permute.xlu0 2
    %3193 = vperm.xlu0 %3192, %v120
    %v3194 = vpop.permute.xlu0 %3193
    %3196 = vset.pattern.permute.xlu0 2
    %3197 = vperm.xlu0 %3196, %v121
    %v3198 = vpop.permute.xlu0 %3197
    %3200 = vset.pattern.permute.xlu0 2
    %3201 = vperm.xlu0 %3200, %v122
    %v3202 = vpop.permute.xlu0 %3201
    %3204 = vset.pattern.permute.xlu0 2
    %3205 = vperm.xlu0 %3204, %v123
    %v3206 = vpop.permute.xlu0 %3205
    %3208 = vset.pattern.permute.xlu0 2
    %3209 = vperm.xlu0 %3208, %v124
    %v3210 = vpop.permute.xlu0 %3209
    %3212 = vset.pattern.permute.xlu0 2
    %3213 = vperm.xlu0 %3212, %v125
    %v3214 = vpop.permute.xlu0 %3213
    %3216 = vset.pattern.permute.xlu0 2
    %3217 = vperm.xlu0 %3216, %v126
    %v3218 = vpop.permute.xlu0 %3217
    %3220 = vset.pattern.permute.xlu0 2
    %3221 = vperm.xlu0 %3220, %v127
    %v3222 = vpop.permute.xlu0 %3221
    %3224 = vset.pattern.permute.xlu0 2
    %3225 = vperm.xlu0 %3224, %v128
    %v3226 = vpop.permute.xlu0 %3225
    %3228 = vset.pattern.permute.xlu0 2
    %3229 = vperm.xlu0 %3228, %v129
    %v3230 = vpop.permute.xlu0 %3229
    %3232 = vset.pattern.permute.xlu0 2
    %3233 = vperm.xlu0 %3232, %v130
    %v3234 = vpop.permute.xlu0 %3233
    %3236 = vset.pattern.permute.xlu0 2
    %3237 = vperm.xlu0 %3236, %v131
    %v3238 = vpop.permute.xlu0 %3237
    %3240 = vset.pattern.permute.xlu0 2
    %3241 = vperm.xlu0 %3240, %v132
    %v3242 = vpop.permute.xlu0 %3241
    %3244 = vset.pattern.permute.xlu0 2
    %3245 = vperm.xlu0 %3244, %v133
    %v3246 = vpop.permute.xlu0 %3245
    %3248 = vset.pattern.permute.xlu0 2
    %3249 = vperm.xlu0 %3248, %v134
    %v3250 = vpop.permute.xlu0 %3249
    %3252 = vset.pattern.permute.xlu0 2
    %3253 = vperm.xlu0 %3252, %v135
    %v3254 = vpop.permute.xlu0 %3253
    %3256 = vset.pattern.permute.xlu0 2
    %3257 = vperm.xlu0 %3256, %v136
    %v3258 = vpop.permute.xlu0 %3257
    %3260 = vset.pattern.permute.xlu0 2
    %3261 = vperm.xlu0 %3260, %v137
    %v3262 = vpop.permute.xlu0 %3261
    %3264 = vset.pattern.permute.xlu0 2
    %3265 = vperm.xlu0 %3264, %v138
    %v3266 = vpop.permute.xlu0 %3265
    %3268 = vset.pattern.permute.xlu0 2
    %3269 = vperm.xlu0 %3268, %v139
    %v3270 = vpop.permute.xlu0 %3269
    %3272 = vset.pattern.permute.xlu0 2
    %3273 = vperm.xlu0 %3272, %v140
    %v3274 = vpop.permute.xlu0 %3273
    %3276 = vset.pattern.permute.xlu0 2
    %3277 = vperm.xlu0 %3276, %v141
    %v3278 = vpop.permute.xlu0 %3277
    %3280 = vset.pattern.permute.xlu0 2
    %3281 = vperm.xlu0 %3280, %v142
    %v3282 = vpop.permute.xlu0 %3281
    %3284 = vset.pattern.permute.xlu0 2
    %3285 = vperm.xlu0 %3284, %v143
    %v3286 = vpop.permute.xlu0 %3285
    %3288 = vset.pattern.permute.xlu0 2
    %3289 = vperm.xlu0 %3288, %v144
    %v3290 = vpop.permute.xlu0 %3289
    %3292 = vset.pattern.permute.xlu0 2
    %3293 = vperm.xlu0 %3292, %v145
    %v3294 = vpop.permute.xlu0 %3293
    %3296 = vset.pattern.permute.xlu0 2
    %3297 = vperm.xlu0 %3296, %v146
    %v3298 = vpop.permute.xlu0 %3297
    %3300 = vset.pattern.permute.xlu0 2
    %3301 = vperm.xlu0 %3300, %v147
    %v3302 = vpop.permute.xlu0 %3301
    %3304 = vset.pattern.permute.xlu0 2
    %3305 = vperm.xlu0 %3304, %v148
    %v3306 = vpop.permute.xlu0 %3305
    %3308 = vset.pattern.permute.xlu0 2
    %3309 = vperm.xlu0 %3308, %v149
    %v3310 = vpop.permute.xlu0 %3309
    %3312 = vset.pattern.permute.xlu0 2
    %3313 = vperm.xlu0 %3312, %v150
    %v3314 = vpop.permute.xlu0 %3313
    %3316 = vset.pattern.permute.xlu0 2
    %3317 = vperm.xlu0 %3316, %v151
    %v3318 = vpop.permute.xlu0 %3317
    %3320 = vset.pattern.permute.xlu0 2
    %3321 = vperm.xlu0 %3320, %v152
    %v3322 = vpop.permute.xlu0 %3321
    %3324 = vset.pattern.permute.xlu0 2
    %3325 = vperm.xlu0 %3324, %v153
    %v3326 = vpop.permute.xlu0 %3325
    %3328 = vset.pattern.permute.xlu0 2
    %3329 = vperm.xlu0 %3328, %v154
    %v3330 = vpop.permute.xlu0 %3329
    %3332 = vset.pattern.permute.xlu0 2
    %3333 = vperm.xlu0 %3332, %v155
    %v3334 = vpop.permute.xlu0 %3333
    %3336 = vset.pattern.permute.xlu0 2
    %3337 = vperm.xlu0 %3336, %v156
    %v3338 = vpop.permute.xlu0 %3337
    %3340 = vset.pattern.permute.xlu0 2
    %3341 = vperm.xlu0 %3340, %v157
    %v3342 = vpop.permute.xlu0 %3341
    %3344 = vset.pattern.permute.xlu0 2
    %3345 = vperm.xlu0 %3344, %v158
    %v3346 = vpop.permute.xlu0 %3345
    %3348 = vset.pattern.permute.xlu0 2
    %3349 = vperm.xlu0 %3348, %v159
    %v3350 = vpop.permute.xlu0 %3349
    %3352 = vset.pattern.permute.xlu0 2
    %3353 = vperm.xlu0 %3352, %v160
    %v3354 = vpop.permute.xlu0 %3353
    %3356 = vset.pattern.permute.xlu0 2
    %3357 = vperm.xlu0 %3356, %v161
    %v3358 = vpop.permute.xlu0 %3357
    %3360 = vset.pattern.permute.xlu0 2
    %3361 = vperm.xlu0 %3360, %v162
    %v3362 = vpop.permute.xlu0 %3361
    %3364 = vset.pattern.permute.xlu0 2
    %3365 = vperm.xlu0 %3364, %v163
    %v3366 = vpop.permute.xlu0 %3365
    %3368 = vset.pattern.permute.xlu0 2
    %3369 = vperm.xlu0 %3368, %v164
    %v3370 = vpop.permute.xlu0 %3369
    %3372 = vset.pattern.permute.xlu0 2
    %3373 = vperm.xlu0 %3372, %v165
    %v3374 = vpop.permute.xlu0 %3373
    %3376 = vset.pattern.permute.xlu0 2
    %3377 = vperm.xlu0 %3376, %v166
    %v3378 = vpop.permute.xlu0 %3377
    %3380 = vset.pattern.permute.xlu0 2
    %3381 = vperm.xlu0 %3380, %v167
    %v3382 = vpop.permute.xlu0 %3381
    %3384 = vset.pattern.permute.xlu0 2
    %3385 = vperm.xlu0 %3384, %v168
    %v3386 = vpop.permute.xlu0 %3385
    %3388 = vset.pattern.permute.xlu0 2
    %3389 = vperm.xlu0 %3388, %v169
    %v3390 = vpop.permute.xlu0 %3389
    %3392 = vset.pattern.permute.xlu0 2
    %3393 = vperm.xlu0 %3392, %v170
    %v3394 = vpop.permute.xlu0 %3393
    %3396 = vset.pattern.permute.xlu0 2
    %3397 = vperm.xlu0 %3396, %v171
    %v3398 = vpop.permute.xlu0 %3397
    %3400 = vset.pattern.permute.xlu0 2
    %3401 = vperm.xlu0 %3400, %v172
    %v3402 = vpop.permute.xlu0 %3401
    %3404 = vset.pattern.permute.xlu0 2
    %3405 = vperm.xlu0 %3404, %v173
    %v3406 = vpop.permute.xlu0 %3405
    %3408 = vset.pattern.permute.xlu0 2
    %3409 = vperm.xlu0 %3408, %v174
    %v3410 = vpop.permute.xlu0 %3409
    %3412 = vset.pattern.permute.xlu0 2
    %3413 = vperm.xlu0 %3412, %v175
    %v3414 = vpop.permute.xlu0 %3413
    %3416 = vset.pattern.permute.xlu0 2
    %3417 = vperm.xlu0 %3416, %v176
    %v3418 = vpop.permute.xlu0 %3417
    %3420 = vset.pattern.permute.xlu0 2
    %3421 = vperm.xlu0 %3420, %v177
    %v3422 = vpop.permute.xlu0 %3421
    %3424 = vset.pattern.permute.xlu0 2
    %3425 = vperm.xlu0 %3424, %v178
    %v3426 = vpop.permute.xlu0 %3425
    %3428 = vset.pattern.permute.xlu0 2
    %3429 = vperm.xlu0 %3428, %v179
    %v3430 = vpop.permute.xlu0 %3429
    %3432 = vset.pattern.permute.xlu0 2
    %3433 = vperm.xlu0 %3432, %v180
    %v3434 = vpop.permute.xlu0 %3433
    %3436 = vset.pattern.permute.xlu0 2
    %3437 = vperm.xlu0 %3436, %v181
    %v3438 = vpop.permute.xlu0 %3437
    %3440 = vset.pattern.permute.xlu0 2
    %3441 = vperm.xlu0 %3440, %v182
    %v3442 = vpop.permute.xlu0 %3441
    %3444 = vset.pattern.permute.xlu0 2
    %3445 = vperm.xlu0 %3444, %v183
    %v3446 = vpop.permute.xlu0 %3445
    %3448 = vset.pattern.permute.xlu0 2
    %3449 = vperm.xlu0 %3448, %v184
    %v3450 = vpop.permute.xlu0 %3449
    %3452 = vset.pattern.permute.xlu0 2
    %3453 = vperm.xlu0 %3452, %v185
    %v3454 = vpop.permute.xlu0 %3453
    %3456 = vset.pattern.permute.xlu0 2
    %3457 = vperm.xlu0 %3456, %v186
    %v3458 = vpop.permute.xlu0 %3457
    %3460 = vset.pattern.permute.xlu0 2
    %3461 = vperm.xlu0 %3460, %v187
    %v3462 = vpop.permute.xlu0 %3461
    %3464 = vset.pattern.permute.xlu0 2
    %3465 = vperm.xlu0 %3464, %v188
    %v3466 = vpop.permute.xlu0 %3465
    %3468 = vset.pattern.permute.xlu0 2
    %3469 = vperm.xlu0 %3468, %v189
    %v3470 = vpop.permute.xlu0 %3469
    %3472 = vset.pattern.permute.xlu0 2
    %3473 = vperm.xlu0 %3472, %v190
    %v3474 = vpop.permute.xlu0 %3473
    %3476 = vset.pattern.permute.xlu0 2
    %3477 = vperm.xlu0 %3476, %v191
    %v3478 = vpop.permute.xlu0 %3477
    %3480 = vset.pattern.permute.xlu0 2
    %3481 = vperm.xlu0 %3480, %v192
    %v3482 = vpop.permute.xlu0 %3481
    %3484 = vset.pattern.permute.xlu0 2
    %3485 = vperm.xlu0 %3484, %v193
    %v3486 = vpop.permute.xlu0 %3485
    %3488 = vset.pattern.permute.xlu0 2
    %3489 = vperm.xlu0 %3488, %v194
    %v3490 = vpop.permute.xlu0 %3489
    %3492 = vset.pattern.permute.xlu0 2
    %3493 = vperm.xlu0 %3492, %v195
    %v3494 = vpop.permute.xlu0 %3493
    %3496 = vset.pattern.permute.xlu0 2
    %3497 = vperm.xlu0 %3496, %v196
    %v3498 = vpop.permute.xlu0 %3497
    %3500 = vset.pattern.permute.xlu0 2
    %3501 = vperm.xlu0 %3500, %v197
    %v3502 = vpop.permute.xlu0 %3501
    %3504 = vset.pattern.permute.xlu0 2
    %3505 = vperm.xlu0 %3504, %v198
    %v3506 = vpop.permute.xlu0 %3505
    %3508 = vset.pattern.permute.xlu0 2
    %3509 = vperm.xlu0 %3508, %v199
    %v3510 = vpop.permute.xlu0 %3509
    %3512 = vset.pattern.permute.xlu0 2
    %3513 = vperm.xlu0 %3512, %v200
    %v3514 = vpop.permute.xlu0 %3513
    %3516 = vset.pattern.permute.xlu0 2
    %3517 = vperm.xlu0 %3516, %v201
    %v3518 = vpop.permute.xlu0 %3517
    %3520 = vset.pattern.permute.xlu0 2
    %3521 = vperm.xlu0 %3520, %v202
    %v3522 = vpop.permute.xlu0 %3521
    %3524 = vset.pattern.permute.xlu0 2
    %3525 = vperm.xlu0 %3524, %v203
    %v3526 = vpop.permute.xlu0 %3525
    %3528 = vset.pattern.permute.xlu0 2
    %3529 = vperm.xlu0 %3528, %v204
    %v3530 = vpop.permute.xlu0 %3529
    %3532 = vset.pattern.permute.xlu0 2
    %3533 = vperm.xlu0 %3532, %v205
    %v3534 = vpop.permute.xlu0 %3533
    %3536 = vset.pattern.permute.xlu0 2
    %3537 = vperm.xlu0 %3536, %v206
    %v3538 = vpop.permute.xlu0 %3537
    %3540 = vset.pattern.permute.xlu0 2
    %3541 = vperm.xlu0 %3540, %v207
    %v3542 = vpop.permute.xlu0 %3541
    %3544 = vset.pattern.permute.xlu0 2
    %3545 = vperm.xlu0 %3544, %v208
    %v3546 = vpop.permute.xlu0 %3545
    %3548 = vset.pattern.permute.xlu0 2
    %3549 = vperm.xlu0 %3548, %v209
    %v3550 = vpop.permute.xlu0 %3549
    %3552 = vset.pattern.permute.xlu0 2
    %3553 = vperm.xlu0 %3552, %v210
    %v3554 = vpop.permute.xlu0 %3553
    %3556 = vset.pattern.permute.xlu0 2
    %3557 = vperm.xlu0 %3556, %v211
    %v3558 = vpop.permute.xlu0 %3557
    %3560 = vset.pattern.permute.xlu0 2
    %3561 = vperm.xlu0 %3560, %v212
    %v3562 = vpop.permute.xlu0 %3561
    %3564 = vset.pattern.permute.xlu0 2
    %3565 = vperm.xlu0 %3564, %v213
    %v3566 = vpop.permute.xlu0 %3565
    %3568 = vset.pattern.permute.xlu0 2
    %3569 = vperm.xlu0 %3568, %v214
    %v3570 = vpop.permute.xlu0 %3569
    %3572 = vset.pattern.permute.xlu0 2
    %3573 = vperm.xlu0 %3572, %v215
    %v3574 = vpop.permute.xlu0 %3573
    %3576 = vset.pattern.permute.xlu0 2
    %3577 = vperm.xlu0 %3576, %v216
    %v3578 = vpop.permute.xlu0 %3577
    %3580 = vset.pattern.permute.xlu0 2
    %3581 = vperm.xlu0 %3580, %v217
    %v3582 = vpop.permute.xlu0 %3581
    %3584 = vset.pattern.permute.xlu0 2
    %3585 = vperm.xlu0 %3584, %v218
    %v3586 = vpop.permute.xlu0 %3585
    %3588 = vset.pattern.permute.xlu0 2
    %3589 = vperm.xlu0 %3588, %v219
    %v3590 = vpop.permute.xlu0 %3589
    %3592 = vset.pattern.permute.xlu0 2
    %3593 = vperm.xlu0 %3592, %v220
    %v3594 = vpop.permute.xlu0 %3593
    %3596 = vset.pattern.permute.xlu0 2
    %3597 = vperm.xlu0 %3596, %v221
    %v3598 = vpop.permute.xlu0 %3597
    %3600 = vset.pattern.permute.xlu0 2
    %3601 = vperm.xlu0 %3600, %v222
    %v3602 = vpop.permute.xlu0 %3601
    %3604 = vset.pattern.permute.xlu0 2
    %3605 = vperm.xlu0 %3604, %v223
    %v3606 = vpop.permute.xlu0 %3605
    %3608 = vset.pattern.permute.xlu0 2
    %3609 = vperm.xlu0 %3608, %v224
    %v3610 = vpop.permute.xlu0 %3609
    %3612 = vset.pattern.permute.xlu0 2
    %3613 = vperm.xlu0 %3612, %v225
    %v3614 = vpop.permute.xlu0 %3613
    %3616 = vset.pattern.permute.xlu0 2
    %3617 = vperm.xlu0 %3616, %v226
    %v3618 = vpop.permute.xlu0 %3617
    %3620 = vset.pattern.permute.xlu0 2
    %3621 = vperm.xlu0 %3620, %v227
    %v3622 = vpop.permute.xlu0 %3621
    %3624 = vset.pattern.permute.xlu0 2
    %3625 = vperm.xlu0 %3624, %v228
    %v3626 = vpop.permute.xlu0 %3625
    %3628 = vset.pattern.permute.xlu0 2
    %3629 = vperm.xlu0 %3628, %v229
    %v3630 = vpop.permute.xlu0 %3629
    %3632 = vset.pattern.permute.xlu0 2
    %3633 = vperm.xlu0 %3632, %v230
    %v3634 = vpop.permute.xlu0 %3633
    %v3636 = vperm.slane %v231, 2
    %v3637 = vmul.f32 %v2838, %v3636
    %v3638 = vmul.f32 %v2842, %v3636
    %v3639 = vmul.f32 %v2846, %v3636
    %v3640 = vmul.f32 %v2850, %v3636
    %v3641 = vmul.f32 %v2854, %v3636
    %v3642 = vmul.f32 %v2858, %v3636
    %v3643 = vmul.f32 %v2862, %v3636
    %v3644 = vmul.f32 %v2866, %v3636
    %v3645 = vmul.f32 %v2870, %v3636
    %v3646 = vmul.f32 %v2874, %v3636
    %v3647 = vmul.f32 %v2878, %v3636
    %v3648 = vmul.f32 %v2882, %v3636
    %v3649 = vmul.f32 %v2886, %v3636
    %v3650 = vmul.f32 %v2890, %v3636
    %v3651 = vmul.f32 %v2894, %v3636
    %v3652 = vmul.f32 %v2898, %v3636
    %v3653 = vmul.f32 %v2902, %v3636
    %v3654 = vmul.f32 %v2906, %v3636
    %v3655 = vmul.f32 %v2910, %v3636
    %v3656 = vmul.f32 %v2914, %v3636
    %v3657 = vmul.f32 %v2918, %v3636
    %v3658 = vmul.f32 %v2922, %v3636
    %v3659 = vmul.f32 %v2926, %v3636
    %v3660 = vmul.f32 %v2930, %v3636
    %v3661 = vmul.f32 %v2934, %v3636
    %v3662 = vmul.f32 %v2938, %v3636
    %v3663 = vmul.f32 %v2942, %v3636
    %v3664 = vmul.f32 %v2946, %v3636
    %v3665 = vmul.f32 %v2950, %v3636
    %v3666 = vmul.f32 %v2954, %v3636
    %v3667 = vmul.f32 %v2958, %v3636
    %v3668 = vmul.f32 %v2962, %v3636
    %v3669 = vmul.f32 %v2966, %v3636
    %v3670 = vmul.f32 %v2970, %v3636
    %v3671 = vmul.f32 %v2974, %v3636
    %v3672 = vmul.f32 %v2978, %v3636
    %v3673 = vmul.f32 %v2982, %v3636
    %v3674 = vmul.f32 %v2986, %v3636
    %v3675 = vmul.f32 %v2990, %v3636
    %v3676 = vmul.f32 %v2994, %v3636
    %v3677 = vmul.f32 %v2998, %v3636
    %v3678 = vmul.f32 %v3002, %v3636
    %v3679 = vmul.f32 %v3006, %v3636
    %v3680 = vmul.f32 %v3010, %v3636
    %v3681 = vmul.f32 %v3014, %v3636
    %v3682 = vmul.f32 %v3018, %v3636
    %v3683 = vmul.f32 %v3022, %v3636
    %v3684 = vmul.f32 %v3026, %v3636
    %v3685 = vmul.f32 %v3030, %v3636
    %v3686 = vmul.f32 %v3034, %v3636
    %v3687 = vmul.f32 %v3038, %v3636
    %v3688 = vmul.f32 %v3042, %v3636
    %v3689 = vmul.f32 %v3046, %v3636
    %v3690 = vmul.f32 %v3050, %v3636
    %v3691 = vmul.f32 %v3054, %v3636
    %v3692 = vmul.f32 %v3058, %v3636
    %v3693 = vmul.f32 %v3062, %v3636
    %v3694 = vmul.f32 %v3066, %v3636
    %v3695 = vmul.f32 %v3070, %v3636
    %v3696 = vmul.f32 %v3074, %v3636
    %v3697 = vmul.f32 %v3078, %v3636
    %v3698 = vmul.f32 %v3082, %v3636
    %v3699 = vmul.f32 %v3086, %v3636
    %v3700 = vmul.f32 %v3090, %v3636
    %v3701 = vmul.f32 %v3094, %v3636
    %v3702 = vmul.f32 %v3098, %v3636
    %v3703 = vmul.f32 %v3102, %v3636
    %v3704 = vmul.f32 %v3106, %v3636
    %v3705 = vmul.f32 %v3110, %v3636
    %v3706 = vmul.f32 %v3114, %v3636
    %v3707 = vmul.f32 %v3118, %v3636
    %v3708 = vmul.f32 %v3122, %v3636
    %v3709 = vmul.f32 %v3126, %v3636
    %v3710 = vmul.f32 %v3130, %v3636
    %v3711 = vmul.f32 %v3134, %v3636
    %v3712 = vmul.f32 %v3138, %v3636
    %v3713 = vmul.f32 %v3142, %v3636
    %v3714 = vmul.f32 %v3146, %v3636
    %v3715 = vmul.f32 %v3150, %v3636
    %v3716 = vmul.f32 %v3154, %v3636
    %v3717 = vmul.f32 %v3158, %v3636
    %v3718 = vmul.f32 %v3162, %v3636
    %v3719 = vmul.f32 %v3166, %v3636
    %v3720 = vmul.f32 %v3170, %v3636
    %v3721 = vmul.f32 %v3174, %v3636
    %v3722 = vmul.f32 %v3178, %v3636
    %v3723 = vmul.f32 %v3182, %v3636
    %v3724 = vmul.f32 %v3186, %v3636
    %v3725 = vmul.f32 %v3190, %v3636
    %v3726 = vmul.f32 %v3194, %v3636
    %v3727 = vmul.f32 %v3198, %v3636
    %v3728 = vmul.f32 %v3202, %v3636
    %v3729 = vmul.f32 %v3206, %v3636
    %v3730 = vmul.f32 %v3210, %v3636
    %v3731 = vmul.f32 %v3214, %v3636
    %v3732 = vmul.f32 %v3218, %v3636
    %v3733 = vmul.f32 %v3222, %v3636
    %v3734 = vmul.f32 %v3226, %v3636
    %v3735 = vmul.f32 %v3230, %v3636
    %v3736 = vmul.f32 %v3234, %v3636
    %v3737 = vmul.f32 %v3238, %v3636
    %v3738 = vmul.f32 %v3242, %v3636
    %v3739 = vmul.f32 %v3246, %v3636
    %v3740 = vmul.f32 %v3250, %v3636
    %v3741 = vmul.f32 %v3254, %v3636
    %v3742 = vmul.f32 %v3258, %v3636
    %v3743 = vmul.f32 %v3262, %v3636
    %v3744 = vmul.f32 %v3266, %v3636
    %v3745 = vmul.f32 %v3270, %v3636
    %v3746 = vmul.f32 %v3274, %v3636
    %v3747 = vmul.f32 %v3278, %v3636
    %v3748 = vmul.f32 %v3282, %v3636
    %v3749 = vmul.f32 %v3286, %v3636
    %v3750 = vmul.f32 %v3290, %v3636
    %v3751 = vmul.f32 %v3294, %v3636
    %v3752 = vmul.f32 %v3298, %v3636
    %v3753 = vmul.f32 %v3302, %v3636
    %v3754 = vmul.f32 %v3306, %v3636
    %v3755 = vmul.f32 %v3310, %v3636
    %v3756 = vmul.f32 %v3314, %v3636
    %v3757 = vmul.f32 %v3318, %v3636
    %v3758 = vmul.f32 %v3322, %v3636
    %v3759 = vmul.f32 %v3326, %v3636
    %v3760 = vmul.f32 %v3330, %v3636
    %v3761 = vmul.f32 %v3334, %v3636
    %v3762 = vmul.f32 %v3338, %v3636
    %v3763 = vmul.f32 %v3342, %v3636
    %v3764 = vmul.f32 %v3346, %v3636
    %v3765 = vmul.f32 %v3350, %v3636
    %v3766 = vmul.f32 %v3354, %v3636
    %v3767 = vmul.f32 %v3358, %v3636
    %v3768 = vmul.f32 %v3362, %v3636
    %v3769 = vmul.f32 %v3366, %v3636
    %v3770 = vmul.f32 %v3370, %v3636
    %v3771 = vmul.f32 %v3374, %v3636
    %v3772 = vmul.f32 %v3378, %v3636
    %v3773 = vmul.f32 %v3382, %v3636
    %v3774 = vmul.f32 %v3386, %v3636
    %v3775 = vmul.f32 %v3390, %v3636
    %v3776 = vmul.f32 %v3394, %v3636
    %v3777 = vmul.f32 %v3398, %v3636
    %v3778 = vmul.f32 %v3402, %v3636
    %v3779 = vmul.f32 %v3406, %v3636
    %v3780 = vmul.f32 %v3410, %v3636
    %v3781 = vmul.f32 %v3414, %v3636
    %v3782 = vmul.f32 %v3418, %v3636
    %v3783 = vmul.f32 %v3422, %v3636
    %v3784 = vmul.f32 %v3426, %v3636
    %v3785 = vmul.f32 %v3430, %v3636
    %v3786 = vmul.f32 %v3434, %v3636
    %v3787 = vmul.f32 %v3438, %v3636
    %v3788 = vmul.f32 %v3442, %v3636
    %v3789 = vmul.f32 %v3446, %v3636
    %v3790 = vmul.f32 %v3450, %v3636
    %v3791 = vmul.f32 %v3454, %v3636
    %v3792 = vmul.f32 %v3458, %v3636
    %v3793 = vmul.f32 %v3462, %v3636
    %v3794 = vmul.f32 %v3466, %v3636
    %v3795 = vmul.f32 %v3470, %v3636
    %v3796 = vmul.f32 %v3474, %v3636
    %v3797 = vmul.f32 %v3478, %v3636
    %v3798 = vmul.f32 %v3482, %v3636
    %v3799 = vmul.f32 %v3486, %v3636
    %v3800 = vmul.f32 %v3490, %v3636
    %v3801 = vmul.f32 %v3494, %v3636
    %v3802 = vmul.f32 %v3498, %v3636
    %v3803 = vmul.f32 %v3502, %v3636
    %v3804 = vmul.f32 %v3506, %v3636
    %v3805 = vmul.f32 %v3510, %v3636
    %v3806 = vmul.f32 %v3514, %v3636
    %v3807 = vmul.f32 %v3518, %v3636
    %v3808 = vmul.f32 %v3522, %v3636
    %v3809 = vmul.f32 %v3526, %v3636
    %v3810 = vmul.f32 %v3530, %v3636
    %v3811 = vmul.f32 %v3534, %v3636
    %v3812 = vmul.f32 %v3538, %v3636
    %v3813 = vmul.f32 %v3542, %v3636
    %v3814 = vmul.f32 %v3546, %v3636
    %v3815 = vmul.f32 %v3550, %v3636
    %v3816 = vmul.f32 %v3554, %v3636
    %v3817 = vmul.f32 %v3558, %v3636
    %v3818 = vmul.f32 %v3562, %v3636
    %v3819 = vmul.f32 %v3566, %v3636
    %v3820 = vmul.f32 %v3570, %v3636
    %v3821 = vmul.f32 %v3574, %v3636
    %v3822 = vmul.f32 %v3578, %v3636
    %v3823 = vmul.f32 %v3582, %v3636
    %v3824 = vmul.f32 %v3586, %v3636
    %v3825 = vmul.f32 %v3590, %v3636
    %v3826 = vmul.f32 %v3594, %v3636
    %v3827 = vmul.f32 %v3598, %v3636
    %v3828 = vmul.f32 %v3602, %v3636
    %v3829 = vmul.f32 %v3606, %v3636
    %v3830 = vmul.f32 %v3610, %v3636
    %v3831 = vmul.f32 %v3614, %v3636
    %v3832 = vmul.f32 %v3618, %v3636
    %v3833 = vmul.f32 %v3622, %v3636
    %v3834 = vmul.f32 %v3626, %v3636
    %v3835 = vmul.f32 %v3630, %v3636
    %v3836 = vmul.f32 %v3634, %v3636
    %v3837 = vadd.f32 %v2636, %v3637
    %v3838 = vadd.f32 %v2637, %v3638
    %v3839 = vadd.f32 %v2638, %v3639
    %v3840 = vadd.f32 %v2639, %v3640
    %v3841 = vadd.f32 %v2640, %v3641
    %v3842 = vadd.f32 %v2641, %v3642
    %v3843 = vadd.f32 %v2642, %v3643
    %v3844 = vadd.f32 %v2643, %v3644
    %v3845 = vadd.f32 %v2644, %v3645
    %v3846 = vadd.f32 %v2645, %v3646
    %v3847 = vadd.f32 %v2646, %v3647
    %v3848 = vadd.f32 %v2647, %v3648
    %v3849 = vadd.f32 %v2648, %v3649
    %v3850 = vadd.f32 %v2649, %v3650
    %v3851 = vadd.f32 %v2650, %v3651
    %v3852 = vadd.f32 %v2651, %v3652
    %v3853 = vadd.f32 %v2652, %v3653
    %v3854 = vadd.f32 %v2653, %v3654
    %v3855 = vadd.f32 %v2654, %v3655
    %v3856 = vadd.f32 %v2655, %v3656
    %v3857 = vadd.f32 %v2656, %v3657
    %v3858 = vadd.f32 %v2657, %v3658
    %v3859 = vadd.f32 %v2658, %v3659
    %v3860 = vadd.f32 %v2659, %v3660
    %v3861 = vadd.f32 %v2660, %v3661
    %v3862 = vadd.f32 %v2661, %v3662
    %v3863 = vadd.f32 %v2662, %v3663
    %v3864 = vadd.f32 %v2663, %v3664
    %v3865 = vadd.f32 %v2664, %v3665
    %v3866 = vadd.f32 %v2665, %v3666
    %v3867 = vadd.f32 %v2666, %v3667
    %v3868 = vadd.f32 %v2667, %v3668
    %v3869 = vadd.f32 %v2668, %v3669
    %v3870 = vadd.f32 %v2669, %v3670
    %v3871 = vadd.f32 %v2670, %v3671
    %v3872 = vadd.f32 %v2671, %v3672
    %v3873 = vadd.f32 %v2672, %v3673
    %v3874 = vadd.f32 %v2673, %v3674
    %v3875 = vadd.f32 %v2674, %v3675
    %v3876 = vadd.f32 %v2675, %v3676
    %v3877 = vadd.f32 %v2676, %v3677
    %v3878 = vadd.f32 %v2677, %v3678
    %v3879 = vadd.f32 %v2678, %v3679
    %v3880 = vadd.f32 %v2679, %v3680
    %v3881 = vadd.f32 %v2680, %v3681
    %v3882 = vadd.f32 %v2681, %v3682
    %v3883 = vadd.f32 %v2682, %v3683
    %v3884 = vadd.f32 %v2683, %v3684
    %v3885 = vadd.f32 %v2684, %v3685
    %v3886 = vadd.f32 %v2685, %v3686
    %v3887 = vadd.f32 %v2686, %v3687
    %v3888 = vadd.f32 %v2687, %v3688
    %v3889 = vadd.f32 %v2688, %v3689
    %v3890 = vadd.f32 %v2689, %v3690
    %v3891 = vadd.f32 %v2690, %v3691
    %v3892 = vadd.f32 %v2691, %v3692
    %v3893 = vadd.f32 %v2692, %v3693
    %v3894 = vadd.f32 %v2693, %v3694
    %v3895 = vadd.f32 %v2694, %v3695
    %v3896 = vadd.f32 %v2695, %v3696
    %v3897 = vadd.f32 %v2696, %v3697
    %v3898 = vadd.f32 %v2697, %v3698
    %v3899 = vadd.f32 %v2698, %v3699
    %v3900 = vadd.f32 %v2699, %v3700
    %v3901 = vadd.f32 %v2700, %v3701
    %v3902 = vadd.f32 %v2701, %v3702
    %v3903 = vadd.f32 %v2702, %v3703
    %v3904 = vadd.f32 %v2703, %v3704
    %v3905 = vadd.f32 %v2704, %v3705
    %v3906 = vadd.f32 %v2705, %v3706
    %v3907 = vadd.f32 %v2706, %v3707
    %v3908 = vadd.f32 %v2707, %v3708
    %v3909 = vadd.f32 %v2708, %v3709
    %v3910 = vadd.f32 %v2709, %v3710
    %v3911 = vadd.f32 %v2710, %v3711
    %v3912 = vadd.f32 %v2711, %v3712
    %v3913 = vadd.f32 %v2712, %v3713
    %v3914 = vadd.f32 %v2713, %v3714
    %v3915 = vadd.f32 %v2714, %v3715
    %v3916 = vadd.f32 %v2715, %v3716
    %v3917 = vadd.f32 %v2716, %v3717
    %v3918 = vadd.f32 %v2717, %v3718
    %v3919 = vadd.f32 %v2718, %v3719
    %v3920 = vadd.f32 %v2719, %v3720
    %v3921 = vadd.f32 %v2720, %v3721
    %v3922 = vadd.f32 %v2721, %v3722
    %v3923 = vadd.f32 %v2722, %v3723
    %v3924 = vadd.f32 %v2723, %v3724
    %v3925 = vadd.f32 %v2724, %v3725
    %v3926 = vadd.f32 %v2725, %v3726
    %v3927 = vadd.f32 %v2726, %v3727
    %v3928 = vadd.f32 %v2727, %v3728
    %v3929 = vadd.f32 %v2728, %v3729
    %v3930 = vadd.f32 %v2729, %v3730
    %v3931 = vadd.f32 %v2730, %v3731
    %v3932 = vadd.f32 %v2731, %v3732
    %v3933 = vadd.f32 %v2732, %v3733
    %v3934 = vadd.f32 %v2733, %v3734
    %v3935 = vadd.f32 %v2734, %v3735
    %v3936 = vadd.f32 %v2735, %v3736
    %v3937 = vadd.f32 %v2736, %v3737
    %v3938 = vadd.f32 %v2737, %v3738
    %v3939 = vadd.f32 %v2738, %v3739
    %v3940 = vadd.f32 %v2739, %v3740
    %v3941 = vadd.f32 %v2740, %v3741
    %v3942 = vadd.f32 %v2741, %v3742
    %v3943 = vadd.f32 %v2742, %v3743
    %v3944 = vadd.f32 %v2743, %v3744
    %v3945 = vadd.f32 %v2744, %v3745
    %v3946 = vadd.f32 %v2745, %v3746
    %v3947 = vadd.f32 %v2746, %v3747
    %v3948 = vadd.f32 %v2747, %v3748
    %v3949 = vadd.f32 %v2748, %v3749
    %v3950 = vadd.f32 %v2749, %v3750
    %v3951 = vadd.f32 %v2750, %v3751
    %v3952 = vadd.f32 %v2751, %v3752
    %v3953 = vadd.f32 %v2752, %v3753
    %v3954 = vadd.f32 %v2753, %v3754
    %v3955 = vadd.f32 %v2754, %v3755
    %v3956 = vadd.f32 %v2755, %v3756
    %v3957 = vadd.f32 %v2756, %v3757
    %v3958 = vadd.f32 %v2757, %v3758
    %v3959 = vadd.f32 %v2758, %v3759
    %v3960 = vadd.f32 %v2759, %v3760
    %v3961 = vadd.f32 %v2760, %v3761
    %v3962 = vadd.f32 %v2761, %v3762
    %v3963 = vadd.f32 %v2762, %v3763
    %v3964 = vadd.f32 %v2763, %v3764
    %v3965 = vadd.f32 %v2764, %v3765
    %v3966 = vadd.f32 %v2765, %v3766
    %v3967 = vadd.f32 %v2766, %v3767
    %v3968 = vadd.f32 %v2767, %v3768
    %v3969 = vadd.f32 %v2768, %v3769
    %v3970 = vadd.f32 %v2769, %v3770
    %v3971 = vadd.f32 %v2770, %v3771
    %v3972 = vadd.f32 %v2771, %v3772
    %v3973 = vadd.f32 %v2772, %v3773
    %v3974 = vadd.f32 %v2773, %v3774
    %v3975 = vadd.f32 %v2774, %v3775
    %v3976 = vadd.f32 %v2775, %v3776
    %v3977 = vadd.f32 %v2776, %v3777
    %v3978 = vadd.f32 %v2777, %v3778
    %v3979 = vadd.f32 %v2778, %v3779
    %v3980 = vadd.f32 %v2779, %v3780
    %v3981 = vadd.f32 %v2780, %v3781
    %v3982 = vadd.f32 %v2781, %v3782
    %v3983 = vadd.f32 %v2782, %v3783
    %v3984 = vadd.f32 %v2783, %v3784
    %v3985 = vadd.f32 %v2784, %v3785
    %v3986 = vadd.f32 %v2785, %v3786
    %v3987 = vadd.f32 %v2786, %v3787
    %v3988 = vadd.f32 %v2787, %v3788
    %v3989 = vadd.f32 %v2788, %v3789
    %v3990 = vadd.f32 %v2789, %v3790
    %v3991 = vadd.f32 %v2790, %v3791
    %v3992 = vadd.f32 %v2791, %v3792
    %v3993 = vadd.f32 %v2792, %v3793
    %v3994 = vadd.f32 %v2793, %v3794
    %v3995 = vadd.f32 %v2794, %v3795
    %v3996 = vadd.f32 %v2795, %v3796
    %v3997 = vadd.f32 %v2796, %v3797
    %v3998 = vadd.f32 %v2797, %v3798
    %v3999 = vadd.f32 %v2798, %v3799
    %v4000 = vadd.f32 %v2799, %v3800
    %v4001 = vadd.f32 %v2800, %v3801
    %v4002 = vadd.f32 %v2801, %v3802
    %v4003 = vadd.f32 %v2802, %v3803
    %v4004 = vadd.f32 %v2803, %v3804
    %v4005 = vadd.f32 %v2804, %v3805
    %v4006 = vadd.f32 %v2805, %v3806
    %v4007 = vadd.f32 %v2806, %v3807
    %v4008 = vadd.f32 %v2807, %v3808
    %v4009 = vadd.f32 %v2808, %v3809
    %v4010 = vadd.f32 %v2809, %v3810
    %v4011 = vadd.f32 %v2810, %v3811
    %v4012 = vadd.f32 %v2811, %v3812
    %v4013 = vadd.f32 %v2812, %v3813
    %v4014 = vadd.f32 %v2813, %v3814
    %v4015 = vadd.f32 %v2814, %v3815
    %v4016 = vadd.f32 %v2815, %v3816
    %v4017 = vadd.f32 %v2816, %v3817
    %v4018 = vadd.f32 %v2817, %v3818
    %v4019 = vadd.f32 %v2818, %v3819
    %v4020 = vadd.f32 %v2819, %v3820
    %v4021 = vadd.f32 %v2820, %v3821
    %v4022 = vadd.f32 %v2821, %v3822
    %v4023 = vadd.f32 %v2822, %v3823
    %v4024 = vadd.f32 %v2823, %v3824
    %v4025 = vadd.f32 %v2824, %v3825
    %v4026 = vadd.f32 %v2825, %v3826
    %v4027 = vadd.f32 %v2826, %v3827
    %v4028 = vadd.f32 %v2827, %v3828
    %v4029 = vadd.f32 %v2828, %v3829
    %v4030 = vadd.f32 %v2829, %v3830
    %v4031 = vadd.f32 %v2830, %v3831
    %v4032 = vadd.f32 %v2831, %v3832
    %v4033 = vadd.f32 %v2832, %v3833
    %v4034 = vadd.f32 %v2833, %v3834
    %v4035 = vadd.f32 %v2834, %v3835
    %v4036 = vadd.f32 %v2835, %v3836
    %4037 = vset.pattern.permute.xlu0 3
    %4038 = vperm.xlu0 %4037, %v31
    %v4039 = vpop.permute.xlu0 %4038
    %4041 = vset.pattern.permute.xlu0 3
    %4042 = vperm.xlu0 %4041, %v32
    %v4043 = vpop.permute.xlu0 %4042
    %4045 = vset.pattern.permute.xlu0 3
    %4046 = vperm.xlu0 %4045, %v33
    %v4047 = vpop.permute.xlu0 %4046
    %4049 = vset.pattern.permute.xlu0 3
    %4050 = vperm.xlu0 %4049, %v34
    %v4051 = vpop.permute.xlu0 %4050
    %4053 = vset.pattern.permute.xlu0 3
    %4054 = vperm.xlu0 %4053, %v35
    %v4055 = vpop.permute.xlu0 %4054
    %4057 = vset.pattern.permute.xlu0 3
    %4058 = vperm.xlu0 %4057, %v36
    %v4059 = vpop.permute.xlu0 %4058
    %4061 = vset.pattern.permute.xlu0 3
    %4062 = vperm.xlu0 %4061, %v37
    %v4063 = vpop.permute.xlu0 %4062
    %4065 = vset.pattern.permute.xlu0 3
    %4066 = vperm.xlu0 %4065, %v38
    %v4067 = vpop.permute.xlu0 %4066
    %4069 = vset.pattern.permute.xlu0 3
    %4070 = vperm.xlu0 %4069, %v39
    %v4071 = vpop.permute.xlu0 %4070
    %4073 = vset.pattern.permute.xlu0 3
    %4074 = vperm.xlu0 %4073, %v40
    %v4075 = vpop.permute.xlu0 %4074
    %4077 = vset.pattern.permute.xlu0 3
    %4078 = vperm.xlu0 %4077, %v41
    %v4079 = vpop.permute.xlu0 %4078
    %4081 = vset.pattern.permute.xlu0 3
    %4082 = vperm.xlu0 %4081, %v42
    %v4083 = vpop.permute.xlu0 %4082
    %4085 = vset.pattern.permute.xlu0 3
    %4086 = vperm.xlu0 %4085, %v43
    %v4087 = vpop.permute.xlu0 %4086
    %4089 = vset.pattern.permute.xlu0 3
    %4090 = vperm.xlu0 %4089, %v44
    %v4091 = vpop.permute.xlu0 %4090
    %4093 = vset.pattern.permute.xlu0 3
    %4094 = vperm.xlu0 %4093, %v45
    %v4095 = vpop.permute.xlu0 %4094
    %4097 = vset.pattern.permute.xlu0 3
    %4098 = vperm.xlu0 %4097, %v46
    %v4099 = vpop.permute.xlu0 %4098
    %4101 = vset.pattern.permute.xlu0 3
    %4102 = vperm.xlu0 %4101, %v47
    %v4103 = vpop.permute.xlu0 %4102
    %4105 = vset.pattern.permute.xlu0 3
    %4106 = vperm.xlu0 %4105, %v48
    %v4107 = vpop.permute.xlu0 %4106
    %4109 = vset.pattern.permute.xlu0 3
    %4110 = vperm.xlu0 %4109, %v49
    %v4111 = vpop.permute.xlu0 %4110
    %4113 = vset.pattern.permute.xlu0 3
    %4114 = vperm.xlu0 %4113, %v50
    %v4115 = vpop.permute.xlu0 %4114
    %4117 = vset.pattern.permute.xlu0 3
    %4118 = vperm.xlu0 %4117, %v51
    %v4119 = vpop.permute.xlu0 %4118
    %4121 = vset.pattern.permute.xlu0 3
    %4122 = vperm.xlu0 %4121, %v52
    %v4123 = vpop.permute.xlu0 %4122
    %4125 = vset.pattern.permute.xlu0 3
    %4126 = vperm.xlu0 %4125, %v53
    %v4127 = vpop.permute.xlu0 %4126
    %4129 = vset.pattern.permute.xlu0 3
    %4130 = vperm.xlu0 %4129, %v54
    %v4131 = vpop.permute.xlu0 %4130
    %4133 = vset.pattern.permute.xlu0 3
    %4134 = vperm.xlu0 %4133, %v55
    %v4135 = vpop.permute.xlu0 %4134
    %4137 = vset.pattern.permute.xlu0 3
    %4138 = vperm.xlu0 %4137, %v56
    %v4139 = vpop.permute.xlu0 %4138
    %4141 = vset.pattern.permute.xlu0 3
    %4142 = vperm.xlu0 %4141, %v57
    %v4143 = vpop.permute.xlu0 %4142
    %4145 = vset.pattern.permute.xlu0 3
    %4146 = vperm.xlu0 %4145, %v58
    %v4147 = vpop.permute.xlu0 %4146
    %4149 = vset.pattern.permute.xlu0 3
    %4150 = vperm.xlu0 %4149, %v59
    %v4151 = vpop.permute.xlu0 %4150
    %4153 = vset.pattern.permute.xlu0 3
    %4154 = vperm.xlu0 %4153, %v60
    %v4155 = vpop.permute.xlu0 %4154
    %4157 = vset.pattern.permute.xlu0 3
    %4158 = vperm.xlu0 %4157, %v61
    %v4159 = vpop.permute.xlu0 %4158
    %4161 = vset.pattern.permute.xlu0 3
    %4162 = vperm.xlu0 %4161, %v62
    %v4163 = vpop.permute.xlu0 %4162
    %4165 = vset.pattern.permute.xlu0 3
    %4166 = vperm.xlu0 %4165, %v63
    %v4167 = vpop.permute.xlu0 %4166
    %4169 = vset.pattern.permute.xlu0 3
    %4170 = vperm.xlu0 %4169, %v64
    %v4171 = vpop.permute.xlu0 %4170
    %4173 = vset.pattern.permute.xlu0 3
    %4174 = vperm.xlu0 %4173, %v65
    %v4175 = vpop.permute.xlu0 %4174
    %4177 = vset.pattern.permute.xlu0 3
    %4178 = vperm.xlu0 %4177, %v66
    %v4179 = vpop.permute.xlu0 %4178
    %4181 = vset.pattern.permute.xlu0 3
    %4182 = vperm.xlu0 %4181, %v67
    %v4183 = vpop.permute.xlu0 %4182
    %4185 = vset.pattern.permute.xlu0 3
    %4186 = vperm.xlu0 %4185, %v68
    %v4187 = vpop.permute.xlu0 %4186
    %4189 = vset.pattern.permute.xlu0 3
    %4190 = vperm.xlu0 %4189, %v69
    %v4191 = vpop.permute.xlu0 %4190
    %4193 = vset.pattern.permute.xlu0 3
    %4194 = vperm.xlu0 %4193, %v70
    %v4195 = vpop.permute.xlu0 %4194
    %4197 = vset.pattern.permute.xlu0 3
    %4198 = vperm.xlu0 %4197, %v71
    %v4199 = vpop.permute.xlu0 %4198
    %4201 = vset.pattern.permute.xlu0 3
    %4202 = vperm.xlu0 %4201, %v72
    %v4203 = vpop.permute.xlu0 %4202
    %4205 = vset.pattern.permute.xlu0 3
    %4206 = vperm.xlu0 %4205, %v73
    %v4207 = vpop.permute.xlu0 %4206
    %4209 = vset.pattern.permute.xlu0 3
    %4210 = vperm.xlu0 %4209, %v74
    %v4211 = vpop.permute.xlu0 %4210
    %4213 = vset.pattern.permute.xlu0 3
    %4214 = vperm.xlu0 %4213, %v75
    %v4215 = vpop.permute.xlu0 %4214
    %4217 = vset.pattern.permute.xlu0 3
    %4218 = vperm.xlu0 %4217, %v76
    %v4219 = vpop.permute.xlu0 %4218
    %4221 = vset.pattern.permute.xlu0 3
    %4222 = vperm.xlu0 %4221, %v77
    %v4223 = vpop.permute.xlu0 %4222
    %4225 = vset.pattern.permute.xlu0 3
    %4226 = vperm.xlu0 %4225, %v78
    %v4227 = vpop.permute.xlu0 %4226
    %4229 = vset.pattern.permute.xlu0 3
    %4230 = vperm.xlu0 %4229, %v79
    %v4231 = vpop.permute.xlu0 %4230
    %4233 = vset.pattern.permute.xlu0 3
    %4234 = vperm.xlu0 %4233, %v80
    %v4235 = vpop.permute.xlu0 %4234
    %4237 = vset.pattern.permute.xlu0 3
    %4238 = vperm.xlu0 %4237, %v81
    %v4239 = vpop.permute.xlu0 %4238
    %4241 = vset.pattern.permute.xlu0 3
    %4242 = vperm.xlu0 %4241, %v82
    %v4243 = vpop.permute.xlu0 %4242
    %4245 = vset.pattern.permute.xlu0 3
    %4246 = vperm.xlu0 %4245, %v83
    %v4247 = vpop.permute.xlu0 %4246
    %4249 = vset.pattern.permute.xlu0 3
    %4250 = vperm.xlu0 %4249, %v84
    %v4251 = vpop.permute.xlu0 %4250
    %4253 = vset.pattern.permute.xlu0 3
    %4254 = vperm.xlu0 %4253, %v85
    %v4255 = vpop.permute.xlu0 %4254
    %4257 = vset.pattern.permute.xlu0 3
    %4258 = vperm.xlu0 %4257, %v86
    %v4259 = vpop.permute.xlu0 %4258
    %4261 = vset.pattern.permute.xlu0 3
    %4262 = vperm.xlu0 %4261, %v87
    %v4263 = vpop.permute.xlu0 %4262
    %4265 = vset.pattern.permute.xlu0 3
    %4266 = vperm.xlu0 %4265, %v88
    %v4267 = vpop.permute.xlu0 %4266
    %4269 = vset.pattern.permute.xlu0 3
    %4270 = vperm.xlu0 %4269, %v89
    %v4271 = vpop.permute.xlu0 %4270
    %4273 = vset.pattern.permute.xlu0 3
    %4274 = vperm.xlu0 %4273, %v90
    %v4275 = vpop.permute.xlu0 %4274
    %4277 = vset.pattern.permute.xlu0 3
    %4278 = vperm.xlu0 %4277, %v91
    %v4279 = vpop.permute.xlu0 %4278
    %4281 = vset.pattern.permute.xlu0 3
    %4282 = vperm.xlu0 %4281, %v92
    %v4283 = vpop.permute.xlu0 %4282
    %4285 = vset.pattern.permute.xlu0 3
    %4286 = vperm.xlu0 %4285, %v93
    %v4287 = vpop.permute.xlu0 %4286
    %4289 = vset.pattern.permute.xlu0 3
    %4290 = vperm.xlu0 %4289, %v94
    %v4291 = vpop.permute.xlu0 %4290
    %4293 = vset.pattern.permute.xlu0 3
    %4294 = vperm.xlu0 %4293, %v95
    %v4295 = vpop.permute.xlu0 %4294
    %4297 = vset.pattern.permute.xlu0 3
    %4298 = vperm.xlu0 %4297, %v96
    %v4299 = vpop.permute.xlu0 %4298
    %4301 = vset.pattern.permute.xlu0 3
    %4302 = vperm.xlu0 %4301, %v97
    %v4303 = vpop.permute.xlu0 %4302
    %4305 = vset.pattern.permute.xlu0 3
    %4306 = vperm.xlu0 %4305, %v98
    %v4307 = vpop.permute.xlu0 %4306
    %4309 = vset.pattern.permute.xlu0 3
    %4310 = vperm.xlu0 %4309, %v99
    %v4311 = vpop.permute.xlu0 %4310
    %4313 = vset.pattern.permute.xlu0 3
    %4314 = vperm.xlu0 %4313, %v100
    %v4315 = vpop.permute.xlu0 %4314
    %4317 = vset.pattern.permute.xlu0 3
    %4318 = vperm.xlu0 %4317, %v101
    %v4319 = vpop.permute.xlu0 %4318
    %4321 = vset.pattern.permute.xlu0 3
    %4322 = vperm.xlu0 %4321, %v102
    %v4323 = vpop.permute.xlu0 %4322
    %4325 = vset.pattern.permute.xlu0 3
    %4326 = vperm.xlu0 %4325, %v103
    %v4327 = vpop.permute.xlu0 %4326
    %4329 = vset.pattern.permute.xlu0 3
    %4330 = vperm.xlu0 %4329, %v104
    %v4331 = vpop.permute.xlu0 %4330
    %4333 = vset.pattern.permute.xlu0 3
    %4334 = vperm.xlu0 %4333, %v105
    %v4335 = vpop.permute.xlu0 %4334
    %4337 = vset.pattern.permute.xlu0 3
    %4338 = vperm.xlu0 %4337, %v106
    %v4339 = vpop.permute.xlu0 %4338
    %4341 = vset.pattern.permute.xlu0 3
    %4342 = vperm.xlu0 %4341, %v107
    %v4343 = vpop.permute.xlu0 %4342
    %4345 = vset.pattern.permute.xlu0 3
    %4346 = vperm.xlu0 %4345, %v108
    %v4347 = vpop.permute.xlu0 %4346
    %4349 = vset.pattern.permute.xlu0 3
    %4350 = vperm.xlu0 %4349, %v109
    %v4351 = vpop.permute.xlu0 %4350
    %4353 = vset.pattern.permute.xlu0 3
    %4354 = vperm.xlu0 %4353, %v110
    %v4355 = vpop.permute.xlu0 %4354
    %4357 = vset.pattern.permute.xlu0 3
    %4358 = vperm.xlu0 %4357, %v111
    %v4359 = vpop.permute.xlu0 %4358
    %4361 = vset.pattern.permute.xlu0 3
    %4362 = vperm.xlu0 %4361, %v112
    %v4363 = vpop.permute.xlu0 %4362
    %4365 = vset.pattern.permute.xlu0 3
    %4366 = vperm.xlu0 %4365, %v113
    %v4367 = vpop.permute.xlu0 %4366
    %4369 = vset.pattern.permute.xlu0 3
    %4370 = vperm.xlu0 %4369, %v114
    %v4371 = vpop.permute.xlu0 %4370
    %4373 = vset.pattern.permute.xlu0 3
    %4374 = vperm.xlu0 %4373, %v115
    %v4375 = vpop.permute.xlu0 %4374
    %4377 = vset.pattern.permute.xlu0 3
    %4378 = vperm.xlu0 %4377, %v116
    %v4379 = vpop.permute.xlu0 %4378
    %4381 = vset.pattern.permute.xlu0 3
    %4382 = vperm.xlu0 %4381, %v117
    %v4383 = vpop.permute.xlu0 %4382
    %4385 = vset.pattern.permute.xlu0 3
    %4386 = vperm.xlu0 %4385, %v118
    %v4387 = vpop.permute.xlu0 %4386
    %4389 = vset.pattern.permute.xlu0 3
    %4390 = vperm.xlu0 %4389, %v119
    %v4391 = vpop.permute.xlu0 %4390
    %4393 = vset.pattern.permute.xlu0 3
    %4394 = vperm.xlu0 %4393, %v120
    %v4395 = vpop.permute.xlu0 %4394
    %4397 = vset.pattern.permute.xlu0 3
    %4398 = vperm.xlu0 %4397, %v121
    %v4399 = vpop.permute.xlu0 %4398
    %4401 = vset.pattern.permute.xlu0 3
    %4402 = vperm.xlu0 %4401, %v122
    %v4403 = vpop.permute.xlu0 %4402
    %4405 = vset.pattern.permute.xlu0 3
    %4406 = vperm.xlu0 %4405, %v123
    %v4407 = vpop.permute.xlu0 %4406
    %4409 = vset.pattern.permute.xlu0 3
    %4410 = vperm.xlu0 %4409, %v124
    %v4411 = vpop.permute.xlu0 %4410
    %4413 = vset.pattern.permute.xlu0 3
    %4414 = vperm.xlu0 %4413, %v125
    %v4415 = vpop.permute.xlu0 %4414
    %4417 = vset.pattern.permute.xlu0 3
    %4418 = vperm.xlu0 %4417, %v126
    %v4419 = vpop.permute.xlu0 %4418
    %4421 = vset.pattern.permute.xlu0 3
    %4422 = vperm.xlu0 %4421, %v127
    %v4423 = vpop.permute.xlu0 %4422
    %4425 = vset.pattern.permute.xlu0 3
    %4426 = vperm.xlu0 %4425, %v128
    %v4427 = vpop.permute.xlu0 %4426
    %4429 = vset.pattern.permute.xlu0 3
    %4430 = vperm.xlu0 %4429, %v129
    %v4431 = vpop.permute.xlu0 %4430
    %4433 = vset.pattern.permute.xlu0 3
    %4434 = vperm.xlu0 %4433, %v130
    %v4435 = vpop.permute.xlu0 %4434
    %4437 = vset.pattern.permute.xlu0 3
    %4438 = vperm.xlu0 %4437, %v131
    %v4439 = vpop.permute.xlu0 %4438
    %4441 = vset.pattern.permute.xlu0 3
    %4442 = vperm.xlu0 %4441, %v132
    %v4443 = vpop.permute.xlu0 %4442
    %4445 = vset.pattern.permute.xlu0 3
    %4446 = vperm.xlu0 %4445, %v133
    %v4447 = vpop.permute.xlu0 %4446
    %4449 = vset.pattern.permute.xlu0 3
    %4450 = vperm.xlu0 %4449, %v134
    %v4451 = vpop.permute.xlu0 %4450
    %4453 = vset.pattern.permute.xlu0 3
    %4454 = vperm.xlu0 %4453, %v135
    %v4455 = vpop.permute.xlu0 %4454
    %4457 = vset.pattern.permute.xlu0 3
    %4458 = vperm.xlu0 %4457, %v136
    %v4459 = vpop.permute.xlu0 %4458
    %4461 = vset.pattern.permute.xlu0 3
    %4462 = vperm.xlu0 %4461, %v137
    %v4463 = vpop.permute.xlu0 %4462
    %4465 = vset.pattern.permute.xlu0 3
    %4466 = vperm.xlu0 %4465, %v138
    %v4467 = vpop.permute.xlu0 %4466
    %4469 = vset.pattern.permute.xlu0 3
    %4470 = vperm.xlu0 %4469, %v139
    %v4471 = vpop.permute.xlu0 %4470
    %4473 = vset.pattern.permute.xlu0 3
    %4474 = vperm.xlu0 %4473, %v140
    %v4475 = vpop.permute.xlu0 %4474
    %4477 = vset.pattern.permute.xlu0 3
    %4478 = vperm.xlu0 %4477, %v141
    %v4479 = vpop.permute.xlu0 %4478
    %4481 = vset.pattern.permute.xlu0 3
    %4482 = vperm.xlu0 %4481, %v142
    %v4483 = vpop.permute.xlu0 %4482
    %4485 = vset.pattern.permute.xlu0 3
    %4486 = vperm.xlu0 %4485, %v143
    %v4487 = vpop.permute.xlu0 %4486
    %4489 = vset.pattern.permute.xlu0 3
    %4490 = vperm.xlu0 %4489, %v144
    %v4491 = vpop.permute.xlu0 %4490
    %4493 = vset.pattern.permute.xlu0 3
    %4494 = vperm.xlu0 %4493, %v145
    %v4495 = vpop.permute.xlu0 %4494
    %4497 = vset.pattern.permute.xlu0 3
    %4498 = vperm.xlu0 %4497, %v146
    %v4499 = vpop.permute.xlu0 %4498
    %4501 = vset.pattern.permute.xlu0 3
    %4502 = vperm.xlu0 %4501, %v147
    %v4503 = vpop.permute.xlu0 %4502
    %4505 = vset.pattern.permute.xlu0 3
    %4506 = vperm.xlu0 %4505, %v148
    %v4507 = vpop.permute.xlu0 %4506
    %4509 = vset.pattern.permute.xlu0 3
    %4510 = vperm.xlu0 %4509, %v149
    %v4511 = vpop.permute.xlu0 %4510
    %4513 = vset.pattern.permute.xlu0 3
    %4514 = vperm.xlu0 %4513, %v150
    %v4515 = vpop.permute.xlu0 %4514
    %4517 = vset.pattern.permute.xlu0 3
    %4518 = vperm.xlu0 %4517, %v151
    %v4519 = vpop.permute.xlu0 %4518
    %4521 = vset.pattern.permute.xlu0 3
    %4522 = vperm.xlu0 %4521, %v152
    %v4523 = vpop.permute.xlu0 %4522
    %4525 = vset.pattern.permute.xlu0 3
    %4526 = vperm.xlu0 %4525, %v153
    %v4527 = vpop.permute.xlu0 %4526
    %4529 = vset.pattern.permute.xlu0 3
    %4530 = vperm.xlu0 %4529, %v154
    %v4531 = vpop.permute.xlu0 %4530
    %4533 = vset.pattern.permute.xlu0 3
    %4534 = vperm.xlu0 %4533, %v155
    %v4535 = vpop.permute.xlu0 %4534
    %4537 = vset.pattern.permute.xlu0 3
    %4538 = vperm.xlu0 %4537, %v156
    %v4539 = vpop.permute.xlu0 %4538
    %4541 = vset.pattern.permute.xlu0 3
    %4542 = vperm.xlu0 %4541, %v157
    %v4543 = vpop.permute.xlu0 %4542
    %4545 = vset.pattern.permute.xlu0 3
    %4546 = vperm.xlu0 %4545, %v158
    %v4547 = vpop.permute.xlu0 %4546
    %4549 = vset.pattern.permute.xlu0 3
    %4550 = vperm.xlu0 %4549, %v159
    %v4551 = vpop.permute.xlu0 %4550
    %4553 = vset.pattern.permute.xlu0 3
    %4554 = vperm.xlu0 %4553, %v160
    %v4555 = vpop.permute.xlu0 %4554
    %4557 = vset.pattern.permute.xlu0 3
    %4558 = vperm.xlu0 %4557, %v161
    %v4559 = vpop.permute.xlu0 %4558
    %4561 = vset.pattern.permute.xlu0 3
    %4562 = vperm.xlu0 %4561, %v162
    %v4563 = vpop.permute.xlu0 %4562
    %4565 = vset.pattern.permute.xlu0 3
    %4566 = vperm.xlu0 %4565, %v163
    %v4567 = vpop.permute.xlu0 %4566
    %4569 = vset.pattern.permute.xlu0 3
    %4570 = vperm.xlu0 %4569, %v164
    %v4571 = vpop.permute.xlu0 %4570
    %4573 = vset.pattern.permute.xlu0 3
    %4574 = vperm.xlu0 %4573, %v165
    %v4575 = vpop.permute.xlu0 %4574
    %4577 = vset.pattern.permute.xlu0 3
    %4578 = vperm.xlu0 %4577, %v166
    %v4579 = vpop.permute.xlu0 %4578
    %4581 = vset.pattern.permute.xlu0 3
    %4582 = vperm.xlu0 %4581, %v167
    %v4583 = vpop.permute.xlu0 %4582
    %4585 = vset.pattern.permute.xlu0 3
    %4586 = vperm.xlu0 %4585, %v168
    %v4587 = vpop.permute.xlu0 %4586
    %4589 = vset.pattern.permute.xlu0 3
    %4590 = vperm.xlu0 %4589, %v169
    %v4591 = vpop.permute.xlu0 %4590
    %4593 = vset.pattern.permute.xlu0 3
    %4594 = vperm.xlu0 %4593, %v170
    %v4595 = vpop.permute.xlu0 %4594
    %4597 = vset.pattern.permute.xlu0 3
    %4598 = vperm.xlu0 %4597, %v171
    %v4599 = vpop.permute.xlu0 %4598
    %4601 = vset.pattern.permute.xlu0 3
    %4602 = vperm.xlu0 %4601, %v172
    %v4603 = vpop.permute.xlu0 %4602
    %4605 = vset.pattern.permute.xlu0 3
    %4606 = vperm.xlu0 %4605, %v173
    %v4607 = vpop.permute.xlu0 %4606
    %4609 = vset.pattern.permute.xlu0 3
    %4610 = vperm.xlu0 %4609, %v174
    %v4611 = vpop.permute.xlu0 %4610
    %4613 = vset.pattern.permute.xlu0 3
    %4614 = vperm.xlu0 %4613, %v175
    %v4615 = vpop.permute.xlu0 %4614
    %4617 = vset.pattern.permute.xlu0 3
    %4618 = vperm.xlu0 %4617, %v176
    %v4619 = vpop.permute.xlu0 %4618
    %4621 = vset.pattern.permute.xlu0 3
    %4622 = vperm.xlu0 %4621, %v177
    %v4623 = vpop.permute.xlu0 %4622
    %4625 = vset.pattern.permute.xlu0 3
    %4626 = vperm.xlu0 %4625, %v178
    %v4627 = vpop.permute.xlu0 %4626
    %4629 = vset.pattern.permute.xlu0 3
    %4630 = vperm.xlu0 %4629, %v179
    %v4631 = vpop.permute.xlu0 %4630
    %4633 = vset.pattern.permute.xlu0 3
    %4634 = vperm.xlu0 %4633, %v180
    %v4635 = vpop.permute.xlu0 %4634
    %4637 = vset.pattern.permute.xlu0 3
    %4638 = vperm.xlu0 %4637, %v181
    %v4639 = vpop.permute.xlu0 %4638
    %4641 = vset.pattern.permute.xlu0 3
    %4642 = vperm.xlu0 %4641, %v182
    %v4643 = vpop.permute.xlu0 %4642
    %4645 = vset.pattern.permute.xlu0 3
    %4646 = vperm.xlu0 %4645, %v183
    %v4647 = vpop.permute.xlu0 %4646
    %4649 = vset.pattern.permute.xlu0 3
    %4650 = vperm.xlu0 %4649, %v184
    %v4651 = vpop.permute.xlu0 %4650
    %4653 = vset.pattern.permute.xlu0 3
    %4654 = vperm.xlu0 %4653, %v185
    %v4655 = vpop.permute.xlu0 %4654
    %4657 = vset.pattern.permute.xlu0 3
    %4658 = vperm.xlu0 %4657, %v186
    %v4659 = vpop.permute.xlu0 %4658
    %4661 = vset.pattern.permute.xlu0 3
    %4662 = vperm.xlu0 %4661, %v187
    %v4663 = vpop.permute.xlu0 %4662
    %4665 = vset.pattern.permute.xlu0 3
    %4666 = vperm.xlu0 %4665, %v188
    %v4667 = vpop.permute.xlu0 %4666
    %4669 = vset.pattern.permute.xlu0 3
    %4670 = vperm.xlu0 %4669, %v189
    %v4671 = vpop.permute.xlu0 %4670
    %4673 = vset.pattern.permute.xlu0 3
    %4674 = vperm.xlu0 %4673, %v190
    %v4675 = vpop.permute.xlu0 %4674
    %4677 = vset.pattern.permute.xlu0 3
    %4678 = vperm.xlu0 %4677, %v191
    %v4679 = vpop.permute.xlu0 %4678
    %4681 = vset.pattern.permute.xlu0 3
    %4682 = vperm.xlu0 %4681, %v192
    %v4683 = vpop.permute.xlu0 %4682
    %4685 = vset.pattern.permute.xlu0 3
    %4686 = vperm.xlu0 %4685, %v193
    %v4687 = vpop.permute.xlu0 %4686
    %4689 = vset.pattern.permute.xlu0 3
    %4690 = vperm.xlu0 %4689, %v194
    %v4691 = vpop.permute.xlu0 %4690
    %4693 = vset.pattern.permute.xlu0 3
    %4694 = vperm.xlu0 %4693, %v195
    %v4695 = vpop.permute.xlu0 %4694
    %4697 = vset.pattern.permute.xlu0 3
    %4698 = vperm.xlu0 %4697, %v196
    %v4699 = vpop.permute.xlu0 %4698
    %4701 = vset.pattern.permute.xlu0 3
    %4702 = vperm.xlu0 %4701, %v197
    %v4703 = vpop.permute.xlu0 %4702
    %4705 = vset.pattern.permute.xlu0 3
    %4706 = vperm.xlu0 %4705, %v198
    %v4707 = vpop.permute.xlu0 %4706
    %4709 = vset.pattern.permute.xlu0 3
    %4710 = vperm.xlu0 %4709, %v199
    %v4711 = vpop.permute.xlu0 %4710
    %4713 = vset.pattern.permute.xlu0 3
    %4714 = vperm.xlu0 %4713, %v200
    %v4715 = vpop.permute.xlu0 %4714
    %4717 = vset.pattern.permute.xlu0 3
    %4718 = vperm.xlu0 %4717, %v201
    %v4719 = vpop.permute.xlu0 %4718
    %4721 = vset.pattern.permute.xlu0 3
    %4722 = vperm.xlu0 %4721, %v202
    %v4723 = vpop.permute.xlu0 %4722
    %4725 = vset.pattern.permute.xlu0 3
    %4726 = vperm.xlu0 %4725, %v203
    %v4727 = vpop.permute.xlu0 %4726
    %4729 = vset.pattern.permute.xlu0 3
    %4730 = vperm.xlu0 %4729, %v204
    %v4731 = vpop.permute.xlu0 %4730
    %4733 = vset.pattern.permute.xlu0 3
    %4734 = vperm.xlu0 %4733, %v205
    %v4735 = vpop.permute.xlu0 %4734
    %4737 = vset.pattern.permute.xlu0 3
    %4738 = vperm.xlu0 %4737, %v206
    %v4739 = vpop.permute.xlu0 %4738
    %4741 = vset.pattern.permute.xlu0 3
    %4742 = vperm.xlu0 %4741, %v207
    %v4743 = vpop.permute.xlu0 %4742
    %4745 = vset.pattern.permute.xlu0 3
    %4746 = vperm.xlu0 %4745, %v208
    %v4747 = vpop.permute.xlu0 %4746
    %4749 = vset.pattern.permute.xlu0 3
    %4750 = vperm.xlu0 %4749, %v209
    %v4751 = vpop.permute.xlu0 %4750
    %4753 = vset.pattern.permute.xlu0 3
    %4754 = vperm.xlu0 %4753, %v210
    %v4755 = vpop.permute.xlu0 %4754
    %4757 = vset.pattern.permute.xlu0 3
    %4758 = vperm.xlu0 %4757, %v211
    %v4759 = vpop.permute.xlu0 %4758
    %4761 = vset.pattern.permute.xlu0 3
    %4762 = vperm.xlu0 %4761, %v212
    %v4763 = vpop.permute.xlu0 %4762
    %4765 = vset.pattern.permute.xlu0 3
    %4766 = vperm.xlu0 %4765, %v213
    %v4767 = vpop.permute.xlu0 %4766
    %4769 = vset.pattern.permute.xlu0 3
    %4770 = vperm.xlu0 %4769, %v214
    %v4771 = vpop.permute.xlu0 %4770
    %4773 = vset.pattern.permute.xlu0 3
    %4774 = vperm.xlu0 %4773, %v215
    %v4775 = vpop.permute.xlu0 %4774
    %4777 = vset.pattern.permute.xlu0 3
    %4778 = vperm.xlu0 %4777, %v216
    %v4779 = vpop.permute.xlu0 %4778
    %4781 = vset.pattern.permute.xlu0 3
    %4782 = vperm.xlu0 %4781, %v217
    %v4783 = vpop.permute.xlu0 %4782
    %4785 = vset.pattern.permute.xlu0 3
    %4786 = vperm.xlu0 %4785, %v218
    %v4787 = vpop.permute.xlu0 %4786
    %4789 = vset.pattern.permute.xlu0 3
    %4790 = vperm.xlu0 %4789, %v219
    %v4791 = vpop.permute.xlu0 %4790
    %4793 = vset.pattern.permute.xlu0 3
    %4794 = vperm.xlu0 %4793, %v220
    %v4795 = vpop.permute.xlu0 %4794
    %4797 = vset.pattern.permute.xlu0 3
    %4798 = vperm.xlu0 %4797, %v221
    %v4799 = vpop.permute.xlu0 %4798
    %4801 = vset.pattern.permute.xlu0 3
    %4802 = vperm.xlu0 %4801, %v222
    %v4803 = vpop.permute.xlu0 %4802
    %4805 = vset.pattern.permute.xlu0 3
    %4806 = vperm.xlu0 %4805, %v223
    %v4807 = vpop.permute.xlu0 %4806
    %4809 = vset.pattern.permute.xlu0 3
    %4810 = vperm.xlu0 %4809, %v224
    %v4811 = vpop.permute.xlu0 %4810
    %4813 = vset.pattern.permute.xlu0 3
    %4814 = vperm.xlu0 %4813, %v225
    %v4815 = vpop.permute.xlu0 %4814
    %4817 = vset.pattern.permute.xlu0 3
    %4818 = vperm.xlu0 %4817, %v226
    %v4819 = vpop.permute.xlu0 %4818
    %4821 = vset.pattern.permute.xlu0 3
    %4822 = vperm.xlu0 %4821, %v227
    %v4823 = vpop.permute.xlu0 %4822
    %4825 = vset.pattern.permute.xlu0 3
    %4826 = vperm.xlu0 %4825, %v228
    %v4827 = vpop.permute.xlu0 %4826
    %4829 = vset.pattern.permute.xlu0 3
    %4830 = vperm.xlu0 %4829, %v229
    %v4831 = vpop.permute.xlu0 %4830
    %4833 = vset.pattern.permute.xlu0 3
    %4834 = vperm.xlu0 %4833, %v230
    %v4835 = vpop.permute.xlu0 %4834
    %v4837 = vperm.slane %v231, 3
    %v4838 = vmul.f32 %v4039, %v4837
    %v4839 = vmul.f32 %v4043, %v4837
    %v4840 = vmul.f32 %v4047, %v4837
    %v4841 = vmul.f32 %v4051, %v4837
    %v4842 = vmul.f32 %v4055, %v4837
    %v4843 = vmul.f32 %v4059, %v4837
    %v4844 = vmul.f32 %v4063, %v4837
    %v4845 = vmul.f32 %v4067, %v4837
    %v4846 = vmul.f32 %v4071, %v4837
    %v4847 = vmul.f32 %v4075, %v4837
    %v4848 = vmul.f32 %v4079, %v4837
    %v4849 = vmul.f32 %v4083, %v4837
    %v4850 = vmul.f32 %v4087, %v4837
    %v4851 = vmul.f32 %v4091, %v4837
    %v4852 = vmul.f32 %v4095, %v4837
    %v4853 = vmul.f32 %v4099, %v4837
    %v4854 = vmul.f32 %v4103, %v4837
    %v4855 = vmul.f32 %v4107, %v4837
    %v4856 = vmul.f32 %v4111, %v4837
    %v4857 = vmul.f32 %v4115, %v4837
    %v4858 = vmul.f32 %v4119, %v4837
    %v4859 = vmul.f32 %v4123, %v4837
    %v4860 = vmul.f32 %v4127, %v4837
    %v4861 = vmul.f32 %v4131, %v4837
    %v4862 = vmul.f32 %v4135, %v4837
    %v4863 = vmul.f32 %v4139, %v4837
    %v4864 = vmul.f32 %v4143, %v4837
    %v4865 = vmul.f32 %v4147, %v4837
    %v4866 = vmul.f32 %v4151, %v4837
    %v4867 = vmul.f32 %v4155, %v4837
    %v4868 = vmul.f32 %v4159, %v4837
    %v4869 = vmul.f32 %v4163, %v4837
    %v4870 = vmul.f32 %v4167, %v4837
    %v4871 = vmul.f32 %v4171, %v4837
    %v4872 = vmul.f32 %v4175, %v4837
    %v4873 = vmul.f32 %v4179, %v4837
    %v4874 = vmul.f32 %v4183, %v4837
    %v4875 = vmul.f32 %v4187, %v4837
    %v4876 = vmul.f32 %v4191, %v4837
    %v4877 = vmul.f32 %v4195, %v4837
    %v4878 = vmul.f32 %v4199, %v4837
    %v4879 = vmul.f32 %v4203, %v4837
    %v4880 = vmul.f32 %v4207, %v4837
    %v4881 = vmul.f32 %v4211, %v4837
    %v4882 = vmul.f32 %v4215, %v4837
    %v4883 = vmul.f32 %v4219, %v4837
    %v4884 = vmul.f32 %v4223, %v4837
    %v4885 = vmul.f32 %v4227, %v4837
    %v4886 = vmul.f32 %v4231, %v4837
    %v4887 = vmul.f32 %v4235, %v4837
    %v4888 = vmul.f32 %v4239, %v4837
    %v4889 = vmul.f32 %v4243, %v4837
    %v4890 = vmul.f32 %v4247, %v4837
    %v4891 = vmul.f32 %v4251, %v4837
    %v4892 = vmul.f32 %v4255, %v4837
    %v4893 = vmul.f32 %v4259, %v4837
    %v4894 = vmul.f32 %v4263, %v4837
    %v4895 = vmul.f32 %v4267, %v4837
    %v4896 = vmul.f32 %v4271, %v4837
    %v4897 = vmul.f32 %v4275, %v4837
    %v4898 = vmul.f32 %v4279, %v4837
    %v4899 = vmul.f32 %v4283, %v4837
    %v4900 = vmul.f32 %v4287, %v4837
    %v4901 = vmul.f32 %v4291, %v4837
    %v4902 = vmul.f32 %v4295, %v4837
    %v4903 = vmul.f32 %v4299, %v4837
    %v4904 = vmul.f32 %v4303, %v4837
    %v4905 = vmul.f32 %v4307, %v4837
    %v4906 = vmul.f32 %v4311, %v4837
    %v4907 = vmul.f32 %v4315, %v4837
    %v4908 = vmul.f32 %v4319, %v4837
    %v4909 = vmul.f32 %v4323, %v4837
    %v4910 = vmul.f32 %v4327, %v4837
    %v4911 = vmul.f32 %v4331, %v4837
    %v4912 = vmul.f32 %v4335, %v4837
    %v4913 = vmul.f32 %v4339, %v4837
    %v4914 = vmul.f32 %v4343, %v4837
    %v4915 = vmul.f32 %v4347, %v4837
    %v4916 = vmul.f32 %v4351, %v4837
    %v4917 = vmul.f32 %v4355, %v4837
    %v4918 = vmul.f32 %v4359, %v4837
    %v4919 = vmul.f32 %v4363, %v4837
    %v4920 = vmul.f32 %v4367, %v4837
    %v4921 = vmul.f32 %v4371, %v4837
    %v4922 = vmul.f32 %v4375, %v4837
    %v4923 = vmul.f32 %v4379, %v4837
    %v4924 = vmul.f32 %v4383, %v4837
    %v4925 = vmul.f32 %v4387, %v4837
    %v4926 = vmul.f32 %v4391, %v4837
    %v4927 = vmul.f32 %v4395, %v4837
    %v4928 = vmul.f32 %v4399, %v4837
    %v4929 = vmul.f32 %v4403, %v4837
    %v4930 = vmul.f32 %v4407, %v4837
    %v4931 = vmul.f32 %v4411, %v4837
    %v4932 = vmul.f32 %v4415, %v4837
    %v4933 = vmul.f32 %v4419, %v4837
    %v4934 = vmul.f32 %v4423, %v4837
    %v4935 = vmul.f32 %v4427, %v4837
    %v4936 = vmul.f32 %v4431, %v4837
    %v4937 = vmul.f32 %v4435, %v4837
    %v4938 = vmul.f32 %v4439, %v4837
    %v4939 = vmul.f32 %v4443, %v4837
    %v4940 = vmul.f32 %v4447, %v4837
    %v4941 = vmul.f32 %v4451, %v4837
    %v4942 = vmul.f32 %v4455, %v4837
    %v4943 = vmul.f32 %v4459, %v4837
    %v4944 = vmul.f32 %v4463, %v4837
    %v4945 = vmul.f32 %v4467, %v4837
    %v4946 = vmul.f32 %v4471, %v4837
    %v4947 = vmul.f32 %v4475, %v4837
    %v4948 = vmul.f32 %v4479, %v4837
    %v4949 = vmul.f32 %v4483, %v4837
    %v4950 = vmul.f32 %v4487, %v4837
    %v4951 = vmul.f32 %v4491, %v4837
    %v4952 = vmul.f32 %v4495, %v4837
    %v4953 = vmul.f32 %v4499, %v4837
    %v4954 = vmul.f32 %v4503, %v4837
    %v4955 = vmul.f32 %v4507, %v4837
    %v4956 = vmul.f32 %v4511, %v4837
    %v4957 = vmul.f32 %v4515, %v4837
    %v4958 = vmul.f32 %v4519, %v4837
    %v4959 = vmul.f32 %v4523, %v4837
    %v4960 = vmul.f32 %v4527, %v4837
    %v4961 = vmul.f32 %v4531, %v4837
    %v4962 = vmul.f32 %v4535, %v4837
    %v4963 = vmul.f32 %v4539, %v4837
    %v4964 = vmul.f32 %v4543, %v4837
    %v4965 = vmul.f32 %v4547, %v4837
    %v4966 = vmul.f32 %v4551, %v4837
    %v4967 = vmul.f32 %v4555, %v4837
    %v4968 = vmul.f32 %v4559, %v4837
    %v4969 = vmul.f32 %v4563, %v4837
    %v4970 = vmul.f32 %v4567, %v4837
    %v4971 = vmul.f32 %v4571, %v4837
    %v4972 = vmul.f32 %v4575, %v4837
    %v4973 = vmul.f32 %v4579, %v4837
    %v4974 = vmul.f32 %v4583, %v4837
    %v4975 = vmul.f32 %v4587, %v4837
    %v4976 = vmul.f32 %v4591, %v4837
    %v4977 = vmul.f32 %v4595, %v4837
    %v4978 = vmul.f32 %v4599, %v4837
    %v4979 = vmul.f32 %v4603, %v4837
    %v4980 = vmul.f32 %v4607, %v4837
    %v4981 = vmul.f32 %v4611, %v4837
    %v4982 = vmul.f32 %v4615, %v4837
    %v4983 = vmul.f32 %v4619, %v4837
    %v4984 = vmul.f32 %v4623, %v4837
    %v4985 = vmul.f32 %v4627, %v4837
    %v4986 = vmul.f32 %v4631, %v4837
    %v4987 = vmul.f32 %v4635, %v4837
    %v4988 = vmul.f32 %v4639, %v4837
    %v4989 = vmul.f32 %v4643, %v4837
    %v4990 = vmul.f32 %v4647, %v4837
    %v4991 = vmul.f32 %v4651, %v4837
    %v4992 = vmul.f32 %v4655, %v4837
    %v4993 = vmul.f32 %v4659, %v4837
    %v4994 = vmul.f32 %v4663, %v4837
    %v4995 = vmul.f32 %v4667, %v4837
    %v4996 = vmul.f32 %v4671, %v4837
    %v4997 = vmul.f32 %v4675, %v4837
    %v4998 = vmul.f32 %v4679, %v4837
    %v4999 = vmul.f32 %v4683, %v4837
    %v5000 = vmul.f32 %v4687, %v4837
    %v5001 = vmul.f32 %v4691, %v4837
    %v5002 = vmul.f32 %v4695, %v4837
    %v5003 = vmul.f32 %v4699, %v4837
    %v5004 = vmul.f32 %v4703, %v4837
    %v5005 = vmul.f32 %v4707, %v4837
    %v5006 = vmul.f32 %v4711, %v4837
    %v5007 = vmul.f32 %v4715, %v4837
    %v5008 = vmul.f32 %v4719, %v4837
    %v5009 = vmul.f32 %v4723, %v4837
    %v5010 = vmul.f32 %v4727, %v4837
    %v5011 = vmul.f32 %v4731, %v4837
    %v5012 = vmul.f32 %v4735, %v4837
    %v5013 = vmul.f32 %v4739, %v4837
    %v5014 = vmul.f32 %v4743, %v4837
    %v5015 = vmul.f32 %v4747, %v4837
    %v5016 = vmul.f32 %v4751, %v4837
    %v5017 = vmul.f32 %v4755, %v4837
    %v5018 = vmul.f32 %v4759, %v4837
    %v5019 = vmul.f32 %v4763, %v4837
    %v5020 = vmul.f32 %v4767, %v4837
    %v5021 = vmul.f32 %v4771, %v4837
    %v5022 = vmul.f32 %v4775, %v4837
    %v5023 = vmul.f32 %v4779, %v4837
    %v5024 = vmul.f32 %v4783, %v4837
    %v5025 = vmul.f32 %v4787, %v4837
    %v5026 = vmul.f32 %v4791, %v4837
    %v5027 = vmul.f32 %v4795, %v4837
    %v5028 = vmul.f32 %v4799, %v4837
    %v5029 = vmul.f32 %v4803, %v4837
    %v5030 = vmul.f32 %v4807, %v4837
    %v5031 = vmul.f32 %v4811, %v4837
    %v5032 = vmul.f32 %v4815, %v4837
    %v5033 = vmul.f32 %v4819, %v4837
    %v5034 = vmul.f32 %v4823, %v4837
    %v5035 = vmul.f32 %v4827, %v4837
    %v5036 = vmul.f32 %v4831, %v4837
    %v5037 = vmul.f32 %v4835, %v4837
    %v5038 = vadd.f32 %v3837, %v4838
    %v5039 = vadd.f32 %v3838, %v4839
    %v5040 = vadd.f32 %v3839, %v4840
    %v5041 = vadd.f32 %v3840, %v4841
    %v5042 = vadd.f32 %v3841, %v4842
    %v5043 = vadd.f32 %v3842, %v4843
    %v5044 = vadd.f32 %v3843, %v4844
    %v5045 = vadd.f32 %v3844, %v4845
    %v5046 = vadd.f32 %v3845, %v4846
    %v5047 = vadd.f32 %v3846, %v4847
    %v5048 = vadd.f32 %v3847, %v4848
    %v5049 = vadd.f32 %v3848, %v4849
    %v5050 = vadd.f32 %v3849, %v4850
    %v5051 = vadd.f32 %v3850, %v4851
    %v5052 = vadd.f32 %v3851, %v4852
    %v5053 = vadd.f32 %v3852, %v4853
    %v5054 = vadd.f32 %v3853, %v4854
    %v5055 = vadd.f32 %v3854, %v4855
    %v5056 = vadd.f32 %v3855, %v4856
    %v5057 = vadd.f32 %v3856, %v4857
    %v5058 = vadd.f32 %v3857, %v4858
    %v5059 = vadd.f32 %v3858, %v4859
    %v5060 = vadd.f32 %v3859, %v4860
    %v5061 = vadd.f32 %v3860, %v4861
    %v5062 = vadd.f32 %v3861, %v4862
    %v5063 = vadd.f32 %v3862, %v4863
    %v5064 = vadd.f32 %v3863, %v4864
    %v5065 = vadd.f32 %v3864, %v4865
    %v5066 = vadd.f32 %v3865, %v4866
    %v5067 = vadd.f32 %v3866, %v4867
    %v5068 = vadd.f32 %v3867, %v4868
    %v5069 = vadd.f32 %v3868, %v4869
    %v5070 = vadd.f32 %v3869, %v4870
    %v5071 = vadd.f32 %v3870, %v4871
    %v5072 = vadd.f32 %v3871, %v4872
    %v5073 = vadd.f32 %v3872, %v4873
    %v5074 = vadd.f32 %v3873, %v4874
    %v5075 = vadd.f32 %v3874, %v4875
    %v5076 = vadd.f32 %v3875, %v4876
    %v5077 = vadd.f32 %v3876, %v4877
    %v5078 = vadd.f32 %v3877, %v4878
    %v5079 = vadd.f32 %v3878, %v4879
    %v5080 = vadd.f32 %v3879, %v4880
    %v5081 = vadd.f32 %v3880, %v4881
    %v5082 = vadd.f32 %v3881, %v4882
    %v5083 = vadd.f32 %v3882, %v4883
    %v5084 = vadd.f32 %v3883, %v4884
    %v5085 = vadd.f32 %v3884, %v4885
    %v5086 = vadd.f32 %v3885, %v4886
    %v5087 = vadd.f32 %v3886, %v4887
    %v5088 = vadd.f32 %v3887, %v4888
    %v5089 = vadd.f32 %v3888, %v4889
    %v5090 = vadd.f32 %v3889, %v4890
    %v5091 = vadd.f32 %v3890, %v4891
    %v5092 = vadd.f32 %v3891, %v4892
    %v5093 = vadd.f32 %v3892, %v4893
    %v5094 = vadd.f32 %v3893, %v4894
    %v5095 = vadd.f32 %v3894, %v4895
    %v5096 = vadd.f32 %v3895, %v4896
    %v5097 = vadd.f32 %v3896, %v4897
    %v5098 = vadd.f32 %v3897, %v4898
    %v5099 = vadd.f32 %v3898, %v4899
    %v5100 = vadd.f32 %v3899, %v4900
    %v5101 = vadd.f32 %v3900, %v4901
    %v5102 = vadd.f32 %v3901, %v4902
    %v5103 = vadd.f32 %v3902, %v4903
    %v5104 = vadd.f32 %v3903, %v4904
    %v5105 = vadd.f32 %v3904, %v4905
    %v5106 = vadd.f32 %v3905, %v4906
    %v5107 = vadd.f32 %v3906, %v4907
    %v5108 = vadd.f32 %v3907, %v4908
    %v5109 = vadd.f32 %v3908, %v4909
    %v5110 = vadd.f32 %v3909, %v4910
    %v5111 = vadd.f32 %v3910, %v4911
    %v5112 = vadd.f32 %v3911, %v4912
    %v5113 = vadd.f32 %v3912, %v4913
    %v5114 = vadd.f32 %v3913, %v4914
    %v5115 = vadd.f32 %v3914, %v4915
    %v5116 = vadd.f32 %v3915, %v4916
    %v5117 = vadd.f32 %v3916, %v4917
    %v5118 = vadd.f32 %v3917, %v4918
    %v5119 = vadd.f32 %v3918, %v4919
    %v5120 = vadd.f32 %v3919, %v4920
    %v5121 = vadd.f32 %v3920, %v4921
    %v5122 = vadd.f32 %v3921, %v4922
    %v5123 = vadd.f32 %v3922, %v4923
    %v5124 = vadd.f32 %v3923, %v4924
    %v5125 = vadd.f32 %v3924, %v4925
    %v5126 = vadd.f32 %v3925, %v4926
    %v5127 = vadd.f32 %v3926, %v4927
    %v5128 = vadd.f32 %v3927, %v4928
    %v5129 = vadd.f32 %v3928, %v4929
    %v5130 = vadd.f32 %v3929, %v4930
    %v5131 = vadd.f32 %v3930, %v4931
    %v5132 = vadd.f32 %v3931, %v4932
    %v5133 = vadd.f32 %v3932, %v4933
    %v5134 = vadd.f32 %v3933, %v4934
    %v5135 = vadd.f32 %v3934, %v4935
    %v5136 = vadd.f32 %v3935, %v4936
    %v5137 = vadd.f32 %v3936, %v4937
    %v5138 = vadd.f32 %v3937, %v4938
    %v5139 = vadd.f32 %v3938, %v4939
    %v5140 = vadd.f32 %v3939, %v4940
    %v5141 = vadd.f32 %v3940, %v4941
    %v5142 = vadd.f32 %v3941, %v4942
    %v5143 = vadd.f32 %v3942, %v4943
    %v5144 = vadd.f32 %v3943, %v4944
    %v5145 = vadd.f32 %v3944, %v4945
    %v5146 = vadd.f32 %v3945, %v4946
    %v5147 = vadd.f32 %v3946, %v4947
    %v5148 = vadd.f32 %v3947, %v4948
    %v5149 = vadd.f32 %v3948, %v4949
    %v5150 = vadd.f32 %v3949, %v4950
    %v5151 = vadd.f32 %v3950, %v4951
    %v5152 = vadd.f32 %v3951, %v4952
    %v5153 = vadd.f32 %v3952, %v4953
    %v5154 = vadd.f32 %v3953, %v4954
    %v5155 = vadd.f32 %v3954, %v4955
    %v5156 = vadd.f32 %v3955, %v4956
    %v5157 = vadd.f32 %v3956, %v4957
    %v5158 = vadd.f32 %v3957, %v4958
    %v5159 = vadd.f32 %v3958, %v4959
    %v5160 = vadd.f32 %v3959, %v4960
    %v5161 = vadd.f32 %v3960, %v4961
    %v5162 = vadd.f32 %v3961, %v4962
    %v5163 = vadd.f32 %v3962, %v4963
    %v5164 = vadd.f32 %v3963, %v4964
    %v5165 = vadd.f32 %v3964, %v4965
    %v5166 = vadd.f32 %v3965, %v4966
    %v5167 = vadd.f32 %v3966, %v4967
    %v5168 = vadd.f32 %v3967, %v4968
    %v5169 = vadd.f32 %v3968, %v4969
    %v5170 = vadd.f32 %v3969, %v4970
    %v5171 = vadd.f32 %v3970, %v4971
    %v5172 = vadd.f32 %v3971, %v4972
    %v5173 = vadd.f32 %v3972, %v4973
    %v5174 = vadd.f32 %v3973, %v4974
    %v5175 = vadd.f32 %v3974, %v4975
    %v5176 = vadd.f32 %v3975, %v4976
    %v5177 = vadd.f32 %v3976, %v4977
    %v5178 = vadd.f32 %v3977, %v4978
    %v5179 = vadd.f32 %v3978, %v4979
    %v5180 = vadd.f32 %v3979, %v4980
    %v5181 = vadd.f32 %v3980, %v4981
    %v5182 = vadd.f32 %v3981, %v4982
    %v5183 = vadd.f32 %v3982, %v4983
    %v5184 = vadd.f32 %v3983, %v4984
    %v5185 = vadd.f32 %v3984, %v4985
    %v5186 = vadd.f32 %v3985, %v4986
    %v5187 = vadd.f32 %v3986, %v4987
    %v5188 = vadd.f32 %v3987, %v4988
    %v5189 = vadd.f32 %v3988, %v4989
    %v5190 = vadd.f32 %v3989, %v4990
    %v5191 = vadd.f32 %v3990, %v4991
    %v5192 = vadd.f32 %v3991, %v4992
    %v5193 = vadd.f32 %v3992, %v4993
    %v5194 = vadd.f32 %v3993, %v4994
    %v5195 = vadd.f32 %v3994, %v4995
    %v5196 = vadd.f32 %v3995, %v4996
    %v5197 = vadd.f32 %v3996, %v4997
    %v5198 = vadd.f32 %v3997, %v4998
    %v5199 = vadd.f32 %v3998, %v4999
    %v5200 = vadd.f32 %v3999, %v5000
    %v5201 = vadd.f32 %v4000, %v5001
    %v5202 = vadd.f32 %v4001, %v5002
    %v5203 = vadd.f32 %v4002, %v5003
    %v5204 = vadd.f32 %v4003, %v5004
    %v5205 = vadd.f32 %v4004, %v5005
    %v5206 = vadd.f32 %v4005, %v5006
    %v5207 = vadd.f32 %v4006, %v5007
    %v5208 = vadd.f32 %v4007, %v5008
    %v5209 = vadd.f32 %v4008, %v5009
    %v5210 = vadd.f32 %v4009, %v5010
    %v5211 = vadd.f32 %v4010, %v5011
    %v5212 = vadd.f32 %v4011, %v5012
    %v5213 = vadd.f32 %v4012, %v5013
    %v5214 = vadd.f32 %v4013, %v5014
    %v5215 = vadd.f32 %v4014, %v5015
    %v5216 = vadd.f32 %v4015, %v5016
    %v5217 = vadd.f32 %v4016, %v5017
    %v5218 = vadd.f32 %v4017, %v5018
    %v5219 = vadd.f32 %v4018, %v5019
    %v5220 = vadd.f32 %v4019, %v5020
    %v5221 = vadd.f32 %v4020, %v5021
    %v5222 = vadd.f32 %v4021, %v5022
    %v5223 = vadd.f32 %v4022, %v5023
    %v5224 = vadd.f32 %v4023, %v5024
    %v5225 = vadd.f32 %v4024, %v5025
    %v5226 = vadd.f32 %v4025, %v5026
    %v5227 = vadd.f32 %v4026, %v5027
    %v5228 = vadd.f32 %v4027, %v5028
    %v5229 = vadd.f32 %v4028, %v5029
    %v5230 = vadd.f32 %v4029, %v5030
    %v5231 = vadd.f32 %v4030, %v5031
    %v5232 = vadd.f32 %v4031, %v5032
    %v5233 = vadd.f32 %v4032, %v5033
    %v5234 = vadd.f32 %v4033, %v5034
    %v5235 = vadd.f32 %v4034, %v5035
    %v5236 = vadd.f32 %v4035, %v5036
    %v5237 = vadd.f32 %v4036, %v5037
    %v5238 = vmax.f32 %v5038, 0.0
    %v5239 = vmax.f32 %v5039, 0.0
    %v5240 = vmax.f32 %v5040, 0.0
    %v5241 = vmax.f32 %v5041, 0.0
    %v5242 = vmax.f32 %v5042, 0.0
    %v5243 = vmax.f32 %v5043, 0.0
    %v5244 = vmax.f32 %v5044, 0.0
    %v5245 = vmax.f32 %v5045, 0.0
    %v5246 = vmax.f32 %v5046, 0.0
    %v5247 = vmax.f32 %v5047, 0.0
    %v5248 = vmax.f32 %v5048, 0.0
    %v5249 = vmax.f32 %v5049, 0.0
    %v5250 = vmax.f32 %v5050, 0.0
    %v5251 = vmax.f32 %v5051, 0.0
    %v5252 = vmax.f32 %v5052, 0.0
    %v5253 = vmax.f32 %v5053, 0.0
    %v5254 = vmax.f32 %v5054, 0.0
    %v5255 = vmax.f32 %v5055, 0.0
    %v5256 = vmax.f32 %v5056, 0.0
    %v5257 = vmax.f32 %v5057, 0.0
    %v5258 = vmax.f32 %v5058, 0.0
    %v5259 = vmax.f32 %v5059, 0.0
    %v5260 = vmax.f32 %v5060, 0.0
    %v5261 = vmax.f32 %v5061, 0.0
    %v5262 = vmax.f32 %v5062, 0.0
    %v5263 = vmax.f32 %v5063, 0.0
    %v5264 = vmax.f32 %v5064, 0.0
    %v5265 = vmax.f32 %v5065, 0.0
    %v5266 = vmax.f32 %v5066, 0.0
    %v5267 = vmax.f32 %v5067, 0.0
    %v5268 = vmax.f32 %v5068, 0.0
    %v5269 = vmax.f32 %v5069, 0.0
    %v5270 = vmax.f32 %v5070, 0.0
    %v5271 = vmax.f32 %v5071, 0.0
    %v5272 = vmax.f32 %v5072, 0.0
    %v5273 = vmax.f32 %v5073, 0.0
    %v5274 = vmax.f32 %v5074, 0.0
    %v5275 = vmax.f32 %v5075, 0.0
    %v5276 = vmax.f32 %v5076, 0.0
    %v5277 = vmax.f32 %v5077, 0.0
    %v5278 = vmax.f32 %v5078, 0.0
    %v5279 = vmax.f32 %v5079, 0.0
    %v5280 = vmax.f32 %v5080, 0.0
    %v5281 = vmax.f32 %v5081, 0.0
    %v5282 = vmax.f32 %v5082, 0.0
    %v5283 = vmax.f32 %v5083, 0.0
    %v5284 = vmax.f32 %v5084, 0.0
    %v5285 = vmax.f32 %v5085, 0.0
    %v5286 = vmax.f32 %v5086, 0.0
    %v5287 = vmax.f32 %v5087, 0.0
    %v5288 = vmax.f32 %v5088, 0.0
    %v5289 = vmax.f32 %v5089, 0.0
    %v5290 = vmax.f32 %v5090, 0.0
    %v5291 = vmax.f32 %v5091, 0.0
    %v5292 = vmax.f32 %v5092, 0.0
    %v5293 = vmax.f32 %v5093, 0.0
    %v5294 = vmax.f32 %v5094, 0.0
    %v5295 = vmax.f32 %v5095, 0.0
    %v5296 = vmax.f32 %v5096, 0.0
    %v5297 = vmax.f32 %v5097, 0.0
    %v5298 = vmax.f32 %v5098, 0.0
    %v5299 = vmax.f32 %v5099, 0.0
    %v5300 = vmax.f32 %v5100, 0.0
    %v5301 = vmax.f32 %v5101, 0.0
    %v5302 = vmax.f32 %v5102, 0.0
    %v5303 = vmax.f32 %v5103, 0.0
    %v5304 = vmax.f32 %v5104, 0.0
    %v5305 = vmax.f32 %v5105, 0.0
    %v5306 = vmax.f32 %v5106, 0.0
    %v5307 = vmax.f32 %v5107, 0.0
    %v5308 = vmax.f32 %v5108, 0.0
    %v5309 = vmax.f32 %v5109, 0.0
    %v5310 = vmax.f32 %v5110, 0.0
    %v5311 = vmax.f32 %v5111, 0.0
    %v5312 = vmax.f32 %v5112, 0.0
    %v5313 = vmax.f32 %v5113, 0.0
    %v5314 = vmax.f32 %v5114, 0.0
    %v5315 = vmax.f32 %v5115, 0.0
    %v5316 = vmax.f32 %v5116, 0.0
    %v5317 = vmax.f32 %v5117, 0.0
    %v5318 = vmax.f32 %v5118, 0.0
    %v5319 = vmax.f32 %v5119, 0.0
    %v5320 = vmax.f32 %v5120, 0.0
    %v5321 = vmax.f32 %v5121, 0.0
    %v5322 = vmax.f32 %v5122, 0.0
    %v5323 = vmax.f32 %v5123, 0.0
    %v5324 = vmax.f32 %v5124, 0.0
    %v5325 = vmax.f32 %v5125, 0.0
    %v5326 = vmax.f32 %v5126, 0.0
    %v5327 = vmax.f32 %v5127, 0.0
    %v5328 = vmax.f32 %v5128, 0.0
    %v5329 = vmax.f32 %v5129, 0.0
    %v5330 = vmax.f32 %v5130, 0.0
    %v5331 = vmax.f32 %v5131, 0.0
    %v5332 = vmax.f32 %v5132, 0.0
    %v5333 = vmax.f32 %v5133, 0.0
    %v5334 = vmax.f32 %v5134, 0.0
    %v5335 = vmax.f32 %v5135, 0.0
    %v5336 = vmax.f32 %v5136, 0.0
    %v5337 = vmax.f32 %v5137, 0.0
    %v5338 = vmax.f32 %v5138, 0.0
    %v5339 = vmax.f32 %v5139, 0.0
    %v5340 = vmax.f32 %v5140, 0.0
    %v5341 = vmax.f32 %v5141, 0.0
    %v5342 = vmax.f32 %v5142, 0.0
    %v5343 = vmax.f32 %v5143, 0.0
    %v5344 = vmax.f32 %v5144, 0.0
    %v5345 = vmax.f32 %v5145, 0.0
    %v5346 = vmax.f32 %v5146, 0.0
    %v5347 = vmax.f32 %v5147, 0.0
    %v5348 = vmax.f32 %v5148, 0.0
    %v5349 = vmax.f32 %v5149, 0.0
    %v5350 = vmax.f32 %v5150, 0.0
    %v5351 = vmax.f32 %v5151, 0.0
    %v5352 = vmax.f32 %v5152, 0.0
    %v5353 = vmax.f32 %v5153, 0.0
    %v5354 = vmax.f32 %v5154, 0.0
    %v5355 = vmax.f32 %v5155, 0.0
    %v5356 = vmax.f32 %v5156, 0.0
    %v5357 = vmax.f32 %v5157, 0.0
    %v5358 = vmax.f32 %v5158, 0.0
    %v5359 = vmax.f32 %v5159, 0.0
    %v5360 = vmax.f32 %v5160, 0.0
    %v5361 = vmax.f32 %v5161, 0.0
    %v5362 = vmax.f32 %v5162, 0.0
    %v5363 = vmax.f32 %v5163, 0.0
    %v5364 = vmax.f32 %v5164, 0.0
    %v5365 = vmax.f32 %v5165, 0.0
    %v5366 = vmax.f32 %v5166, 0.0
    %v5367 = vmax.f32 %v5167, 0.0
    %v5368 = vmax.f32 %v5168, 0.0
    %v5369 = vmax.f32 %v5169, 0.0
    %v5370 = vmax.f32 %v5170, 0.0
    %v5371 = vmax.f32 %v5171, 0.0
    %v5372 = vmax.f32 %v5172, 0.0
    %v5373 = vmax.f32 %v5173, 0.0
    %v5374 = vmax.f32 %v5174, 0.0
    %v5375 = vmax.f32 %v5175, 0.0
    %v5376 = vmax.f32 %v5176, 0.0
    %v5377 = vmax.f32 %v5177, 0.0
    %v5378 = vmax.f32 %v5178, 0.0
    %v5379 = vmax.f32 %v5179, 0.0
    %v5380 = vmax.f32 %v5180, 0.0
    %v5381 = vmax.f32 %v5181, 0.0
    %v5382 = vmax.f32 %v5182, 0.0
    %v5383 = vmax.f32 %v5183, 0.0
    %v5384 = vmax.f32 %v5184, 0.0
    %v5385 = vmax.f32 %v5185, 0.0
    %v5386 = vmax.f32 %v5186, 0.0
    %v5387 = vmax.f32 %v5187, 0.0
    %v5388 = vmax.f32 %v5188, 0.0
    %v5389 = vmax.f32 %v5189, 0.0
    %v5390 = vmax.f32 %v5190, 0.0
    %v5391 = vmax.f32 %v5191, 0.0
    %v5392 = vmax.f32 %v5192, 0.0
    %v5393 = vmax.f32 %v5193, 0.0
    %v5394 = vmax.f32 %v5194, 0.0
    %v5395 = vmax.f32 %v5195, 0.0
    %v5396 = vmax.f32 %v5196, 0.0
    %v5397 = vmax.f32 %v5197, 0.0
    %v5398 = vmax.f32 %v5198, 0.0
    %v5399 = vmax.f32 %v5199, 0.0
    %v5400 = vmax.f32 %v5200, 0.0
    %v5401 = vmax.f32 %v5201, 0.0
    %v5402 = vmax.f32 %v5202, 0.0
    %v5403 = vmax.f32 %v5203, 0.0
    %v5404 = vmax.f32 %v5204, 0.0
    %v5405 = vmax.f32 %v5205, 0.0
    %v5406 = vmax.f32 %v5206, 0.0
    %v5407 = vmax.f32 %v5207, 0.0
    %v5408 = vmax.f32 %v5208, 0.0
    %v5409 = vmax.f32 %v5209, 0.0
    %v5410 = vmax.f32 %v5210, 0.0
    %v5411 = vmax.f32 %v5211, 0.0
    %v5412 = vmax.f32 %v5212, 0.0
    %v5413 = vmax.f32 %v5213, 0.0
    %v5414 = vmax.f32 %v5214, 0.0
    %v5415 = vmax.f32 %v5215, 0.0
    %v5416 = vmax.f32 %v5216, 0.0
    %v5417 = vmax.f32 %v5217, 0.0
    %v5418 = vmax.f32 %v5218, 0.0
    %v5419 = vmax.f32 %v5219, 0.0
    %v5420 = vmax.f32 %v5220, 0.0
    %v5421 = vmax.f32 %v5221, 0.0
    %v5422 = vmax.f32 %v5222, 0.0
    %v5423 = vmax.f32 %v5223, 0.0
    %v5424 = vmax.f32 %v5224, 0.0
    %v5425 = vmax.f32 %v5225, 0.0
    %v5426 = vmax.f32 %v5226, 0.0
    %v5427 = vmax.f32 %v5227, 0.0
    %v5428 = vmax.f32 %v5228, 0.0
    %v5429 = vmax.f32 %v5229, 0.0
    %v5430 = vmax.f32 %v5230, 0.0
    %v5431 = vmax.f32 %v5231, 0.0
    %v5432 = vmax.f32 %v5232, 0.0
    %v5433 = vmax.f32 %v5233, 0.0
    %v5434 = vmax.f32 %v5234, 0.0
    %v5435 = vmax.f32 %v5235, 0.0
    %v5436 = vmax.f32 %v5236, 0.0
    %v5437 = vmax.f32 %v5237, 0.0
    %v5438 = vpack.c.bf16 %v5238, %v5238
    %v5439 = vpack.c.bf16 %v5239, %v5239
    %v5440 = vpack.c.bf16 %v5240, %v5240
    %v5441 = vpack.c.bf16 %v5241, %v5241
    %v5442 = vpack.c.bf16 %v5242, %v5242
    %v5443 = vpack.c.bf16 %v5243, %v5243
    %v5444 = vpack.c.bf16 %v5244, %v5244
    %v5445 = vpack.c.bf16 %v5245, %v5245
    %v5446 = vpack.c.bf16 %v5246, %v5246
    %v5447 = vpack.c.bf16 %v5247, %v5247
    %v5448 = vpack.c.bf16 %v5248, %v5248
    %v5449 = vpack.c.bf16 %v5249, %v5249
    %v5450 = vpack.c.bf16 %v5250, %v5250
    %v5451 = vpack.c.bf16 %v5251, %v5251
    %v5452 = vpack.c.bf16 %v5252, %v5252
    %v5453 = vpack.c.bf16 %v5253, %v5253
    %v5454 = vpack.c.bf16 %v5254, %v5254
    %v5455 = vpack.c.bf16 %v5255, %v5255
    %v5456 = vpack.c.bf16 %v5256, %v5256
    %v5457 = vpack.c.bf16 %v5257, %v5257
    %v5458 = vpack.c.bf16 %v5258, %v5258
    %v5459 = vpack.c.bf16 %v5259, %v5259
    %v5460 = vpack.c.bf16 %v5260, %v5260
    %v5461 = vpack.c.bf16 %v5261, %v5261
    %v5462 = vpack.c.bf16 %v5262, %v5262
    %v5463 = vpack.c.bf16 %v5263, %v5263
    %v5464 = vpack.c.bf16 %v5264, %v5264
    %v5465 = vpack.c.bf16 %v5265, %v5265
    %v5466 = vpack.c.bf16 %v5266, %v5266
    %v5467 = vpack.c.bf16 %v5267, %v5267
    %v5468 = vpack.c.bf16 %v5268, %v5268
    %v5469 = vpack.c.bf16 %v5269, %v5269
    %v5470 = vpack.c.bf16 %v5270, %v5270
    %v5471 = vpack.c.bf16 %v5271, %v5271
    %v5472 = vpack.c.bf16 %v5272, %v5272
    %v5473 = vpack.c.bf16 %v5273, %v5273
    %v5474 = vpack.c.bf16 %v5274, %v5274
    %v5475 = vpack.c.bf16 %v5275, %v5275
    %v5476 = vpack.c.bf16 %v5276, %v5276
    %v5477 = vpack.c.bf16 %v5277, %v5277
    %v5478 = vpack.c.bf16 %v5278, %v5278
    %v5479 = vpack.c.bf16 %v5279, %v5279
    %v5480 = vpack.c.bf16 %v5280, %v5280
    %v5481 = vpack.c.bf16 %v5281, %v5281
    %v5482 = vpack.c.bf16 %v5282, %v5282
    %v5483 = vpack.c.bf16 %v5283, %v5283
    %v5484 = vpack.c.bf16 %v5284, %v5284
    %v5485 = vpack.c.bf16 %v5285, %v5285
    %v5486 = vpack.c.bf16 %v5286, %v5286
    %v5487 = vpack.c.bf16 %v5287, %v5287
    %v5488 = vpack.c.bf16 %v5288, %v5288
    %v5489 = vpack.c.bf16 %v5289, %v5289
    %v5490 = vpack.c.bf16 %v5290, %v5290
    %v5491 = vpack.c.bf16 %v5291, %v5291
    %v5492 = vpack.c.bf16 %v5292, %v5292
    %v5493 = vpack.c.bf16 %v5293, %v5293
    %v5494 = vpack.c.bf16 %v5294, %v5294
    %v5495 = vpack.c.bf16 %v5295, %v5295
    %v5496 = vpack.c.bf16 %v5296, %v5296
    %v5497 = vpack.c.bf16 %v5297, %v5297
    %v5498 = vpack.c.bf16 %v5298, %v5298
    %v5499 = vpack.c.bf16 %v5299, %v5299
    %v5500 = vpack.c.bf16 %v5300, %v5300
    %v5501 = vpack.c.bf16 %v5301, %v5301
    %v5502 = vpack.c.bf16 %v5302, %v5302
    %v5503 = vpack.c.bf16 %v5303, %v5303
    %v5504 = vpack.c.bf16 %v5304, %v5304
    %v5505 = vpack.c.bf16 %v5305, %v5305
    %v5506 = vpack.c.bf16 %v5306, %v5306
    %v5507 = vpack.c.bf16 %v5307, %v5307
    %v5508 = vpack.c.bf16 %v5308, %v5308
    %v5509 = vpack.c.bf16 %v5309, %v5309
    %v5510 = vpack.c.bf16 %v5310, %v5310
    %v5511 = vpack.c.bf16 %v5311, %v5311
    %v5512 = vpack.c.bf16 %v5312, %v5312
    %v5513 = vpack.c.bf16 %v5313, %v5313
    %v5514 = vpack.c.bf16 %v5314, %v5314
    %v5515 = vpack.c.bf16 %v5315, %v5315
    %v5516 = vpack.c.bf16 %v5316, %v5316
    %v5517 = vpack.c.bf16 %v5317, %v5317
    %v5518 = vpack.c.bf16 %v5318, %v5318
    %v5519 = vpack.c.bf16 %v5319, %v5319
    %v5520 = vpack.c.bf16 %v5320, %v5320
    %v5521 = vpack.c.bf16 %v5321, %v5321
    %v5522 = vpack.c.bf16 %v5322, %v5322
    %v5523 = vpack.c.bf16 %v5323, %v5323
    %v5524 = vpack.c.bf16 %v5324, %v5324
    %v5525 = vpack.c.bf16 %v5325, %v5325
    %v5526 = vpack.c.bf16 %v5326, %v5326
    %v5527 = vpack.c.bf16 %v5327, %v5327
    %v5528 = vpack.c.bf16 %v5328, %v5328
    %v5529 = vpack.c.bf16 %v5329, %v5329
    %v5530 = vpack.c.bf16 %v5330, %v5330
    %v5531 = vpack.c.bf16 %v5331, %v5331
    %v5532 = vpack.c.bf16 %v5332, %v5332
    %v5533 = vpack.c.bf16 %v5333, %v5333
    %v5534 = vpack.c.bf16 %v5334, %v5334
    %v5535 = vpack.c.bf16 %v5335, %v5335
    %v5536 = vpack.c.bf16 %v5336, %v5336
    %v5537 = vpack.c.bf16 %v5337, %v5337
    %v5538 = vpack.c.bf16 %v5338, %v5338
    %v5539 = vpack.c.bf16 %v5339, %v5339
    %v5540 = vpack.c.bf16 %v5340, %v5340
    %v5541 = vpack.c.bf16 %v5341, %v5341
    %v5542 = vpack.c.bf16 %v5342, %v5342
    %v5543 = vpack.c.bf16 %v5343, %v5343
    %v5544 = vpack.c.bf16 %v5344, %v5344
    %v5545 = vpack.c.bf16 %v5345, %v5345
    %v5546 = vpack.c.bf16 %v5346, %v5346
    %v5547 = vpack.c.bf16 %v5347, %v5347
    %v5548 = vpack.c.bf16 %v5348, %v5348
    %v5549 = vpack.c.bf16 %v5349, %v5349
    %v5550 = vpack.c.bf16 %v5350, %v5350
    %v5551 = vpack.c.bf16 %v5351, %v5351
    %v5552 = vpack.c.bf16 %v5352, %v5352
    %v5553 = vpack.c.bf16 %v5353, %v5353
    %v5554 = vpack.c.bf16 %v5354, %v5354
    %v5555 = vpack.c.bf16 %v5355, %v5355
    %v5556 = vpack.c.bf16 %v5356, %v5356
    %v5557 = vpack.c.bf16 %v5357, %v5357
    %v5558 = vpack.c.bf16 %v5358, %v5358
    %v5559 = vpack.c.bf16 %v5359, %v5359
    %v5560 = vpack.c.bf16 %v5360, %v5360
    %v5561 = vpack.c.bf16 %v5361, %v5361
    %v5562 = vpack.c.bf16 %v5362, %v5362
    %v5563 = vpack.c.bf16 %v5363, %v5363
    %v5564 = vpack.c.bf16 %v5364, %v5364
    %v5565 = vpack.c.bf16 %v5365, %v5365
    %v5566 = vpack.c.bf16 %v5366, %v5366
    %v5567 = vpack.c.bf16 %v5367, %v5367
    %v5568 = vpack.c.bf16 %v5368, %v5368
    %v5569 = vpack.c.bf16 %v5369, %v5369
    %v5570 = vpack.c.bf16 %v5370, %v5370
    %v5571 = vpack.c.bf16 %v5371, %v5371
    %v5572 = vpack.c.bf16 %v5372, %v5372
    %v5573 = vpack.c.bf16 %v5373, %v5373
    %v5574 = vpack.c.bf16 %v5374, %v5374
    %v5575 = vpack.c.bf16 %v5375, %v5375
    %v5576 = vpack.c.bf16 %v5376, %v5376
    %v5577 = vpack.c.bf16 %v5377, %v5377
    %v5578 = vpack.c.bf16 %v5378, %v5378
    %v5579 = vpack.c.bf16 %v5379, %v5379
    %v5580 = vpack.c.bf16 %v5380, %v5380
    %v5581 = vpack.c.bf16 %v5381, %v5381
    %v5582 = vpack.c.bf16 %v5382, %v5382
    %v5583 = vpack.c.bf16 %v5383, %v5383
    %v5584 = vpack.c.bf16 %v5384, %v5384
    %v5585 = vpack.c.bf16 %v5385, %v5385
    %v5586 = vpack.c.bf16 %v5386, %v5386
    %v5587 = vpack.c.bf16 %v5387, %v5387
    %v5588 = vpack.c.bf16 %v5388, %v5388
    %v5589 = vpack.c.bf16 %v5389, %v5389
    %v5590 = vpack.c.bf16 %v5390, %v5390
    %v5591 = vpack.c.bf16 %v5391, %v5391
    %v5592 = vpack.c.bf16 %v5392, %v5392
    %v5593 = vpack.c.bf16 %v5393, %v5393
    %v5594 = vpack.c.bf16 %v5394, %v5394
    %v5595 = vpack.c.bf16 %v5395, %v5395
    %v5596 = vpack.c.bf16 %v5396, %v5396
    %v5597 = vpack.c.bf16 %v5397, %v5397
    %v5598 = vpack.c.bf16 %v5398, %v5398
    %v5599 = vpack.c.bf16 %v5399, %v5399
    %v5600 = vpack.c.bf16 %v5400, %v5400
    %v5601 = vpack.c.bf16 %v5401, %v5401
    %v5602 = vpack.c.bf16 %v5402, %v5402
    %v5603 = vpack.c.bf16 %v5403, %v5403
    %v5604 = vpack.c.bf16 %v5404, %v5404
    %v5605 = vpack.c.bf16 %v5405, %v5405
    %v5606 = vpack.c.bf16 %v5406, %v5406
    %v5607 = vpack.c.bf16 %v5407, %v5407
    %v5608 = vpack.c.bf16 %v5408, %v5408
    %v5609 = vpack.c.bf16 %v5409, %v5409
    %v5610 = vpack.c.bf16 %v5410, %v5410
    %v5611 = vpack.c.bf16 %v5411, %v5411
    %v5612 = vpack.c.bf16 %v5412, %v5412
    %v5613 = vpack.c.bf16 %v5413, %v5413
    %v5614 = vpack.c.bf16 %v5414, %v5414
    %v5615 = vpack.c.bf16 %v5415, %v5415
    %v5616 = vpack.c.bf16 %v5416, %v5416
    %v5617 = vpack.c.bf16 %v5417, %v5417
    %v5618 = vpack.c.bf16 %v5418, %v5418
    %v5619 = vpack.c.bf16 %v5419, %v5419
    %v5620 = vpack.c.bf16 %v5420, %v5420
    %v5621 = vpack.c.bf16 %v5421, %v5421
    %v5622 = vpack.c.bf16 %v5422, %v5422
    %v5623 = vpack.c.bf16 %v5423, %v5423
    %v5624 = vpack.c.bf16 %v5424, %v5424
    %v5625 = vpack.c.bf16 %v5425, %v5425
    %v5626 = vpack.c.bf16 %v5426, %v5426
    %v5627 = vpack.c.bf16 %v5427, %v5427
    %v5628 = vpack.c.bf16 %v5428, %v5428
    %v5629 = vpack.c.bf16 %v5429, %v5429
    %v5630 = vpack.c.bf16 %v5430, %v5430
    %v5631 = vpack.c.bf16 %v5431, %v5431
    %v5632 = vpack.c.bf16 %v5432, %v5432
    %v5633 = vpack.c.bf16 %v5433, %v5433
    %v5634 = vpack.c.bf16 %v5434, %v5434
    %v5635 = vpack.c.bf16 %v5435, %v5435
    %v5636 = vpack.c.bf16 %v5436, %v5436
    %v5637 = vpack.c.bf16 %v5437, %v5437
    %v5638 = vld [vmem:[%s1] sm:$0xf]
    %v5639 = vld [vmem:[%s1 + $0x4] sm:$0xf]
    %v5640 = vld [vmem:[%s1 + $0x8] sm:$0xf]
    %v5641 = vld [vmem:[%s1 + $0xc] sm:$0xf]
    %v5642 = vld [vmem:[%s1 + $0x10] sm:$0xf]
    %v5643 = vld [vmem:[%s1 + $0x14] sm:$0xf]
    %v5644 = vld [vmem:[%s1 + $0x18] sm:$0xf]
    %v5645 = vld [vmem:[%s1 + $0x1c] sm:$0xf]
    %v5646 = vld [vmem:[%s1 + $0x20] sm:$0xf]
    %v5647 = vld [vmem:[%s1 + $0x24] sm:$0xf]
    %v5648 = vld [vmem:[%s1 + $0x28] sm:$0xf]
    %v5649 = vld [vmem:[%s1 + $0x2c] sm:$0xf]
    %v5650 = vld [vmem:[%s1 + $0x30] sm:$0xf]
    %v5651 = vld [vmem:[%s1 + $0x34] sm:$0xf]
    %v5652 = vld [vmem:[%s1 + $0x38] sm:$0xf]
    %v5653 = vld [vmem:[%s1 + $0x3c] sm:$0xf]
    %v5692 = vunpack.c.l.b16 %v5488
    %v5693 = vunpack.c.l.b16 %v5489
    %v5694 = vunpack.c.l.b16 %v5490
    %v5695 = vunpack.c.l.b16 %v5491
    %v5696 = vunpack.c.l.b16 %v5492
    %v5697 = vunpack.c.l.b16 %v5493
    %v5698 = vunpack.c.l.b16 %v5494
    %v5699 = vunpack.c.l.b16 %v5495
    %v5700 = vunpack.c.l.b16 %v5496
    %v5701 = vunpack.c.l.b16 %v5497
    %v5702 = vunpack.c.l.b16 %v5498
    %v5703 = vunpack.c.l.b16 %v5499
    %v5704 = vunpack.c.l.b16 %v5500
    %v5705 = vunpack.c.l.b16 %v5501
    %v5706 = vunpack.c.l.b16 %v5502
    %v5707 = vunpack.c.l.b16 %v5503
    %v5708 = vunpack.c.l.b16 %v5504
    %v5709 = vunpack.c.l.b16 %v5505
    %v5710 = vunpack.c.l.b16 %v5506
    %v5711 = vunpack.c.l.b16 %v5507
    %v5712 = vunpack.c.l.b16 %v5508
    %v5713 = vunpack.c.l.b16 %v5509
    %v5714 = vunpack.c.l.b16 %v5510
    %v5715 = vunpack.c.l.b16 %v5511
    %v5716 = vunpack.c.l.b16 %v5512
    %v5717 = vunpack.c.l.b16 %v5513
    %v5718 = vunpack.c.l.b16 %v5514
    %v5719 = vunpack.c.l.b16 %v5515
    %v5720 = vunpack.c.l.b16 %v5516
    %v5721 = vunpack.c.l.b16 %v5517
    %v5722 = vunpack.c.l.b16 %v5518
    %v5723 = vunpack.c.l.b16 %v5519
    %v5724 = vunpack.c.l.b16 %v5520
    %v5725 = vunpack.c.l.b16 %v5521
    %v5726 = vunpack.c.l.b16 %v5522
    %v5727 = vunpack.c.l.b16 %v5523
    %v5728 = vunpack.c.l.b16 %v5524
    %v5729 = vunpack.c.l.b16 %v5525
    %v5730 = vpack.c.b16 %v5693, %v5692
    %v5731 = vpack.c.b16 %v5695, %v5694
    %v5732 = vpack.c.b16 %v5697, %v5696
    %v5733 = vpack.c.b16 %v5699, %v5698
    %v5734 = vpack.c.b16 %v5701, %v5700
    %v5735 = vpack.c.b16 %v5703, %v5702
    %v5736 = vpack.c.b16 %v5705, %v5704
    %v5737 = vpack.c.b16 %v5707, %v5706
    %v5738 = vpack.c.b16 %v5709, %v5708
    %v5739 = vpack.c.b16 %v5711, %v5710
    %v5740 = vpack.c.b16 %v5713, %v5712
    %v5741 = vpack.c.b16 %v5715, %v5714
    %v5742 = vpack.c.b16 %v5717, %v5716
    %v5743 = vpack.c.b16 %v5719, %v5718
    %v5744 = vpack.c.b16 %v5721, %v5720
    %v5745 = vpack.c.b16 %v5723, %v5722
    %v5746 = vpack.c.b16 %v5725, %v5724
    %v5747 = vpack.c.b16 %v5727, %v5726
    %v5748 = vpack.c.b16 %v5729, %v5728
    %v5757 = vunpack.c.l.b16 %v5646
    %v5758 = vunpack.c.l.b16 %v5647
    %v5759 = vunpack.c.l.b16 %v5648
    %v5760 = vunpack.c.l.b16 %v5649
    %v5761 = vunpack.c.l.b16 %v5650
    %v5762 = vunpack.c.l.b16 %v5651
    %v5763 = vunpack.c.l.b16 %v5652
    %v5764 = vunpack.c.l.b16 %v5653
    %v5765 = vpack.c.b16 %v5758, %v5757
    %v5766 = vpack.c.b16 %v5760, %v5759
    %v5767 = vpack.c.b16 %v5762, %v5761
    %v5768 = vpack.c.b16 %v5764, %v5763
    %vm5773 = vcmask 523264
    %v5775 = vsel %vm5773, %v5730, 0
    %v5778 = vsel %vm5773, %v5731, 0
    %v5781 = vsel %vm5773, %v5732, 0
    %v5784 = vsel %vm5773, %v5733, 0
    %v5787 = vsel %vm5773, %v5734, 0
    %v5790 = vsel %vm5773, %v5735, 0
    %v5793 = vsel %vm5773, %v5736, 0
    %v5796 = vsel %vm5773, %v5737, 0
    %v5799 = vsel %vm5773, %v5738, 0
    %v5802 = vsel %vm5773, %v5739, 0
    %v5805 = vsel %vm5773, %v5740, 0
    %v5808 = vsel %vm5773, %v5741, 0
    %v5811 = vsel %vm5773, %v5742, 0
    %v5814 = vsel %vm5773, %v5743, 0
    %v5817 = vsel %vm5773, %v5744, 0
    %v5820 = vsel %vm5773, %v5745, 0
    %v5823 = vsel %vm5773, %v5746, 0
    %v5826 = vsel %vm5773, %v5747, 0
    %v5829 = vsel %vm5773, %v5748, 0
    %5831 = vmatpush.bf16.msra.mxu0 0
    %5832 = vmatpush.bf16.msra.mxu0 0
    %5833 = vmatpush.bf16.msra.mxu0 0
    %5834 = vmatpush.bf16.msra.mxu0 0
    %5835 = vmatpush.bf16.msra.mxu0 %v5768
    %5836 = vmatpush.bf16.msra.mxu0 %v5767
    %5837 = vmatpush.bf16.msra.mxu0 %v5766
    %5838 = vmatpush.bf16.msra.mxu0 %v5765
    %5839 = vmatmul.bf16.gmra.mxu0 %v5775
    %v5840 = vpop.f32.mrf.mxu0
    %v5841 = vadd.f32 0.0, %v5840
    %v5842 = vpop.f32.mrf.mxu0
    %v5843 = vadd.f32 0.0, %v5842
    %5844 = vmatmul.bf16.gmra.mxu0 %v5778
    %v5845 = vpop.f32.mrf.mxu0
    %v5846 = vadd.f32 0.0, %v5845
    %v5847 = vpop.f32.mrf.mxu0
    %v5848 = vadd.f32 0.0, %v5847
    %5849 = vmatmul.bf16.gmra.mxu0 %v5781
    %v5850 = vpop.f32.mrf.mxu0
    %v5851 = vadd.f32 0.0, %v5850
    %v5852 = vpop.f32.mrf.mxu0
    %v5853 = vadd.f32 0.0, %v5852
    %5854 = vmatmul.bf16.gmra.mxu0 %v5784
    %v5855 = vpop.f32.mrf.mxu0
    %v5856 = vadd.f32 0.0, %v5855
    %v5857 = vpop.f32.mrf.mxu0
    %v5858 = vadd.f32 0.0, %v5857
    %5859 = vmatmul.bf16.gmra.mxu0 %v5787
    %v5860 = vpop.f32.mrf.mxu0
    %v5861 = vadd.f32 0.0, %v5860
    %v5862 = vpop.f32.mrf.mxu0
    %v5863 = vadd.f32 0.0, %v5862
    %5864 = vmatmul.bf16.gmra.mxu0 %v5790
    %v5865 = vpop.f32.mrf.mxu0
    %v5866 = vadd.f32 0.0, %v5865
    %v5867 = vpop.f32.mrf.mxu0
    %v5868 = vadd.f32 0.0, %v5867
    %5869 = vmatmul.bf16.gmra.mxu0 %v5793
    %v5870 = vpop.f32.mrf.mxu0
    %v5871 = vadd.f32 0.0, %v5870
    %v5872 = vpop.f32.mrf.mxu0
    %v5873 = vadd.f32 0.0, %v5872
    %5874 = vmatmul.bf16.gmra.mxu0 %v5796
    %v5875 = vpop.f32.mrf.mxu0
    %v5876 = vadd.f32 0.0, %v5875
    %v5877 = vpop.f32.mrf.mxu0
    %v5878 = vadd.f32 0.0, %v5877
    %5879 = vmatmul.bf16.gmra.mxu0 %v5799
    %v5880 = vpop.f32.mrf.mxu0
    %v5881 = vadd.f32 0.0, %v5880
    %v5882 = vpop.f32.mrf.mxu0
    %v5883 = vadd.f32 0.0, %v5882
    %5884 = vmatmul.bf16.gmra.mxu0 %v5802
    %v5885 = vpop.f32.mrf.mxu0
    %v5886 = vadd.f32 0.0, %v5885
    %v5887 = vpop.f32.mrf.mxu0
    %v5888 = vadd.f32 0.0, %v5887
    %5889 = vmatmul.bf16.gmra.mxu0 %v5805
    %v5890 = vpop.f32.mrf.mxu0
    %v5891 = vadd.f32 0.0, %v5890
    %v5892 = vpop.f32.mrf.mxu0
    %v5893 = vadd.f32 0.0, %v5892
    %5894 = vmatmul.bf16.gmra.mxu0 %v5808
    %v5895 = vpop.f32.mrf.mxu0
    %v5896 = vadd.f32 0.0, %v5895
    %v5897 = vpop.f32.mrf.mxu0
    %v5898 = vadd.f32 0.0, %v5897
    %5899 = vmatmul.bf16.gmra.mxu0 %v5811
    %v5900 = vpop.f32.mrf.mxu0
    %v5901 = vadd.f32 0.0, %v5900
    %v5902 = vpop.f32.mrf.mxu0
    %v5903 = vadd.f32 0.0, %v5902
    %5904 = vmatmul.bf16.gmra.mxu0 %v5814
    %v5905 = vpop.f32.mrf.mxu0
    %v5906 = vadd.f32 0.0, %v5905
    %v5907 = vpop.f32.mrf.mxu0
    %v5908 = vadd.f32 0.0, %v5907
    %5909 = vmatmul.bf16.gmra.mxu0 %v5817
    %v5910 = vpop.f32.mrf.mxu0
    %v5911 = vadd.f32 0.0, %v5910
    %v5912 = vpop.f32.mrf.mxu0
    %v5913 = vadd.f32 0.0, %v5912
    %5914 = vmatmul.bf16.gmra.mxu0 %v5820
    %v5915 = vpop.f32.mrf.mxu0
    %v5916 = vadd.f32 0.0, %v5915
    %v5917 = vpop.f32.mrf.mxu0
    %v5918 = vadd.f32 0.0, %v5917
    %5919 = vmatmul.bf16.gmra.mxu0 %v5823
    %v5920 = vpop.f32.mrf.mxu0
    %v5921 = vadd.f32 0.0, %v5920
    %v5922 = vpop.f32.mrf.mxu0
    %v5923 = vadd.f32 0.0, %v5922
    %5924 = vmatmul.bf16.gmra.mxu0 %v5826
    %v5925 = vpop.f32.mrf.mxu0
    %v5926 = vadd.f32 0.0, %v5925
    %v5927 = vpop.f32.mrf.mxu0
    %v5928 = vadd.f32 0.0, %v5927
    %5929 = vmatmul.bf16.gmra.mxu0 %v5829
    %v5930 = vpop.f32.mrf.mxu0
    %v5931 = vadd.f32 0.0, %v5930
    %v5932 = vpop.f32.mrf.mxu0
    %v5933 = vadd.f32 0.0, %v5932
    %5934 = vdwg.mxu0
    %v5973 = vunpack.c.l.b16 %v5438
    %v5974 = vunpack.c.l.b16 %v5439
    %v5975 = vunpack.c.l.b16 %v5440
    %v5976 = vunpack.c.l.b16 %v5441
    %v5977 = vunpack.c.l.b16 %v5442
    %v5978 = vunpack.c.l.b16 %v5443
    %v5979 = vunpack.c.l.b16 %v5444
    %v5980 = vunpack.c.l.b16 %v5445
    %v5981 = vunpack.c.l.b16 %v5446
    %v5982 = vunpack.c.l.b16 %v5447
    %v5983 = vunpack.c.l.b16 %v5448
    %v5984 = vunpack.c.l.b16 %v5449
    %v5985 = vunpack.c.l.b16 %v5450
    %v5986 = vunpack.c.l.b16 %v5451
    %v5987 = vunpack.c.l.b16 %v5452
    %v5988 = vunpack.c.l.b16 %v5453
    %v5989 = vunpack.c.l.b16 %v5454
    %v5990 = vunpack.c.l.b16 %v5455
    %v5991 = vunpack.c.l.b16 %v5456
    %v5992 = vunpack.c.l.b16 %v5457
    %v5993 = vunpack.c.l.b16 %v5458
    %v5994 = vunpack.c.l.b16 %v5459
    %v5995 = vunpack.c.l.b16 %v5460
    %v5996 = vunpack.c.l.b16 %v5461
    %v5997 = vunpack.c.l.b16 %v5462
    %v5998 = vunpack.c.l.b16 %v5463
    %v5999 = vunpack.c.l.b16 %v5464
    %v6000 = vunpack.c.l.b16 %v5465
    %v6001 = vunpack.c.l.b16 %v5466
    %v6002 = vunpack.c.l.b16 %v5467
    %v6003 = vunpack.c.l.b16 %v5468
    %v6004 = vunpack.c.l.b16 %v5469
    %v6005 = vunpack.c.l.b16 %v5470
    %v6006 = vunpack.c.l.b16 %v5471
    %v6007 = vunpack.c.l.b16 %v5472
    %v6008 = vunpack.c.l.b16 %v5473
    %v6009 = vunpack.c.l.b16 %v5474
    %v6010 = vunpack.c.l.b16 %v5475
    %v6011 = vpack.c.b16 %v5974, %v5973
    %v6012 = vpack.c.b16 %v5976, %v5975
    %v6013 = vpack.c.b16 %v5978, %v5977
    %v6014 = vpack.c.b16 %v5980, %v5979
    %v6015 = vpack.c.b16 %v5982, %v5981
    %v6016 = vpack.c.b16 %v5984, %v5983
    %v6017 = vpack.c.b16 %v5986, %v5985
    %v6018 = vpack.c.b16 %v5988, %v5987
    %v6019 = vpack.c.b16 %v5990, %v5989
    %v6020 = vpack.c.b16 %v5992, %v5991
    %v6021 = vpack.c.b16 %v5994, %v5993
    %v6022 = vpack.c.b16 %v5996, %v5995
    %v6023 = vpack.c.b16 %v5998, %v5997
    %v6024 = vpack.c.b16 %v6000, %v5999
    %v6025 = vpack.c.b16 %v6002, %v6001
    %v6026 = vpack.c.b16 %v6004, %v6003
    %v6027 = vpack.c.b16 %v6006, %v6005
    %v6028 = vpack.c.b16 %v6008, %v6007
    %v6029 = vpack.c.b16 %v6010, %v6009
    %v6038 = vunpack.c.l.b16 %v5638
    %v6039 = vunpack.c.l.b16 %v5639
    %v6040 = vunpack.c.l.b16 %v5640
    %v6041 = vunpack.c.l.b16 %v5641
    %v6042 = vunpack.c.l.b16 %v5642
    %v6043 = vunpack.c.l.b16 %v5643
    %v6044 = vunpack.c.l.b16 %v5644
    %v6045 = vunpack.c.l.b16 %v5645
    %v6046 = vpack.c.b16 %v6039, %v6038
    %v6047 = vpack.c.b16 %v6041, %v6040
    %v6048 = vpack.c.b16 %v6043, %v6042
    %v6049 = vpack.c.b16 %v6045, %v6044
    %v6055 = vsel %vm5773, %v6011, 0
    %v6058 = vsel %vm5773, %v6012, 0
    %v6061 = vsel %vm5773, %v6013, 0
    %v6064 = vsel %vm5773, %v6014, 0
    %v6067 = vsel %vm5773, %v6015, 0
    %v6070 = vsel %vm5773, %v6016, 0
    %v6073 = vsel %vm5773, %v6017, 0
    %v6076 = vsel %vm5773, %v6018, 0
    %v6079 = vsel %vm5773, %v6019, 0
    %v6082 = vsel %vm5773, %v6020, 0
    %v6085 = vsel %vm5773, %v6021, 0
    %v6088 = vsel %vm5773, %v6022, 0
    %v6091 = vsel %vm5773, %v6023, 0
    %v6094 = vsel %vm5773, %v6024, 0
    %v6097 = vsel %vm5773, %v6025, 0
    %v6100 = vsel %vm5773, %v6026, 0
    %v6103 = vsel %vm5773, %v6027, 0
    %v6106 = vsel %vm5773, %v6028, 0
    %v6109 = vsel %vm5773, %v6029, 0
    %6111 = vmatpush.bf16.msra.mxu0 0
    %6112 = vmatpush.bf16.msra.mxu0 0
    %6113 = vmatpush.bf16.msra.mxu0 0
    %6114 = vmatpush.bf16.msra.mxu0 0
    %6115 = vmatpush.bf16.msra.mxu0 %v6049
    %6116 = vmatpush.bf16.msra.mxu0 %v6048
    %6117 = vmatpush.bf16.msra.mxu0 %v6047
    %6118 = vmatpush.bf16.msra.mxu0 %v6046
    %6119 = vmatmul.bf16.gmra.mxu0 %v6055
    %v6120 = vpop.f32.mrf.mxu0
    %v6121 = vadd.f32 %v5841, %v6120
    %v6122 = vpop.f32.mrf.mxu0
    %v6123 = vadd.f32 %v5843, %v6122
    %6124 = vmatmul.bf16.gmra.mxu0 %v6058
    %v6125 = vpop.f32.mrf.mxu0
    %v6126 = vadd.f32 %v5846, %v6125
    %v6127 = vpop.f32.mrf.mxu0
    %v6128 = vadd.f32 %v5848, %v6127
    %6129 = vmatmul.bf16.gmra.mxu0 %v6061
    %v6130 = vpop.f32.mrf.mxu0
    %v6131 = vadd.f32 %v5851, %v6130
    %v6132 = vpop.f32.mrf.mxu0
    %v6133 = vadd.f32 %v5853, %v6132
    %6134 = vmatmul.bf16.gmra.mxu0 %v6064
    %v6135 = vpop.f32.mrf.mxu0
    %v6136 = vadd.f32 %v5856, %v6135
    %v6137 = vpop.f32.mrf.mxu0
    %v6138 = vadd.f32 %v5858, %v6137
    %6139 = vmatmul.bf16.gmra.mxu0 %v6067
    %v6140 = vpop.f32.mrf.mxu0
    %v6141 = vadd.f32 %v5861, %v6140
    %v6142 = vpop.f32.mrf.mxu0
    %v6143 = vadd.f32 %v5863, %v6142
    %6144 = vmatmul.bf16.gmra.mxu0 %v6070
    %v6145 = vpop.f32.mrf.mxu0
    %v6146 = vadd.f32 %v5866, %v6145
    %v6147 = vpop.f32.mrf.mxu0
    %v6148 = vadd.f32 %v5868, %v6147
    %6149 = vmatmul.bf16.gmra.mxu0 %v6073
    %v6150 = vpop.f32.mrf.mxu0
    %v6151 = vadd.f32 %v5871, %v6150
    %v6152 = vpop.f32.mrf.mxu0
    %v6153 = vadd.f32 %v5873, %v6152
    %6154 = vmatmul.bf16.gmra.mxu0 %v6076
    %v6155 = vpop.f32.mrf.mxu0
    %v6156 = vadd.f32 %v5876, %v6155
    %v6157 = vpop.f32.mrf.mxu0
    %v6158 = vadd.f32 %v5878, %v6157
    %6159 = vmatmul.bf16.gmra.mxu0 %v6079
    %v6160 = vpop.f32.mrf.mxu0
    %v6161 = vadd.f32 %v5881, %v6160
    %v6162 = vpop.f32.mrf.mxu0
    %v6163 = vadd.f32 %v5883, %v6162
    %6164 = vmatmul.bf16.gmra.mxu0 %v6082
    %v6165 = vpop.f32.mrf.mxu0
    %v6166 = vadd.f32 %v5886, %v6165
    %v6167 = vpop.f32.mrf.mxu0
    %v6168 = vadd.f32 %v5888, %v6167
    %6169 = vmatmul.bf16.gmra.mxu0 %v6085
    %v6170 = vpop.f32.mrf.mxu0
    %v6171 = vadd.f32 %v5891, %v6170
    %v6172 = vpop.f32.mrf.mxu0
    %v6173 = vadd.f32 %v5893, %v6172
    %6174 = vmatmul.bf16.gmra.mxu0 %v6088
    %v6175 = vpop.f32.mrf.mxu0
    %v6176 = vadd.f32 %v5896, %v6175
    %v6177 = vpop.f32.mrf.mxu0
    %v6178 = vadd.f32 %v5898, %v6177
    %6179 = vmatmul.bf16.gmra.mxu0 %v6091
    %v6180 = vpop.f32.mrf.mxu0
    %v6181 = vadd.f32 %v5901, %v6180
    %v6182 = vpop.f32.mrf.mxu0
    %v6183 = vadd.f32 %v5903, %v6182
    %6184 = vmatmul.bf16.gmra.mxu0 %v6094
    %v6185 = vpop.f32.mrf.mxu0
    %v6186 = vadd.f32 %v5906, %v6185
    %v6187 = vpop.f32.mrf.mxu0
    %v6188 = vadd.f32 %v5908, %v6187
    %6189 = vmatmul.bf16.gmra.mxu0 %v6097
    %v6190 = vpop.f32.mrf.mxu0
    %v6191 = vadd.f32 %v5911, %v6190
    %v6192 = vpop.f32.mrf.mxu0
    %v6193 = vadd.f32 %v5913, %v6192
    %6194 = vmatmul.bf16.gmra.mxu0 %v6100
    %v6195 = vpop.f32.mrf.mxu0
    %v6196 = vadd.f32 %v5916, %v6195
    %v6197 = vpop.f32.mrf.mxu0
    %v6198 = vadd.f32 %v5918, %v6197
    %6199 = vmatmul.bf16.gmra.mxu0 %v6103
    %v6200 = vpop.f32.mrf.mxu0
    %v6201 = vadd.f32 %v5921, %v6200
    %v6202 = vpop.f32.mrf.mxu0
    %v6203 = vadd.f32 %v5923, %v6202
    %6204 = vmatmul.bf16.gmra.mxu0 %v6106
    %v6205 = vpop.f32.mrf.mxu0
    %v6206 = vadd.f32 %v5926, %v6205
    %v6207 = vpop.f32.mrf.mxu0
    %v6208 = vadd.f32 %v5928, %v6207
    %6209 = vmatmul.bf16.gmra.mxu0 %v6109
    %v6210 = vpop.f32.mrf.mxu0
    %v6211 = vadd.f32 %v5931, %v6210
    %v6212 = vpop.f32.mrf.mxu0
    %v6213 = vadd.f32 %v5933, %v6212
    %6214 = vdwg.mxu0
    %v6215 = vld [vmem:[%s1 + $0x40] sm:$0xf]
    %v6216 = vld [vmem:[%s1 + $0x44] sm:$0xf]
    %v6217 = vld [vmem:[%s1 + $0x48] sm:$0xf]
    %v6218 = vld [vmem:[%s1 + $0x4c] sm:$0xf]
    %v6219 = vld [vmem:[%s1 + $0x50] sm:$0xf]
    %v6220 = vld [vmem:[%s1 + $0x54] sm:$0xf]
    %v6221 = vld [vmem:[%s1 + $0x58] sm:$0xf]
    %v6222 = vld [vmem:[%s1 + $0x5c] sm:$0xf]
    %v6225 = vunpack.c.l.b16 %v5476
    %v6226 = vunpack.c.l.b16 %v5477
    %v6227 = vpack.c.b16 %v6226, %v6225
    %v6236 = vunpack.c.l.b16 %v6215
    %v6237 = vunpack.c.l.b16 %v6216
    %v6238 = vunpack.c.l.b16 %v6217
    %v6239 = vunpack.c.l.b16 %v6218
    %v6240 = vunpack.c.l.b16 %v6219
    %v6241 = vunpack.c.l.b16 %v6220
    %v6242 = vunpack.c.l.b16 %v6221
    %v6243 = vunpack.c.l.b16 %v6222
    %v6244 = vpack.c.b16 %v6237, %v6236
    %v6245 = vpack.c.b16 %v6239, %v6238
    %v6246 = vpack.c.b16 %v6241, %v6240
    %v6247 = vpack.c.b16 %v6243, %v6242
    %v6253 = vsel %vm5773, %v6227, 0
    %6255 = vmatpush.bf16.msra.mxu0 0
    %6256 = vmatpush.bf16.msra.mxu0 0
    %6257 = vmatpush.bf16.msra.mxu0 0
    %6258 = vmatpush.bf16.msra.mxu0 0
    %6259 = vmatpush.bf16.msra.mxu0 %v6247
    %6260 = vmatpush.bf16.msra.mxu0 %v6246
    %6261 = vmatpush.bf16.msra.mxu0 %v6245
    %6262 = vmatpush.bf16.msra.mxu0 %v6244
    %6263 = vmatmul.bf16.gmra.mxu0 %v6058
    %v6264 = vpop.f32.mrf.mxu0
    %v6265 = vadd.f32 0.0, %v6264
    %v6266 = vpop.f32.mrf.mxu0
    %v6267 = vadd.f32 0.0, %v6266
    %6268 = vmatmul.bf16.gmra.mxu0 %v6061
    %v6269 = vpop.f32.mrf.mxu0
    %v6270 = vadd.f32 0.0, %v6269
    %v6271 = vpop.f32.mrf.mxu0
    %v6272 = vadd.f32 0.0, %v6271
    %6273 = vmatmul.bf16.gmra.mxu0 %v6064
    %v6274 = vpop.f32.mrf.mxu0
    %v6275 = vadd.f32 0.0, %v6274
    %v6276 = vpop.f32.mrf.mxu0
    %v6277 = vadd.f32 0.0, %v6276
    %6278 = vmatmul.bf16.gmra.mxu0 %v6067
    %v6279 = vpop.f32.mrf.mxu0
    %v6280 = vadd.f32 0.0, %v6279
    %v6281 = vpop.f32.mrf.mxu0
    %v6282 = vadd.f32 0.0, %v6281
    %6283 = vmatmul.bf16.gmra.mxu0 %v6070
    %v6284 = vpop.f32.mrf.mxu0
    %v6285 = vadd.f32 0.0, %v6284
    %v6286 = vpop.f32.mrf.mxu0
    %v6287 = vadd.f32 0.0, %v6286
    %6288 = vmatmul.bf16.gmra.mxu0 %v6073
    %v6289 = vpop.f32.mrf.mxu0
    %v6290 = vadd.f32 0.0, %v6289
    %v6291 = vpop.f32.mrf.mxu0
    %v6292 = vadd.f32 0.0, %v6291
    %6293 = vmatmul.bf16.gmra.mxu0 %v6076
    %v6294 = vpop.f32.mrf.mxu0
    %v6295 = vadd.f32 0.0, %v6294
    %v6296 = vpop.f32.mrf.mxu0
    %v6297 = vadd.f32 0.0, %v6296
    %6298 = vmatmul.bf16.gmra.mxu0 %v6079
    %v6299 = vpop.f32.mrf.mxu0
    %v6300 = vadd.f32 0.0, %v6299
    %v6301 = vpop.f32.mrf.mxu0
    %v6302 = vadd.f32 0.0, %v6301
    %6303 = vmatmul.bf16.gmra.mxu0 %v6082
    %v6304 = vpop.f32.mrf.mxu0
    %v6305 = vadd.f32 0.0, %v6304
    %v6306 = vpop.f32.mrf.mxu0
    %v6307 = vadd.f32 0.0, %v6306
    %6308 = vmatmul.bf16.gmra.mxu0 %v6085
    %v6309 = vpop.f32.mrf.mxu0
    %v6310 = vadd.f32 0.0, %v6309
    %v6311 = vpop.f32.mrf.mxu0
    %v6312 = vadd.f32 0.0, %v6311
    %6313 = vmatmul.bf16.gmra.mxu0 %v6088
    %v6314 = vpop.f32.mrf.mxu0
    %v6315 = vadd.f32 0.0, %v6314
    %v6316 = vpop.f32.mrf.mxu0
    %v6317 = vadd.f32 0.0, %v6316
    %6318 = vmatmul.bf16.gmra.mxu0 %v6091
    %v6319 = vpop.f32.mrf.mxu0
    %v6320 = vadd.f32 0.0, %v6319
    %v6321 = vpop.f32.mrf.mxu0
    %v6322 = vadd.f32 0.0, %v6321
    %6323 = vmatmul.bf16.gmra.mxu0 %v6094
    %v6324 = vpop.f32.mrf.mxu0
    %v6325 = vadd.f32 0.0, %v6324
    %v6326 = vpop.f32.mrf.mxu0
    %v6327 = vadd.f32 0.0, %v6326
    %6328 = vmatmul.bf16.gmra.mxu0 %v6097
    %v6329 = vpop.f32.mrf.mxu0
    %v6330 = vadd.f32 0.0, %v6329
    %v6331 = vpop.f32.mrf.mxu0
    %v6332 = vadd.f32 0.0, %v6331
    %6333 = vmatmul.bf16.gmra.mxu0 %v6100
    %v6334 = vpop.f32.mrf.mxu0
    %v6335 = vadd.f32 0.0, %v6334
    %v6336 = vpop.f32.mrf.mxu0
    %v6337 = vadd.f32 0.0, %v6336
    %6338 = vmatmul.bf16.gmra.mxu0 %v6103
    %v6339 = vpop.f32.mrf.mxu0
    %v6340 = vadd.f32 0.0, %v6339
    %v6341 = vpop.f32.mrf.mxu0
    %v6342 = vadd.f32 0.0, %v6341
    %6343 = vmatmul.bf16.gmra.mxu0 %v6106
    %v6344 = vpop.f32.mrf.mxu0
    %v6345 = vadd.f32 0.0, %v6344
    %v6346 = vpop.f32.mrf.mxu0
    %v6347 = vadd.f32 0.0, %v6346
    %6348 = vmatmul.bf16.gmra.mxu0 %v6109
    %v6349 = vpop.f32.mrf.mxu0
    %v6350 = vadd.f32 0.0, %v6349
    %v6351 = vpop.f32.mrf.mxu0
    %v6352 = vadd.f32 0.0, %v6351
    %6353 = vmatmul.bf16.gmra.mxu0 %v6253
    %v6354 = vpop.f32.mrf.mxu0
    %v6355 = vadd.f32 0.0, %v6354
    %v6356 = vpop.f32.mrf.mxu0
    %v6357 = vadd.f32 0.0, %v6356
    %6358 = vdwg.mxu0
    %v6359 = vadd.f32 %v6121, %v6265
    %v6360 = vadd.f32 %v6123, %v6267
    %v6361 = vadd.f32 %v6126, %v6270
    %v6362 = vadd.f32 %v6128, %v6272
    %v6363 = vadd.f32 %v6131, %v6275
    %v6364 = vadd.f32 %v6133, %v6277
    %v6365 = vadd.f32 %v6136, %v6280
    %v6366 = vadd.f32 %v6138, %v6282
    %v6367 = vadd.f32 %v6141, %v6285
    %v6368 = vadd.f32 %v6143, %v6287
    %v6369 = vadd.f32 %v6146, %v6290
    %v6370 = vadd.f32 %v6148, %v6292
    %v6371 = vadd.f32 %v6151, %v6295
    %v6372 = vadd.f32 %v6153, %v6297
    %v6373 = vadd.f32 %v6156, %v6300
    %v6374 = vadd.f32 %v6158, %v6302
    %v6375 = vadd.f32 %v6161, %v6305
    %v6376 = vadd.f32 %v6163, %v6307
    %v6377 = vadd.f32 %v6166, %v6310
    %v6378 = vadd.f32 %v6168, %v6312
    %v6379 = vadd.f32 %v6171, %v6315
    %v6380 = vadd.f32 %v6173, %v6317
    %v6381 = vadd.f32 %v6176, %v6320
    %v6382 = vadd.f32 %v6178, %v6322
    %v6383 = vadd.f32 %v6181, %v6325
    %v6384 = vadd.f32 %v6183, %v6327
    %v6385 = vadd.f32 %v6186, %v6330
    %v6386 = vadd.f32 %v6188, %v6332
    %v6387 = vadd.f32 %v6191, %v6335
    %v6388 = vadd.f32 %v6193, %v6337
    %v6389 = vadd.f32 %v6196, %v6340
    %v6390 = vadd.f32 %v6198, %v6342
    %v6391 = vadd.f32 %v6201, %v6345
    %v6392 = vadd.f32 %v6203, %v6347
    %v6393 = vadd.f32 %v6206, %v6350
    %v6394 = vadd.f32 %v6208, %v6352
    %v6395 = vadd.f32 %v6211, %v6355
    %v6396 = vadd.f32 %v6213, %v6357
    %v6397 = vld [vmem:[%s1 + $0x60] sm:$0xf]
    %v6398 = vld [vmem:[%s1 + $0x64] sm:$0xf]
    %v6399 = vld [vmem:[%s1 + $0x68] sm:$0xf]
    %v6400 = vld [vmem:[%s1 + $0x6c] sm:$0xf]
    %v6401 = vld [vmem:[%s1 + $0x70] sm:$0xf]
    %v6402 = vld [vmem:[%s1 + $0x74] sm:$0xf]
    %v6403 = vld [vmem:[%s1 + $0x78] sm:$0xf]
    %v6404 = vld [vmem:[%s1 + $0x7c] sm:$0xf]
    %v6443 = vunpack.c.l.b16 %v5538
    %v6444 = vunpack.c.l.b16 %v5539
    %v6445 = vunpack.c.l.b16 %v5540
    %v6446 = vunpack.c.l.b16 %v5541
    %v6447 = vunpack.c.l.b16 %v5542
    %v6448 = vunpack.c.l.b16 %v5543
    %v6449 = vunpack.c.l.b16 %v5544
    %v6450 = vunpack.c.l.b16 %v5545
    %v6451 = vunpack.c.l.b16 %v5546
    %v6452 = vunpack.c.l.b16 %v5547
    %v6453 = vunpack.c.l.b16 %v5548
    %v6454 = vunpack.c.l.b16 %v5549
    %v6455 = vunpack.c.l.b16 %v5550
    %v6456 = vunpack.c.l.b16 %v5551
    %v6457 = vunpack.c.l.b16 %v5552
    %v6458 = vunpack.c.l.b16 %v5553
    %v6459 = vunpack.c.l.b16 %v5554
    %v6460 = vunpack.c.l.b16 %v5555
    %v6461 = vunpack.c.l.b16 %v5556
    %v6462 = vunpack.c.l.b16 %v5557
    %v6463 = vunpack.c.l.b16 %v5558
    %v6464 = vunpack.c.l.b16 %v5559
    %v6465 = vunpack.c.l.b16 %v5560
    %v6466 = vunpack.c.l.b16 %v5561
    %v6467 = vunpack.c.l.b16 %v5562
    %v6468 = vunpack.c.l.b16 %v5563
    %v6469 = vunpack.c.l.b16 %v5564
    %v6470 = vunpack.c.l.b16 %v5565
    %v6471 = vunpack.c.l.b16 %v5566
    %v6472 = vunpack.c.l.b16 %v5567
    %v6473 = vunpack.c.l.b16 %v5568
    %v6474 = vunpack.c.l.b16 %v5569
    %v6475 = vunpack.c.l.b16 %v5570
    %v6476 = vunpack.c.l.b16 %v5571
    %v6477 = vunpack.c.l.b16 %v5572
    %v6478 = vunpack.c.l.b16 %v5573
    %v6479 = vunpack.c.l.b16 %v5574
    %v6480 = vunpack.c.l.b16 %v5575
    %v6481 = vpack.c.b16 %v6444, %v6443
    %v6482 = vpack.c.b16 %v6446, %v6445
    %v6483 = vpack.c.b16 %v6448, %v6447
    %v6484 = vpack.c.b16 %v6450, %v6449
    %v6485 = vpack.c.b16 %v6452, %v6451
    %v6486 = vpack.c.b16 %v6454, %v6453
    %v6487 = vpack.c.b16 %v6456, %v6455
    %v6488 = vpack.c.b16 %v6458, %v6457
    %v6489 = vpack.c.b16 %v6460, %v6459
    %v6490 = vpack.c.b16 %v6462, %v6461
    %v6491 = vpack.c.b16 %v6464, %v6463
    %v6492 = vpack.c.b16 %v6466, %v6465
    %v6493 = vpack.c.b16 %v6468, %v6467
    %v6494 = vpack.c.b16 %v6470, %v6469
    %v6495 = vpack.c.b16 %v6472, %v6471
    %v6496 = vpack.c.b16 %v6474, %v6473
    %v6497 = vpack.c.b16 %v6476, %v6475
    %v6498 = vpack.c.b16 %v6478, %v6477
    %v6499 = vpack.c.b16 %v6480, %v6479
    %v6508 = vunpack.c.l.b16 %v6397
    %v6509 = vunpack.c.l.b16 %v6398
    %v6510 = vunpack.c.l.b16 %v6399
    %v6511 = vunpack.c.l.b16 %v6400
    %v6512 = vunpack.c.l.b16 %v6401
    %v6513 = vunpack.c.l.b16 %v6402
    %v6514 = vunpack.c.l.b16 %v6403
    %v6515 = vunpack.c.l.b16 %v6404
    %v6516 = vpack.c.b16 %v6509, %v6508
    %v6517 = vpack.c.b16 %v6511, %v6510
    %v6518 = vpack.c.b16 %v6513, %v6512
    %v6519 = vpack.c.b16 %v6515, %v6514
    %v6525 = vsel %vm5773, %v6481, 0
    %v6528 = vsel %vm5773, %v6482, 0
    %v6531 = vsel %vm5773, %v6483, 0
    %v6534 = vsel %vm5773, %v6484, 0
    %v6537 = vsel %vm5773, %v6485, 0
    %v6540 = vsel %vm5773, %v6486, 0
    %v6543 = vsel %vm5773, %v6487, 0
    %v6546 = vsel %vm5773, %v6488, 0
    %v6549 = vsel %vm5773, %v6489, 0
    %v6552 = vsel %vm5773, %v6490, 0
    %v6555 = vsel %vm5773, %v6491, 0
    %v6558 = vsel %vm5773, %v6492, 0
    %v6561 = vsel %vm5773, %v6493, 0
    %v6564 = vsel %vm5773, %v6494, 0
    %v6567 = vsel %vm5773, %v6495, 0
    %v6570 = vsel %vm5773, %v6496, 0
    %v6573 = vsel %vm5773, %v6497, 0
    %v6576 = vsel %vm5773, %v6498, 0
    %v6579 = vsel %vm5773, %v6499, 0
    %6581 = vmatpush.bf16.msra.mxu0 0
    %6582 = vmatpush.bf16.msra.mxu0 0
    %6583 = vmatpush.bf16.msra.mxu0 0
    %6584 = vmatpush.bf16.msra.mxu0 0
    %6585 = vmatpush.bf16.msra.mxu0 %v6519
    %6586 = vmatpush.bf16.msra.mxu0 %v6518
    %6587 = vmatpush.bf16.msra.mxu0 %v6517
    %6588 = vmatpush.bf16.msra.mxu0 %v6516
    %6589 = vmatmul.bf16.gmra.mxu0 %v6525
    %v6590 = vpop.f32.mrf.mxu0
    %v6591 = vadd.f32 0.0, %v6590
    %v6592 = vpop.f32.mrf.mxu0
    %v6593 = vadd.f32 0.0, %v6592
    %6594 = vmatmul.bf16.gmra.mxu0 %v6528
    %v6595 = vpop.f32.mrf.mxu0
    %v6596 = vadd.f32 0.0, %v6595
    %v6597 = vpop.f32.mrf.mxu0
    %v6598 = vadd.f32 0.0, %v6597
    %6599 = vmatmul.bf16.gmra.mxu0 %v6531
    %v6600 = vpop.f32.mrf.mxu0
    %v6601 = vadd.f32 0.0, %v6600
    %v6602 = vpop.f32.mrf.mxu0
    %v6603 = vadd.f32 0.0, %v6602
    %6604 = vmatmul.bf16.gmra.mxu0 %v6534
    %v6605 = vpop.f32.mrf.mxu0
    %v6606 = vadd.f32 0.0, %v6605
    %v6607 = vpop.f32.mrf.mxu0
    %v6608 = vadd.f32 0.0, %v6607
    %6609 = vmatmul.bf16.gmra.mxu0 %v6537
    %v6610 = vpop.f32.mrf.mxu0
    %v6611 = vadd.f32 0.0, %v6610
    %v6612 = vpop.f32.mrf.mxu0
    %v6613 = vadd.f32 0.0, %v6612
    %6614 = vmatmul.bf16.gmra.mxu0 %v6540
    %v6615 = vpop.f32.mrf.mxu0
    %v6616 = vadd.f32 0.0, %v6615
    %v6617 = vpop.f32.mrf.mxu0
    %v6618 = vadd.f32 0.0, %v6617
    %6619 = vmatmul.bf16.gmra.mxu0 %v6543
    %v6620 = vpop.f32.mrf.mxu0
    %v6621 = vadd.f32 0.0, %v6620
    %v6622 = vpop.f32.mrf.mxu0
    %v6623 = vadd.f32 0.0, %v6622
    %6624 = vmatmul.bf16.gmra.mxu0 %v6546
    %v6625 = vpop.f32.mrf.mxu0
    %v6626 = vadd.f32 0.0, %v6625
    %v6627 = vpop.f32.mrf.mxu0
    %v6628 = vadd.f32 0.0, %v6627
    %6629 = vmatmul.bf16.gmra.mxu0 %v6549
    %v6630 = vpop.f32.mrf.mxu0
    %v6631 = vadd.f32 0.0, %v6630
    %v6632 = vpop.f32.mrf.mxu0
    %v6633 = vadd.f32 0.0, %v6632
    %6634 = vmatmul.bf16.gmra.mxu0 %v6552
    %v6635 = vpop.f32.mrf.mxu0
    %v6636 = vadd.f32 0.0, %v6635
    %v6637 = vpop.f32.mrf.mxu0
    %v6638 = vadd.f32 0.0, %v6637
    %6639 = vmatmul.bf16.gmra.mxu0 %v6555
    %v6640 = vpop.f32.mrf.mxu0
    %v6641 = vadd.f32 0.0, %v6640
    %v6642 = vpop.f32.mrf.mxu0
    %v6643 = vadd.f32 0.0, %v6642
    %6644 = vmatmul.bf16.gmra.mxu0 %v6558
    %v6645 = vpop.f32.mrf.mxu0
    %v6646 = vadd.f32 0.0, %v6645
    %v6647 = vpop.f32.mrf.mxu0
    %v6648 = vadd.f32 0.0, %v6647
    %6649 = vmatmul.bf16.gmra.mxu0 %v6561
    %v6650 = vpop.f32.mrf.mxu0
    %v6651 = vadd.f32 0.0, %v6650
    %v6652 = vpop.f32.mrf.mxu0
    %v6653 = vadd.f32 0.0, %v6652
    %6654 = vmatmul.bf16.gmra.mxu0 %v6564
    %v6655 = vpop.f32.mrf.mxu0
    %v6656 = vadd.f32 0.0, %v6655
    %v6657 = vpop.f32.mrf.mxu0
    %v6658 = vadd.f32 0.0, %v6657
    %6659 = vmatmul.bf16.gmra.mxu0 %v6567
    %v6660 = vpop.f32.mrf.mxu0
    %v6661 = vadd.f32 0.0, %v6660
    %v6662 = vpop.f32.mrf.mxu0
    %v6663 = vadd.f32 0.0, %v6662
    %6664 = vmatmul.bf16.gmra.mxu0 %v6570
    %v6665 = vpop.f32.mrf.mxu0
    %v6666 = vadd.f32 0.0, %v6665
    %v6667 = vpop.f32.mrf.mxu0
    %v6668 = vadd.f32 0.0, %v6667
    %6669 = vmatmul.bf16.gmra.mxu0 %v6573
    %v6670 = vpop.f32.mrf.mxu0
    %v6671 = vadd.f32 0.0, %v6670
    %v6672 = vpop.f32.mrf.mxu0
    %v6673 = vadd.f32 0.0, %v6672
    %6674 = vmatmul.bf16.gmra.mxu0 %v6576
    %v6675 = vpop.f32.mrf.mxu0
    %v6676 = vadd.f32 0.0, %v6675
    %v6677 = vpop.f32.mrf.mxu0
    %v6678 = vadd.f32 0.0, %v6677
    %6679 = vmatmul.bf16.gmra.mxu0 %v6579
    %v6680 = vpop.f32.mrf.mxu0
    %v6681 = vadd.f32 0.0, %v6680
    %v6682 = vpop.f32.mrf.mxu0
    %v6683 = vadd.f32 0.0, %v6682
    %6684 = vdwg.mxu0
    %v6685 = vadd.f32 %v6359, %v6591
    %v6686 = vadd.f32 %v6360, %v6593
    %v6687 = vadd.f32 %v6361, %v6596
    %v6688 = vadd.f32 %v6362, %v6598
    %v6689 = vadd.f32 %v6363, %v6601
    %v6690 = vadd.f32 %v6364, %v6603
    %v6691 = vadd.f32 %v6365, %v6606
    %v6692 = vadd.f32 %v6366, %v6608
    %v6693 = vadd.f32 %v6367, %v6611
    %v6694 = vadd.f32 %v6368, %v6613
    %v6695 = vadd.f32 %v6369, %v6616
    %v6696 = vadd.f32 %v6370, %v6618
    %v6697 = vadd.f32 %v6371, %v6621
    %v6698 = vadd.f32 %v6372, %v6623
    %v6699 = vadd.f32 %v6373, %v6626
    %v6700 = vadd.f32 %v6374, %v6628
    %v6701 = vadd.f32 %v6375, %v6631
    %v6702 = vadd.f32 %v6376, %v6633
    %v6703 = vadd.f32 %v6377, %v6636
    %v6704 = vadd.f32 %v6378, %v6638
    %v6705 = vadd.f32 %v6379, %v6641
    %v6706 = vadd.f32 %v6380, %v6643
    %v6707 = vadd.f32 %v6381, %v6646
    %v6708 = vadd.f32 %v6382, %v6648
    %v6709 = vadd.f32 %v6383, %v6651
    %v6710 = vadd.f32 %v6384, %v6653
    %v6711 = vadd.f32 %v6385, %v6656
    %v6712 = vadd.f32 %v6386, %v6658
    %v6713 = vadd.f32 %v6387, %v6661
    %v6714 = vadd.f32 %v6388, %v6663
    %v6715 = vadd.f32 %v6389, %v6666
    %v6716 = vadd.f32 %v6390, %v6668
    %v6717 = vadd.f32 %v6391, %v6671
    %v6718 = vadd.f32 %v6392, %v6673
    %v6719 = vadd.f32 %v6393, %v6676
    %v6720 = vadd.f32 %v6394, %v6678
    %v6721 = vadd.f32 %v6395, %v6681
    %v6722 = vadd.f32 %v6396, %v6683
    %v6723 = vld [vmem:[%s1 + $0x80] sm:$0xf]
    %v6724 = vld [vmem:[%s1 + $0x84] sm:$0xf]
    %v6725 = vld [vmem:[%s1 + $0x88] sm:$0xf]
    %v6726 = vld [vmem:[%s1 + $0x8c] sm:$0xf]
    %v6727 = vld [vmem:[%s1 + $0x90] sm:$0xf]
    %v6728 = vld [vmem:[%s1 + $0x94] sm:$0xf]
    %v6729 = vld [vmem:[%s1 + $0x98] sm:$0xf]
    %v6730 = vld [vmem:[%s1 + $0x9c] sm:$0xf]
    %v6769 = vunpack.c.l.b16 %v5588
    %v6770 = vunpack.c.l.b16 %v5589
    %v6771 = vunpack.c.l.b16 %v5590
    %v6772 = vunpack.c.l.b16 %v5591
    %v6773 = vunpack.c.l.b16 %v5592
    %v6774 = vunpack.c.l.b16 %v5593
    %v6775 = vunpack.c.l.b16 %v5594
    %v6776 = vunpack.c.l.b16 %v5595
    %v6777 = vunpack.c.l.b16 %v5596
    %v6778 = vunpack.c.l.b16 %v5597
    %v6779 = vunpack.c.l.b16 %v5598
    %v6780 = vunpack.c.l.b16 %v5599
    %v6781 = vunpack.c.l.b16 %v5600
    %v6782 = vunpack.c.l.b16 %v5601
    %v6783 = vunpack.c.l.b16 %v5602
    %v6784 = vunpack.c.l.b16 %v5603
    %v6785 = vunpack.c.l.b16 %v5604
    %v6786 = vunpack.c.l.b16 %v5605
    %v6787 = vunpack.c.l.b16 %v5606
    %v6788 = vunpack.c.l.b16 %v5607
    %v6789 = vunpack.c.l.b16 %v5608
    %v6790 = vunpack.c.l.b16 %v5609
    %v6791 = vunpack.c.l.b16 %v5610
    %v6792 = vunpack.c.l.b16 %v5611
    %v6793 = vunpack.c.l.b16 %v5612
    %v6794 = vunpack.c.l.b16 %v5613
    %v6795 = vunpack.c.l.b16 %v5614
    %v6796 = vunpack.c.l.b16 %v5615
    %v6797 = vunpack.c.l.b16 %v5616
    %v6798 = vunpack.c.l.b16 %v5617
    %v6799 = vunpack.c.l.b16 %v5618
    %v6800 = vunpack.c.l.b16 %v5619
    %v6801 = vunpack.c.l.b16 %v5620
    %v6802 = vunpack.c.l.b16 %v5621
    %v6803 = vunpack.c.l.b16 %v5622
    %v6804 = vunpack.c.l.b16 %v5623
    %v6805 = vunpack.c.l.b16 %v5624
    %v6806 = vunpack.c.l.b16 %v5625
    %v6807 = vpack.c.b16 %v6770, %v6769
    %v6808 = vpack.c.b16 %v6772, %v6771
    %v6809 = vpack.c.b16 %v6774, %v6773
    %v6810 = vpack.c.b16 %v6776, %v6775
    %v6811 = vpack.c.b16 %v6778, %v6777
    %v6812 = vpack.c.b16 %v6780, %v6779
    %v6813 = vpack.c.b16 %v6782, %v6781
    %v6814 = vpack.c.b16 %v6784, %v6783
    %v6815 = vpack.c.b16 %v6786, %v6785
    %v6816 = vpack.c.b16 %v6788, %v6787
    %v6817 = vpack.c.b16 %v6790, %v6789
    %v6818 = vpack.c.b16 %v6792, %v6791
    %v6819 = vpack.c.b16 %v6794, %v6793
    %v6820 = vpack.c.b16 %v6796, %v6795
    %v6821 = vpack.c.b16 %v6798, %v6797
    %v6822 = vpack.c.b16 %v6800, %v6799
    %v6823 = vpack.c.b16 %v6802, %v6801
    %v6824 = vpack.c.b16 %v6804, %v6803
    %v6825 = vpack.c.b16 %v6806, %v6805
    %v6834 = vunpack.c.l.b16 %v6723
    %v6835 = vunpack.c.l.b16 %v6724
    %v6836 = vunpack.c.l.b16 %v6725
    %v6837 = vunpack.c.l.b16 %v6726
    %v6838 = vunpack.c.l.b16 %v6727
    %v6839 = vunpack.c.l.b16 %v6728
    %v6840 = vunpack.c.l.b16 %v6729
    %v6841 = vunpack.c.l.b16 %v6730
    %v6842 = vpack.c.b16 %v6835, %v6834
    %v6843 = vpack.c.b16 %v6837, %v6836
    %v6844 = vpack.c.b16 %v6839, %v6838
    %v6845 = vpack.c.b16 %v6841, %v6840
    %v6851 = vsel %vm5773, %v6807, 0
    %v6854 = vsel %vm5773, %v6808, 0
    %v6857 = vsel %vm5773, %v6809, 0
    %v6860 = vsel %vm5773, %v6810, 0
    %v6863 = vsel %vm5773, %v6811, 0
    %v6866 = vsel %vm5773, %v6812, 0
    %v6869 = vsel %vm5773, %v6813, 0
    %v6872 = vsel %vm5773, %v6814, 0
    %v6875 = vsel %vm5773, %v6815, 0
    %v6878 = vsel %vm5773, %v6816, 0
    %v6881 = vsel %vm5773, %v6817, 0
    %v6884 = vsel %vm5773, %v6818, 0
    %v6887 = vsel %vm5773, %v6819, 0
    %v6890 = vsel %vm5773, %v6820, 0
    %v6893 = vsel %vm5773, %v6821, 0
    %v6896 = vsel %vm5773, %v6822, 0
    %v6899 = vsel %vm5773, %v6823, 0
    %v6902 = vsel %vm5773, %v6824, 0
    %v6905 = vsel %vm5773, %v6825, 0
    %6907 = vmatpush.bf16.msra.mxu0 0
    %6908 = vmatpush.bf16.msra.mxu0 0
    %6909 = vmatpush.bf16.msra.mxu0 0
    %6910 = vmatpush.bf16.msra.mxu0 0
    %6911 = vmatpush.bf16.msra.mxu0 %v6845
    %6912 = vmatpush.bf16.msra.mxu0 %v6844
    %6913 = vmatpush.bf16.msra.mxu0 %v6843
    %6914 = vmatpush.bf16.msra.mxu0 %v6842
    %6915 = vmatmul.bf16.gmra.mxu0 %v6851
    %v6916 = vpop.f32.mrf.mxu0
    %v6917 = vadd.f32 0.0, %v6916
    %v6918 = vpop.f32.mrf.mxu0
    %v6919 = vadd.f32 0.0, %v6918
    %6920 = vmatmul.bf16.gmra.mxu0 %v6854
    %v6921 = vpop.f32.mrf.mxu0
    %v6922 = vadd.f32 0.0, %v6921
    %v6923 = vpop.f32.mrf.mxu0
    %v6924 = vadd.f32 0.0, %v6923
    %6925 = vmatmul.bf16.gmra.mxu0 %v6857
    %v6926 = vpop.f32.mrf.mxu0
    %v6927 = vadd.f32 0.0, %v6926
    %v6928 = vpop.f32.mrf.mxu0
    %v6929 = vadd.f32 0.0, %v6928
    %6930 = vmatmul.bf16.gmra.mxu0 %v6860
    %v6931 = vpop.f32.mrf.mxu0
    %v6932 = vadd.f32 0.0, %v6931
    %v6933 = vpop.f32.mrf.mxu0
    %v6934 = vadd.f32 0.0, %v6933
    %6935 = vmatmul.bf16.gmra.mxu0 %v6863
    %v6936 = vpop.f32.mrf.mxu0
    %v6937 = vadd.f32 0.0, %v6936
    %v6938 = vpop.f32.mrf.mxu0
    %v6939 = vadd.f32 0.0, %v6938
    %6940 = vmatmul.bf16.gmra.mxu0 %v6866
    %v6941 = vpop.f32.mrf.mxu0
    %v6942 = vadd.f32 0.0, %v6941
    %v6943 = vpop.f32.mrf.mxu0
    %v6944 = vadd.f32 0.0, %v6943
    %6945 = vmatmul.bf16.gmra.mxu0 %v6869
    %v6946 = vpop.f32.mrf.mxu0
    %v6947 = vadd.f32 0.0, %v6946
    %v6948 = vpop.f32.mrf.mxu0
    %v6949 = vadd.f32 0.0, %v6948
    %6950 = vmatmul.bf16.gmra.mxu0 %v6872
    %v6951 = vpop.f32.mrf.mxu0
    %v6952 = vadd.f32 0.0, %v6951
    %v6953 = vpop.f32.mrf.mxu0
    %v6954 = vadd.f32 0.0, %v6953
    %6955 = vmatmul.bf16.gmra.mxu0 %v6875
    %v6956 = vpop.f32.mrf.mxu0
    %v6957 = vadd.f32 0.0, %v6956
    %v6958 = vpop.f32.mrf.mxu0
    %v6959 = vadd.f32 0.0, %v6958
    %6960 = vmatmul.bf16.gmra.mxu0 %v6878
    %v6961 = vpop.f32.mrf.mxu0
    %v6962 = vadd.f32 0.0, %v6961
    %v6963 = vpop.f32.mrf.mxu0
    %v6964 = vadd.f32 0.0, %v6963
    %6965 = vmatmul.bf16.gmra.mxu0 %v6881
    %v6966 = vpop.f32.mrf.mxu0
    %v6967 = vadd.f32 0.0, %v6966
    %v6968 = vpop.f32.mrf.mxu0
    %v6969 = vadd.f32 0.0, %v6968
    %6970 = vmatmul.bf16.gmra.mxu0 %v6884
    %v6971 = vpop.f32.mrf.mxu0
    %v6972 = vadd.f32 0.0, %v6971
    %v6973 = vpop.f32.mrf.mxu0
    %v6974 = vadd.f32 0.0, %v6973
    %6975 = vmatmul.bf16.gmra.mxu0 %v6887
    %v6976 = vpop.f32.mrf.mxu0
    %v6977 = vadd.f32 0.0, %v6976
    %v6978 = vpop.f32.mrf.mxu0
    %v6979 = vadd.f32 0.0, %v6978
    %6980 = vmatmul.bf16.gmra.mxu0 %v6890
    %v6981 = vpop.f32.mrf.mxu0
    %v6982 = vadd.f32 0.0, %v6981
    %v6983 = vpop.f32.mrf.mxu0
    %v6984 = vadd.f32 0.0, %v6983
    %6985 = vmatmul.bf16.gmra.mxu0 %v6893
    %v6986 = vpop.f32.mrf.mxu0
    %v6987 = vadd.f32 0.0, %v6986
    %v6988 = vpop.f32.mrf.mxu0
    %v6989 = vadd.f32 0.0, %v6988
    %6990 = vmatmul.bf16.gmra.mxu0 %v6896
    %v6991 = vpop.f32.mrf.mxu0
    %v6992 = vadd.f32 0.0, %v6991
    %v6993 = vpop.f32.mrf.mxu0
    %v6994 = vadd.f32 0.0, %v6993
    %6995 = vmatmul.bf16.gmra.mxu0 %v6899
    %v6996 = vpop.f32.mrf.mxu0
    %v6997 = vadd.f32 0.0, %v6996
    %v6998 = vpop.f32.mrf.mxu0
    %v6999 = vadd.f32 0.0, %v6998
    %7000 = vmatmul.bf16.gmra.mxu0 %v6902
    %v7001 = vpop.f32.mrf.mxu0
    %v7002 = vadd.f32 0.0, %v7001
    %v7003 = vpop.f32.mrf.mxu0
    %v7004 = vadd.f32 0.0, %v7003
    %7005 = vmatmul.bf16.gmra.mxu0 %v6905
    %v7006 = vpop.f32.mrf.mxu0
    %v7007 = vadd.f32 0.0, %v7006
    %v7008 = vpop.f32.mrf.mxu0
    %v7009 = vadd.f32 0.0, %v7008
    %7010 = vdwg.mxu0
    %v7011 = vadd.f32 %v6685, %v6917
    %v7012 = vadd.f32 %v6686, %v6919
    %v7013 = vadd.f32 %v6687, %v6922
    %v7014 = vadd.f32 %v6688, %v6924
    %v7015 = vadd.f32 %v6689, %v6927
    %v7016 = vadd.f32 %v6690, %v6929
    %v7017 = vadd.f32 %v6691, %v6932
    %v7018 = vadd.f32 %v6692, %v6934
    %v7019 = vadd.f32 %v6693, %v6937
    %v7020 = vadd.f32 %v6694, %v6939
    %v7021 = vadd.f32 %v6695, %v6942
    %v7022 = vadd.f32 %v6696, %v6944
    %v7023 = vadd.f32 %v6697, %v6947
    %v7024 = vadd.f32 %v6698, %v6949
    %v7025 = vadd.f32 %v6699, %v6952
    %v7026 = vadd.f32 %v6700, %v6954
    %v7027 = vadd.f32 %v6701, %v6957
    %v7028 = vadd.f32 %v6702, %v6959
    %v7029 = vadd.f32 %v6703, %v6962
    %v7030 = vadd.f32 %v6704, %v6964
    %v7031 = vadd.f32 %v6705, %v6967
    %v7032 = vadd.f32 %v6706, %v6969
    %v7033 = vadd.f32 %v6707, %v6972
    %v7034 = vadd.f32 %v6708, %v6974
    %v7035 = vadd.f32 %v6709, %v6977
    %v7036 = vadd.f32 %v6710, %v6979
    %v7037 = vadd.f32 %v6711, %v6982
    %v7038 = vadd.f32 %v6712, %v6984
    %v7039 = vadd.f32 %v6713, %v6987
    %v7040 = vadd.f32 %v6714, %v6989
    %v7041 = vadd.f32 %v6715, %v6992
    %v7042 = vadd.f32 %v6716, %v6994
    %v7043 = vadd.f32 %v6717, %v6997
    %v7044 = vadd.f32 %v6718, %v6999
    %v7045 = vadd.f32 %v6719, %v7002
    %v7046 = vadd.f32 %v6720, %v7004
    %v7047 = vadd.f32 %v6721, %v7007
    %v7048 = vadd.f32 %v6722, %v7009
    %v7049 = vld [vmem:[%s1 + $0xa0] sm:$0xf]
    %v7050 = vld [vmem:[%s1 + $0xa4] sm:$0xf]
    %v7051 = vld [vmem:[%s1 + $0xa8] sm:$0xf]
    %v7052 = vld [vmem:[%s1 + $0xac] sm:$0xf]
    %v7053 = vld [vmem:[%s1 + $0xb0] sm:$0xf]
    %v7054 = vld [vmem:[%s1 + $0xb4] sm:$0xf]
    %v7055 = vld [vmem:[%s1 + $0xb8] sm:$0xf]
    %v7056 = vld [vmem:[%s1 + $0xbc] sm:$0xf]
    %v7059 = vunpack.c.l.b16 %v5576
    %v7060 = vunpack.c.l.b16 %v5577
    %v7061 = vpack.c.b16 %v7060, %v7059
    %v7070 = vunpack.c.l.b16 %v7049
    %v7071 = vunpack.c.l.b16 %v7050
    %v7072 = vunpack.c.l.b16 %v7051
    %v7073 = vunpack.c.l.b16 %v7052
    %v7074 = vunpack.c.l.b16 %v7053
    %v7075 = vunpack.c.l.b16 %v7054
    %v7076 = vunpack.c.l.b16 %v7055
    %v7077 = vunpack.c.l.b16 %v7056
    %v7078 = vpack.c.b16 %v7071, %v7070
    %v7079 = vpack.c.b16 %v7073, %v7072
    %v7080 = vpack.c.b16 %v7075, %v7074
    %v7081 = vpack.c.b16 %v7077, %v7076
    %v7087 = vsel %vm5773, %v7061, 0
    %7089 = vmatpush.bf16.msra.mxu0 0
    %7090 = vmatpush.bf16.msra.mxu0 0
    %7091 = vmatpush.bf16.msra.mxu0 0
    %7092 = vmatpush.bf16.msra.mxu0 0
    %7093 = vmatpush.bf16.msra.mxu0 %v7081
    %7094 = vmatpush.bf16.msra.mxu0 %v7080
    %7095 = vmatpush.bf16.msra.mxu0 %v7079
    %7096 = vmatpush.bf16.msra.mxu0 %v7078
    %7097 = vmatmul.bf16.gmra.mxu0 %v6528
    %v7098 = vpop.f32.mrf.mxu0
    %v7099 = vadd.f32 0.0, %v7098
    %v7100 = vpop.f32.mrf.mxu0
    %v7101 = vadd.f32 0.0, %v7100
    %7102 = vmatmul.bf16.gmra.mxu0 %v6531
    %v7103 = vpop.f32.mrf.mxu0
    %v7104 = vadd.f32 0.0, %v7103
    %v7105 = vpop.f32.mrf.mxu0
    %v7106 = vadd.f32 0.0, %v7105
    %7107 = vmatmul.bf16.gmra.mxu0 %v6534
    %v7108 = vpop.f32.mrf.mxu0
    %v7109 = vadd.f32 0.0, %v7108
    %v7110 = vpop.f32.mrf.mxu0
    %v7111 = vadd.f32 0.0, %v7110
    %7112 = vmatmul.bf16.gmra.mxu0 %v6537
    %v7113 = vpop.f32.mrf.mxu0
    %v7114 = vadd.f32 0.0, %v7113
    %v7115 = vpop.f32.mrf.mxu0
    %v7116 = vadd.f32 0.0, %v7115
    %7117 = vmatmul.bf16.gmra.mxu0 %v6540
    %v7118 = vpop.f32.mrf.mxu0
    %v7119 = vadd.f32 0.0, %v7118
    %v7120 = vpop.f32.mrf.mxu0
    %v7121 = vadd.f32 0.0, %v7120
    %7122 = vmatmul.bf16.gmra.mxu0 %v6543
    %v7123 = vpop.f32.mrf.mxu0
    %v7124 = vadd.f32 0.0, %v7123
    %v7125 = vpop.f32.mrf.mxu0
    %v7126 = vadd.f32 0.0, %v7125
    %7127 = vmatmul.bf16.gmra.mxu0 %v6546
    %v7128 = vpop.f32.mrf.mxu0
    %v7129 = vadd.f32 0.0, %v7128
    %v7130 = vpop.f32.mrf.mxu0
    %v7131 = vadd.f32 0.0, %v7130
    %7132 = vmatmul.bf16.gmra.mxu0 %v6549
    %v7133 = vpop.f32.mrf.mxu0
    %v7134 = vadd.f32 0.0, %v7133
    %v7135 = vpop.f32.mrf.mxu0
    %v7136 = vadd.f32 0.0, %v7135
    %7137 = vmatmul.bf16.gmra.mxu0 %v6552
    %v7138 = vpop.f32.mrf.mxu0
    %v7139 = vadd.f32 0.0, %v7138
    %v7140 = vpop.f32.mrf.mxu0
    %v7141 = vadd.f32 0.0, %v7140
    %7142 = vmatmul.bf16.gmra.mxu0 %v6555
    %v7143 = vpop.f32.mrf.mxu0
    %v7144 = vadd.f32 0.0, %v7143
    %v7145 = vpop.f32.mrf.mxu0
    %v7146 = vadd.f32 0.0, %v7145
    %7147 = vmatmul.bf16.gmra.mxu0 %v6558
    %v7148 = vpop.f32.mrf.mxu0
    %v7149 = vadd.f32 0.0, %v7148
    %v7150 = vpop.f32.mrf.mxu0
    %v7151 = vadd.f32 0.0, %v7150
    %7152 = vmatmul.bf16.gmra.mxu0 %v6561
    %v7153 = vpop.f32.mrf.mxu0
    %v7154 = vadd.f32 0.0, %v7153
    %v7155 = vpop.f32.mrf.mxu0
    %v7156 = vadd.f32 0.0, %v7155
    %7157 = vmatmul.bf16.gmra.mxu0 %v6564
    %v7158 = vpop.f32.mrf.mxu0
    %v7159 = vadd.f32 0.0, %v7158
    %v7160 = vpop.f32.mrf.mxu0
    %v7161 = vadd.f32 0.0, %v7160
    %7162 = vmatmul.bf16.gmra.mxu0 %v6567
    %v7163 = vpop.f32.mrf.mxu0
    %v7164 = vadd.f32 0.0, %v7163
    %v7165 = vpop.f32.mrf.mxu0
    %v7166 = vadd.f32 0.0, %v7165
    %7167 = vmatmul.bf16.gmra.mxu0 %v6570
    %v7168 = vpop.f32.mrf.mxu0
    %v7169 = vadd.f32 0.0, %v7168
    %v7170 = vpop.f32.mrf.mxu0
    %v7171 = vadd.f32 0.0, %v7170
    %7172 = vmatmul.bf16.gmra.mxu0 %v6573
    %v7173 = vpop.f32.mrf.mxu0
    %v7174 = vadd.f32 0.0, %v7173
    %v7175 = vpop.f32.mrf.mxu0
    %v7176 = vadd.f32 0.0, %v7175
    %7177 = vmatmul.bf16.gmra.mxu0 %v6576
    %v7178 = vpop.f32.mrf.mxu0
    %v7179 = vadd.f32 0.0, %v7178
    %v7180 = vpop.f32.mrf.mxu0
    %v7181 = vadd.f32 0.0, %v7180
    %7182 = vmatmul.bf16.gmra.mxu0 %v6579
    %v7183 = vpop.f32.mrf.mxu0
    %v7184 = vadd.f32 0.0, %v7183
    %v7185 = vpop.f32.mrf.mxu0
    %v7186 = vadd.f32 0.0, %v7185
    %7187 = vmatmul.bf16.gmra.mxu0 %v7087
    %v7188 = vpop.f32.mrf.mxu0
    %v7189 = vadd.f32 0.0, %v7188
    %v7190 = vpop.f32.mrf.mxu0
    %v7191 = vadd.f32 0.0, %v7190
    %7192 = vdwg.mxu0
    %v7193 = vadd.f32 %v7011, %v7099
    %v7194 = vadd.f32 %v7012, %v7101
    %v7195 = vadd.f32 %v7013, %v7104
    %v7196 = vadd.f32 %v7014, %v7106
    %v7197 = vadd.f32 %v7015, %v7109
    %v7198 = vadd.f32 %v7016, %v7111
    %v7199 = vadd.f32 %v7017, %v7114
    %v7200 = vadd.f32 %v7018, %v7116
    %v7201 = vadd.f32 %v7019, %v7119
    %v7202 = vadd.f32 %v7020, %v7121
    %v7203 = vadd.f32 %v7021, %v7124
    %v7204 = vadd.f32 %v7022, %v7126
    %v7205 = vadd.f32 %v7023, %v7129
    %v7206 = vadd.f32 %v7024, %v7131
    %v7207 = vadd.f32 %v7025, %v7134
    %v7208 = vadd.f32 %v7026, %v7136
    %v7209 = vadd.f32 %v7027, %v7139
    %v7210 = vadd.f32 %v7028, %v7141
    %v7211 = vadd.f32 %v7029, %v7144
    %v7212 = vadd.f32 %v7030, %v7146
    %v7213 = vadd.f32 %v7031, %v7149
    %v7214 = vadd.f32 %v7032, %v7151
    %v7215 = vadd.f32 %v7033, %v7154
    %v7216 = vadd.f32 %v7034, %v7156
    %v7217 = vadd.f32 %v7035, %v7159
    %v7218 = vadd.f32 %v7036, %v7161
    %v7219 = vadd.f32 %v7037, %v7164
    %v7220 = vadd.f32 %v7038, %v7166
    %v7221 = vadd.f32 %v7039, %v7169
    %v7222 = vadd.f32 %v7040, %v7171
    %v7223 = vadd.f32 %v7041, %v7174
    %v7224 = vadd.f32 %v7042, %v7176
    %v7225 = vadd.f32 %v7043, %v7179
    %v7226 = vadd.f32 %v7044, %v7181
    %v7227 = vadd.f32 %v7045, %v7184
    %v7228 = vadd.f32 %v7046, %v7186
    %v7229 = vadd.f32 %v7047, %v7189
    %v7230 = vadd.f32 %v7048, %v7191
    %v7231 = vld [vmem:[%s1 + $0xc0] sm:$0xf]
    %v7232 = vld [vmem:[%s1 + $0xc4] sm:$0xf]
    %v7233 = vld [vmem:[%s1 + $0xc8] sm:$0xf]
    %v7234 = vld [vmem:[%s1 + $0xcc] sm:$0xf]
    %v7235 = vld [vmem:[%s1 + $0xd0] sm:$0xf]
    %v7236 = vld [vmem:[%s1 + $0xd4] sm:$0xf]
    %v7237 = vld [vmem:[%s1 + $0xd8] sm:$0xf]
    %v7238 = vld [vmem:[%s1 + $0xdc] sm:$0xf]
    %v7247 = vunpack.c.l.b16 %v5478
    %v7248 = vunpack.c.l.b16 %v5479
    %v7249 = vunpack.c.l.b16 %v5480
    %v7250 = vunpack.c.l.b16 %v5481
    %v7251 = vunpack.c.l.b16 %v5482
    %v7252 = vunpack.c.l.b16 %v5483
    %v7253 = vunpack.c.l.b16 %v5484
    %v7254 = vunpack.c.l.b16 %v5485
    %v7255 = vpack.c.b16 %v7248, %v7247
    %v7256 = vpack.c.b16 %v7250, %v7249
    %v7257 = vpack.c.b16 %v7252, %v7251
    %v7258 = vpack.c.b16 %v7254, %v7253
    %v7267 = vunpack.c.l.b16 %v7231
    %v7268 = vunpack.c.l.b16 %v7232
    %v7269 = vunpack.c.l.b16 %v7233
    %v7270 = vunpack.c.l.b16 %v7234
    %v7271 = vunpack.c.l.b16 %v7235
    %v7272 = vunpack.c.l.b16 %v7236
    %v7273 = vunpack.c.l.b16 %v7237
    %v7274 = vunpack.c.l.b16 %v7238
    %v7275 = vpack.c.b16 %v7268, %v7267
    %v7276 = vpack.c.b16 %v7270, %v7269
    %v7277 = vpack.c.b16 %v7272, %v7271
    %v7278 = vpack.c.b16 %v7274, %v7273
    %v7284 = vsel %vm5773, %v7255, 0
    %v7287 = vsel %vm5773, %v7256, 0
    %v7290 = vsel %vm5773, %v7257, 0
    %v7293 = vsel %vm5773, %v7258, 0
    %7295 = vmatpush.bf16.msra.mxu0 0
    %7296 = vmatpush.bf16.msra.mxu0 0
    %7297 = vmatpush.bf16.msra.mxu0 0
    %7298 = vmatpush.bf16.msra.mxu0 0
    %7299 = vmatpush.bf16.msra.mxu0 %v7278
    %7300 = vmatpush.bf16.msra.mxu0 %v7277
    %7301 = vmatpush.bf16.msra.mxu0 %v7276
    %7302 = vmatpush.bf16.msra.mxu0 %v7275
    %7303 = vmatmul.bf16.gmra.mxu0 %v6070
    %v7304 = vpop.f32.mrf.mxu0
    %v7305 = vadd.f32 0.0, %v7304
    %v7306 = vpop.f32.mrf.mxu0
    %v7307 = vadd.f32 0.0, %v7306
    %7308 = vmatmul.bf16.gmra.mxu0 %v6073
    %v7309 = vpop.f32.mrf.mxu0
    %v7310 = vadd.f32 0.0, %v7309
    %v7311 = vpop.f32.mrf.mxu0
    %v7312 = vadd.f32 0.0, %v7311
    %7313 = vmatmul.bf16.gmra.mxu0 %v6076
    %v7314 = vpop.f32.mrf.mxu0
    %v7315 = vadd.f32 0.0, %v7314
    %v7316 = vpop.f32.mrf.mxu0
    %v7317 = vadd.f32 0.0, %v7316
    %7318 = vmatmul.bf16.gmra.mxu0 %v6079
    %v7319 = vpop.f32.mrf.mxu0
    %v7320 = vadd.f32 0.0, %v7319
    %v7321 = vpop.f32.mrf.mxu0
    %v7322 = vadd.f32 0.0, %v7321
    %7323 = vmatmul.bf16.gmra.mxu0 %v6082
    %v7324 = vpop.f32.mrf.mxu0
    %v7325 = vadd.f32 0.0, %v7324
    %v7326 = vpop.f32.mrf.mxu0
    %v7327 = vadd.f32 0.0, %v7326
    %7328 = vmatmul.bf16.gmra.mxu0 %v6085
    %v7329 = vpop.f32.mrf.mxu0
    %v7330 = vadd.f32 0.0, %v7329
    %v7331 = vpop.f32.mrf.mxu0
    %v7332 = vadd.f32 0.0, %v7331
    %7333 = vmatmul.bf16.gmra.mxu0 %v6088
    %v7334 = vpop.f32.mrf.mxu0
    %v7335 = vadd.f32 0.0, %v7334
    %v7336 = vpop.f32.mrf.mxu0
    %v7337 = vadd.f32 0.0, %v7336
    %7338 = vmatmul.bf16.gmra.mxu0 %v6091
    %v7339 = vpop.f32.mrf.mxu0
    %v7340 = vadd.f32 0.0, %v7339
    %v7341 = vpop.f32.mrf.mxu0
    %v7342 = vadd.f32 0.0, %v7341
    %7343 = vmatmul.bf16.gmra.mxu0 %v6094
    %v7344 = vpop.f32.mrf.mxu0
    %v7345 = vadd.f32 0.0, %v7344
    %v7346 = vpop.f32.mrf.mxu0
    %v7347 = vadd.f32 0.0, %v7346
    %7348 = vmatmul.bf16.gmra.mxu0 %v6097
    %v7349 = vpop.f32.mrf.mxu0
    %v7350 = vadd.f32 0.0, %v7349
    %v7351 = vpop.f32.mrf.mxu0
    %v7352 = vadd.f32 0.0, %v7351
    %7353 = vmatmul.bf16.gmra.mxu0 %v6100
    %v7354 = vpop.f32.mrf.mxu0
    %v7355 = vadd.f32 0.0, %v7354
    %v7356 = vpop.f32.mrf.mxu0
    %v7357 = vadd.f32 0.0, %v7356
    %7358 = vmatmul.bf16.gmra.mxu0 %v6103
    %v7359 = vpop.f32.mrf.mxu0
    %v7360 = vadd.f32 0.0, %v7359
    %v7361 = vpop.f32.mrf.mxu0
    %v7362 = vadd.f32 0.0, %v7361
    %7363 = vmatmul.bf16.gmra.mxu0 %v6106
    %v7364 = vpop.f32.mrf.mxu0
    %v7365 = vadd.f32 0.0, %v7364
    %v7366 = vpop.f32.mrf.mxu0
    %v7367 = vadd.f32 0.0, %v7366
    %7368 = vmatmul.bf16.gmra.mxu0 %v6109
    %v7369 = vpop.f32.mrf.mxu0
    %v7370 = vadd.f32 0.0, %v7369
    %v7371 = vpop.f32.mrf.mxu0
    %v7372 = vadd.f32 0.0, %v7371
    %7373 = vmatmul.bf16.gmra.mxu0 %v6253
    %v7374 = vpop.f32.mrf.mxu0
    %v7375 = vadd.f32 0.0, %v7374
    %v7376 = vpop.f32.mrf.mxu0
    %v7377 = vadd.f32 0.0, %v7376
    %7378 = vmatmul.bf16.gmra.mxu0 %v7284
    %v7379 = vpop.f32.mrf.mxu0
    %v7380 = vadd.f32 0.0, %v7379
    %v7381 = vpop.f32.mrf.mxu0
    %v7382 = vadd.f32 0.0, %v7381
    %7383 = vmatmul.bf16.gmra.mxu0 %v7287
    %v7384 = vpop.f32.mrf.mxu0
    %v7385 = vadd.f32 0.0, %v7384
    %v7386 = vpop.f32.mrf.mxu0
    %v7387 = vadd.f32 0.0, %v7386
    %7388 = vmatmul.bf16.gmra.mxu0 %v7290
    %v7389 = vpop.f32.mrf.mxu0
    %v7390 = vadd.f32 0.0, %v7389
    %v7391 = vpop.f32.mrf.mxu0
    %v7392 = vadd.f32 0.0, %v7391
    %7393 = vmatmul.bf16.gmra.mxu0 %v7293
    %v7394 = vpop.f32.mrf.mxu0
    %v7395 = vadd.f32 0.0, %v7394
    %v7396 = vpop.f32.mrf.mxu0
    %v7397 = vadd.f32 0.0, %v7396
    %7398 = vdwg.mxu0
    %v7399 = vadd.f32 %v7193, %v7305
    %v7400 = vadd.f32 %v7194, %v7307
    %v7401 = vadd.f32 %v7195, %v7310
    %v7402 = vadd.f32 %v7196, %v7312
    %v7403 = vadd.f32 %v7197, %v7315
    %v7404 = vadd.f32 %v7198, %v7317
    %v7405 = vadd.f32 %v7199, %v7320
    %v7406 = vadd.f32 %v7200, %v7322
    %v7407 = vadd.f32 %v7201, %v7325
    %v7408 = vadd.f32 %v7202, %v7327
    %v7409 = vadd.f32 %v7203, %v7330
    %v7410 = vadd.f32 %v7204, %v7332
    %v7411 = vadd.f32 %v7205, %v7335
    %v7412 = vadd.f32 %v7206, %v7337
    %v7413 = vadd.f32 %v7207, %v7340
    %v7414 = vadd.f32 %v7208, %v7342
    %v7415 = vadd.f32 %v7209, %v7345
    %v7416 = vadd.f32 %v7210, %v7347
    %v7417 = vadd.f32 %v7211, %v7350
    %v7418 = vadd.f32 %v7212, %v7352
    %v7419 = vadd.f32 %v7213, %v7355
    %v7420 = vadd.f32 %v7214, %v7357
    %v7421 = vadd.f32 %v7215, %v7360
    %v7422 = vadd.f32 %v7216, %v7362
    %v7423 = vadd.f32 %v7217, %v7365
    %v7424 = vadd.f32 %v7218, %v7367
    %v7425 = vadd.f32 %v7219, %v7370
    %v7426 = vadd.f32 %v7220, %v7372
    %v7427 = vadd.f32 %v7221, %v7375
    %v7428 = vadd.f32 %v7222, %v7377
    %v7429 = vadd.f32 %v7223, %v7380
    %v7430 = vadd.f32 %v7224, %v7382
    %v7431 = vadd.f32 %v7225, %v7385
    %v7432 = vadd.f32 %v7226, %v7387
    %v7433 = vadd.f32 %v7227, %v7390
    %v7434 = vadd.f32 %v7228, %v7392
    %v7435 = vadd.f32 %v7229, %v7395
    %v7436 = vadd.f32 %v7230, %v7397
    %v7437 = vld [vmem:[%s1 + $0xe0] sm:$0xf]
    %v7438 = vld [vmem:[%s1 + $0xe4] sm:$0xf]
    %v7439 = vld [vmem:[%s1 + $0xe8] sm:$0xf]
    %v7440 = vld [vmem:[%s1 + $0xec] sm:$0xf]
    %v7441 = vld [vmem:[%s1 + $0xf0] sm:$0xf]
    %v7442 = vld [vmem:[%s1 + $0xf4] sm:$0xf]
    %v7443 = vld [vmem:[%s1 + $0xf8] sm:$0xf]
    %v7444 = vld [vmem:[%s1 + $0xfc] sm:$0xf]
    %v7455 = vunpack.c.l.b16 %v5526
    %v7456 = vunpack.c.l.b16 %v5527
    %v7457 = vunpack.c.l.b16 %v5528
    %v7458 = vunpack.c.l.b16 %v5529
    %v7459 = vunpack.c.l.b16 %v5530
    %v7460 = vunpack.c.l.b16 %v5531
    %v7461 = vunpack.c.l.b16 %v5532
    %v7462 = vunpack.c.l.b16 %v5533
    %v7463 = vunpack.c.l.b16 %v5534
    %v7464 = vunpack.c.l.b16 %v5535
    %v7465 = vpack.c.b16 %v7456, %v7455
    %v7466 = vpack.c.b16 %v7458, %v7457
    %v7467 = vpack.c.b16 %v7460, %v7459
    %v7468 = vpack.c.b16 %v7462, %v7461
    %v7469 = vpack.c.b16 %v7464, %v7463
    %v7478 = vunpack.c.l.b16 %v7437
    %v7479 = vunpack.c.l.b16 %v7438
    %v7480 = vunpack.c.l.b16 %v7439
    %v7481 = vunpack.c.l.b16 %v7440
    %v7482 = vunpack.c.l.b16 %v7441
    %v7483 = vunpack.c.l.b16 %v7442
    %v7484 = vunpack.c.l.b16 %v7443
    %v7485 = vunpack.c.l.b16 %v7444
    %v7486 = vpack.c.b16 %v7479, %v7478
    %v7487 = vpack.c.b16 %v7481, %v7480
    %v7488 = vpack.c.b16 %v7483, %v7482
    %v7489 = vpack.c.b16 %v7485, %v7484
    %v7495 = vsel %vm5773, %v7465, 0
    %v7498 = vsel %vm5773, %v7466, 0
    %v7501 = vsel %vm5773, %v7467, 0
    %v7504 = vsel %vm5773, %v7468, 0
    %v7507 = vsel %vm5773, %v7469, 0
    %7509 = vmatpush.bf16.msra.mxu0 0
    %7510 = vmatpush.bf16.msra.mxu0 0
    %7511 = vmatpush.bf16.msra.mxu0 0
    %7512 = vmatpush.bf16.msra.mxu0 0
    %7513 = vmatpush.bf16.msra.mxu0 %v7489
    %7514 = vmatpush.bf16.msra.mxu0 %v7488
    %7515 = vmatpush.bf16.msra.mxu0 %v7487
    %7516 = vmatpush.bf16.msra.mxu0 %v7486
    %7517 = vmatmul.bf16.gmra.mxu0 %v5790
    %v7518 = vpop.f32.mrf.mxu0
    %v7519 = vadd.f32 0.0, %v7518
    %v7520 = vpop.f32.mrf.mxu0
    %v7521 = vadd.f32 0.0, %v7520
    %7522 = vmatmul.bf16.gmra.mxu0 %v5793
    %v7523 = vpop.f32.mrf.mxu0
    %v7524 = vadd.f32 0.0, %v7523
    %v7525 = vpop.f32.mrf.mxu0
    %v7526 = vadd.f32 0.0, %v7525
    %7527 = vmatmul.bf16.gmra.mxu0 %v5796
    %v7528 = vpop.f32.mrf.mxu0
    %v7529 = vadd.f32 0.0, %v7528
    %v7530 = vpop.f32.mrf.mxu0
    %v7531 = vadd.f32 0.0, %v7530
    %7532 = vmatmul.bf16.gmra.mxu0 %v5799
    %v7533 = vpop.f32.mrf.mxu0
    %v7534 = vadd.f32 0.0, %v7533
    %v7535 = vpop.f32.mrf.mxu0
    %v7536 = vadd.f32 0.0, %v7535
    %7537 = vmatmul.bf16.gmra.mxu0 %v5802
    %v7538 = vpop.f32.mrf.mxu0
    %v7539 = vadd.f32 0.0, %v7538
    %v7540 = vpop.f32.mrf.mxu0
    %v7541 = vadd.f32 0.0, %v7540
    %7542 = vmatmul.bf16.gmra.mxu0 %v5805
    %v7543 = vpop.f32.mrf.mxu0
    %v7544 = vadd.f32 0.0, %v7543
    %v7545 = vpop.f32.mrf.mxu0
    %v7546 = vadd.f32 0.0, %v7545
    %7547 = vmatmul.bf16.gmra.mxu0 %v5808
    %v7548 = vpop.f32.mrf.mxu0
    %v7549 = vadd.f32 0.0, %v7548
    %v7550 = vpop.f32.mrf.mxu0
    %v7551 = vadd.f32 0.0, %v7550
    %7552 = vmatmul.bf16.gmra.mxu0 %v5811
    %v7553 = vpop.f32.mrf.mxu0
    %v7554 = vadd.f32 0.0, %v7553
    %v7555 = vpop.f32.mrf.mxu0
    %v7556 = vadd.f32 0.0, %v7555
    %7557 = vmatmul.bf16.gmra.mxu0 %v5814
    %v7558 = vpop.f32.mrf.mxu0
    %v7559 = vadd.f32 0.0, %v7558
    %v7560 = vpop.f32.mrf.mxu0
    %v7561 = vadd.f32 0.0, %v7560
    %7562 = vmatmul.bf16.gmra.mxu0 %v5817
    %v7563 = vpop.f32.mrf.mxu0
    %v7564 = vadd.f32 0.0, %v7563
    %v7565 = vpop.f32.mrf.mxu0
    %v7566 = vadd.f32 0.0, %v7565
    %7567 = vmatmul.bf16.gmra.mxu0 %v5820
    %v7568 = vpop.f32.mrf.mxu0
    %v7569 = vadd.f32 0.0, %v7568
    %v7570 = vpop.f32.mrf.mxu0
    %v7571 = vadd.f32 0.0, %v7570
    %7572 = vmatmul.bf16.gmra.mxu0 %v5823
    %v7573 = vpop.f32.mrf.mxu0
    %v7574 = vadd.f32 0.0, %v7573
    %v7575 = vpop.f32.mrf.mxu0
    %v7576 = vadd.f32 0.0, %v7575
    %7577 = vmatmul.bf16.gmra.mxu0 %v5826
    %v7578 = vpop.f32.mrf.mxu0
    %v7579 = vadd.f32 0.0, %v7578
    %v7580 = vpop.f32.mrf.mxu0
    %v7581 = vadd.f32 0.0, %v7580
    %7582 = vmatmul.bf16.gmra.mxu0 %v5829
    %v7583 = vpop.f32.mrf.mxu0
    %v7584 = vadd.f32 0.0, %v7583
    %v7585 = vpop.f32.mrf.mxu0
    %v7586 = vadd.f32 0.0, %v7585
    %7587 = vmatmul.bf16.gmra.mxu0 %v7495
    %v7588 = vpop.f32.mrf.mxu0
    %v7589 = vadd.f32 0.0, %v7588
    %v7590 = vpop.f32.mrf.mxu0
    %v7591 = vadd.f32 0.0, %v7590
    %7592 = vmatmul.bf16.gmra.mxu0 %v7498
    %v7593 = vpop.f32.mrf.mxu0
    %v7594 = vadd.f32 0.0, %v7593
    %v7595 = vpop.f32.mrf.mxu0
    %v7596 = vadd.f32 0.0, %v7595
    %7597 = vmatmul.bf16.gmra.mxu0 %v7501
    %v7598 = vpop.f32.mrf.mxu0
    %v7599 = vadd.f32 0.0, %v7598
    %v7600 = vpop.f32.mrf.mxu0
    %v7601 = vadd.f32 0.0, %v7600
    %7602 = vmatmul.bf16.gmra.mxu0 %v7504
    %v7603 = vpop.f32.mrf.mxu0
    %v7604 = vadd.f32 0.0, %v7603
    %v7605 = vpop.f32.mrf.mxu0
    %v7606 = vadd.f32 0.0, %v7605
    %7607 = vmatmul.bf16.gmra.mxu0 %v7507
    %v7608 = vpop.f32.mrf.mxu0
    %v7609 = vadd.f32 0.0, %v7608
    %v7610 = vpop.f32.mrf.mxu0
    %v7611 = vadd.f32 0.0, %v7610
    %7612 = vdwg.mxu0
    %v7613 = vadd.f32 %v7399, %v7519
    %v7614 = vadd.f32 %v7400, %v7521
    %v7615 = vadd.f32 %v7401, %v7524
    %v7616 = vadd.f32 %v7402, %v7526
    %v7617 = vadd.f32 %v7403, %v7529
    %v7618 = vadd.f32 %v7404, %v7531
    %v7619 = vadd.f32 %v7405, %v7534
    %v7620 = vadd.f32 %v7406, %v7536
    %v7621 = vadd.f32 %v7407, %v7539
    %v7622 = vadd.f32 %v7408, %v7541
    %v7623 = vadd.f32 %v7409, %v7544
    %v7624 = vadd.f32 %v7410, %v7546
    %v7625 = vadd.f32 %v7411, %v7549
    %v7626 = vadd.f32 %v7412, %v7551
    %v7627 = vadd.f32 %v7413, %v7554
    %v7628 = vadd.f32 %v7414, %v7556
    %v7629 = vadd.f32 %v7415, %v7559
    %v7630 = vadd.f32 %v7416, %v7561
    %v7631 = vadd.f32 %v7417, %v7564
    %v7632 = vadd.f32 %v7418, %v7566
    %v7633 = vadd.f32 %v7419, %v7569
    %v7634 = vadd.f32 %v7420, %v7571
    %v7635 = vadd.f32 %v7421, %v7574
    %v7636 = vadd.f32 %v7422, %v7576
    %v7637 = vadd.f32 %v7423, %v7579
    %v7638 = vadd.f32 %v7424, %v7581
    %v7639 = vadd.f32 %v7425, %v7584
    %v7640 = vadd.f32 %v7426, %v7586
    %v7641 = vadd.f32 %v7427, %v7589
    %v7642 = vadd.f32 %v7428, %v7591
    %v7643 = vadd.f32 %v7429, %v7594
    %v7644 = vadd.f32 %v7430, %v7596
    %v7645 = vadd.f32 %v7431, %v7599
    %v7646 = vadd.f32 %v7432, %v7601
    %v7647 = vadd.f32 %v7433, %v7604
    %v7648 = vadd.f32 %v7434, %v7606
    %v7649 = vadd.f32 %v7435, %v7609
    %v7650 = vadd.f32 %v7436, %v7611
    %v7651 = vld [vmem:[%s1 + $0x100] sm:$0xf]
    %v7652 = vld [vmem:[%s1 + $0x104] sm:$0xf]
    %v7653 = vld [vmem:[%s1 + $0x108] sm:$0xf]
    %v7654 = vld [vmem:[%s1 + $0x10c] sm:$0xf]
    %v7655 = vld [vmem:[%s1 + $0x110] sm:$0xf]
    %v7656 = vld [vmem:[%s1 + $0x114] sm:$0xf]
    %v7657 = vld [vmem:[%s1 + $0x118] sm:$0xf]
    %v7658 = vld [vmem:[%s1 + $0x11c] sm:$0xf]
    %v7661 = vunpack.c.l.b16 %v5486
    %v7662 = vunpack.c.l.b16 %v5487
    %v7663 = vpack.c.b16 %v7662, %v7661
    %v7672 = vunpack.c.l.b16 %v7651
    %v7673 = vunpack.c.l.b16 %v7652
    %v7674 = vunpack.c.l.b16 %v7653
    %v7675 = vunpack.c.l.b16 %v7654
    %v7676 = vunpack.c.l.b16 %v7655
    %v7677 = vunpack.c.l.b16 %v7656
    %v7678 = vunpack.c.l.b16 %v7657
    %v7679 = vunpack.c.l.b16 %v7658
    %v7680 = vpack.c.b16 %v7673, %v7672
    %v7681 = vpack.c.b16 %v7675, %v7674
    %v7682 = vpack.c.b16 %v7677, %v7676
    %v7683 = vpack.c.b16 %v7679, %v7678
    %v7689 = vsel %vm5773, %v7663, 0
    %7691 = vmatpush.bf16.msra.mxu0 0
    %7692 = vmatpush.bf16.msra.mxu0 0
    %7693 = vmatpush.bf16.msra.mxu0 0
    %7694 = vmatpush.bf16.msra.mxu0 0
    %7695 = vmatpush.bf16.msra.mxu0 %v7683
    %7696 = vmatpush.bf16.msra.mxu0 %v7682
    %7697 = vmatpush.bf16.msra.mxu0 %v7681
    %7698 = vmatpush.bf16.msra.mxu0 %v7680
    %7699 = vmatmul.bf16.gmra.mxu0 %v6073
    %v7700 = vpop.f32.mrf.mxu0
    %v7701 = vadd.f32 0.0, %v7700
    %v7702 = vpop.f32.mrf.mxu0
    %v7703 = vadd.f32 0.0, %v7702
    %7704 = vmatmul.bf16.gmra.mxu0 %v6076
    %v7705 = vpop.f32.mrf.mxu0
    %v7706 = vadd.f32 0.0, %v7705
    %v7707 = vpop.f32.mrf.mxu0
    %v7708 = vadd.f32 0.0, %v7707
    %7709 = vmatmul.bf16.gmra.mxu0 %v6079
    %v7710 = vpop.f32.mrf.mxu0
    %v7711 = vadd.f32 0.0, %v7710
    %v7712 = vpop.f32.mrf.mxu0
    %v7713 = vadd.f32 0.0, %v7712
    %7714 = vmatmul.bf16.gmra.mxu0 %v6082
    %v7715 = vpop.f32.mrf.mxu0
    %v7716 = vadd.f32 0.0, %v7715
    %v7717 = vpop.f32.mrf.mxu0
    %v7718 = vadd.f32 0.0, %v7717
    %7719 = vmatmul.bf16.gmra.mxu0 %v6085
    %v7720 = vpop.f32.mrf.mxu0
    %v7721 = vadd.f32 0.0, %v7720
    %v7722 = vpop.f32.mrf.mxu0
    %v7723 = vadd.f32 0.0, %v7722
    %7724 = vmatmul.bf16.gmra.mxu0 %v6088
    %v7725 = vpop.f32.mrf.mxu0
    %v7726 = vadd.f32 0.0, %v7725
    %v7727 = vpop.f32.mrf.mxu0
    %v7728 = vadd.f32 0.0, %v7727
    %7729 = vmatmul.bf16.gmra.mxu0 %v6091
    %v7730 = vpop.f32.mrf.mxu0
    %v7731 = vadd.f32 0.0, %v7730
    %v7732 = vpop.f32.mrf.mxu0
    %v7733 = vadd.f32 0.0, %v7732
    %7734 = vmatmul.bf16.gmra.mxu0 %v6094
    %v7735 = vpop.f32.mrf.mxu0
    %v7736 = vadd.f32 0.0, %v7735
    %v7737 = vpop.f32.mrf.mxu0
    %v7738 = vadd.f32 0.0, %v7737
    %7739 = vmatmul.bf16.gmra.mxu0 %v6097
    %v7740 = vpop.f32.mrf.mxu0
    %v7741 = vadd.f32 0.0, %v7740
    %v7742 = vpop.f32.mrf.mxu0
    %v7743 = vadd.f32 0.0, %v7742
    %7744 = vmatmul.bf16.gmra.mxu0 %v6100
    %v7745 = vpop.f32.mrf.mxu0
    %v7746 = vadd.f32 0.0, %v7745
    %v7747 = vpop.f32.mrf.mxu0
    %v7748 = vadd.f32 0.0, %v7747
    %7749 = vmatmul.bf16.gmra.mxu0 %v6103
    %v7750 = vpop.f32.mrf.mxu0
    %v7751 = vadd.f32 0.0, %v7750
    %v7752 = vpop.f32.mrf.mxu0
    %v7753 = vadd.f32 0.0, %v7752
    %7754 = vmatmul.bf16.gmra.mxu0 %v6106
    %v7755 = vpop.f32.mrf.mxu0
    %v7756 = vadd.f32 0.0, %v7755
    %v7757 = vpop.f32.mrf.mxu0
    %v7758 = vadd.f32 0.0, %v7757
    %7759 = vmatmul.bf16.gmra.mxu0 %v6109
    %v7760 = vpop.f32.mrf.mxu0
    %v7761 = vadd.f32 0.0, %v7760
    %v7762 = vpop.f32.mrf.mxu0
    %v7763 = vadd.f32 0.0, %v7762
    %7764 = vmatmul.bf16.gmra.mxu0 %v6253
    %v7765 = vpop.f32.mrf.mxu0
    %v7766 = vadd.f32 0.0, %v7765
    %v7767 = vpop.f32.mrf.mxu0
    %v7768 = vadd.f32 0.0, %v7767
    %7769 = vmatmul.bf16.gmra.mxu0 %v7284
    %v7770 = vpop.f32.mrf.mxu0
    %v7771 = vadd.f32 0.0, %v7770
    %v7772 = vpop.f32.mrf.mxu0
    %v7773 = vadd.f32 0.0, %v7772
    %7774 = vmatmul.bf16.gmra.mxu0 %v7287
    %v7775 = vpop.f32.mrf.mxu0
    %v7776 = vadd.f32 0.0, %v7775
    %v7777 = vpop.f32.mrf.mxu0
    %v7778 = vadd.f32 0.0, %v7777
    %7779 = vmatmul.bf16.gmra.mxu0 %v7290
    %v7780 = vpop.f32.mrf.mxu0
    %v7781 = vadd.f32 0.0, %v7780
    %v7782 = vpop.f32.mrf.mxu0
    %v7783 = vadd.f32 0.0, %v7782
    %7784 = vmatmul.bf16.gmra.mxu0 %v7293
    %v7785 = vpop.f32.mrf.mxu0
    %v7786 = vadd.f32 0.0, %v7785
    %v7787 = vpop.f32.mrf.mxu0
    %v7788 = vadd.f32 0.0, %v7787
    %7789 = vmatmul.bf16.gmra.mxu0 %v7689
    %v7790 = vpop.f32.mrf.mxu0
    %v7791 = vadd.f32 0.0, %v7790
    %v7792 = vpop.f32.mrf.mxu0
    %v7793 = vadd.f32 0.0, %v7792
    %7794 = vdwg.mxu0
    %v7795 = vadd.f32 %v7613, %v7701
    %v7796 = vadd.f32 %v7614, %v7703
    %v7797 = vadd.f32 %v7615, %v7706
    %v7798 = vadd.f32 %v7616, %v7708
    %v7799 = vadd.f32 %v7617, %v7711
    %v7800 = vadd.f32 %v7618, %v7713
    %v7801 = vadd.f32 %v7619, %v7716
    %v7802 = vadd.f32 %v7620, %v7718
    %v7803 = vadd.f32 %v7621, %v7721
    %v7804 = vadd.f32 %v7622, %v7723
    %v7805 = vadd.f32 %v7623, %v7726
    %v7806 = vadd.f32 %v7624, %v7728
    %v7807 = vadd.f32 %v7625, %v7731
    %v7808 = vadd.f32 %v7626, %v7733
    %v7809 = vadd.f32 %v7627, %v7736
    %v7810 = vadd.f32 %v7628, %v7738
    %v7811 = vadd.f32 %v7629, %v7741
    %v7812 = vadd.f32 %v7630, %v7743
    %v7813 = vadd.f32 %v7631, %v7746
    %v7814 = vadd.f32 %v7632, %v7748
    %v7815 = vadd.f32 %v7633, %v7751
    %v7816 = vadd.f32 %v7634, %v7753
    %v7817 = vadd.f32 %v7635, %v7756
    %v7818 = vadd.f32 %v7636, %v7758
    %v7819 = vadd.f32 %v7637, %v7761
    %v7820 = vadd.f32 %v7638, %v7763
    %v7821 = vadd.f32 %v7639, %v7766
    %v7822 = vadd.f32 %v7640, %v7768
    %v7823 = vadd.f32 %v7641, %v7771
    %v7824 = vadd.f32 %v7642, %v7773
    %v7825 = vadd.f32 %v7643, %v7776
    %v7826 = vadd.f32 %v7644, %v7778
    %v7827 = vadd.f32 %v7645, %v7781
    %v7828 = vadd.f32 %v7646, %v7783
    %v7829 = vadd.f32 %v7647, %v7786
    %v7830 = vadd.f32 %v7648, %v7788
    %v7831 = vadd.f32 %v7649, %v7791
    %v7832 = vadd.f32 %v7650, %v7793
    %7833 = vmatpush.bf16.msra.mxu0 0
    %7834 = vmatpush.bf16.msra.mxu0 0
    %7835 = vmatpush.bf16.msra.mxu0 0
    %7836 = vmatpush.bf16.msra.mxu0 0
    %7837 = vmatpush.bf16.msra.mxu0 %v5768
    %7838 = vmatpush.bf16.msra.mxu0 %v5767
    %7839 = vmatpush.bf16.msra.mxu0 %v5766
    %7840 = vmatpush.bf16.msra.mxu0 %v5765
    %7841 = vmatmul.bf16.gmra.mxu0 %v6058
    %v7842 = vpop.f32.mrf.mxu0
    %v7843 = vadd.f32 0.0, %v7842
    %v7844 = vpop.f32.mrf.mxu0
    %v7845 = vadd.f32 0.0, %v7844
    %7846 = vmatmul.bf16.gmra.mxu0 %v6061
    %v7847 = vpop.f32.mrf.mxu0
    %v7848 = vadd.f32 0.0, %v7847
    %v7849 = vpop.f32.mrf.mxu0
    %v7850 = vadd.f32 0.0, %v7849
    %7851 = vmatmul.bf16.gmra.mxu0 %v6064
    %v7852 = vpop.f32.mrf.mxu0
    %v7853 = vadd.f32 0.0, %v7852
    %v7854 = vpop.f32.mrf.mxu0
    %v7855 = vadd.f32 0.0, %v7854
    %7856 = vmatmul.bf16.gmra.mxu0 %v6067
    %v7857 = vpop.f32.mrf.mxu0
    %v7858 = vadd.f32 0.0, %v7857
    %v7859 = vpop.f32.mrf.mxu0
    %v7860 = vadd.f32 0.0, %v7859
    %7861 = vmatmul.bf16.gmra.mxu0 %v6070
    %v7862 = vpop.f32.mrf.mxu0
    %v7863 = vadd.f32 0.0, %v7862
    %v7864 = vpop.f32.mrf.mxu0
    %v7865 = vadd.f32 0.0, %v7864
    %7866 = vmatmul.bf16.gmra.mxu0 %v6073
    %v7867 = vpop.f32.mrf.mxu0
    %v7868 = vadd.f32 0.0, %v7867
    %v7869 = vpop.f32.mrf.mxu0
    %v7870 = vadd.f32 0.0, %v7869
    %7871 = vmatmul.bf16.gmra.mxu0 %v6076
    %v7872 = vpop.f32.mrf.mxu0
    %v7873 = vadd.f32 0.0, %v7872
    %v7874 = vpop.f32.mrf.mxu0
    %v7875 = vadd.f32 0.0, %v7874
    %7876 = vmatmul.bf16.gmra.mxu0 %v6079
    %v7877 = vpop.f32.mrf.mxu0
    %v7878 = vadd.f32 0.0, %v7877
    %v7879 = vpop.f32.mrf.mxu0
    %v7880 = vadd.f32 0.0, %v7879
    %7881 = vmatmul.bf16.gmra.mxu0 %v6082
    %v7882 = vpop.f32.mrf.mxu0
    %v7883 = vadd.f32 0.0, %v7882
    %v7884 = vpop.f32.mrf.mxu0
    %v7885 = vadd.f32 0.0, %v7884
    %7886 = vmatmul.bf16.gmra.mxu0 %v6085
    %v7887 = vpop.f32.mrf.mxu0
    %v7888 = vadd.f32 0.0, %v7887
    %v7889 = vpop.f32.mrf.mxu0
    %v7890 = vadd.f32 0.0, %v7889
    %7891 = vmatmul.bf16.gmra.mxu0 %v6088
    %v7892 = vpop.f32.mrf.mxu0
    %v7893 = vadd.f32 0.0, %v7892
    %v7894 = vpop.f32.mrf.mxu0
    %v7895 = vadd.f32 0.0, %v7894
    %7896 = vmatmul.bf16.gmra.mxu0 %v6091
    %v7897 = vpop.f32.mrf.mxu0
    %v7898 = vadd.f32 0.0, %v7897
    %v7899 = vpop.f32.mrf.mxu0
    %v7900 = vadd.f32 0.0, %v7899
    %7901 = vmatmul.bf16.gmra.mxu0 %v6094
    %v7902 = vpop.f32.mrf.mxu0
    %v7903 = vadd.f32 0.0, %v7902
    %v7904 = vpop.f32.mrf.mxu0
    %v7905 = vadd.f32 0.0, %v7904
    %7906 = vmatmul.bf16.gmra.mxu0 %v6097
    %v7907 = vpop.f32.mrf.mxu0
    %v7908 = vadd.f32 0.0, %v7907
    %v7909 = vpop.f32.mrf.mxu0
    %v7910 = vadd.f32 0.0, %v7909
    %7911 = vmatmul.bf16.gmra.mxu0 %v6100
    %v7912 = vpop.f32.mrf.mxu0
    %v7913 = vadd.f32 0.0, %v7912
    %v7914 = vpop.f32.mrf.mxu0
    %v7915 = vadd.f32 0.0, %v7914
    %7916 = vmatmul.bf16.gmra.mxu0 %v6103
    %v7917 = vpop.f32.mrf.mxu0
    %v7918 = vadd.f32 0.0, %v7917
    %v7919 = vpop.f32.mrf.mxu0
    %v7920 = vadd.f32 0.0, %v7919
    %7921 = vmatmul.bf16.gmra.mxu0 %v6106
    %v7922 = vpop.f32.mrf.mxu0
    %v7923 = vadd.f32 0.0, %v7922
    %v7924 = vpop.f32.mrf.mxu0
    %v7925 = vadd.f32 0.0, %v7924
    %7926 = vmatmul.bf16.gmra.mxu0 %v6109
    %v7927 = vpop.f32.mrf.mxu0
    %v7928 = vadd.f32 0.0, %v7927
    %v7929 = vpop.f32.mrf.mxu0
    %v7930 = vadd.f32 0.0, %v7929
    %7931 = vmatmul.bf16.gmra.mxu0 %v6253
    %v7932 = vpop.f32.mrf.mxu0
    %v7933 = vadd.f32 0.0, %v7932
    %v7934 = vpop.f32.mrf.mxu0
    %v7935 = vadd.f32 0.0, %v7934
    %7936 = vdwg.mxu0
    %7937 = vmatpush.bf16.msra.mxu0 0
    %7938 = vmatpush.bf16.msra.mxu0 0
    %7939 = vmatpush.bf16.msra.mxu0 0
    %7940 = vmatpush.bf16.msra.mxu0 0
    %7941 = vmatpush.bf16.msra.mxu0 %v6049
    %7942 = vmatpush.bf16.msra.mxu0 %v6048
    %7943 = vmatpush.bf16.msra.mxu0 %v6047
    %7944 = vmatpush.bf16.msra.mxu0 %v6046
    %7945 = vmatmul.bf16.gmra.mxu0 %v5775
    %v7946 = vpop.f32.mrf.mxu0
    %v7947 = vadd.f32 %v7843, %v7946
    %v7948 = vpop.f32.mrf.mxu0
    %v7949 = vadd.f32 %v7845, %v7948
    %7950 = vmatmul.bf16.gmra.mxu0 %v5778
    %v7951 = vpop.f32.mrf.mxu0
    %v7952 = vadd.f32 %v7848, %v7951
    %v7953 = vpop.f32.mrf.mxu0
    %v7954 = vadd.f32 %v7850, %v7953
    %7955 = vmatmul.bf16.gmra.mxu0 %v5781
    %v7956 = vpop.f32.mrf.mxu0
    %v7957 = vadd.f32 %v7853, %v7956
    %v7958 = vpop.f32.mrf.mxu0
    %v7959 = vadd.f32 %v7855, %v7958
    %7960 = vmatmul.bf16.gmra.mxu0 %v5784
    %v7961 = vpop.f32.mrf.mxu0
    %v7962 = vadd.f32 %v7858, %v7961
    %v7963 = vpop.f32.mrf.mxu0
    %v7964 = vadd.f32 %v7860, %v7963
    %7965 = vmatmul.bf16.gmra.mxu0 %v5787
    %v7966 = vpop.f32.mrf.mxu0
    %v7967 = vadd.f32 %v7863, %v7966
    %v7968 = vpop.f32.mrf.mxu0
    %v7969 = vadd.f32 %v7865, %v7968
    %7970 = vmatmul.bf16.gmra.mxu0 %v5790
    %v7971 = vpop.f32.mrf.mxu0
    %v7972 = vadd.f32 %v7868, %v7971
    %v7973 = vpop.f32.mrf.mxu0
    %v7974 = vadd.f32 %v7870, %v7973
    %7975 = vmatmul.bf16.gmra.mxu0 %v5793
    %v7976 = vpop.f32.mrf.mxu0
    %v7977 = vadd.f32 %v7873, %v7976
    %v7978 = vpop.f32.mrf.mxu0
    %v7979 = vadd.f32 %v7875, %v7978
    %7980 = vmatmul.bf16.gmra.mxu0 %v5796
    %v7981 = vpop.f32.mrf.mxu0
    %v7982 = vadd.f32 %v7878, %v7981
    %v7983 = vpop.f32.mrf.mxu0
    %v7984 = vadd.f32 %v7880, %v7983
    %7985 = vmatmul.bf16.gmra.mxu0 %v5799
    %v7986 = vpop.f32.mrf.mxu0
    %v7987 = vadd.f32 %v7883, %v7986
    %v7988 = vpop.f32.mrf.mxu0
    %v7989 = vadd.f32 %v7885, %v7988
    %7990 = vmatmul.bf16.gmra.mxu0 %v5802
    %v7991 = vpop.f32.mrf.mxu0
    %v7992 = vadd.f32 %v7888, %v7991
    %v7993 = vpop.f32.mrf.mxu0
    %v7994 = vadd.f32 %v7890, %v7993
    %7995 = vmatmul.bf16.gmra.mxu0 %v5805
    %v7996 = vpop.f32.mrf.mxu0
    %v7997 = vadd.f32 %v7893, %v7996
    %v7998 = vpop.f32.mrf.mxu0
    %v7999 = vadd.f32 %v7895, %v7998
    %8000 = vmatmul.bf16.gmra.mxu0 %v5808
    %v8001 = vpop.f32.mrf.mxu0
    %v8002 = vadd.f32 %v7898, %v8001
    %v8003 = vpop.f32.mrf.mxu0
    %v8004 = vadd.f32 %v7900, %v8003
    %8005 = vmatmul.bf16.gmra.mxu0 %v5811
    %v8006 = vpop.f32.mrf.mxu0
    %v8007 = vadd.f32 %v7903, %v8006
    %v8008 = vpop.f32.mrf.mxu0
    %v8009 = vadd.f32 %v7905, %v8008
    %8010 = vmatmul.bf16.gmra.mxu0 %v5814
    %v8011 = vpop.f32.mrf.mxu0
    %v8012 = vadd.f32 %v7908, %v8011
    %v8013 = vpop.f32.mrf.mxu0
    %v8014 = vadd.f32 %v7910, %v8013
    %8015 = vmatmul.bf16.gmra.mxu0 %v5817
    %v8016 = vpop.f32.mrf.mxu0
    %v8017 = vadd.f32 %v7913, %v8016
    %v8018 = vpop.f32.mrf.mxu0
    %v8019 = vadd.f32 %v7915, %v8018
    %8020 = vmatmul.bf16.gmra.mxu0 %v5820
    %v8021 = vpop.f32.mrf.mxu0
    %v8022 = vadd.f32 %v7918, %v8021
    %v8023 = vpop.f32.mrf.mxu0
    %v8024 = vadd.f32 %v7920, %v8023
    %8025 = vmatmul.bf16.gmra.mxu0 %v5823
    %v8026 = vpop.f32.mrf.mxu0
    %v8027 = vadd.f32 %v7923, %v8026
    %v8028 = vpop.f32.mrf.mxu0
    %v8029 = vadd.f32 %v7925, %v8028
    %8030 = vmatmul.bf16.gmra.mxu0 %v5826
    %v8031 = vpop.f32.mrf.mxu0
    %v8032 = vadd.f32 %v7928, %v8031
    %v8033 = vpop.f32.mrf.mxu0
    %v8034 = vadd.f32 %v7930, %v8033
    %8035 = vmatmul.bf16.gmra.mxu0 %v5829
    %v8036 = vpop.f32.mrf.mxu0
    %v8037 = vadd.f32 %v7933, %v8036
    %v8038 = vpop.f32.mrf.mxu0
    %v8039 = vadd.f32 %v7935, %v8038
    %8040 = vdwg.mxu0
    %8041 = vmatpush.bf16.msra.mxu0 0
    %8042 = vmatpush.bf16.msra.mxu0 0
    %8043 = vmatpush.bf16.msra.mxu0 0
    %8044 = vmatpush.bf16.msra.mxu0 0
    %8045 = vmatpush.bf16.msra.mxu0 %v6247
    %8046 = vmatpush.bf16.msra.mxu0 %v6246
    %8047 = vmatpush.bf16.msra.mxu0 %v6245
    %8048 = vmatpush.bf16.msra.mxu0 %v6244
    %8049 = vmatmul.bf16.gmra.mxu0 %v5778
    %v8050 = vpop.f32.mrf.mxu0
    %v8051 = vadd.f32 0.0, %v8050
    %v8052 = vpop.f32.mrf.mxu0
    %v8053 = vadd.f32 0.0, %v8052
    %8054 = vmatmul.bf16.gmra.mxu0 %v5781
    %v8055 = vpop.f32.mrf.mxu0
    %v8056 = vadd.f32 0.0, %v8055
    %v8057 = vpop.f32.mrf.mxu0
    %v8058 = vadd.f32 0.0, %v8057
    %8059 = vmatmul.bf16.gmra.mxu0 %v5784
    %v8060 = vpop.f32.mrf.mxu0
    %v8061 = vadd.f32 0.0, %v8060
    %v8062 = vpop.f32.mrf.mxu0
    %v8063 = vadd.f32 0.0, %v8062
    %8064 = vmatmul.bf16.gmra.mxu0 %v5787
    %v8065 = vpop.f32.mrf.mxu0
    %v8066 = vadd.f32 0.0, %v8065
    %v8067 = vpop.f32.mrf.mxu0
    %v8068 = vadd.f32 0.0, %v8067
    %8069 = vmatmul.bf16.gmra.mxu0 %v5790
    %v8070 = vpop.f32.mrf.mxu0
    %v8071 = vadd.f32 0.0, %v8070
    %v8072 = vpop.f32.mrf.mxu0
    %v8073 = vadd.f32 0.0, %v8072
    %8074 = vmatmul.bf16.gmra.mxu0 %v5793
    %v8075 = vpop.f32.mrf.mxu0
    %v8076 = vadd.f32 0.0, %v8075
    %v8077 = vpop.f32.mrf.mxu0
    %v8078 = vadd.f32 0.0, %v8077
    %8079 = vmatmul.bf16.gmra.mxu0 %v5796
    %v8080 = vpop.f32.mrf.mxu0
    %v8081 = vadd.f32 0.0, %v8080
    %v8082 = vpop.f32.mrf.mxu0
    %v8083 = vadd.f32 0.0, %v8082
    %8084 = vmatmul.bf16.gmra.mxu0 %v5799
    %v8085 = vpop.f32.mrf.mxu0
    %v8086 = vadd.f32 0.0, %v8085
    %v8087 = vpop.f32.mrf.mxu0
    %v8088 = vadd.f32 0.0, %v8087
    %8089 = vmatmul.bf16.gmra.mxu0 %v5802
    %v8090 = vpop.f32.mrf.mxu0
    %v8091 = vadd.f32 0.0, %v8090
    %v8092 = vpop.f32.mrf.mxu0
    %v8093 = vadd.f32 0.0, %v8092
    %8094 = vmatmul.bf16.gmra.mxu0 %v5805
    %v8095 = vpop.f32.mrf.mxu0
    %v8096 = vadd.f32 0.0, %v8095
    %v8097 = vpop.f32.mrf.mxu0
    %v8098 = vadd.f32 0.0, %v8097
    %8099 = vmatmul.bf16.gmra.mxu0 %v5808
    %v8100 = vpop.f32.mrf.mxu0
    %v8101 = vadd.f32 0.0, %v8100
    %v8102 = vpop.f32.mrf.mxu0
    %v8103 = vadd.f32 0.0, %v8102
    %8104 = vmatmul.bf16.gmra.mxu0 %v5811
    %v8105 = vpop.f32.mrf.mxu0
    %v8106 = vadd.f32 0.0, %v8105
    %v8107 = vpop.f32.mrf.mxu0
    %v8108 = vadd.f32 0.0, %v8107
    %8109 = vmatmul.bf16.gmra.mxu0 %v5814
    %v8110 = vpop.f32.mrf.mxu0
    %v8111 = vadd.f32 0.0, %v8110
    %v8112 = vpop.f32.mrf.mxu0
    %v8113 = vadd.f32 0.0, %v8112
    %8114 = vmatmul.bf16.gmra.mxu0 %v5817
    %v8115 = vpop.f32.mrf.mxu0
    %v8116 = vadd.f32 0.0, %v8115
    %v8117 = vpop.f32.mrf.mxu0
    %v8118 = vadd.f32 0.0, %v8117
    %8119 = vmatmul.bf16.gmra.mxu0 %v5820
    %v8120 = vpop.f32.mrf.mxu0
    %v8121 = vadd.f32 0.0, %v8120
    %v8122 = vpop.f32.mrf.mxu0
    %v8123 = vadd.f32 0.0, %v8122
    %8124 = vmatmul.bf16.gmra.mxu0 %v5823
    %v8125 = vpop.f32.mrf.mxu0
    %v8126 = vadd.f32 0.0, %v8125
    %v8127 = vpop.f32.mrf.mxu0
    %v8128 = vadd.f32 0.0, %v8127
    %8129 = vmatmul.bf16.gmra.mxu0 %v5826
    %v8130 = vpop.f32.mrf.mxu0
    %v8131 = vadd.f32 0.0, %v8130
    %v8132 = vpop.f32.mrf.mxu0
    %v8133 = vadd.f32 0.0, %v8132
    %8134 = vmatmul.bf16.gmra.mxu0 %v5829
    %v8135 = vpop.f32.mrf.mxu0
    %v8136 = vadd.f32 0.0, %v8135
    %v8137 = vpop.f32.mrf.mxu0
    %v8138 = vadd.f32 0.0, %v8137
    %8139 = vmatmul.bf16.gmra.mxu0 %v7495
    %v8140 = vpop.f32.mrf.mxu0
    %v8141 = vadd.f32 0.0, %v8140
    %v8142 = vpop.f32.mrf.mxu0
    %v8143 = vadd.f32 0.0, %v8142
    %8144 = vdwg.mxu0
    %v8145 = vadd.f32 %v7947, %v8051
    %v8146 = vadd.f32 %v7949, %v8053
    %v8147 = vadd.f32 %v7952, %v8056
    %v8148 = vadd.f32 %v7954, %v8058
    %v8149 = vadd.f32 %v7957, %v8061
    %v8150 = vadd.f32 %v7959, %v8063
    %v8151 = vadd.f32 %v7962, %v8066
    %v8152 = vadd.f32 %v7964, %v8068
    %v8153 = vadd.f32 %v7967, %v8071
    %v8154 = vadd.f32 %v7969, %v8073
    %v8155 = vadd.f32 %v7972, %v8076
    %v8156 = vadd.f32 %v7974, %v8078
    %v8157 = vadd.f32 %v7977, %v8081
    %v8158 = vadd.f32 %v7979, %v8083
    %v8159 = vadd.f32 %v7982, %v8086
    %v8160 = vadd.f32 %v7984, %v8088
    %v8161 = vadd.f32 %v7987, %v8091
    %v8162 = vadd.f32 %v7989, %v8093
    %v8163 = vadd.f32 %v7992, %v8096
    %v8164 = vadd.f32 %v7994, %v8098
    %v8165 = vadd.f32 %v7997, %v8101
    %v8166 = vadd.f32 %v7999, %v8103
    %v8167 = vadd.f32 %v8002, %v8106
    %v8168 = vadd.f32 %v8004, %v8108
    %v8169 = vadd.f32 %v8007, %v8111
    %v8170 = vadd.f32 %v8009, %v8113
    %v8171 = vadd.f32 %v8012, %v8116
    %v8172 = vadd.f32 %v8014, %v8118
    %v8173 = vadd.f32 %v8017, %v8121
    %v8174 = vadd.f32 %v8019, %v8123
    %v8175 = vadd.f32 %v8022, %v8126
    %v8176 = vadd.f32 %v8024, %v8128
    %v8177 = vadd.f32 %v8027, %v8131
    %v8178 = vadd.f32 %v8029, %v8133
    %v8179 = vadd.f32 %v8032, %v8136
    %v8180 = vadd.f32 %v8034, %v8138
    %v8181 = vadd.f32 %v8037, %v8141
    %v8182 = vadd.f32 %v8039, %v8143
    %8183 = vmatpush.bf16.msra.mxu0 0
    %8184 = vmatpush.bf16.msra.mxu0 0
    %8185 = vmatpush.bf16.msra.mxu0 0
    %8186 = vmatpush.bf16.msra.mxu0 0
    %8187 = vmatpush.bf16.msra.mxu0 %v6519
    %8188 = vmatpush.bf16.msra.mxu0 %v6518
    %8189 = vmatpush.bf16.msra.mxu0 %v6517
    %8190 = vmatpush.bf16.msra.mxu0 %v6516
    %8191 = vmatmul.bf16.gmra.mxu0 %v6851
    %v8192 = vpop.f32.mrf.mxu0
    %v8193 = vadd.f32 0.0, %v8192
    %v8194 = vpop.f32.mrf.mxu0
    %v8195 = vadd.f32 0.0, %v8194
    %8196 = vmatmul.bf16.gmra.mxu0 %v6854
    %v8197 = vpop.f32.mrf.mxu0
    %v8198 = vadd.f32 0.0, %v8197
    %v8199 = vpop.f32.mrf.mxu0
    %v8200 = vadd.f32 0.0, %v8199
    %8201 = vmatmul.bf16.gmra.mxu0 %v6857
    %v8202 = vpop.f32.mrf.mxu0
    %v8203 = vadd.f32 0.0, %v8202
    %v8204 = vpop.f32.mrf.mxu0
    %v8205 = vadd.f32 0.0, %v8204
    %8206 = vmatmul.bf16.gmra.mxu0 %v6860
    %v8207 = vpop.f32.mrf.mxu0
    %v8208 = vadd.f32 0.0, %v8207
    %v8209 = vpop.f32.mrf.mxu0
    %v8210 = vadd.f32 0.0, %v8209
    %8211 = vmatmul.bf16.gmra.mxu0 %v6863
    %v8212 = vpop.f32.mrf.mxu0
    %v8213 = vadd.f32 0.0, %v8212
    %v8214 = vpop.f32.mrf.mxu0
    %v8215 = vadd.f32 0.0, %v8214
    %8216 = vmatmul.bf16.gmra.mxu0 %v6866
    %v8217 = vpop.f32.mrf.mxu0
    %v8218 = vadd.f32 0.0, %v8217
    %v8219 = vpop.f32.mrf.mxu0
    %v8220 = vadd.f32 0.0, %v8219
    %8221 = vmatmul.bf16.gmra.mxu0 %v6869
    %v8222 = vpop.f32.mrf.mxu0
    %v8223 = vadd.f32 0.0, %v8222
    %v8224 = vpop.f32.mrf.mxu0
    %v8225 = vadd.f32 0.0, %v8224
    %8226 = vmatmul.bf16.gmra.mxu0 %v6872
    %v8227 = vpop.f32.mrf.mxu0
    %v8228 = vadd.f32 0.0, %v8227
    %v8229 = vpop.f32.mrf.mxu0
    %v8230 = vadd.f32 0.0, %v8229
    %8231 = vmatmul.bf16.gmra.mxu0 %v6875
    %v8232 = vpop.f32.mrf.mxu0
    %v8233 = vadd.f32 0.0, %v8232
    %v8234 = vpop.f32.mrf.mxu0
    %v8235 = vadd.f32 0.0, %v8234
    %8236 = vmatmul.bf16.gmra.mxu0 %v6878
    %v8237 = vpop.f32.mrf.mxu0
    %v8238 = vadd.f32 0.0, %v8237
    %v8239 = vpop.f32.mrf.mxu0
    %v8240 = vadd.f32 0.0, %v8239
    %8241 = vmatmul.bf16.gmra.mxu0 %v6881
    %v8242 = vpop.f32.mrf.mxu0
    %v8243 = vadd.f32 0.0, %v8242
    %v8244 = vpop.f32.mrf.mxu0
    %v8245 = vadd.f32 0.0, %v8244
    %8246 = vmatmul.bf16.gmra.mxu0 %v6884
    %v8247 = vpop.f32.mrf.mxu0
    %v8248 = vadd.f32 0.0, %v8247
    %v8249 = vpop.f32.mrf.mxu0
    %v8250 = vadd.f32 0.0, %v8249
    %8251 = vmatmul.bf16.gmra.mxu0 %v6887
    %v8252 = vpop.f32.mrf.mxu0
    %v8253 = vadd.f32 0.0, %v8252
    %v8254 = vpop.f32.mrf.mxu0
    %v8255 = vadd.f32 0.0, %v8254
    %8256 = vmatmul.bf16.gmra.mxu0 %v6890
    %v8257 = vpop.f32.mrf.mxu0
    %v8258 = vadd.f32 0.0, %v8257
    %v8259 = vpop.f32.mrf.mxu0
    %v8260 = vadd.f32 0.0, %v8259
    %8261 = vmatmul.bf16.gmra.mxu0 %v6893
    %v8262 = vpop.f32.mrf.mxu0
    %v8263 = vadd.f32 0.0, %v8262
    %v8264 = vpop.f32.mrf.mxu0
    %v8265 = vadd.f32 0.0, %v8264
    %8266 = vmatmul.bf16.gmra.mxu0 %v6896
    %v8267 = vpop.f32.mrf.mxu0
    %v8268 = vadd.f32 0.0, %v8267
    %v8269 = vpop.f32.mrf.mxu0
    %v8270 = vadd.f32 0.0, %v8269
    %8271 = vmatmul.bf16.gmra.mxu0 %v6899
    %v8272 = vpop.f32.mrf.mxu0
    %v8273 = vadd.f32 0.0, %v8272
    %v8274 = vpop.f32.mrf.mxu0
    %v8275 = vadd.f32 0.0, %v8274
    %8276 = vmatmul.bf16.gmra.mxu0 %v6902
    %v8277 = vpop.f32.mrf.mxu0
    %v8278 = vadd.f32 0.0, %v8277
    %v8279 = vpop.f32.mrf.mxu0
    %v8280 = vadd.f32 0.0, %v8279
    %8281 = vmatmul.bf16.gmra.mxu0 %v6905
    %v8282 = vpop.f32.mrf.mxu0
    %v8283 = vadd.f32 0.0, %v8282
    %v8284 = vpop.f32.mrf.mxu0
    %v8285 = vadd.f32 0.0, %v8284
    %8286 = vdwg.mxu0
    %v8287 = vadd.f32 %v8145, %v8193
    %v8288 = vadd.f32 %v8146, %v8195
    %v8289 = vadd.f32 %v8147, %v8198
    %v8290 = vadd.f32 %v8148, %v8200
    %v8291 = vadd.f32 %v8149, %v8203
    %v8292 = vadd.f32 %v8150, %v8205
    %v8293 = vadd.f32 %v8151, %v8208
    %v8294 = vadd.f32 %v8152, %v8210
    %v8295 = vadd.f32 %v8153, %v8213
    %v8296 = vadd.f32 %v8154, %v8215
    %v8297 = vadd.f32 %v8155, %v8218
    %v8298 = vadd.f32 %v8156, %v8220
    %v8299 = vadd.f32 %v8157, %v8223
    %v8300 = vadd.f32 %v8158, %v8225
    %v8301 = vadd.f32 %v8159, %v8228
    %v8302 = vadd.f32 %v8160, %v8230
    %v8303 = vadd.f32 %v8161, %v8233
    %v8304 = vadd.f32 %v8162, %v8235
    %v8305 = vadd.f32 %v8163, %v8238
    %v8306 = vadd.f32 %v8164, %v8240
    %v8307 = vadd.f32 %v8165, %v8243
    %v8308 = vadd.f32 %v8166, %v8245
    %v8309 = vadd.f32 %v8167, %v8248
    %v8310 = vadd.f32 %v8168, %v8250
    %v8311 = vadd.f32 %v8169, %v8253
    %v8312 = vadd.f32 %v8170, %v8255
    %v8313 = vadd.f32 %v8171, %v8258
    %v8314 = vadd.f32 %v8172, %v8260
    %v8315 = vadd.f32 %v8173, %v8263
    %v8316 = vadd.f32 %v8174, %v8265
    %v8317 = vadd.f32 %v8175, %v8268
    %v8318 = vadd.f32 %v8176, %v8270
    %v8319 = vadd.f32 %v8177, %v8273
    %v8320 = vadd.f32 %v8178, %v8275
    %v8321 = vadd.f32 %v8179, %v8278
    %v8322 = vadd.f32 %v8180, %v8280
    %v8323 = vadd.f32 %v8181, %v8283
    %v8324 = vadd.f32 %v8182, %v8285
    %8325 = vmatpush.bf16.msra.mxu0 0
    %8326 = vmatpush.bf16.msra.mxu0 0
    %8327 = vmatpush.bf16.msra.mxu0 0
    %8328 = vmatpush.bf16.msra.mxu0 0
    %8329 = vmatpush.bf16.msra.mxu0 %v6845
    %8330 = vmatpush.bf16.msra.mxu0 %v6844
    %8331 = vmatpush.bf16.msra.mxu0 %v6843
    %8332 = vmatpush.bf16.msra.mxu0 %v6842
    %8333 = vmatmul.bf16.gmra.mxu0 %v6528
    %v8334 = vpop.f32.mrf.mxu0
    %v8335 = vadd.f32 0.0, %v8334
    %v8336 = vpop.f32.mrf.mxu0
    %v8337 = vadd.f32 0.0, %v8336
    %8338 = vmatmul.bf16.gmra.mxu0 %v6531
    %v8339 = vpop.f32.mrf.mxu0
    %v8340 = vadd.f32 0.0, %v8339
    %v8341 = vpop.f32.mrf.mxu0
    %v8342 = vadd.f32 0.0, %v8341
    %8343 = vmatmul.bf16.gmra.mxu0 %v6534
    %v8344 = vpop.f32.mrf.mxu0
    %v8345 = vadd.f32 0.0, %v8344
    %v8346 = vpop.f32.mrf.mxu0
    %v8347 = vadd.f32 0.0, %v8346
    %8348 = vmatmul.bf16.gmra.mxu0 %v6537
    %v8349 = vpop.f32.mrf.mxu0
    %v8350 = vadd.f32 0.0, %v8349
    %v8351 = vpop.f32.mrf.mxu0
    %v8352 = vadd.f32 0.0, %v8351
    %8353 = vmatmul.bf16.gmra.mxu0 %v6540
    %v8354 = vpop.f32.mrf.mxu0
    %v8355 = vadd.f32 0.0, %v8354
    %v8356 = vpop.f32.mrf.mxu0
    %v8357 = vadd.f32 0.0, %v8356
    %8358 = vmatmul.bf16.gmra.mxu0 %v6543
    %v8359 = vpop.f32.mrf.mxu0
    %v8360 = vadd.f32 0.0, %v8359
    %v8361 = vpop.f32.mrf.mxu0
    %v8362 = vadd.f32 0.0, %v8361
    %8363 = vmatmul.bf16.gmra.mxu0 %v6546
    %v8364 = vpop.f32.mrf.mxu0
    %v8365 = vadd.f32 0.0, %v8364
    %v8366 = vpop.f32.mrf.mxu0
    %v8367 = vadd.f32 0.0, %v8366
    %8368 = vmatmul.bf16.gmra.mxu0 %v6549
    %v8369 = vpop.f32.mrf.mxu0
    %v8370 = vadd.f32 0.0, %v8369
    %v8371 = vpop.f32.mrf.mxu0
    %v8372 = vadd.f32 0.0, %v8371
    %8373 = vmatmul.bf16.gmra.mxu0 %v6552
    %v8374 = vpop.f32.mrf.mxu0
    %v8375 = vadd.f32 0.0, %v8374
    %v8376 = vpop.f32.mrf.mxu0
    %v8377 = vadd.f32 0.0, %v8376
    %8378 = vmatmul.bf16.gmra.mxu0 %v6555
    %v8379 = vpop.f32.mrf.mxu0
    %v8380 = vadd.f32 0.0, %v8379
    %v8381 = vpop.f32.mrf.mxu0
    %v8382 = vadd.f32 0.0, %v8381
    %8383 = vmatmul.bf16.gmra.mxu0 %v6558
    %v8384 = vpop.f32.mrf.mxu0
    %v8385 = vadd.f32 0.0, %v8384
    %v8386 = vpop.f32.mrf.mxu0
    %v8387 = vadd.f32 0.0, %v8386
    %8388 = vmatmul.bf16.gmra.mxu0 %v6561
    %v8389 = vpop.f32.mrf.mxu0
    %v8390 = vadd.f32 0.0, %v8389
    %v8391 = vpop.f32.mrf.mxu0
    %v8392 = vadd.f32 0.0, %v8391
    %8393 = vmatmul.bf16.gmra.mxu0 %v6564
    %v8394 = vpop.f32.mrf.mxu0
    %v8395 = vadd.f32 0.0, %v8394
    %v8396 = vpop.f32.mrf.mxu0
    %v8397 = vadd.f32 0.0, %v8396
    %8398 = vmatmul.bf16.gmra.mxu0 %v6567
    %v8399 = vpop.f32.mrf.mxu0
    %v8400 = vadd.f32 0.0, %v8399
    %v8401 = vpop.f32.mrf.mxu0
    %v8402 = vadd.f32 0.0, %v8401
    %8403 = vmatmul.bf16.gmra.mxu0 %v6570
    %v8404 = vpop.f32.mrf.mxu0
    %v8405 = vadd.f32 0.0, %v8404
    %v8406 = vpop.f32.mrf.mxu0
    %v8407 = vadd.f32 0.0, %v8406
    %8408 = vmatmul.bf16.gmra.mxu0 %v6573
    %v8409 = vpop.f32.mrf.mxu0
    %v8410 = vadd.f32 0.0, %v8409
    %v8411 = vpop.f32.mrf.mxu0
    %v8412 = vadd.f32 0.0, %v8411
    %8413 = vmatmul.bf16.gmra.mxu0 %v6576
    %v8414 = vpop.f32.mrf.mxu0
    %v8415 = vadd.f32 0.0, %v8414
    %v8416 = vpop.f32.mrf.mxu0
    %v8417 = vadd.f32 0.0, %v8416
    %8418 = vmatmul.bf16.gmra.mxu0 %v6579
    %v8419 = vpop.f32.mrf.mxu0
    %v8420 = vadd.f32 0.0, %v8419
    %v8421 = vpop.f32.mrf.mxu0
    %v8422 = vadd.f32 0.0, %v8421
    %8423 = vmatmul.bf16.gmra.mxu0 %v7087
    %v8424 = vpop.f32.mrf.mxu0
    %v8425 = vadd.f32 0.0, %v8424
    %v8426 = vpop.f32.mrf.mxu0
    %v8427 = vadd.f32 0.0, %v8426
    %8428 = vdwg.mxu0
    %v8429 = vadd.f32 %v8287, %v8335
    %v8430 = vadd.f32 %v8288, %v8337
    %v8431 = vadd.f32 %v8289, %v8340
    %v8432 = vadd.f32 %v8290, %v8342
    %v8433 = vadd.f32 %v8291, %v8345
    %v8434 = vadd.f32 %v8292, %v8347
    %v8435 = vadd.f32 %v8293, %v8350
    %v8436 = vadd.f32 %v8294, %v8352
    %v8437 = vadd.f32 %v8295, %v8355
    %v8438 = vadd.f32 %v8296, %v8357
    %v8439 = vadd.f32 %v8297, %v8360
    %v8440 = vadd.f32 %v8298, %v8362
    %v8441 = vadd.f32 %v8299, %v8365
    %v8442 = vadd.f32 %v8300, %v8367
    %v8443 = vadd.f32 %v8301, %v8370
    %v8444 = vadd.f32 %v8302, %v8372
    %v8445 = vadd.f32 %v8303, %v8375
    %v8446 = vadd.f32 %v8304, %v8377
    %v8447 = vadd.f32 %v8305, %v8380
    %v8448 = vadd.f32 %v8306, %v8382
    %v8449 = vadd.f32 %v8307, %v8385
    %v8450 = vadd.f32 %v8308, %v8387
    %v8451 = vadd.f32 %v8309, %v8390
    %v8452 = vadd.f32 %v8310, %v8392
    %v8453 = vadd.f32 %v8311, %v8395
    %v8454 = vadd.f32 %v8312, %v8397
    %v8455 = vadd.f32 %v8313, %v8400
    %v8456 = vadd.f32 %v8314, %v8402
    %v8457 = vadd.f32 %v8315, %v8405
    %v8458 = vadd.f32 %v8316, %v8407
    %v8459 = vadd.f32 %v8317, %v8410
    %v8460 = vadd.f32 %v8318, %v8412
    %v8461 = vadd.f32 %v8319, %v8415
    %v8462 = vadd.f32 %v8320, %v8417
    %v8463 = vadd.f32 %v8321, %v8420
    %v8464 = vadd.f32 %v8322, %v8422
    %v8465 = vadd.f32 %v8323, %v8425
    %v8466 = vadd.f32 %v8324, %v8427
    %v8469 = vunpack.c.l.b16 %v5626
    %v8470 = vunpack.c.l.b16 %v5627
    %v8471 = vpack.c.b16 %v8470, %v8469
    %v8473 = vsel %vm5773, %v8471, 0
    %8475 = vmatpush.bf16.msra.mxu0 0
    %8476 = vmatpush.bf16.msra.mxu0 0
    %8477 = vmatpush.bf16.msra.mxu0 0
    %8478 = vmatpush.bf16.msra.mxu0 0
    %8479 = vmatpush.bf16.msra.mxu0 %v7081
    %8480 = vmatpush.bf16.msra.mxu0 %v7080
    %8481 = vmatpush.bf16.msra.mxu0 %v7079
    %8482 = vmatpush.bf16.msra.mxu0 %v7078
    %8483 = vmatmul.bf16.gmra.mxu0 %v6854
    %v8484 = vpop.f32.mrf.mxu0
    %v8485 = vadd.f32 0.0, %v8484
    %v8486 = vpop.f32.mrf.mxu0
    %v8487 = vadd.f32 0.0, %v8486
    %8488 = vmatmul.bf16.gmra.mxu0 %v6857
    %v8489 = vpop.f32.mrf.mxu0
    %v8490 = vadd.f32 0.0, %v8489
    %v8491 = vpop.f32.mrf.mxu0
    %v8492 = vadd.f32 0.0, %v8491
    %8493 = vmatmul.bf16.gmra.mxu0 %v6860
    %v8494 = vpop.f32.mrf.mxu0
    %v8495 = vadd.f32 0.0, %v8494
    %v8496 = vpop.f32.mrf.mxu0
    %v8497 = vadd.f32 0.0, %v8496
    %8498 = vmatmul.bf16.gmra.mxu0 %v6863
    %v8499 = vpop.f32.mrf.mxu0
    %v8500 = vadd.f32 0.0, %v8499
    %v8501 = vpop.f32.mrf.mxu0
    %v8502 = vadd.f32 0.0, %v8501
    %8503 = vmatmul.bf16.gmra.mxu0 %v6866
    %v8504 = vpop.f32.mrf.mxu0
    %v8505 = vadd.f32 0.0, %v8504
    %v8506 = vpop.f32.mrf.mxu0
    %v8507 = vadd.f32 0.0, %v8506
    %8508 = vmatmul.bf16.gmra.mxu0 %v6869
    %v8509 = vpop.f32.mrf.mxu0
    %v8510 = vadd.f32 0.0, %v8509
    %v8511 = vpop.f32.mrf.mxu0
    %v8512 = vadd.f32 0.0, %v8511
    %8513 = vmatmul.bf16.gmra.mxu0 %v6872
    %v8514 = vpop.f32.mrf.mxu0
    %v8515 = vadd.f32 0.0, %v8514
    %v8516 = vpop.f32.mrf.mxu0
    %v8517 = vadd.f32 0.0, %v8516
    %8518 = vmatmul.bf16.gmra.mxu0 %v6875
    %v8519 = vpop.f32.mrf.mxu0
    %v8520 = vadd.f32 0.0, %v8519
    %v8521 = vpop.f32.mrf.mxu0
    %v8522 = vadd.f32 0.0, %v8521
    %8523 = vmatmul.bf16.gmra.mxu0 %v6878
    %v8524 = vpop.f32.mrf.mxu0
    %v8525 = vadd.f32 0.0, %v8524
    %v8526 = vpop.f32.mrf.mxu0
    %v8527 = vadd.f32 0.0, %v8526
    %8528 = vmatmul.bf16.gmra.mxu0 %v6881
    %v8529 = vpop.f32.mrf.mxu0
    %v8530 = vadd.f32 0.0, %v8529
    %v8531 = vpop.f32.mrf.mxu0
    %v8532 = vadd.f32 0.0, %v8531
    %8533 = vmatmul.bf16.gmra.mxu0 %v6884
    %v8534 = vpop.f32.mrf.mxu0
    %v8535 = vadd.f32 0.0, %v8534
    %v8536 = vpop.f32.mrf.mxu0
    %v8537 = vadd.f32 0.0, %v8536
    %8538 = vmatmul.bf16.gmra.mxu0 %v6887
    %v8539 = vpop.f32.mrf.mxu0
    %v8540 = vadd.f32 0.0, %v8539
    %v8541 = vpop.f32.mrf.mxu0
    %v8542 = vadd.f32 0.0, %v8541
    %8543 = vmatmul.bf16.gmra.mxu0 %v6890
    %v8544 = vpop.f32.mrf.mxu0
    %v8545 = vadd.f32 0.0, %v8544
    %v8546 = vpop.f32.mrf.mxu0
    %v8547 = vadd.f32 0.0, %v8546
    %8548 = vmatmul.bf16.gmra.mxu0 %v6893
    %v8549 = vpop.f32.mrf.mxu0
    %v8550 = vadd.f32 0.0, %v8549
    %v8551 = vpop.f32.mrf.mxu0
    %v8552 = vadd.f32 0.0, %v8551
    %8553 = vmatmul.bf16.gmra.mxu0 %v6896
    %v8554 = vpop.f32.mrf.mxu0
    %v8555 = vadd.f32 0.0, %v8554
    %v8556 = vpop.f32.mrf.mxu0
    %v8557 = vadd.f32 0.0, %v8556
    %8558 = vmatmul.bf16.gmra.mxu0 %v6899
    %v8559 = vpop.f32.mrf.mxu0
    %v8560 = vadd.f32 0.0, %v8559
    %v8561 = vpop.f32.mrf.mxu0
    %v8562 = vadd.f32 0.0, %v8561
    %8563 = vmatmul.bf16.gmra.mxu0 %v6902
    %v8564 = vpop.f32.mrf.mxu0
    %v8565 = vadd.f32 0.0, %v8564
    %v8566 = vpop.f32.mrf.mxu0
    %v8567 = vadd.f32 0.0, %v8566
    %8568 = vmatmul.bf16.gmra.mxu0 %v6905
    %v8569 = vpop.f32.mrf.mxu0
    %v8570 = vadd.f32 0.0, %v8569
    %v8571 = vpop.f32.mrf.mxu0
    %v8572 = vadd.f32 0.0, %v8571
    %8573 = vmatmul.bf16.gmra.mxu0 %v8473
    %v8574 = vpop.f32.mrf.mxu0
    %v8575 = vadd.f32 0.0, %v8574
    %v8576 = vpop.f32.mrf.mxu0
    %v8577 = vadd.f32 0.0, %v8576
    %8578 = vdwg.mxu0
    %v8579 = vadd.f32 %v8429, %v8485
    %v8580 = vadd.f32 %v8430, %v8487
    %v8581 = vadd.f32 %v8431, %v8490
    %v8582 = vadd.f32 %v8432, %v8492
    %v8583 = vadd.f32 %v8433, %v8495
    %v8584 = vadd.f32 %v8434, %v8497
    %v8585 = vadd.f32 %v8435, %v8500
    %v8586 = vadd.f32 %v8436, %v8502
    %v8587 = vadd.f32 %v8437, %v8505
    %v8588 = vadd.f32 %v8438, %v8507
    %v8589 = vadd.f32 %v8439, %v8510
    %v8590 = vadd.f32 %v8440, %v8512
    %v8591 = vadd.f32 %v8441, %v8515
    %v8592 = vadd.f32 %v8442, %v8517
    %v8593 = vadd.f32 %v8443, %v8520
    %v8594 = vadd.f32 %v8444, %v8522
    %v8595 = vadd.f32 %v8445, %v8525
    %v8596 = vadd.f32 %v8446, %v8527
    %v8597 = vadd.f32 %v8447, %v8530
    %v8598 = vadd.f32 %v8448, %v8532
    %v8599 = vadd.f32 %v8449, %v8535
    %v8600 = vadd.f32 %v8450, %v8537
    %v8601 = vadd.f32 %v8451, %v8540
    %v8602 = vadd.f32 %v8452, %v8542
    %v8603 = vadd.f32 %v8453, %v8545
    %v8604 = vadd.f32 %v8454, %v8547
    %v8605 = vadd.f32 %v8455, %v8550
    %v8606 = vadd.f32 %v8456, %v8552
    %v8607 = vadd.f32 %v8457, %v8555
    %v8608 = vadd.f32 %v8458, %v8557
    %v8609 = vadd.f32 %v8459, %v8560
    %v8610 = vadd.f32 %v8460, %v8562
    %v8611 = vadd.f32 %v8461, %v8565
    %v8612 = vadd.f32 %v8462, %v8567
    %v8613 = vadd.f32 %v8463, %v8570
    %v8614 = vadd.f32 %v8464, %v8572
    %v8615 = vadd.f32 %v8465, %v8575
    %v8616 = vadd.f32 %v8466, %v8577
    %8617 = vmatpush.bf16.msra.mxu0 0
    %8618 = vmatpush.bf16.msra.mxu0 0
    %8619 = vmatpush.bf16.msra.mxu0 0
    %8620 = vmatpush.bf16.msra.mxu0 0
    %8621 = vmatpush.bf16.msra.mxu0 %v7278
    %8622 = vmatpush.bf16.msra.mxu0 %v7277
    %8623 = vmatpush.bf16.msra.mxu0 %v7276
    %8624 = vmatpush.bf16.msra.mxu0 %v7275
    %8625 = vmatmul.bf16.gmra.mxu0 %v5790
    %v8626 = vpop.f32.mrf.mxu0
    %v8627 = vadd.f32 0.0, %v8626
    %v8628 = vpop.f32.mrf.mxu0
    %v8629 = vadd.f32 0.0, %v8628
    %8630 = vmatmul.bf16.gmra.mxu0 %v5793
    %v8631 = vpop.f32.mrf.mxu0
    %v8632 = vadd.f32 0.0, %v8631
    %v8633 = vpop.f32.mrf.mxu0
    %v8634 = vadd.f32 0.0, %v8633
    %8635 = vmatmul.bf16.gmra.mxu0 %v5796
    %v8636 = vpop.f32.mrf.mxu0
    %v8637 = vadd.f32 0.0, %v8636
    %v8638 = vpop.f32.mrf.mxu0
    %v8639 = vadd.f32 0.0, %v8638
    %8640 = vmatmul.bf16.gmra.mxu0 %v5799
    %v8641 = vpop.f32.mrf.mxu0
    %v8642 = vadd.f32 0.0, %v8641
    %v8643 = vpop.f32.mrf.mxu0
    %v8644 = vadd.f32 0.0, %v8643
    %8645 = vmatmul.bf16.gmra.mxu0 %v5802
    %v8646 = vpop.f32.mrf.mxu0
    %v8647 = vadd.f32 0.0, %v8646
    %v8648 = vpop.f32.mrf.mxu0
    %v8649 = vadd.f32 0.0, %v8648
    %8650 = vmatmul.bf16.gmra.mxu0 %v5805
    %v8651 = vpop.f32.mrf.mxu0
    %v8652 = vadd.f32 0.0, %v8651
    %v8653 = vpop.f32.mrf.mxu0
    %v8654 = vadd.f32 0.0, %v8653
    %8655 = vmatmul.bf16.gmra.mxu0 %v5808
    %v8656 = vpop.f32.mrf.mxu0
    %v8657 = vadd.f32 0.0, %v8656
    %v8658 = vpop.f32.mrf.mxu0
    %v8659 = vadd.f32 0.0, %v8658
    %8660 = vmatmul.bf16.gmra.mxu0 %v5811
    %v8661 = vpop.f32.mrf.mxu0
    %v8662 = vadd.f32 0.0, %v8661
    %v8663 = vpop.f32.mrf.mxu0
    %v8664 = vadd.f32 0.0, %v8663
    %8665 = vmatmul.bf16.gmra.mxu0 %v5814
    %v8666 = vpop.f32.mrf.mxu0
    %v8667 = vadd.f32 0.0, %v8666
    %v8668 = vpop.f32.mrf.mxu0
    %v8669 = vadd.f32 0.0, %v8668
    %8670 = vmatmul.bf16.gmra.mxu0 %v5817
    %v8671 = vpop.f32.mrf.mxu0
    %v8672 = vadd.f32 0.0, %v8671
    %v8673 = vpop.f32.mrf.mxu0
    %v8674 = vadd.f32 0.0, %v8673
    %8675 = vmatmul.bf16.gmra.mxu0 %v5820
    %v8676 = vpop.f32.mrf.mxu0
    %v8677 = vadd.f32 0.0, %v8676
    %v8678 = vpop.f32.mrf.mxu0
    %v8679 = vadd.f32 0.0, %v8678
    %8680 = vmatmul.bf16.gmra.mxu0 %v5823
    %v8681 = vpop.f32.mrf.mxu0
    %v8682 = vadd.f32 0.0, %v8681
    %v8683 = vpop.f32.mrf.mxu0
    %v8684 = vadd.f32 0.0, %v8683
    %8685 = vmatmul.bf16.gmra.mxu0 %v5826
    %v8686 = vpop.f32.mrf.mxu0
    %v8687 = vadd.f32 0.0, %v8686
    %v8688 = vpop.f32.mrf.mxu0
    %v8689 = vadd.f32 0.0, %v8688
    %8690 = vmatmul.bf16.gmra.mxu0 %v5829
    %v8691 = vpop.f32.mrf.mxu0
    %v8692 = vadd.f32 0.0, %v8691
    %v8693 = vpop.f32.mrf.mxu0
    %v8694 = vadd.f32 0.0, %v8693
    %8695 = vmatmul.bf16.gmra.mxu0 %v7495
    %v8696 = vpop.f32.mrf.mxu0
    %v8697 = vadd.f32 0.0, %v8696
    %v8698 = vpop.f32.mrf.mxu0
    %v8699 = vadd.f32 0.0, %v8698
    %8700 = vmatmul.bf16.gmra.mxu0 %v7498
    %v8701 = vpop.f32.mrf.mxu0
    %v8702 = vadd.f32 0.0, %v8701
    %v8703 = vpop.f32.mrf.mxu0
    %v8704 = vadd.f32 0.0, %v8703
    %8705 = vmatmul.bf16.gmra.mxu0 %v7501
    %v8706 = vpop.f32.mrf.mxu0
    %v8707 = vadd.f32 0.0, %v8706
    %v8708 = vpop.f32.mrf.mxu0
    %v8709 = vadd.f32 0.0, %v8708
    %8710 = vmatmul.bf16.gmra.mxu0 %v7504
    %v8711 = vpop.f32.mrf.mxu0
    %v8712 = vadd.f32 0.0, %v8711
    %v8713 = vpop.f32.mrf.mxu0
    %v8714 = vadd.f32 0.0, %v8713
    %8715 = vmatmul.bf16.gmra.mxu0 %v7507
    %v8716 = vpop.f32.mrf.mxu0
    %v8717 = vadd.f32 0.0, %v8716
    %v8718 = vpop.f32.mrf.mxu0
    %v8719 = vadd.f32 0.0, %v8718
    %8720 = vdwg.mxu0
    %v8721 = vadd.f32 %v8579, %v8627
    %v8722 = vadd.f32 %v8580, %v8629
    %v8723 = vadd.f32 %v8581, %v8632
    %v8724 = vadd.f32 %v8582, %v8634
    %v8725 = vadd.f32 %v8583, %v8637
    %v8726 = vadd.f32 %v8584, %v8639
    %v8727 = vadd.f32 %v8585, %v8642
    %v8728 = vadd.f32 %v8586, %v8644
    %v8729 = vadd.f32 %v8587, %v8647
    %v8730 = vadd.f32 %v8588, %v8649
    %v8731 = vadd.f32 %v8589, %v8652
    %v8732 = vadd.f32 %v8590, %v8654
    %v8733 = vadd.f32 %v8591, %v8657
    %v8734 = vadd.f32 %v8592, %v8659
    %v8735 = vadd.f32 %v8593, %v8662
    %v8736 = vadd.f32 %v8594, %v8664
    %v8737 = vadd.f32 %v8595, %v8667
    %v8738 = vadd.f32 %v8596, %v8669
    %v8739 = vadd.f32 %v8597, %v8672
    %v8740 = vadd.f32 %v8598, %v8674
    %v8741 = vadd.f32 %v8599, %v8677
    %v8742 = vadd.f32 %v8600, %v8679
    %v8743 = vadd.f32 %v8601, %v8682
    %v8744 = vadd.f32 %v8602, %v8684
    %v8745 = vadd.f32 %v8603, %v8687
    %v8746 = vadd.f32 %v8604, %v8689
    %v8747 = vadd.f32 %v8605, %v8692
    %v8748 = vadd.f32 %v8606, %v8694
    %v8749 = vadd.f32 %v8607, %v8697
    %v8750 = vadd.f32 %v8608, %v8699
    %v8751 = vadd.f32 %v8609, %v8702
    %v8752 = vadd.f32 %v8610, %v8704
    %v8753 = vadd.f32 %v8611, %v8707
    %v8754 = vadd.f32 %v8612, %v8709
    %v8755 = vadd.f32 %v8613, %v8712
    %v8756 = vadd.f32 %v8614, %v8714
    %v8757 = vadd.f32 %v8615, %v8717
    %v8758 = vadd.f32 %v8616, %v8719
    %8759 = vmatpush.bf16.msra.mxu0 0
    %8760 = vmatpush.bf16.msra.mxu0 0
    %8761 = vmatpush.bf16.msra.mxu0 0
    %8762 = vmatpush.bf16.msra.mxu0 0
    %8763 = vmatpush.bf16.msra.mxu0 %v7489
    %8764 = vmatpush.bf16.msra.mxu0 %v7488
    %8765 = vmatpush.bf16.msra.mxu0 %v7487
    %8766 = vmatpush.bf16.msra.mxu0 %v7486
    %8767 = vmatmul.bf16.gmra.mxu0 %v6073
    %v8768 = vpop.f32.mrf.mxu0
    %v8769 = vadd.f32 0.0, %v8768
    %v8770 = vpop.f32.mrf.mxu0
    %v8771 = vadd.f32 0.0, %v8770
    %8772 = vmatmul.bf16.gmra.mxu0 %v6076
    %v8773 = vpop.f32.mrf.mxu0
    %v8774 = vadd.f32 0.0, %v8773
    %v8775 = vpop.f32.mrf.mxu0
    %v8776 = vadd.f32 0.0, %v8775
    %8777 = vmatmul.bf16.gmra.mxu0 %v6079
    %v8778 = vpop.f32.mrf.mxu0
    %v8779 = vadd.f32 0.0, %v8778
    %v8780 = vpop.f32.mrf.mxu0
    %v8781 = vadd.f32 0.0, %v8780
    %8782 = vmatmul.bf16.gmra.mxu0 %v6082
    %v8783 = vpop.f32.mrf.mxu0
    %v8784 = vadd.f32 0.0, %v8783
    %v8785 = vpop.f32.mrf.mxu0
    %v8786 = vadd.f32 0.0, %v8785
    %8787 = vmatmul.bf16.gmra.mxu0 %v6085
    %v8788 = vpop.f32.mrf.mxu0
    %v8789 = vadd.f32 0.0, %v8788
    %v8790 = vpop.f32.mrf.mxu0
    %v8791 = vadd.f32 0.0, %v8790
    %8792 = vmatmul.bf16.gmra.mxu0 %v6088
    %v8793 = vpop.f32.mrf.mxu0
    %v8794 = vadd.f32 0.0, %v8793
    %v8795 = vpop.f32.mrf.mxu0
    %v8796 = vadd.f32 0.0, %v8795
    %8797 = vmatmul.bf16.gmra.mxu0 %v6091
    %v8798 = vpop.f32.mrf.mxu0
    %v8799 = vadd.f32 0.0, %v8798
    %v8800 = vpop.f32.mrf.mxu0
    %v8801 = vadd.f32 0.0, %v8800
    %8802 = vmatmul.bf16.gmra.mxu0 %v6094
    %v8803 = vpop.f32.mrf.mxu0
    %v8804 = vadd.f32 0.0, %v8803
    %v8805 = vpop.f32.mrf.mxu0
    %v8806 = vadd.f32 0.0, %v8805
    %8807 = vmatmul.bf16.gmra.mxu0 %v6097
    %v8808 = vpop.f32.mrf.mxu0
    %v8809 = vadd.f32 0.0, %v8808
    %v8810 = vpop.f32.mrf.mxu0
    %v8811 = vadd.f32 0.0, %v8810
    %8812 = vmatmul.bf16.gmra.mxu0 %v6100
    %v8813 = vpop.f32.mrf.mxu0
    %v8814 = vadd.f32 0.0, %v8813
    %v8815 = vpop.f32.mrf.mxu0
    %v8816 = vadd.f32 0.0, %v8815
    %8817 = vmatmul.bf16.gmra.mxu0 %v6103
    %v8818 = vpop.f32.mrf.mxu0
    %v8819 = vadd.f32 0.0, %v8818
    %v8820 = vpop.f32.mrf.mxu0
    %v8821 = vadd.f32 0.0, %v8820
    %8822 = vmatmul.bf16.gmra.mxu0 %v6106
    %v8823 = vpop.f32.mrf.mxu0
    %v8824 = vadd.f32 0.0, %v8823
    %v8825 = vpop.f32.mrf.mxu0
    %v8826 = vadd.f32 0.0, %v8825
    %8827 = vmatmul.bf16.gmra.mxu0 %v6109
    %v8828 = vpop.f32.mrf.mxu0
    %v8829 = vadd.f32 0.0, %v8828
    %v8830 = vpop.f32.mrf.mxu0
    %v8831 = vadd.f32 0.0, %v8830
    %8832 = vmatmul.bf16.gmra.mxu0 %v6253
    %v8833 = vpop.f32.mrf.mxu0
    %v8834 = vadd.f32 0.0, %v8833
    %v8835 = vpop.f32.mrf.mxu0
    %v8836 = vadd.f32 0.0, %v8835
    %8837 = vmatmul.bf16.gmra.mxu0 %v7284
    %v8838 = vpop.f32.mrf.mxu0
    %v8839 = vadd.f32 0.0, %v8838
    %v8840 = vpop.f32.mrf.mxu0
    %v8841 = vadd.f32 0.0, %v8840
    %8842 = vmatmul.bf16.gmra.mxu0 %v7287
    %v8843 = vpop.f32.mrf.mxu0
    %v8844 = vadd.f32 0.0, %v8843
    %v8845 = vpop.f32.mrf.mxu0
    %v8846 = vadd.f32 0.0, %v8845
    %8847 = vmatmul.bf16.gmra.mxu0 %v7290
    %v8848 = vpop.f32.mrf.mxu0
    %v8849 = vadd.f32 0.0, %v8848
    %v8850 = vpop.f32.mrf.mxu0
    %v8851 = vadd.f32 0.0, %v8850
    %8852 = vmatmul.bf16.gmra.mxu0 %v7293
    %v8853 = vpop.f32.mrf.mxu0
    %v8854 = vadd.f32 0.0, %v8853
    %v8855 = vpop.f32.mrf.mxu0
    %v8856 = vadd.f32 0.0, %v8855
    %8857 = vmatmul.bf16.gmra.mxu0 %v7689
    %v8858 = vpop.f32.mrf.mxu0
    %v8859 = vadd.f32 0.0, %v8858
    %v8860 = vpop.f32.mrf.mxu0
    %v8861 = vadd.f32 0.0, %v8860
    %8862 = vdwg.mxu0
    %v8863 = vadd.f32 %v8721, %v8769
    %v8864 = vadd.f32 %v8722, %v8771
    %v8865 = vadd.f32 %v8723, %v8774
    %v8866 = vadd.f32 %v8724, %v8776
    %v8867 = vadd.f32 %v8725, %v8779
    %v8868 = vadd.f32 %v8726, %v8781
    %v8869 = vadd.f32 %v8727, %v8784
    %v8870 = vadd.f32 %v8728, %v8786
    %v8871 = vadd.f32 %v8729, %v8789
    %v8872 = vadd.f32 %v8730, %v8791
    %v8873 = vadd.f32 %v8731, %v8794
    %v8874 = vadd.f32 %v8732, %v8796
    %v8875 = vadd.f32 %v8733, %v8799
    %v8876 = vadd.f32 %v8734, %v8801
    %v8877 = vadd.f32 %v8735, %v8804
    %v8878 = vadd.f32 %v8736, %v8806
    %v8879 = vadd.f32 %v8737, %v8809
    %v8880 = vadd.f32 %v8738, %v8811
    %v8881 = vadd.f32 %v8739, %v8814
    %v8882 = vadd.f32 %v8740, %v8816
    %v8883 = vadd.f32 %v8741, %v8819
    %v8884 = vadd.f32 %v8742, %v8821
    %v8885 = vadd.f32 %v8743, %v8824
    %v8886 = vadd.f32 %v8744, %v8826
    %v8887 = vadd.f32 %v8745, %v8829
    %v8888 = vadd.f32 %v8746, %v8831
    %v8889 = vadd.f32 %v8747, %v8834
    %v8890 = vadd.f32 %v8748, %v8836
    %v8891 = vadd.f32 %v8749, %v8839
    %v8892 = vadd.f32 %v8750, %v8841
    %v8893 = vadd.f32 %v8751, %v8844
    %v8894 = vadd.f32 %v8752, %v8846
    %v8895 = vadd.f32 %v8753, %v8849
    %v8896 = vadd.f32 %v8754, %v8851
    %v8897 = vadd.f32 %v8755, %v8854
    %v8898 = vadd.f32 %v8756, %v8856
    %v8899 = vadd.f32 %v8757, %v8859
    %v8900 = vadd.f32 %v8758, %v8861
    %v8903 = vunpack.c.l.b16 %v5536
    %v8904 = vunpack.c.l.b16 %v5537
    %v8905 = vpack.c.b16 %v8904, %v8903
    %v8907 = vsel %vm5773, %v8905, 0
    %8909 = vmatpush.bf16.msra.mxu0 0
    %8910 = vmatpush.bf16.msra.mxu0 0
    %8911 = vmatpush.bf16.msra.mxu0 0
    %8912 = vmatpush.bf16.msra.mxu0 0
    %8913 = vmatpush.bf16.msra.mxu0 %v7683
    %8914 = vmatpush.bf16.msra.mxu0 %v7682
    %8915 = vmatpush.bf16.msra.mxu0 %v7681
    %8916 = vmatpush.bf16.msra.mxu0 %v7680
    %8917 = vmatmul.bf16.gmra.mxu0 %v5793
    %v8918 = vpop.f32.mrf.mxu0
    %v8919 = vadd.f32 0.0, %v8918
    %v8920 = vpop.f32.mrf.mxu0
    %v8921 = vadd.f32 0.0, %v8920
    %8922 = vmatmul.bf16.gmra.mxu0 %v5796
    %v8923 = vpop.f32.mrf.mxu0
    %v8924 = vadd.f32 0.0, %v8923
    %v8925 = vpop.f32.mrf.mxu0
    %v8926 = vadd.f32 0.0, %v8925
    %8927 = vmatmul.bf16.gmra.mxu0 %v5799
    %v8928 = vpop.f32.mrf.mxu0
    %v8929 = vadd.f32 0.0, %v8928
    %v8930 = vpop.f32.mrf.mxu0
    %v8931 = vadd.f32 0.0, %v8930
    %8932 = vmatmul.bf16.gmra.mxu0 %v5802
    %v8933 = vpop.f32.mrf.mxu0
    %v8934 = vadd.f32 0.0, %v8933
    %v8935 = vpop.f32.mrf.mxu0
    %v8936 = vadd.f32 0.0, %v8935
    %8937 = vmatmul.bf16.gmra.mxu0 %v5805
    %v8938 = vpop.f32.mrf.mxu0
    %v8939 = vadd.f32 0.0, %v8938
    %v8940 = vpop.f32.mrf.mxu0
    %v8941 = vadd.f32 0.0, %v8940
    %8942 = vmatmul.bf16.gmra.mxu0 %v5808
    %v8943 = vpop.f32.mrf.mxu0
    %v8944 = vadd.f32 0.0, %v8943
    %v8945 = vpop.f32.mrf.mxu0
    %v8946 = vadd.f32 0.0, %v8945
    %8947 = vmatmul.bf16.gmra.mxu0 %v5811
    %v8948 = vpop.f32.mrf.mxu0
    %v8949 = vadd.f32 0.0, %v8948
    %v8950 = vpop.f32.mrf.mxu0
    %v8951 = vadd.f32 0.0, %v8950
    %8952 = vmatmul.bf16.gmra.mxu0 %v5814
    %v8953 = vpop.f32.mrf.mxu0
    %v8954 = vadd.f32 0.0, %v8953
    %v8955 = vpop.f32.mrf.mxu0
    %v8956 = vadd.f32 0.0, %v8955
    %8957 = vmatmul.bf16.gmra.mxu0 %v5817
    %v8958 = vpop.f32.mrf.mxu0
    %v8959 = vadd.f32 0.0, %v8958
    %v8960 = vpop.f32.mrf.mxu0
    %v8961 = vadd.f32 0.0, %v8960
    %8962 = vmatmul.bf16.gmra.mxu0 %v5820
    %v8963 = vpop.f32.mrf.mxu0
    %v8964 = vadd.f32 0.0, %v8963
    %v8965 = vpop.f32.mrf.mxu0
    %v8966 = vadd.f32 0.0, %v8965
    %8967 = vmatmul.bf16.gmra.mxu0 %v5823
    %v8968 = vpop.f32.mrf.mxu0
    %v8969 = vadd.f32 0.0, %v8968
    %v8970 = vpop.f32.mrf.mxu0
    %v8971 = vadd.f32 0.0, %v8970
    %8972 = vmatmul.bf16.gmra.mxu0 %v5826
    %v8973 = vpop.f32.mrf.mxu0
    %v8974 = vadd.f32 0.0, %v8973
    %v8975 = vpop.f32.mrf.mxu0
    %v8976 = vadd.f32 0.0, %v8975
    %8977 = vmatmul.bf16.gmra.mxu0 %v5829
    %v8978 = vpop.f32.mrf.mxu0
    %v8979 = vadd.f32 0.0, %v8978
    %v8980 = vpop.f32.mrf.mxu0
    %v8981 = vadd.f32 0.0, %v8980
    %8982 = vmatmul.bf16.gmra.mxu0 %v7495
    %v8983 = vpop.f32.mrf.mxu0
    %v8984 = vadd.f32 0.0, %v8983
    %v8985 = vpop.f32.mrf.mxu0
    %v8986 = vadd.f32 0.0, %v8985
    %8987 = vmatmul.bf16.gmra.mxu0 %v7498
    %v8988 = vpop.f32.mrf.mxu0
    %v8989 = vadd.f32 0.0, %v8988
    %v8990 = vpop.f32.mrf.mxu0
    %v8991 = vadd.f32 0.0, %v8990
    %8992 = vmatmul.bf16.gmra.mxu0 %v7501
    %v8993 = vpop.f32.mrf.mxu0
    %v8994 = vadd.f32 0.0, %v8993
    %v8995 = vpop.f32.mrf.mxu0
    %v8996 = vadd.f32 0.0, %v8995
    %8997 = vmatmul.bf16.gmra.mxu0 %v7504
    %v8998 = vpop.f32.mrf.mxu0
    %v8999 = vadd.f32 0.0, %v8998
    %v9000 = vpop.f32.mrf.mxu0
    %v9001 = vadd.f32 0.0, %v9000
    %9002 = vmatmul.bf16.gmra.mxu0 %v7507
    %v9003 = vpop.f32.mrf.mxu0
    %v9004 = vadd.f32 0.0, %v9003
    %v9005 = vpop.f32.mrf.mxu0
    %v9006 = vadd.f32 0.0, %v9005
    %9007 = vmatmul.bf16.gmra.mxu0 %v8907
    %v9008 = vpop.f32.mrf.mxu0
    %v9009 = vadd.f32 0.0, %v9008
    %v9010 = vpop.f32.mrf.mxu0
    %v9011 = vadd.f32 0.0, %v9010
    %9012 = vdwg.mxu0
    %v9013 = vadd.f32 %v8863, %v8919
    %v9014 = vadd.f32 %v8864, %v8921
    %v9015 = vadd.f32 %v8865, %v8924
    %v9016 = vadd.f32 %v8866, %v8926
    %v9017 = vadd.f32 %v8867, %v8929
    %v9018 = vadd.f32 %v8868, %v8931
    %v9019 = vadd.f32 %v8869, %v8934
    %v9020 = vadd.f32 %v8870, %v8936
    %v9021 = vadd.f32 %v8871, %v8939
    %v9022 = vadd.f32 %v8872, %v8941
    %v9023 = vadd.f32 %v8873, %v8944
    %v9024 = vadd.f32 %v8874, %v8946
    %v9025 = vadd.f32 %v8875, %v8949
    %v9026 = vadd.f32 %v8876, %v8951
    %v9027 = vadd.f32 %v8877, %v8954
    %v9028 = vadd.f32 %v8878, %v8956
    %v9029 = vadd.f32 %v8879, %v8959
    %v9030 = vadd.f32 %v8880, %v8961
    %v9031 = vadd.f32 %v8881, %v8964
    %v9032 = vadd.f32 %v8882, %v8966
    %v9033 = vadd.f32 %v8883, %v8969
    %v9034 = vadd.f32 %v8884, %v8971
    %v9035 = vadd.f32 %v8885, %v8974
    %v9036 = vadd.f32 %v8886, %v8976
    %v9037 = vadd.f32 %v8887, %v8979
    %v9038 = vadd.f32 %v8888, %v8981
    %v9039 = vadd.f32 %v8889, %v8984
    %v9040 = vadd.f32 %v8890, %v8986
    %v9041 = vadd.f32 %v8891, %v8989
    %v9042 = vadd.f32 %v8892, %v8991
    %v9043 = vadd.f32 %v8893, %v8994
    %v9044 = vadd.f32 %v8894, %v8996
    %v9045 = vadd.f32 %v8895, %v8999
    %v9046 = vadd.f32 %v8896, %v9001
    %v9047 = vadd.f32 %v8897, %v9004
    %v9048 = vadd.f32 %v8898, %v9006
    %v9049 = vadd.f32 %v8899, %v9009
    %v9050 = vadd.f32 %v8900, %v9011
    %v9051 = vmax.f32 %v7795, %v9013
    %v9052 = vmax.f32 %v7796, %v9014
    %v9053 = vmax.f32 %v7797, %v9015
    %v9054 = vmax.f32 %v7798, %v9016
    %v9055 = vmax.f32 %v7799, %v9017
    %v9056 = vmax.f32 %v7800, %v9018
    %v9057 = vmax.f32 %v7801, %v9019
    %v9058 = vmax.f32 %v7802, %v9020
    %v9059 = vmax.f32 %v7803, %v9021
    %v9060 = vmax.f32 %v7804, %v9022
    %v9061 = vmax.f32 %v7805, %v9023
    %v9062 = vmax.f32 %v7806, %v9024
    %v9063 = vmax.f32 %v7807, %v9025
    %v9064 = vmax.f32 %v7808, %v9026
    %v9065 = vmax.f32 %v7809, %v9027
    %v9066 = vmax.f32 %v7810, %v9028
    %v9067 = vmax.f32 %v7811, %v9029
    %v9068 = vmax.f32 %v7812, %v9030
    %v9069 = vmax.f32 %v7813, %v9031
    %v9070 = vmax.f32 %v7814, %v9032
    %v9071 = vmax.f32 %v7815, %v9033
    %v9072 = vmax.f32 %v7816, %v9034
    %v9073 = vmax.f32 %v7817, %v9035
    %v9074 = vmax.f32 %v7818, %v9036
    %v9075 = vmax.f32 %v7819, %v9037
    %v9076 = vmax.f32 %v7820, %v9038
    %v9077 = vmax.f32 %v7821, %v9039
    %v9078 = vmax.f32 %v7822, %v9040
    %v9079 = vmax.f32 %v7823, %v9041
    %v9080 = vmax.f32 %v7824, %v9042
    %v9081 = vmax.f32 %v7825, %v9043
    %v9082 = vmax.f32 %v7826, %v9044
    %v9083 = vmax.f32 %v7827, %v9045
    %v9084 = vmax.f32 %v7828, %v9046
    %v9085 = vmax.f32 %v7829, %v9047
    %v9086 = vmax.f32 %v7830, %v9048
    %v9087 = vmax.f32 %v7831, %v9049
    %v9088 = vmax.f32 %v7832, %v9050
    %9089 = vmatpush.bf16.msra.mxu0 0
    %9090 = vmatpush.bf16.msra.mxu0 0
    %9091 = vmatpush.bf16.msra.mxu0 0
    %9092 = vmatpush.bf16.msra.mxu0 0
    %9093 = vmatpush.bf16.msra.mxu0 %v5768
    %9094 = vmatpush.bf16.msra.mxu0 %v5767
    %9095 = vmatpush.bf16.msra.mxu0 %v5766
    %9096 = vmatpush.bf16.msra.mxu0 %v5765
    %9097 = vmatmul.bf16.gmra.mxu0 %v6851
    %v9098 = vpop.f32.mrf.mxu0
    %v9099 = vadd.f32 0.0, %v9098
    %v9100 = vpop.f32.mrf.mxu0
    %v9101 = vadd.f32 0.0, %v9100
    %9102 = vmatmul.bf16.gmra.mxu0 %v6854
    %v9103 = vpop.f32.mrf.mxu0
    %v9104 = vadd.f32 0.0, %v9103
    %v9105 = vpop.f32.mrf.mxu0
    %v9106 = vadd.f32 0.0, %v9105
    %9107 = vmatmul.bf16.gmra.mxu0 %v6857
    %v9108 = vpop.f32.mrf.mxu0
    %v9109 = vadd.f32 0.0, %v9108
    %v9110 = vpop.f32.mrf.mxu0
    %v9111 = vadd.f32 0.0, %v9110
    %9112 = vmatmul.bf16.gmra.mxu0 %v6860
    %v9113 = vpop.f32.mrf.mxu0
    %v9114 = vadd.f32 0.0, %v9113
    %v9115 = vpop.f32.mrf.mxu0
    %v9116 = vadd.f32 0.0, %v9115
    %9117 = vmatmul.bf16.gmra.mxu0 %v6863
    %v9118 = vpop.f32.mrf.mxu0
    %v9119 = vadd.f32 0.0, %v9118
    %v9120 = vpop.f32.mrf.mxu0
    %v9121 = vadd.f32 0.0, %v9120
    %9122 = vmatmul.bf16.gmra.mxu0 %v6866
    %v9123 = vpop.f32.mrf.mxu0
    %v9124 = vadd.f32 0.0, %v9123
    %v9125 = vpop.f32.mrf.mxu0
    %v9126 = vadd.f32 0.0, %v9125
    %9127 = vmatmul.bf16.gmra.mxu0 %v6869
    %v9128 = vpop.f32.mrf.mxu0
    %v9129 = vadd.f32 0.0, %v9128
    %v9130 = vpop.f32.mrf.mxu0
    %v9131 = vadd.f32 0.0, %v9130
    %9132 = vmatmul.bf16.gmra.mxu0 %v6872
    %v9133 = vpop.f32.mrf.mxu0
    %v9134 = vadd.f32 0.0, %v9133
    %v9135 = vpop.f32.mrf.mxu0
    %v9136 = vadd.f32 0.0, %v9135
    %9137 = vmatmul.bf16.gmra.mxu0 %v6875
    %v9138 = vpop.f32.mrf.mxu0
    %v9139 = vadd.f32 0.0, %v9138
    %v9140 = vpop.f32.mrf.mxu0
    %v9141 = vadd.f32 0.0, %v9140
    %9142 = vmatmul.bf16.gmra.mxu0 %v6878
    %v9143 = vpop.f32.mrf.mxu0
    %v9144 = vadd.f32 0.0, %v9143
    %v9145 = vpop.f32.mrf.mxu0
    %v9146 = vadd.f32 0.0, %v9145
    %9147 = vmatmul.bf16.gmra.mxu0 %v6881
    %v9148 = vpop.f32.mrf.mxu0
    %v9149 = vadd.f32 0.0, %v9148
    %v9150 = vpop.f32.mrf.mxu0
    %v9151 = vadd.f32 0.0, %v9150
    %9152 = vmatmul.bf16.gmra.mxu0 %v6884
    %v9153 = vpop.f32.mrf.mxu0
    %v9154 = vadd.f32 0.0, %v9153
    %v9155 = vpop.f32.mrf.mxu0
    %v9156 = vadd.f32 0.0, %v9155
    %9157 = vmatmul.bf16.gmra.mxu0 %v6887
    %v9158 = vpop.f32.mrf.mxu0
    %v9159 = vadd.f32 0.0, %v9158
    %v9160 = vpop.f32.mrf.mxu0
    %v9161 = vadd.f32 0.0, %v9160
    %9162 = vmatmul.bf16.gmra.mxu0 %v6890
    %v9163 = vpop.f32.mrf.mxu0
    %v9164 = vadd.f32 0.0, %v9163
    %v9165 = vpop.f32.mrf.mxu0
    %v9166 = vadd.f32 0.0, %v9165
    %9167 = vmatmul.bf16.gmra.mxu0 %v6893
    %v9168 = vpop.f32.mrf.mxu0
    %v9169 = vadd.f32 0.0, %v9168
    %v9170 = vpop.f32.mrf.mxu0
    %v9171 = vadd.f32 0.0, %v9170
    %9172 = vmatmul.bf16.gmra.mxu0 %v6896
    %v9173 = vpop.f32.mrf.mxu0
    %v9174 = vadd.f32 0.0, %v9173
    %v9175 = vpop.f32.mrf.mxu0
    %v9176 = vadd.f32 0.0, %v9175
    %9177 = vmatmul.bf16.gmra.mxu0 %v6899
    %v9178 = vpop.f32.mrf.mxu0
    %v9179 = vadd.f32 0.0, %v9178
    %v9180 = vpop.f32.mrf.mxu0
    %v9181 = vadd.f32 0.0, %v9180
    %9182 = vmatmul.bf16.gmra.mxu0 %v6902
    %v9183 = vpop.f32.mrf.mxu0
    %v9184 = vadd.f32 0.0, %v9183
    %v9185 = vpop.f32.mrf.mxu0
    %v9186 = vadd.f32 0.0, %v9185
    %9187 = vmatmul.bf16.gmra.mxu0 %v6905
    %v9188 = vpop.f32.mrf.mxu0
    %v9189 = vadd.f32 0.0, %v9188
    %v9190 = vpop.f32.mrf.mxu0
    %v9191 = vadd.f32 0.0, %v9190
    %9192 = vdwg.mxu0
    %9193 = vmatpush.bf16.msra.mxu0 0
    %9194 = vmatpush.bf16.msra.mxu0 0
    %9195 = vmatpush.bf16.msra.mxu0 0
    %9196 = vmatpush.bf16.msra.mxu0 0
    %9197 = vmatpush.bf16.msra.mxu0 %v6049
    %9198 = vmatpush.bf16.msra.mxu0 %v6048
    %9199 = vmatpush.bf16.msra.mxu0 %v6047
    %9200 = vmatpush.bf16.msra.mxu0 %v6046
    %9201 = vmatmul.bf16.gmra.mxu0 %v6525
    %v9202 = vpop.f32.mrf.mxu0
    %v9203 = vadd.f32 %v9099, %v9202
    %v9204 = vpop.f32.mrf.mxu0
    %v9205 = vadd.f32 %v9101, %v9204
    %9206 = vmatmul.bf16.gmra.mxu0 %v6528
    %v9207 = vpop.f32.mrf.mxu0
    %v9208 = vadd.f32 %v9104, %v9207
    %v9209 = vpop.f32.mrf.mxu0
    %v9210 = vadd.f32 %v9106, %v9209
    %9211 = vmatmul.bf16.gmra.mxu0 %v6531
    %v9212 = vpop.f32.mrf.mxu0
    %v9213 = vadd.f32 %v9109, %v9212
    %v9214 = vpop.f32.mrf.mxu0
    %v9215 = vadd.f32 %v9111, %v9214
    %9216 = vmatmul.bf16.gmra.mxu0 %v6534
    %v9217 = vpop.f32.mrf.mxu0
    %v9218 = vadd.f32 %v9114, %v9217
    %v9219 = vpop.f32.mrf.mxu0
    %v9220 = vadd.f32 %v9116, %v9219
    %9221 = vmatmul.bf16.gmra.mxu0 %v6537
    %v9222 = vpop.f32.mrf.mxu0
    %v9223 = vadd.f32 %v9119, %v9222
    %v9224 = vpop.f32.mrf.mxu0
    %v9225 = vadd.f32 %v9121, %v9224
    %9226 = vmatmul.bf16.gmra.mxu0 %v6540
    %v9227 = vpop.f32.mrf.mxu0
    %v9228 = vadd.f32 %v9124, %v9227
    %v9229 = vpop.f32.mrf.mxu0
    %v9230 = vadd.f32 %v9126, %v9229
    %9231 = vmatmul.bf16.gmra.mxu0 %v6543
    %v9232 = vpop.f32.mrf.mxu0
    %v9233 = vadd.f32 %v9129, %v9232
    %v9234 = vpop.f32.mrf.mxu0
    %v9235 = vadd.f32 %v9131, %v9234
    %9236 = vmatmul.bf16.gmra.mxu0 %v6546
    %v9237 = vpop.f32.mrf.mxu0
    %v9238 = vadd.f32 %v9134, %v9237
    %v9239 = vpop.f32.mrf.mxu0
    %v9240 = vadd.f32 %v9136, %v9239
    %9241 = vmatmul.bf16.gmra.mxu0 %v6549
    %v9242 = vpop.f32.mrf.mxu0
    %v9243 = vadd.f32 %v9139, %v9242
    %v9244 = vpop.f32.mrf.mxu0
    %v9245 = vadd.f32 %v9141, %v9244
    %9246 = vmatmul.bf16.gmra.mxu0 %v6552
    %v9247 = vpop.f32.mrf.mxu0
    %v9248 = vadd.f32 %v9144, %v9247
    %v9249 = vpop.f32.mrf.mxu0
    %v9250 = vadd.f32 %v9146, %v9249
    %9251 = vmatmul.bf16.gmra.mxu0 %v6555
    %v9252 = vpop.f32.mrf.mxu0
    %v9253 = vadd.f32 %v9149, %v9252
    %v9254 = vpop.f32.mrf.mxu0
    %v9255 = vadd.f32 %v9151, %v9254
    %9256 = vmatmul.bf16.gmra.mxu0 %v6558
    %v9257 = vpop.f32.mrf.mxu0
    %v9258 = vadd.f32 %v9154, %v9257
    %v9259 = vpop.f32.mrf.mxu0
    %v9260 = vadd.f32 %v9156, %v9259
    %9261 = vmatmul.bf16.gmra.mxu0 %v6561
    %v9262 = vpop.f32.mrf.mxu0
    %v9263 = vadd.f32 %v9159, %v9262
    %v9264 = vpop.f32.mrf.mxu0
    %v9265 = vadd.f32 %v9161, %v9264
    %9266 = vmatmul.bf16.gmra.mxu0 %v6564
    %v9267 = vpop.f32.mrf.mxu0
    %v9268 = vadd.f32 %v9164, %v9267
    %v9269 = vpop.f32.mrf.mxu0
    %v9270 = vadd.f32 %v9166, %v9269
    %9271 = vmatmul.bf16.gmra.mxu0 %v6567
    %v9272 = vpop.f32.mrf.mxu0
    %v9273 = vadd.f32 %v9169, %v9272
    %v9274 = vpop.f32.mrf.mxu0
    %v9275 = vadd.f32 %v9171, %v9274
    %9276 = vmatmul.bf16.gmra.mxu0 %v6570
    %v9277 = vpop.f32.mrf.mxu0
    %v9278 = vadd.f32 %v9174, %v9277
    %v9279 = vpop.f32.mrf.mxu0
    %v9280 = vadd.f32 %v9176, %v9279
    %9281 = vmatmul.bf16.gmra.mxu0 %v6573
    %v9282 = vpop.f32.mrf.mxu0
    %v9283 = vadd.f32 %v9179, %v9282
    %v9284 = vpop.f32.mrf.mxu0
    %v9285 = vadd.f32 %v9181, %v9284
    %9286 = vmatmul.bf16.gmra.mxu0 %v6576
    %v9287 = vpop.f32.mrf.mxu0
    %v9288 = vadd.f32 %v9184, %v9287
    %v9289 = vpop.f32.mrf.mxu0
    %v9290 = vadd.f32 %v9186, %v9289
    %9291 = vmatmul.bf16.gmra.mxu0 %v6579
    %v9292 = vpop.f32.mrf.mxu0
    %v9293 = vadd.f32 %v9189, %v9292
    %v9294 = vpop.f32.mrf.mxu0
    %v9295 = vadd.f32 %v9191, %v9294
    %9296 = vdwg.mxu0
    %9297 = vmatpush.bf16.msra.mxu0 0
    %9298 = vmatpush.bf16.msra.mxu0 0
    %9299 = vmatpush.bf16.msra.mxu0 0
    %9300 = vmatpush.bf16.msra.mxu0 0
    %9301 = vmatpush.bf16.msra.mxu0 %v6247
    %9302 = vmatpush.bf16.msra.mxu0 %v6246
    %9303 = vmatpush.bf16.msra.mxu0 %v6245
    %9304 = vmatpush.bf16.msra.mxu0 %v6244
    %9305 = vmatmul.bf16.gmra.mxu0 %v6528
    %v9306 = vpop.f32.mrf.mxu0
    %v9307 = vadd.f32 0.0, %v9306
    %v9308 = vpop.f32.mrf.mxu0
    %v9309 = vadd.f32 0.0, %v9308
    %9310 = vmatmul.bf16.gmra.mxu0 %v6531
    %v9311 = vpop.f32.mrf.mxu0
    %v9312 = vadd.f32 0.0, %v9311
    %v9313 = vpop.f32.mrf.mxu0
    %v9314 = vadd.f32 0.0, %v9313
    %9315 = vmatmul.bf16.gmra.mxu0 %v6534
    %v9316 = vpop.f32.mrf.mxu0
    %v9317 = vadd.f32 0.0, %v9316
    %v9318 = vpop.f32.mrf.mxu0
    %v9319 = vadd.f32 0.0, %v9318
    %9320 = vmatmul.bf16.gmra.mxu0 %v6537
    %v9321 = vpop.f32.mrf.mxu0
    %v9322 = vadd.f32 0.0, %v9321
    %v9323 = vpop.f32.mrf.mxu0
    %v9324 = vadd.f32 0.0, %v9323
    %9325 = vmatmul.bf16.gmra.mxu0 %v6540
    %v9326 = vpop.f32.mrf.mxu0
    %v9327 = vadd.f32 0.0, %v9326
    %v9328 = vpop.f32.mrf.mxu0
    %v9329 = vadd.f32 0.0, %v9328
    %9330 = vmatmul.bf16.gmra.mxu0 %v6543
    %v9331 = vpop.f32.mrf.mxu0
    %v9332 = vadd.f32 0.0, %v9331
    %v9333 = vpop.f32.mrf.mxu0
    %v9334 = vadd.f32 0.0, %v9333
    %9335 = vmatmul.bf16.gmra.mxu0 %v6546
    %v9336 = vpop.f32.mrf.mxu0
    %v9337 = vadd.f32 0.0, %v9336
    %v9338 = vpop.f32.mrf.mxu0
    %v9339 = vadd.f32 0.0, %v9338
    %9340 = vmatmul.bf16.gmra.mxu0 %v6549
    %v9341 = vpop.f32.mrf.mxu0
    %v9342 = vadd.f32 0.0, %v9341
    %v9343 = vpop.f32.mrf.mxu0
    %v9344 = vadd.f32 0.0, %v9343
    %9345 = vmatmul.bf16.gmra.mxu0 %v6552
    %v9346 = vpop.f32.mrf.mxu0
    %v9347 = vadd.f32 0.0, %v9346
    %v9348 = vpop.f32.mrf.mxu0
    %v9349 = vadd.f32 0.0, %v9348
    %9350 = vmatmul.bf16.gmra.mxu0 %v6555
    %v9351 = vpop.f32.mrf.mxu0
    %v9352 = vadd.f32 0.0, %v9351
    %v9353 = vpop.f32.mrf.mxu0
    %v9354 = vadd.f32 0.0, %v9353
    %9355 = vmatmul.bf16.gmra.mxu0 %v6558
    %v9356 = vpop.f32.mrf.mxu0
    %v9357 = vadd.f32 0.0, %v9356
    %v9358 = vpop.f32.mrf.mxu0
    %v9359 = vadd.f32 0.0, %v9358
    %9360 = vmatmul.bf16.gmra.mxu0 %v6561
    %v9361 = vpop.f32.mrf.mxu0
    %v9362 = vadd.f32 0.0, %v9361
    %v9363 = vpop.f32.mrf.mxu0
    %v9364 = vadd.f32 0.0, %v9363
    %9365 = vmatmul.bf16.gmra.mxu0 %v6564
    %v9366 = vpop.f32.mrf.mxu0
    %v9367 = vadd.f32 0.0, %v9366
    %v9368 = vpop.f32.mrf.mxu0
    %v9369 = vadd.f32 0.0, %v9368
    %9370 = vmatmul.bf16.gmra.mxu0 %v6567
    %v9371 = vpop.f32.mrf.mxu0
    %v9372 = vadd.f32 0.0, %v9371
    %v9373 = vpop.f32.mrf.mxu0
    %v9374 = vadd.f32 0.0, %v9373
    %9375 = vmatmul.bf16.gmra.mxu0 %v6570
    %v9376 = vpop.f32.mrf.mxu0
    %v9377 = vadd.f32 0.0, %v9376
    %v9378 = vpop.f32.mrf.mxu0
    %v9379 = vadd.f32 0.0, %v9378
    %9380 = vmatmul.bf16.gmra.mxu0 %v6573
    %v9381 = vpop.f32.mrf.mxu0
    %v9382 = vadd.f32 0.0, %v9381
    %v9383 = vpop.f32.mrf.mxu0
    %v9384 = vadd.f32 0.0, %v9383
    %9385 = vmatmul.bf16.gmra.mxu0 %v6576
    %v9386 = vpop.f32.mrf.mxu0
    %v9387 = vadd.f32 0.0, %v9386
    %v9388 = vpop.f32.mrf.mxu0
    %v9389 = vadd.f32 0.0, %v9388
    %9390 = vmatmul.bf16.gmra.mxu0 %v6579
    %v9391 = vpop.f32.mrf.mxu0
    %v9392 = vadd.f32 0.0, %v9391
    %v9393 = vpop.f32.mrf.mxu0
    %v9394 = vadd.f32 0.0, %v9393
    %9395 = vmatmul.bf16.gmra.mxu0 %v7087
    %v9396 = vpop.f32.mrf.mxu0
    %v9397 = vadd.f32 0.0, %v9396
    %v9398 = vpop.f32.mrf.mxu0
    %v9399 = vadd.f32 0.0, %v9398
    %9400 = vdwg.mxu0
    %v9401 = vadd.f32 %v9203, %v9307
    %v9402 = vadd.f32 %v9205, %v9309
    %v9403 = vadd.f32 %v9208, %v9312
    %v9404 = vadd.f32 %v9210, %v9314
    %v9405 = vadd.f32 %v9213, %v9317
    %v9406 = vadd.f32 %v9215, %v9319
    %v9407 = vadd.f32 %v9218, %v9322
    %v9408 = vadd.f32 %v9220, %v9324
    %v9409 = vadd.f32 %v9223, %v9327
    %v9410 = vadd.f32 %v9225, %v9329
    %v9411 = vadd.f32 %v9228, %v9332
    %v9412 = vadd.f32 %v9230, %v9334
    %v9413 = vadd.f32 %v9233, %v9337
    %v9414 = vadd.f32 %v9235, %v9339
    %v9415 = vadd.f32 %v9238, %v9342
    %v9416 = vadd.f32 %v9240, %v9344
    %v9417 = vadd.f32 %v9243, %v9347
    %v9418 = vadd.f32 %v9245, %v9349
    %v9419 = vadd.f32 %v9248, %v9352
    %v9420 = vadd.f32 %v9250, %v9354
    %v9421 = vadd.f32 %v9253, %v9357
    %v9422 = vadd.f32 %v9255, %v9359
    %v9423 = vadd.f32 %v9258, %v9362
    %v9424 = vadd.f32 %v9260, %v9364
    %v9425 = vadd.f32 %v9263, %v9367
    %v9426 = vadd.f32 %v9265, %v9369
    %v9427 = vadd.f32 %v9268, %v9372
    %v9428 = vadd.f32 %v9270, %v9374
    %v9429 = vadd.f32 %v9273, %v9377
    %v9430 = vadd.f32 %v9275, %v9379
    %v9431 = vadd.f32 %v9278, %v9382
    %v9432 = vadd.f32 %v9280, %v9384
    %v9433 = vadd.f32 %v9283, %v9387
    %v9434 = vadd.f32 %v9285, %v9389
    %v9435 = vadd.f32 %v9288, %v9392
    %v9436 = vadd.f32 %v9290, %v9394
    %v9437 = vadd.f32 %v9293, %v9397
    %v9438 = vadd.f32 %v9295, %v9399
    %9439 = vmatpush.bf16.msra.mxu0 0
    %9440 = vmatpush.bf16.msra.mxu0 0
    %9441 = vmatpush.bf16.msra.mxu0 0
    %9442 = vmatpush.bf16.msra.mxu0 0
    %9443 = vmatpush.bf16.msra.mxu0 %v6519
    %9444 = vmatpush.bf16.msra.mxu0 %v6518
    %9445 = vmatpush.bf16.msra.mxu0 %v6517
    %9446 = vmatpush.bf16.msra.mxu0 %v6516
    %9447 = vmatmul.bf16.gmra.mxu0 %v6070
    %v9448 = vpop.f32.mrf.mxu0
    %v9449 = vadd.f32 0.0, %v9448
    %v9450 = vpop.f32.mrf.mxu0
    %v9451 = vadd.f32 0.0, %v9450
    %9452 = vmatmul.bf16.gmra.mxu0 %v6073
    %v9453 = vpop.f32.mrf.mxu0
    %v9454 = vadd.f32 0.0, %v9453
    %v9455 = vpop.f32.mrf.mxu0
    %v9456 = vadd.f32 0.0, %v9455
    %9457 = vmatmul.bf16.gmra.mxu0 %v6076
    %v9458 = vpop.f32.mrf.mxu0
    %v9459 = vadd.f32 0.0, %v9458
    %v9460 = vpop.f32.mrf.mxu0
    %v9461 = vadd.f32 0.0, %v9460
    %9462 = vmatmul.bf16.gmra.mxu0 %v6079
    %v9463 = vpop.f32.mrf.mxu0
    %v9464 = vadd.f32 0.0, %v9463
    %v9465 = vpop.f32.mrf.mxu0
    %v9466 = vadd.f32 0.0, %v9465
    %9467 = vmatmul.bf16.gmra.mxu0 %v6082
    %v9468 = vpop.f32.mrf.mxu0
    %v9469 = vadd.f32 0.0, %v9468
    %v9470 = vpop.f32.mrf.mxu0
    %v9471 = vadd.f32 0.0, %v9470
    %9472 = vmatmul.bf16.gmra.mxu0 %v6085
    %v9473 = vpop.f32.mrf.mxu0
    %v9474 = vadd.f32 0.0, %v9473
    %v9475 = vpop.f32.mrf.mxu0
    %v9476 = vadd.f32 0.0, %v9475
    %9477 = vmatmul.bf16.gmra.mxu0 %v6088
    %v9478 = vpop.f32.mrf.mxu0
    %v9479 = vadd.f32 0.0, %v9478
    %v9480 = vpop.f32.mrf.mxu0
    %v9481 = vadd.f32 0.0, %v9480
    %9482 = vmatmul.bf16.gmra.mxu0 %v6091
    %v9483 = vpop.f32.mrf.mxu0
    %v9484 = vadd.f32 0.0, %v9483
    %v9485 = vpop.f32.mrf.mxu0
    %v9486 = vadd.f32 0.0, %v9485
    %9487 = vmatmul.bf16.gmra.mxu0 %v6094
    %v9488 = vpop.f32.mrf.mxu0
    %v9489 = vadd.f32 0.0, %v9488
    %v9490 = vpop.f32.mrf.mxu0
    %v9491 = vadd.f32 0.0, %v9490
    %9492 = vmatmul.bf16.gmra.mxu0 %v6097
    %v9493 = vpop.f32.mrf.mxu0
    %v9494 = vadd.f32 0.0, %v9493
    %v9495 = vpop.f32.mrf.mxu0
    %v9496 = vadd.f32 0.0, %v9495
    %9497 = vmatmul.bf16.gmra.mxu0 %v6100
    %v9498 = vpop.f32.mrf.mxu0
    %v9499 = vadd.f32 0.0, %v9498
    %v9500 = vpop.f32.mrf.mxu0
    %v9501 = vadd.f32 0.0, %v9500
    %9502 = vmatmul.bf16.gmra.mxu0 %v6103
    %v9503 = vpop.f32.mrf.mxu0
    %v9504 = vadd.f32 0.0, %v9503
    %v9505 = vpop.f32.mrf.mxu0
    %v9506 = vadd.f32 0.0, %v9505
    %9507 = vmatmul.bf16.gmra.mxu0 %v6106
    %v9508 = vpop.f32.mrf.mxu0
    %v9509 = vadd.f32 0.0, %v9508
    %v9510 = vpop.f32.mrf.mxu0
    %v9511 = vadd.f32 0.0, %v9510
    %9512 = vmatmul.bf16.gmra.mxu0 %v6109
    %v9513 = vpop.f32.mrf.mxu0
    %v9514 = vadd.f32 0.0, %v9513
    %v9515 = vpop.f32.mrf.mxu0
    %v9516 = vadd.f32 0.0, %v9515
    %9517 = vmatmul.bf16.gmra.mxu0 %v6253
    %v9518 = vpop.f32.mrf.mxu0
    %v9519 = vadd.f32 0.0, %v9518
    %v9520 = vpop.f32.mrf.mxu0
    %v9521 = vadd.f32 0.0, %v9520
    %9522 = vmatmul.bf16.gmra.mxu0 %v7284
    %v9523 = vpop.f32.mrf.mxu0
    %v9524 = vadd.f32 0.0, %v9523
    %v9525 = vpop.f32.mrf.mxu0
    %v9526 = vadd.f32 0.0, %v9525
    %9527 = vmatmul.bf16.gmra.mxu0 %v7287
    %v9528 = vpop.f32.mrf.mxu0
    %v9529 = vadd.f32 0.0, %v9528
    %v9530 = vpop.f32.mrf.mxu0
    %v9531 = vadd.f32 0.0, %v9530
    %9532 = vmatmul.bf16.gmra.mxu0 %v7290
    %v9533 = vpop.f32.mrf.mxu0
    %v9534 = vadd.f32 0.0, %v9533
    %v9535 = vpop.f32.mrf.mxu0
    %v9536 = vadd.f32 0.0, %v9535
    %9537 = vmatmul.bf16.gmra.mxu0 %v7293
    %v9538 = vpop.f32.mrf.mxu0
    %v9539 = vadd.f32 0.0, %v9538
    %v9540 = vpop.f32.mrf.mxu0
    %v9541 = vadd.f32 0.0, %v9540
    %9542 = vdwg.mxu0
    %v9543 = vadd.f32 %v9401, %v9449
    %v9544 = vadd.f32 %v9402, %v9451
    %v9545 = vadd.f32 %v9403, %v9454
    %v9546 = vadd.f32 %v9404, %v9456
    %v9547 = vadd.f32 %v9405, %v9459
    %v9548 = vadd.f32 %v9406, %v9461
    %v9549 = vadd.f32 %v9407, %v9464
    %v9550 = vadd.f32 %v9408, %v9466
    %v9551 = vadd.f32 %v9409, %v9469
    %v9552 = vadd.f32 %v9410, %v9471
    %v9553 = vadd.f32 %v9411, %v9474
    %v9554 = vadd.f32 %v9412, %v9476
    %v9555 = vadd.f32 %v9413, %v9479
    %v9556 = vadd.f32 %v9414, %v9481
    %v9557 = vadd.f32 %v9415, %v9484
    %v9558 = vadd.f32 %v9416, %v9486
    %v9559 = vadd.f32 %v9417, %v9489
    %v9560 = vadd.f32 %v9418, %v9491
    %v9561 = vadd.f32 %v9419, %v9494
    %v9562 = vadd.f32 %v9420, %v9496
    %v9563 = vadd.f32 %v9421, %v9499
    %v9564 = vadd.f32 %v9422, %v9501
    %v9565 = vadd.f32 %v9423, %v9504
    %v9566 = vadd.f32 %v9424, %v9506
    %v9567 = vadd.f32 %v9425, %v9509
    %v9568 = vadd.f32 %v9426, %v9511
    %v9569 = vadd.f32 %v9427, %v9514
    %v9570 = vadd.f32 %v9428, %v9516
    %v9571 = vadd.f32 %v9429, %v9519
    %v9572 = vadd.f32 %v9430, %v9521
    %v9573 = vadd.f32 %v9431, %v9524
    %v9574 = vadd.f32 %v9432, %v9526
    %v9575 = vadd.f32 %v9433, %v9529
    %v9576 = vadd.f32 %v9434, %v9531
    %v9577 = vadd.f32 %v9435, %v9534
    %v9578 = vadd.f32 %v9436, %v9536
    %v9579 = vadd.f32 %v9437, %v9539
    %v9580 = vadd.f32 %v9438, %v9541
    %9581 = vmatpush.bf16.msra.mxu0 0
    %9582 = vmatpush.bf16.msra.mxu0 0
    %9583 = vmatpush.bf16.msra.mxu0 0
    %9584 = vmatpush.bf16.msra.mxu0 0
    %9585 = vmatpush.bf16.msra.mxu0 %v6845
    %9586 = vmatpush.bf16.msra.mxu0 %v6844
    %9587 = vmatpush.bf16.msra.mxu0 %v6843
    %9588 = vmatpush.bf16.msra.mxu0 %v6842
    %9589 = vmatmul.bf16.gmra.mxu0 %v5790
    %v9590 = vpop.f32.mrf.mxu0
    %v9591 = vadd.f32 0.0, %v9590
    %v9592 = vpop.f32.mrf.mxu0
    %v9593 = vadd.f32 0.0, %v9592
    %9594 = vmatmul.bf16.gmra.mxu0 %v5793
    %v9595 = vpop.f32.mrf.mxu0
    %v9596 = vadd.f32 0.0, %v9595
    %v9597 = vpop.f32.mrf.mxu0
    %v9598 = vadd.f32 0.0, %v9597
    %9599 = vmatmul.bf16.gmra.mxu0 %v5796
    %v9600 = vpop.f32.mrf.mxu0
    %v9601 = vadd.f32 0.0, %v9600
    %v9602 = vpop.f32.mrf.mxu0
    %v9603 = vadd.f32 0.0, %v9602
    %9604 = vmatmul.bf16.gmra.mxu0 %v5799
    %v9605 = vpop.f32.mrf.mxu0
    %v9606 = vadd.f32 0.0, %v9605
    %v9607 = vpop.f32.mrf.mxu0
    %v9608 = vadd.f32 0.0, %v9607
    %9609 = vmatmul.bf16.gmra.mxu0 %v5802
    %v9610 = vpop.f32.mrf.mxu0
    %v9611 = vadd.f32 0.0, %v9610
    %v9612 = vpop.f32.mrf.mxu0
    %v9613 = vadd.f32 0.0, %v9612
    %9614 = vmatmul.bf16.gmra.mxu0 %v5805
    %v9615 = vpop.f32.mrf.mxu0
    %v9616 = vadd.f32 0.0, %v9615
    %v9617 = vpop.f32.mrf.mxu0
    %v9618 = vadd.f32 0.0, %v9617
    %9619 = vmatmul.bf16.gmra.mxu0 %v5808
    %v9620 = vpop.f32.mrf.mxu0
    %v9621 = vadd.f32 0.0, %v9620
    %v9622 = vpop.f32.mrf.mxu0
    %v9623 = vadd.f32 0.0, %v9622
    %9624 = vmatmul.bf16.gmra.mxu0 %v5811
    %v9625 = vpop.f32.mrf.mxu0
    %v9626 = vadd.f32 0.0, %v9625
    %v9627 = vpop.f32.mrf.mxu0
    %v9628 = vadd.f32 0.0, %v9627
    %9629 = vmatmul.bf16.gmra.mxu0 %v5814
    %v9630 = vpop.f32.mrf.mxu0
    %v9631 = vadd.f32 0.0, %v9630
    %v9632 = vpop.f32.mrf.mxu0
    %v9633 = vadd.f32 0.0, %v9632
    %9634 = vmatmul.bf16.gmra.mxu0 %v5817
    %v9635 = vpop.f32.mrf.mxu0
    %v9636 = vadd.f32 0.0, %v9635
    %v9637 = vpop.f32.mrf.mxu0
    %v9638 = vadd.f32 0.0, %v9637
    %9639 = vmatmul.bf16.gmra.mxu0 %v5820
    %v9640 = vpop.f32.mrf.mxu0
    %v9641 = vadd.f32 0.0, %v9640
    %v9642 = vpop.f32.mrf.mxu0
    %v9643 = vadd.f32 0.0, %v9642
    %9644 = vmatmul.bf16.gmra.mxu0 %v5823
    %v9645 = vpop.f32.mrf.mxu0
    %v9646 = vadd.f32 0.0, %v9645
    %v9647 = vpop.f32.mrf.mxu0
    %v9648 = vadd.f32 0.0, %v9647
    %9649 = vmatmul.bf16.gmra.mxu0 %v5826
    %v9650 = vpop.f32.mrf.mxu0
    %v9651 = vadd.f32 0.0, %v9650
    %v9652 = vpop.f32.mrf.mxu0
    %v9653 = vadd.f32 0.0, %v9652
    %9654 = vmatmul.bf16.gmra.mxu0 %v5829
    %v9655 = vpop.f32.mrf.mxu0
    %v9656 = vadd.f32 0.0, %v9655
    %v9657 = vpop.f32.mrf.mxu0
    %v9658 = vadd.f32 0.0, %v9657
    %9659 = vmatmul.bf16.gmra.mxu0 %v7495
    %v9660 = vpop.f32.mrf.mxu0
    %v9661 = vadd.f32 0.0, %v9660
    %v9662 = vpop.f32.mrf.mxu0
    %v9663 = vadd.f32 0.0, %v9662
    %9664 = vmatmul.bf16.gmra.mxu0 %v7498
    %v9665 = vpop.f32.mrf.mxu0
    %v9666 = vadd.f32 0.0, %v9665
    %v9667 = vpop.f32.mrf.mxu0
    %v9668 = vadd.f32 0.0, %v9667
    %9669 = vmatmul.bf16.gmra.mxu0 %v7501
    %v9670 = vpop.f32.mrf.mxu0
    %v9671 = vadd.f32 0.0, %v9670
    %v9672 = vpop.f32.mrf.mxu0
    %v9673 = vadd.f32 0.0, %v9672
    %9674 = vmatmul.bf16.gmra.mxu0 %v7504
    %v9675 = vpop.f32.mrf.mxu0
    %v9676 = vadd.f32 0.0, %v9675
    %v9677 = vpop.f32.mrf.mxu0
    %v9678 = vadd.f32 0.0, %v9677
    %9679 = vmatmul.bf16.gmra.mxu0 %v7507
    %v9680 = vpop.f32.mrf.mxu0
    %v9681 = vadd.f32 0.0, %v9680
    %v9682 = vpop.f32.mrf.mxu0
    %v9683 = vadd.f32 0.0, %v9682
    %9684 = vdwg.mxu0
    %v9685 = vadd.f32 %v9543, %v9591
    %v9686 = vadd.f32 %v9544, %v9593
    %v9687 = vadd.f32 %v9545, %v9596
    %v9688 = vadd.f32 %v9546, %v9598
    %v9689 = vadd.f32 %v9547, %v9601
    %v9690 = vadd.f32 %v9548, %v9603
    %v9691 = vadd.f32 %v9549, %v9606
    %v9692 = vadd.f32 %v9550, %v9608
    %v9693 = vadd.f32 %v9551, %v9611
    %v9694 = vadd.f32 %v9552, %v9613
    %v9695 = vadd.f32 %v9553, %v9616
    %v9696 = vadd.f32 %v9554, %v9618
    %v9697 = vadd.f32 %v9555, %v9621
    %v9698 = vadd.f32 %v9556, %v9623
    %v9699 = vadd.f32 %v9557, %v9626
    %v9700 = vadd.f32 %v9558, %v9628
    %v9701 = vadd.f32 %v9559, %v9631
    %v9702 = vadd.f32 %v9560, %v9633
    %v9703 = vadd.f32 %v9561, %v9636
    %v9704 = vadd.f32 %v9562, %v9638
    %v9705 = vadd.f32 %v9563, %v9641
    %v9706 = vadd.f32 %v9564, %v9643
    %v9707 = vadd.f32 %v9565, %v9646
    %v9708 = vadd.f32 %v9566, %v9648
    %v9709 = vadd.f32 %v9567, %v9651
    %v9710 = vadd.f32 %v9568, %v9653
    %v9711 = vadd.f32 %v9569, %v9656
    %v9712 = vadd.f32 %v9570, %v9658
    %v9713 = vadd.f32 %v9571, %v9661
    %v9714 = vadd.f32 %v9572, %v9663
    %v9715 = vadd.f32 %v9573, %v9666
    %v9716 = vadd.f32 %v9574, %v9668
    %v9717 = vadd.f32 %v9575, %v9671
    %v9718 = vadd.f32 %v9576, %v9673
    %v9719 = vadd.f32 %v9577, %v9676
    %v9720 = vadd.f32 %v9578, %v9678
    %v9721 = vadd.f32 %v9579, %v9681
    %v9722 = vadd.f32 %v9580, %v9683
    %9723 = vmatpush.bf16.msra.mxu0 0
    %9724 = vmatpush.bf16.msra.mxu0 0
    %9725 = vmatpush.bf16.msra.mxu0 0
    %9726 = vmatpush.bf16.msra.mxu0 0
    %9727 = vmatpush.bf16.msra.mxu0 %v7081
    %9728 = vmatpush.bf16.msra.mxu0 %v7080
    %9729 = vmatpush.bf16.msra.mxu0 %v7079
    %9730 = vmatpush.bf16.msra.mxu0 %v7078
    %9731 = vmatmul.bf16.gmra.mxu0 %v6073
    %v9732 = vpop.f32.mrf.mxu0
    %v9733 = vadd.f32 0.0, %v9732
    %v9734 = vpop.f32.mrf.mxu0
    %v9735 = vadd.f32 0.0, %v9734
    %9736 = vmatmul.bf16.gmra.mxu0 %v6076
    %v9737 = vpop.f32.mrf.mxu0
    %v9738 = vadd.f32 0.0, %v9737
    %v9739 = vpop.f32.mrf.mxu0
    %v9740 = vadd.f32 0.0, %v9739
    %9741 = vmatmul.bf16.gmra.mxu0 %v6079
    %v9742 = vpop.f32.mrf.mxu0
    %v9743 = vadd.f32 0.0, %v9742
    %v9744 = vpop.f32.mrf.mxu0
    %v9745 = vadd.f32 0.0, %v9744
    %9746 = vmatmul.bf16.gmra.mxu0 %v6082
    %v9747 = vpop.f32.mrf.mxu0
    %v9748 = vadd.f32 0.0, %v9747
    %v9749 = vpop.f32.mrf.mxu0
    %v9750 = vadd.f32 0.0, %v9749
    %9751 = vmatmul.bf16.gmra.mxu0 %v6085
    %v9752 = vpop.f32.mrf.mxu0
    %v9753 = vadd.f32 0.0, %v9752
    %v9754 = vpop.f32.mrf.mxu0
    %v9755 = vadd.f32 0.0, %v9754
    %9756 = vmatmul.bf16.gmra.mxu0 %v6088
    %v9757 = vpop.f32.mrf.mxu0
    %v9758 = vadd.f32 0.0, %v9757
    %v9759 = vpop.f32.mrf.mxu0
    %v9760 = vadd.f32 0.0, %v9759
    %9761 = vmatmul.bf16.gmra.mxu0 %v6091
    %v9762 = vpop.f32.mrf.mxu0
    %v9763 = vadd.f32 0.0, %v9762
    %v9764 = vpop.f32.mrf.mxu0
    %v9765 = vadd.f32 0.0, %v9764
    %9766 = vmatmul.bf16.gmra.mxu0 %v6094
    %v9767 = vpop.f32.mrf.mxu0
    %v9768 = vadd.f32 0.0, %v9767
    %v9769 = vpop.f32.mrf.mxu0
    %v9770 = vadd.f32 0.0, %v9769
    %9771 = vmatmul.bf16.gmra.mxu0 %v6097
    %v9772 = vpop.f32.mrf.mxu0
    %v9773 = vadd.f32 0.0, %v9772
    %v9774 = vpop.f32.mrf.mxu0
    %v9775 = vadd.f32 0.0, %v9774
    %9776 = vmatmul.bf16.gmra.mxu0 %v6100
    %v9777 = vpop.f32.mrf.mxu0
    %v9778 = vadd.f32 0.0, %v9777
    %v9779 = vpop.f32.mrf.mxu0
    %v9780 = vadd.f32 0.0, %v9779
    %9781 = vmatmul.bf16.gmra.mxu0 %v6103
    %v9782 = vpop.f32.mrf.mxu0
    %v9783 = vadd.f32 0.0, %v9782
    %v9784 = vpop.f32.mrf.mxu0
    %v9785 = vadd.f32 0.0, %v9784
    %9786 = vmatmul.bf16.gmra.mxu0 %v6106
    %v9787 = vpop.f32.mrf.mxu0
    %v9788 = vadd.f32 0.0, %v9787
    %v9789 = vpop.f32.mrf.mxu0
    %v9790 = vadd.f32 0.0, %v9789
    %9791 = vmatmul.bf16.gmra.mxu0 %v6109
    %v9792 = vpop.f32.mrf.mxu0
    %v9793 = vadd.f32 0.0, %v9792
    %v9794 = vpop.f32.mrf.mxu0
    %v9795 = vadd.f32 0.0, %v9794
    %9796 = vmatmul.bf16.gmra.mxu0 %v6253
    %v9797 = vpop.f32.mrf.mxu0
    %v9798 = vadd.f32 0.0, %v9797
    %v9799 = vpop.f32.mrf.mxu0
    %v9800 = vadd.f32 0.0, %v9799
    %9801 = vmatmul.bf16.gmra.mxu0 %v7284
    %v9802 = vpop.f32.mrf.mxu0
    %v9803 = vadd.f32 0.0, %v9802
    %v9804 = vpop.f32.mrf.mxu0
    %v9805 = vadd.f32 0.0, %v9804
    %9806 = vmatmul.bf16.gmra.mxu0 %v7287
    %v9807 = vpop.f32.mrf.mxu0
    %v9808 = vadd.f32 0.0, %v9807
    %v9809 = vpop.f32.mrf.mxu0
    %v9810 = vadd.f32 0.0, %v9809
    %9811 = vmatmul.bf16.gmra.mxu0 %v7290
    %v9812 = vpop.f32.mrf.mxu0
    %v9813 = vadd.f32 0.0, %v9812
    %v9814 = vpop.f32.mrf.mxu0
    %v9815 = vadd.f32 0.0, %v9814
    %9816 = vmatmul.bf16.gmra.mxu0 %v7293
    %v9817 = vpop.f32.mrf.mxu0
    %v9818 = vadd.f32 0.0, %v9817
    %v9819 = vpop.f32.mrf.mxu0
    %v9820 = vadd.f32 0.0, %v9819
    %9821 = vmatmul.bf16.gmra.mxu0 %v7689
    %v9822 = vpop.f32.mrf.mxu0
    %v9823 = vadd.f32 0.0, %v9822
    %v9824 = vpop.f32.mrf.mxu0
    %v9825 = vadd.f32 0.0, %v9824
    %9826 = vdwg.mxu0
    %v9827 = vadd.f32 %v9685, %v9733
    %v9828 = vadd.f32 %v9686, %v9735
    %v9829 = vadd.f32 %v9687, %v9738
    %v9830 = vadd.f32 %v9688, %v9740
    %v9831 = vadd.f32 %v9689, %v9743
    %v9832 = vadd.f32 %v9690, %v9745
    %v9833 = vadd.f32 %v9691, %v9748
    %v9834 = vadd.f32 %v9692, %v9750
    %v9835 = vadd.f32 %v9693, %v9753
    %v9836 = vadd.f32 %v9694, %v9755
    %v9837 = vadd.f32 %v9695, %v9758
    %v9838 = vadd.f32 %v9696, %v9760
    %v9839 = vadd.f32 %v9697, %v9763
    %v9840 = vadd.f32 %v9698, %v9765
    %v9841 = vadd.f32 %v9699, %v9768
    %v9842 = vadd.f32 %v9700, %v9770
    %v9843 = vadd.f32 %v9701, %v9773
    %v9844 = vadd.f32 %v9702, %v9775
    %v9845 = vadd.f32 %v9703, %v9778
    %v9846 = vadd.f32 %v9704, %v9780
    %v9847 = vadd.f32 %v9705, %v9783
    %v9848 = vadd.f32 %v9706, %v9785
    %v9849 = vadd.f32 %v9707, %v9788
    %v9850 = vadd.f32 %v9708, %v9790
    %v9851 = vadd.f32 %v9709, %v9793
    %v9852 = vadd.f32 %v9710, %v9795
    %v9853 = vadd.f32 %v9711, %v9798
    %v9854 = vadd.f32 %v9712, %v9800
    %v9855 = vadd.f32 %v9713, %v9803
    %v9856 = vadd.f32 %v9714, %v9805
    %v9857 = vadd.f32 %v9715, %v9808
    %v9858 = vadd.f32 %v9716, %v9810
    %v9859 = vadd.f32 %v9717, %v9813
    %v9860 = vadd.f32 %v9718, %v9815
    %v9861 = vadd.f32 %v9719, %v9818
    %v9862 = vadd.f32 %v9720, %v9820
    %v9863 = vadd.f32 %v9721, %v9823
    %v9864 = vadd.f32 %v9722, %v9825
    %v9873 = vunpack.c.l.b16 %v5578
    %v9874 = vunpack.c.l.b16 %v5579
    %v9875 = vunpack.c.l.b16 %v5580
    %v9876 = vunpack.c.l.b16 %v5581
    %v9877 = vunpack.c.l.b16 %v5582
    %v9878 = vunpack.c.l.b16 %v5583
    %v9879 = vunpack.c.l.b16 %v5584
    %v9880 = vunpack.c.l.b16 %v5585
    %v9881 = vpack.c.b16 %v9874, %v9873
    %v9882 = vpack.c.b16 %v9876, %v9875
    %v9883 = vpack.c.b16 %v9878, %v9877
    %v9884 = vpack.c.b16 %v9880, %v9879
    %v9886 = vsel %vm5773, %v9881, 0
    %v9889 = vsel %vm5773, %v9882, 0
    %v9892 = vsel %vm5773, %v9883, 0
    %v9895 = vsel %vm5773, %v9884, 0
    %9897 = vmatpush.bf16.msra.mxu0 0
    %9898 = vmatpush.bf16.msra.mxu0 0
    %9899 = vmatpush.bf16.msra.mxu0 0
    %9900 = vmatpush.bf16.msra.mxu0 0
    %9901 = vmatpush.bf16.msra.mxu0 %v7278
    %9902 = vmatpush.bf16.msra.mxu0 %v7277
    %9903 = vmatpush.bf16.msra.mxu0 %v7276
    %9904 = vmatpush.bf16.msra.mxu0 %v7275
    %9905 = vmatmul.bf16.gmra.mxu0 %v6540
    %v9906 = vpop.f32.mrf.mxu0
    %v9907 = vadd.f32 0.0, %v9906
    %v9908 = vpop.f32.mrf.mxu0
    %v9909 = vadd.f32 0.0, %v9908
    %9910 = vmatmul.bf16.gmra.mxu0 %v6543
    %v9911 = vpop.f32.mrf.mxu0
    %v9912 = vadd.f32 0.0, %v9911
    %v9913 = vpop.f32.mrf.mxu0
    %v9914 = vadd.f32 0.0, %v9913
    %9915 = vmatmul.bf16.gmra.mxu0 %v6546
    %v9916 = vpop.f32.mrf.mxu0
    %v9917 = vadd.f32 0.0, %v9916
    %v9918 = vpop.f32.mrf.mxu0
    %v9919 = vadd.f32 0.0, %v9918
    %9920 = vmatmul.bf16.gmra.mxu0 %v6549
    %v9921 = vpop.f32.mrf.mxu0
    %v9922 = vadd.f32 0.0, %v9921
    %v9923 = vpop.f32.mrf.mxu0
    %v9924 = vadd.f32 0.0, %v9923
    %9925 = vmatmul.bf16.gmra.mxu0 %v6552
    %v9926 = vpop.f32.mrf.mxu0
    %v9927 = vadd.f32 0.0, %v9926
    %v9928 = vpop.f32.mrf.mxu0
    %v9929 = vadd.f32 0.0, %v9928
    %9930 = vmatmul.bf16.gmra.mxu0 %v6555
    %v9931 = vpop.f32.mrf.mxu0
    %v9932 = vadd.f32 0.0, %v9931
    %v9933 = vpop.f32.mrf.mxu0
    %v9934 = vadd.f32 0.0, %v9933
    %9935 = vmatmul.bf16.gmra.mxu0 %v6558
    %v9936 = vpop.f32.mrf.mxu0
    %v9937 = vadd.f32 0.0, %v9936
    %v9938 = vpop.f32.mrf.mxu0
    %v9939 = vadd.f32 0.0, %v9938
    %9940 = vmatmul.bf16.gmra.mxu0 %v6561
    %v9941 = vpop.f32.mrf.mxu0
    %v9942 = vadd.f32 0.0, %v9941
    %v9943 = vpop.f32.mrf.mxu0
    %v9944 = vadd.f32 0.0, %v9943
    %9945 = vmatmul.bf16.gmra.mxu0 %v6564
    %v9946 = vpop.f32.mrf.mxu0
    %v9947 = vadd.f32 0.0, %v9946
    %v9948 = vpop.f32.mrf.mxu0
    %v9949 = vadd.f32 0.0, %v9948
    %9950 = vmatmul.bf16.gmra.mxu0 %v6567
    %v9951 = vpop.f32.mrf.mxu0
    %v9952 = vadd.f32 0.0, %v9951
    %v9953 = vpop.f32.mrf.mxu0
    %v9954 = vadd.f32 0.0, %v9953
    %9955 = vmatmul.bf16.gmra.mxu0 %v6570
    %v9956 = vpop.f32.mrf.mxu0
    %v9957 = vadd.f32 0.0, %v9956
    %v9958 = vpop.f32.mrf.mxu0
    %v9959 = vadd.f32 0.0, %v9958
    %9960 = vmatmul.bf16.gmra.mxu0 %v6573
    %v9961 = vpop.f32.mrf.mxu0
    %v9962 = vadd.f32 0.0, %v9961
    %v9963 = vpop.f32.mrf.mxu0
    %v9964 = vadd.f32 0.0, %v9963
    %9965 = vmatmul.bf16.gmra.mxu0 %v6576
    %v9966 = vpop.f32.mrf.mxu0
    %v9967 = vadd.f32 0.0, %v9966
    %v9968 = vpop.f32.mrf.mxu0
    %v9969 = vadd.f32 0.0, %v9968
    %9970 = vmatmul.bf16.gmra.mxu0 %v6579
    %v9971 = vpop.f32.mrf.mxu0
    %v9972 = vadd.f32 0.0, %v9971
    %v9973 = vpop.f32.mrf.mxu0
    %v9974 = vadd.f32 0.0, %v9973
    %9975 = vmatmul.bf16.gmra.mxu0 %v7087
    %v9976 = vpop.f32.mrf.mxu0
    %v9977 = vadd.f32 0.0, %v9976
    %v9978 = vpop.f32.mrf.mxu0
    %v9979 = vadd.f32 0.0, %v9978
    %9980 = vmatmul.bf16.gmra.mxu0 %v9886
    %v9981 = vpop.f32.mrf.mxu0
    %v9982 = vadd.f32 0.0, %v9981
    %v9983 = vpop.f32.mrf.mxu0
    %v9984 = vadd.f32 0.0, %v9983
    %9985 = vmatmul.bf16.gmra.mxu0 %v9889
    %v9986 = vpop.f32.mrf.mxu0
    %v9987 = vadd.f32 0.0, %v9986
    %v9988 = vpop.f32.mrf.mxu0
    %v9989 = vadd.f32 0.0, %v9988
    %9990 = vmatmul.bf16.gmra.mxu0 %v9892
    %v9991 = vpop.f32.mrf.mxu0
    %v9992 = vadd.f32 0.0, %v9991
    %v9993 = vpop.f32.mrf.mxu0
    %v9994 = vadd.f32 0.0, %v9993
    %9995 = vmatmul.bf16.gmra.mxu0 %v9895
    %v9996 = vpop.f32.mrf.mxu0
    %v9997 = vadd.f32 0.0, %v9996
    %v9998 = vpop.f32.mrf.mxu0
    %v9999 = vadd.f32 0.0, %v9998
    %10000 = vdwg.mxu0
    %v10001 = vadd.f32 %v9827, %v9907
    %v10002 = vadd.f32 %v9828, %v9909
    %v10003 = vadd.f32 %v9829, %v9912
    %v10004 = vadd.f32 %v9830, %v9914
    %v10005 = vadd.f32 %v9831, %v9917
    %v10006 = vadd.f32 %v9832, %v9919
    %v10007 = vadd.f32 %v9833, %v9922
    %v10008 = vadd.f32 %v9834, %v9924
    %v10009 = vadd.f32 %v9835, %v9927
    %v10010 = vadd.f32 %v9836, %v9929
    %v10011 = vadd.f32 %v9837, %v9932
    %v10012 = vadd.f32 %v9838, %v9934
    %v10013 = vadd.f32 %v9839, %v9937
    %v10014 = vadd.f32 %v9840, %v9939
    %v10015 = vadd.f32 %v9841, %v9942
    %v10016 = vadd.f32 %v9842, %v9944
    %v10017 = vadd.f32 %v9843, %v9947
    %v10018 = vadd.f32 %v9844, %v9949
    %v10019 = vadd.f32 %v9845, %v9952
    %v10020 = vadd.f32 %v9846, %v9954
    %v10021 = vadd.f32 %v9847, %v9957
    %v10022 = vadd.f32 %v9848, %v9959
    %v10023 = vadd.f32 %v9849, %v9962
    %v10024 = vadd.f32 %v9850, %v9964
    %v10025 = vadd.f32 %v9851, %v9967
    %v10026 = vadd.f32 %v9852, %v9969
    %v10027 = vadd.f32 %v9853, %v9972
    %v10028 = vadd.f32 %v9854, %v9974
    %v10029 = vadd.f32 %v9855, %v9977
    %v10030 = vadd.f32 %v9856, %v9979
    %v10031 = vadd.f32 %v9857, %v9982
    %v10032 = vadd.f32 %v9858, %v9984
    %v10033 = vadd.f32 %v9859, %v9987
    %v10034 = vadd.f32 %v9860, %v9989
    %v10035 = vadd.f32 %v9861, %v9992
    %v10036 = vadd.f32 %v9862, %v9994
    %v10037 = vadd.f32 %v9863, %v9997
    %v10038 = vadd.f32 %v9864, %v9999
    %v10047 = vunpack.c.l.b16 %v5628
    %v10048 = vunpack.c.l.b16 %v5629
    %v10049 = vunpack.c.l.b16 %v5630
    %v10050 = vunpack.c.l.b16 %v5631
    %v10051 = vunpack.c.l.b16 %v5632
    %v10052 = vunpack.c.l.b16 %v5633
    %v10053 = vunpack.c.l.b16 %v5634
    %v10054 = vunpack.c.l.b16 %v5635
    %v10055 = vpack.c.b16 %v10048, %v10047
    %v10056 = vpack.c.b16 %v10050, %v10049
    %v10057 = vpack.c.b16 %v10052, %v10051
    %v10058 = vpack.c.b16 %v10054, %v10053
    %v10060 = vsel %vm5773, %v10055, 0
    %v10063 = vsel %vm5773, %v10056, 0
    %v10066 = vsel %vm5773, %v10057, 0
    %v10069 = vsel %vm5773, %v10058, 0
    %10071 = vmatpush.bf16.msra.mxu0 0
    %10072 = vmatpush.bf16.msra.mxu0 0
    %10073 = vmatpush.bf16.msra.mxu0 0
    %10074 = vmatpush.bf16.msra.mxu0 0
    %10075 = vmatpush.bf16.msra.mxu0 %v7489
    %10076 = vmatpush.bf16.msra.mxu0 %v7488
    %10077 = vmatpush.bf16.msra.mxu0 %v7487
    %10078 = vmatpush.bf16.msra.mxu0 %v7486
    %10079 = vmatmul.bf16.gmra.mxu0 %v6866
    %v10080 = vpop.f32.mrf.mxu0
    %v10081 = vadd.f32 0.0, %v10080
    %v10082 = vpop.f32.mrf.mxu0
    %v10083 = vadd.f32 0.0, %v10082
    %10084 = vmatmul.bf16.gmra.mxu0 %v6869
    %v10085 = vpop.f32.mrf.mxu0
    %v10086 = vadd.f32 0.0, %v10085
    %v10087 = vpop.f32.mrf.mxu0
    %v10088 = vadd.f32 0.0, %v10087
    %10089 = vmatmul.bf16.gmra.mxu0 %v6872
    %v10090 = vpop.f32.mrf.mxu0
    %v10091 = vadd.f32 0.0, %v10090
    %v10092 = vpop.f32.mrf.mxu0
    %v10093 = vadd.f32 0.0, %v10092
    %10094 = vmatmul.bf16.gmra.mxu0 %v6875
    %v10095 = vpop.f32.mrf.mxu0
    %v10096 = vadd.f32 0.0, %v10095
    %v10097 = vpop.f32.mrf.mxu0
    %v10098 = vadd.f32 0.0, %v10097
    %10099 = vmatmul.bf16.gmra.mxu0 %v6878
    %v10100 = vpop.f32.mrf.mxu0
    %v10101 = vadd.f32 0.0, %v10100
    %v10102 = vpop.f32.mrf.mxu0
    %v10103 = vadd.f32 0.0, %v10102
    %10104 = vmatmul.bf16.gmra.mxu0 %v6881
    %v10105 = vpop.f32.mrf.mxu0
    %v10106 = vadd.f32 0.0, %v10105
    %v10107 = vpop.f32.mrf.mxu0
    %v10108 = vadd.f32 0.0, %v10107
    %10109 = vmatmul.bf16.gmra.mxu0 %v6884
    %v10110 = vpop.f32.mrf.mxu0
    %v10111 = vadd.f32 0.0, %v10110
    %v10112 = vpop.f32.mrf.mxu0
    %v10113 = vadd.f32 0.0, %v10112
    %10114 = vmatmul.bf16.gmra.mxu0 %v6887
    %v10115 = vpop.f32.mrf.mxu0
    %v10116 = vadd.f32 0.0, %v10115
    %v10117 = vpop.f32.mrf.mxu0
    %v10118 = vadd.f32 0.0, %v10117
    %10119 = vmatmul.bf16.gmra.mxu0 %v6890
    %v10120 = vpop.f32.mrf.mxu0
    %v10121 = vadd.f32 0.0, %v10120
    %v10122 = vpop.f32.mrf.mxu0
    %v10123 = vadd.f32 0.0, %v10122
    %10124 = vmatmul.bf16.gmra.mxu0 %v6893
    %v10125 = vpop.f32.mrf.mxu0
    %v10126 = vadd.f32 0.0, %v10125
    %v10127 = vpop.f32.mrf.mxu0
    %v10128 = vadd.f32 0.0, %v10127
    %10129 = vmatmul.bf16.gmra.mxu0 %v6896
    %v10130 = vpop.f32.mrf.mxu0
    %v10131 = vadd.f32 0.0, %v10130
    %v10132 = vpop.f32.mrf.mxu0
    %v10133 = vadd.f32 0.0, %v10132
    %10134 = vmatmul.bf16.gmra.mxu0 %v6899
    %v10135 = vpop.f32.mrf.mxu0
    %v10136 = vadd.f32 0.0, %v10135
    %v10137 = vpop.f32.mrf.mxu0
    %v10138 = vadd.f32 0.0, %v10137
    %10139 = vmatmul.bf16.gmra.mxu0 %v6902
    %v10140 = vpop.f32.mrf.mxu0
    %v10141 = vadd.f32 0.0, %v10140
    %v10142 = vpop.f32.mrf.mxu0
    %v10143 = vadd.f32 0.0, %v10142
    %10144 = vmatmul.bf16.gmra.mxu0 %v6905
    %v10145 = vpop.f32.mrf.mxu0
    %v10146 = vadd.f32 0.0, %v10145
    %v10147 = vpop.f32.mrf.mxu0
    %v10148 = vadd.f32 0.0, %v10147
    %10149 = vmatmul.bf16.gmra.mxu0 %v8473
    %v10150 = vpop.f32.mrf.mxu0
    %v10151 = vadd.f32 0.0, %v10150
    %v10152 = vpop.f32.mrf.mxu0
    %v10153 = vadd.f32 0.0, %v10152
    %10154 = vmatmul.bf16.gmra.mxu0 %v10060
    %v10155 = vpop.f32.mrf.mxu0
    %v10156 = vadd.f32 0.0, %v10155
    %v10157 = vpop.f32.mrf.mxu0
    %v10158 = vadd.f32 0.0, %v10157
    %10159 = vmatmul.bf16.gmra.mxu0 %v10063
    %v10160 = vpop.f32.mrf.mxu0
    %v10161 = vadd.f32 0.0, %v10160
    %v10162 = vpop.f32.mrf.mxu0
    %v10163 = vadd.f32 0.0, %v10162
    %10164 = vmatmul.bf16.gmra.mxu0 %v10066
    %v10165 = vpop.f32.mrf.mxu0
    %v10166 = vadd.f32 0.0, %v10165
    %v10167 = vpop.f32.mrf.mxu0
    %v10168 = vadd.f32 0.0, %v10167
    %10169 = vmatmul.bf16.gmra.mxu0 %v10069
    %v10170 = vpop.f32.mrf.mxu0
    %v10171 = vadd.f32 0.0, %v10170
    %v10172 = vpop.f32.mrf.mxu0
    %v10173 = vadd.f32 0.0, %v10172
    %10174 = vdwg.mxu0
    %v10175 = vadd.f32 %v10001, %v10081
    %v10176 = vadd.f32 %v10002, %v10083
    %v10177 = vadd.f32 %v10003, %v10086
    %v10178 = vadd.f32 %v10004, %v10088
    %v10179 = vadd.f32 %v10005, %v10091
    %v10180 = vadd.f32 %v10006, %v10093
    %v10181 = vadd.f32 %v10007, %v10096
    %v10182 = vadd.f32 %v10008, %v10098
    %v10183 = vadd.f32 %v10009, %v10101
    %v10184 = vadd.f32 %v10010, %v10103
    %v10185 = vadd.f32 %v10011, %v10106
    %v10186 = vadd.f32 %v10012, %v10108
    %v10187 = vadd.f32 %v10013, %v10111
    %v10188 = vadd.f32 %v10014, %v10113
    %v10189 = vadd.f32 %v10015, %v10116
    %v10190 = vadd.f32 %v10016, %v10118
    %v10191 = vadd.f32 %v10017, %v10121
    %v10192 = vadd.f32 %v10018, %v10123
    %v10193 = vadd.f32 %v10019, %v10126
    %v10194 = vadd.f32 %v10020, %v10128
    %v10195 = vadd.f32 %v10021, %v10131
    %v10196 = vadd.f32 %v10022, %v10133
    %v10197 = vadd.f32 %v10023, %v10136
    %v10198 = vadd.f32 %v10024, %v10138
    %v10199 = vadd.f32 %v10025, %v10141
    %v10200 = vadd.f32 %v10026, %v10143
    %v10201 = vadd.f32 %v10027, %v10146
    %v10202 = vadd.f32 %v10028, %v10148
    %v10203 = vadd.f32 %v10029, %v10151
    %v10204 = vadd.f32 %v10030, %v10153
    %v10205 = vadd.f32 %v10031, %v10156
    %v10206 = vadd.f32 %v10032, %v10158
    %v10207 = vadd.f32 %v10033, %v10161
    %v10208 = vadd.f32 %v10034, %v10163
    %v10209 = vadd.f32 %v10035, %v10166
    %v10210 = vadd.f32 %v10036, %v10168
    %v10211 = vadd.f32 %v10037, %v10171
    %v10212 = vadd.f32 %v10038, %v10173
    %v10215 = vunpack.c.l.b16 %v5586
    %v10216 = vunpack.c.l.b16 %v5587
    %v10217 = vpack.c.b16 %v10216, %v10215
    %v10219 = vsel %vm5773, %v10217, 0
    %10221 = vmatpush.bf16.msra.mxu0 0
    %10222 = vmatpush.bf16.msra.mxu0 0
    %10223 = vmatpush.bf16.msra.mxu0 0
    %10224 = vmatpush.bf16.msra.mxu0 0
    %10225 = vmatpush.bf16.msra.mxu0 %v7683
    %10226 = vmatpush.bf16.msra.mxu0 %v7682
    %10227 = vmatpush.bf16.msra.mxu0 %v7681
    %10228 = vmatpush.bf16.msra.mxu0 %v7680
    %10229 = vmatmul.bf16.gmra.mxu0 %v6543
    %v10230 = vpop.f32.mrf.mxu0
    %v10231 = vadd.f32 0.0, %v10230
    %v10232 = vpop.f32.mrf.mxu0
    %v10233 = vadd.f32 0.0, %v10232
    %10234 = vmatmul.bf16.gmra.mxu0 %v6546
    %v10235 = vpop.f32.mrf.mxu0
    %v10236 = vadd.f32 0.0, %v10235
    %v10237 = vpop.f32.mrf.mxu0
    %v10238 = vadd.f32 0.0, %v10237
    %10239 = vmatmul.bf16.gmra.mxu0 %v6549
    %v10240 = vpop.f32.mrf.mxu0
    %v10241 = vadd.f32 0.0, %v10240
    %v10242 = vpop.f32.mrf.mxu0
    %v10243 = vadd.f32 0.0, %v10242
    %10244 = vmatmul.bf16.gmra.mxu0 %v6552
    %v10245 = vpop.f32.mrf.mxu0
    %v10246 = vadd.f32 0.0, %v10245
    %v10247 = vpop.f32.mrf.mxu0
    %v10248 = vadd.f32 0.0, %v10247
    %10249 = vmatmul.bf16.gmra.mxu0 %v6555
    %v10250 = vpop.f32.mrf.mxu0
    %v10251 = vadd.f32 0.0, %v10250
    %v10252 = vpop.f32.mrf.mxu0
    %v10253 = vadd.f32 0.0, %v10252
    %10254 = vmatmul.bf16.gmra.mxu0 %v6558
    %v10255 = vpop.f32.mrf.mxu0
    %v10256 = vadd.f32 0.0, %v10255
    %v10257 = vpop.f32.mrf.mxu0
    %v10258 = vadd.f32 0.0, %v10257
    %10259 = vmatmul.bf16.gmra.mxu0 %v6561
    %v10260 = vpop.f32.mrf.mxu0
    %v10261 = vadd.f32 0.0, %v10260
    %v10262 = vpop.f32.mrf.mxu0
    %v10263 = vadd.f32 0.0, %v10262
    %10264 = vmatmul.bf16.gmra.mxu0 %v6564
    %v10265 = vpop.f32.mrf.mxu0
    %v10266 = vadd.f32 0.0, %v10265
    %v10267 = vpop.f32.mrf.mxu0
    %v10268 = vadd.f32 0.0, %v10267
    %10269 = vmatmul.bf16.gmra.mxu0 %v6567
    %v10270 = vpop.f32.mrf.mxu0
    %v10271 = vadd.f32 0.0, %v10270
    %v10272 = vpop.f32.mrf.mxu0
    %v10273 = vadd.f32 0.0, %v10272
    %10274 = vmatmul.bf16.gmra.mxu0 %v6570
    %v10275 = vpop.f32.mrf.mxu0
    %v10276 = vadd.f32 0.0, %v10275
    %v10277 = vpop.f32.mrf.mxu0
    %v10278 = vadd.f32 0.0, %v10277
    %10279 = vmatmul.bf16.gmra.mxu0 %v6573
    %v10280 = vpop.f32.mrf.mxu0
    %v10281 = vadd.f32 0.0, %v10280
    %v10282 = vpop.f32.mrf.mxu0
    %v10283 = vadd.f32 0.0, %v10282
    %10284 = vmatmul.bf16.gmra.mxu0 %v6576
    %v10285 = vpop.f32.mrf.mxu0
    %v10286 = vadd.f32 0.0, %v10285
    %v10287 = vpop.f32.mrf.mxu0
    %v10288 = vadd.f32 0.0, %v10287
    %10289 = vmatmul.bf16.gmra.mxu0 %v6579
    %v10290 = vpop.f32.mrf.mxu0
    %v10291 = vadd.f32 0.0, %v10290
    %v10292 = vpop.f32.mrf.mxu0
    %v10293 = vadd.f32 0.0, %v10292
    %10294 = vmatmul.bf16.gmra.mxu0 %v7087
    %v10295 = vpop.f32.mrf.mxu0
    %v10296 = vadd.f32 0.0, %v10295
    %v10297 = vpop.f32.mrf.mxu0
    %v10298 = vadd.f32 0.0, %v10297
    %10299 = vmatmul.bf16.gmra.mxu0 %v9886
    %v10300 = vpop.f32.mrf.mxu0
    %v10301 = vadd.f32 0.0, %v10300
    %v10302 = vpop.f32.mrf.mxu0
    %v10303 = vadd.f32 0.0, %v10302
    %10304 = vmatmul.bf16.gmra.mxu0 %v9889
    %v10305 = vpop.f32.mrf.mxu0
    %v10306 = vadd.f32 0.0, %v10305
    %v10307 = vpop.f32.mrf.mxu0
    %v10308 = vadd.f32 0.0, %v10307
    %10309 = vmatmul.bf16.gmra.mxu0 %v9892
    %v10310 = vpop.f32.mrf.mxu0
    %v10311 = vadd.f32 0.0, %v10310
    %v10312 = vpop.f32.mrf.mxu0
    %v10313 = vadd.f32 0.0, %v10312
    %10314 = vmatmul.bf16.gmra.mxu0 %v9895
    %v10315 = vpop.f32.mrf.mxu0
    %v10316 = vadd.f32 0.0, %v10315
    %v10317 = vpop.f32.mrf.mxu0
    %v10318 = vadd.f32 0.0, %v10317
    %10319 = vmatmul.bf16.gmra.mxu0 %v10219
    %v10320 = vpop.f32.mrf.mxu0
    %v10321 = vadd.f32 0.0, %v10320
    %v10322 = vpop.f32.mrf.mxu0
    %v10323 = vadd.f32 0.0, %v10322
    %10324 = vdwg.mxu0
    %v10325 = vadd.f32 %v10175, %v10231
    %v10326 = vadd.f32 %v10176, %v10233
    %v10327 = vadd.f32 %v10177, %v10236
    %v10328 = vadd.f32 %v10178, %v10238
    %v10329 = vadd.f32 %v10179, %v10241
    %v10330 = vadd.f32 %v10180, %v10243
    %v10331 = vadd.f32 %v10181, %v10246
    %v10332 = vadd.f32 %v10182, %v10248
    %v10333 = vadd.f32 %v10183, %v10251
    %v10334 = vadd.f32 %v10184, %v10253
    %v10335 = vadd.f32 %v10185, %v10256
    %v10336 = vadd.f32 %v10186, %v10258
    %v10337 = vadd.f32 %v10187, %v10261
    %v10338 = vadd.f32 %v10188, %v10263
    %v10339 = vadd.f32 %v10189, %v10266
    %v10340 = vadd.f32 %v10190, %v10268
    %v10341 = vadd.f32 %v10191, %v10271
    %v10342 = vadd.f32 %v10192, %v10273
    %v10343 = vadd.f32 %v10193, %v10276
    %v10344 = vadd.f32 %v10194, %v10278
    %v10345 = vadd.f32 %v10195, %v10281
    %v10346 = vadd.f32 %v10196, %v10283
    %v10347 = vadd.f32 %v10197, %v10286
    %v10348 = vadd.f32 %v10198, %v10288
    %v10349 = vadd.f32 %v10199, %v10291
    %v10350 = vadd.f32 %v10200, %v10293
    %v10351 = vadd.f32 %v10201, %v10296
    %v10352 = vadd.f32 %v10202, %v10298
    %v10353 = vadd.f32 %v10203, %v10301
    %v10354 = vadd.f32 %v10204, %v10303
    %v10355 = vadd.f32 %v10205, %v10306
    %v10356 = vadd.f32 %v10206, %v10308
    %v10357 = vadd.f32 %v10207, %v10311
    %v10358 = vadd.f32 %v10208, %v10313
    %v10359 = vadd.f32 %v10209, %v10316
    %v10360 = vadd.f32 %v10210, %v10318
    %v10361 = vadd.f32 %v10211, %v10321
    %v10362 = vadd.f32 %v10212, %v10323
    %v10363 = vmax.f32 %v9051, %v10325
    %v10364 = vmax.f32 %v9052, %v10326
    %v10365 = vmax.f32 %v9053, %v10327
    %v10366 = vmax.f32 %v9054, %v10328
    %v10367 = vmax.f32 %v9055, %v10329
    %v10368 = vmax.f32 %v9056, %v10330
    %v10369 = vmax.f32 %v9057, %v10331
    %v10370 = vmax.f32 %v9058, %v10332
    %v10371 = vmax.f32 %v9059, %v10333
    %v10372 = vmax.f32 %v9060, %v10334
    %v10373 = vmax.f32 %v9061, %v10335
    %v10374 = vmax.f32 %v9062, %v10336
    %v10375 = vmax.f32 %v9063, %v10337
    %v10376 = vmax.f32 %v9064, %v10338
    %v10377 = vmax.f32 %v9065, %v10339
    %v10378 = vmax.f32 %v9066, %v10340
    %v10379 = vmax.f32 %v9067, %v10341
    %v10380 = vmax.f32 %v9068, %v10342
    %v10381 = vmax.f32 %v9069, %v10343
    %v10382 = vmax.f32 %v9070, %v10344
    %v10383 = vmax.f32 %v9071, %v10345
    %v10384 = vmax.f32 %v9072, %v10346
    %v10385 = vmax.f32 %v9073, %v10347
    %v10386 = vmax.f32 %v9074, %v10348
    %v10387 = vmax.f32 %v9075, %v10349
    %v10388 = vmax.f32 %v9076, %v10350
    %v10389 = vmax.f32 %v9077, %v10351
    %v10390 = vmax.f32 %v9078, %v10352
    %v10391 = vmax.f32 %v9079, %v10353
    %v10392 = vmax.f32 %v9080, %v10354
    %v10393 = vmax.f32 %v9081, %v10355
    %v10394 = vmax.f32 %v9082, %v10356
    %v10395 = vmax.f32 %v9083, %v10357
    %v10396 = vmax.f32 %v9084, %v10358
    %v10397 = vmax.f32 %v9085, %v10359
    %v10398 = vmax.f32 %v9086, %v10360
    %v10399 = vmax.f32 %v9087, %v10361
    %v10400 = vmax.f32 %v9088, %v10362
    %10401 = vmatpush.bf16.msra.mxu0 0
    %10402 = vmatpush.bf16.msra.mxu0 0
    %10403 = vmatpush.bf16.msra.mxu0 0
    %10404 = vmatpush.bf16.msra.mxu0 0
    %10405 = vmatpush.bf16.msra.mxu0 %v5768
    %10406 = vmatpush.bf16.msra.mxu0 %v5767
    %10407 = vmatpush.bf16.msra.mxu0 %v5766
    %10408 = vmatpush.bf16.msra.mxu0 %v5765
    %10409 = vmatmul.bf16.gmra.mxu0 %v6528
    %v10410 = vpop.f32.mrf.mxu0
    %v10411 = vadd.f32 0.0, %v10410
    %v10412 = vpop.f32.mrf.mxu0
    %v10413 = vadd.f32 0.0, %v10412
    %10414 = vmatmul.bf16.gmra.mxu0 %v6531
    %v10415 = vpop.f32.mrf.mxu0
    %v10416 = vadd.f32 0.0, %v10415
    %v10417 = vpop.f32.mrf.mxu0
    %v10418 = vadd.f32 0.0, %v10417
    %10419 = vmatmul.bf16.gmra.mxu0 %v6534
    %v10420 = vpop.f32.mrf.mxu0
    %v10421 = vadd.f32 0.0, %v10420
    %v10422 = vpop.f32.mrf.mxu0
    %v10423 = vadd.f32 0.0, %v10422
    %10424 = vmatmul.bf16.gmra.mxu0 %v6537
    %v10425 = vpop.f32.mrf.mxu0
    %v10426 = vadd.f32 0.0, %v10425
    %v10427 = vpop.f32.mrf.mxu0
    %v10428 = vadd.f32 0.0, %v10427
    %10429 = vmatmul.bf16.gmra.mxu0 %v6540
    %v10430 = vpop.f32.mrf.mxu0
    %v10431 = vadd.f32 0.0, %v10430
    %v10432 = vpop.f32.mrf.mxu0
    %v10433 = vadd.f32 0.0, %v10432
    %10434 = vmatmul.bf16.gmra.mxu0 %v6543
    %v10435 = vpop.f32.mrf.mxu0
    %v10436 = vadd.f32 0.0, %v10435
    %v10437 = vpop.f32.mrf.mxu0
    %v10438 = vadd.f32 0.0, %v10437
    %10439 = vmatmul.bf16.gmra.mxu0 %v6546
    %v10440 = vpop.f32.mrf.mxu0
    %v10441 = vadd.f32 0.0, %v10440
    %v10442 = vpop.f32.mrf.mxu0
    %v10443 = vadd.f32 0.0, %v10442
    %10444 = vmatmul.bf16.gmra.mxu0 %v6549
    %v10445 = vpop.f32.mrf.mxu0
    %v10446 = vadd.f32 0.0, %v10445
    %v10447 = vpop.f32.mrf.mxu0
    %v10448 = vadd.f32 0.0, %v10447
    %10449 = vmatmul.bf16.gmra.mxu0 %v6552
    %v10450 = vpop.f32.mrf.mxu0
    %v10451 = vadd.f32 0.0, %v10450
    %v10452 = vpop.f32.mrf.mxu0
    %v10453 = vadd.f32 0.0, %v10452
    %10454 = vmatmul.bf16.gmra.mxu0 %v6555
    %v10455 = vpop.f32.mrf.mxu0
    %v10456 = vadd.f32 0.0, %v10455
    %v10457 = vpop.f32.mrf.mxu0
    %v10458 = vadd.f32 0.0, %v10457
    %10459 = vmatmul.bf16.gmra.mxu0 %v6558
    %v10460 = vpop.f32.mrf.mxu0
    %v10461 = vadd.f32 0.0, %v10460
    %v10462 = vpop.f32.mrf.mxu0
    %v10463 = vadd.f32 0.0, %v10462
    %10464 = vmatmul.bf16.gmra.mxu0 %v6561
    %v10465 = vpop.f32.mrf.mxu0
    %v10466 = vadd.f32 0.0, %v10465
    %v10467 = vpop.f32.mrf.mxu0
    %v10468 = vadd.f32 0.0, %v10467
    %10469 = vmatmul.bf16.gmra.mxu0 %v6564
    %v10470 = vpop.f32.mrf.mxu0
    %v10471 = vadd.f32 0.0, %v10470
    %v10472 = vpop.f32.mrf.mxu0
    %v10473 = vadd.f32 0.0, %v10472
    %10474 = vmatmul.bf16.gmra.mxu0 %v6567
    %v10475 = vpop.f32.mrf.mxu0
    %v10476 = vadd.f32 0.0, %v10475
    %v10477 = vpop.f32.mrf.mxu0
    %v10478 = vadd.f32 0.0, %v10477
    %10479 = vmatmul.bf16.gmra.mxu0 %v6570
    %v10480 = vpop.f32.mrf.mxu0
    %v10481 = vadd.f32 0.0, %v10480
    %v10482 = vpop.f32.mrf.mxu0
    %v10483 = vadd.f32 0.0, %v10482
    %10484 = vmatmul.bf16.gmra.mxu0 %v6573
    %v10485 = vpop.f32.mrf.mxu0
    %v10486 = vadd.f32 0.0, %v10485
    %v10487 = vpop.f32.mrf.mxu0
    %v10488 = vadd.f32 0.0, %v10487
    %10489 = vmatmul.bf16.gmra.mxu0 %v6576
    %v10490 = vpop.f32.mrf.mxu0
    %v10491 = vadd.f32 0.0, %v10490
    %v10492 = vpop.f32.mrf.mxu0
    %v10493 = vadd.f32 0.0, %v10492
    %10494 = vmatmul.bf16.gmra.mxu0 %v6579
    %v10495 = vpop.f32.mrf.mxu0
    %v10496 = vadd.f32 0.0, %v10495
    %v10497 = vpop.f32.mrf.mxu0
    %v10498 = vadd.f32 0.0, %v10497
    %10499 = vmatmul.bf16.gmra.mxu0 %v7087
    %v10500 = vpop.f32.mrf.mxu0
    %v10501 = vadd.f32 0.0, %v10500
    %v10502 = vpop.f32.mrf.mxu0
    %v10503 = vadd.f32 0.0, %v10502
    %10504 = vdwg.mxu0
    %10505 = vmatpush.bf16.msra.mxu0 0
    %10506 = vmatpush.bf16.msra.mxu0 0
    %10507 = vmatpush.bf16.msra.mxu0 0
    %10508 = vmatpush.bf16.msra.mxu0 0
    %10509 = vmatpush.bf16.msra.mxu0 %v6049
    %10510 = vmatpush.bf16.msra.mxu0 %v6048
    %10511 = vmatpush.bf16.msra.mxu0 %v6047
    %10512 = vmatpush.bf16.msra.mxu0 %v6046
    %10513 = vmatmul.bf16.gmra.mxu0 %v6851
    %v10514 = vpop.f32.mrf.mxu0
    %v10515 = vadd.f32 %v10411, %v10514
    %v10516 = vpop.f32.mrf.mxu0
    %v10517 = vadd.f32 %v10413, %v10516
    %10518 = vmatmul.bf16.gmra.mxu0 %v6854
    %v10519 = vpop.f32.mrf.mxu0
    %v10520 = vadd.f32 %v10416, %v10519
    %v10521 = vpop.f32.mrf.mxu0
    %v10522 = vadd.f32 %v10418, %v10521
    %10523 = vmatmul.bf16.gmra.mxu0 %v6857
    %v10524 = vpop.f32.mrf.mxu0
    %v10525 = vadd.f32 %v10421, %v10524
    %v10526 = vpop.f32.mrf.mxu0
    %v10527 = vadd.f32 %v10423, %v10526
    %10528 = vmatmul.bf16.gmra.mxu0 %v6860
    %v10529 = vpop.f32.mrf.mxu0
    %v10530 = vadd.f32 %v10426, %v10529
    %v10531 = vpop.f32.mrf.mxu0
    %v10532 = vadd.f32 %v10428, %v10531
    %10533 = vmatmul.bf16.gmra.mxu0 %v6863
    %v10534 = vpop.f32.mrf.mxu0
    %v10535 = vadd.f32 %v10431, %v10534
    %v10536 = vpop.f32.mrf.mxu0
    %v10537 = vadd.f32 %v10433, %v10536
    %10538 = vmatmul.bf16.gmra.mxu0 %v6866
    %v10539 = vpop.f32.mrf.mxu0
    %v10540 = vadd.f32 %v10436, %v10539
    %v10541 = vpop.f32.mrf.mxu0
    %v10542 = vadd.f32 %v10438, %v10541
    %10543 = vmatmul.bf16.gmra.mxu0 %v6869
    %v10544 = vpop.f32.mrf.mxu0
    %v10545 = vadd.f32 %v10441, %v10544
    %v10546 = vpop.f32.mrf.mxu0
    %v10547 = vadd.f32 %v10443, %v10546
    %10548 = vmatmul.bf16.gmra.mxu0 %v6872
    %v10549 = vpop.f32.mrf.mxu0
    %v10550 = vadd.f32 %v10446, %v10549
    %v10551 = vpop.f32.mrf.mxu0
    %v10552 = vadd.f32 %v10448, %v10551
    %10553 = vmatmul.bf16.gmra.mxu0 %v6875
    %v10554 = vpop.f32.mrf.mxu0
    %v10555 = vadd.f32 %v10451, %v10554
    %v10556 = vpop.f32.mrf.mxu0
    %v10557 = vadd.f32 %v10453, %v10556
    %10558 = vmatmul.bf16.gmra.mxu0 %v6878
    %v10559 = vpop.f32.mrf.mxu0
    %v10560 = vadd.f32 %v10456, %v10559
    %v10561 = vpop.f32.mrf.mxu0
    %v10562 = vadd.f32 %v10458, %v10561
    %10563 = vmatmul.bf16.gmra.mxu0 %v6881
    %v10564 = vpop.f32.mrf.mxu0
    %v10565 = vadd.f32 %v10461, %v10564
    %v10566 = vpop.f32.mrf.mxu0
    %v10567 = vadd.f32 %v10463, %v10566
    %10568 = vmatmul.bf16.gmra.mxu0 %v6884
    %v10569 = vpop.f32.mrf.mxu0
    %v10570 = vadd.f32 %v10466, %v10569
    %v10571 = vpop.f32.mrf.mxu0
    %v10572 = vadd.f32 %v10468, %v10571
    %10573 = vmatmul.bf16.gmra.mxu0 %v6887
    %v10574 = vpop.f32.mrf.mxu0
    %v10575 = vadd.f32 %v10471, %v10574
    %v10576 = vpop.f32.mrf.mxu0
    %v10577 = vadd.f32 %v10473, %v10576
    %10578 = vmatmul.bf16.gmra.mxu0 %v6890
    %v10579 = vpop.f32.mrf.mxu0
    %v10580 = vadd.f32 %v10476, %v10579
    %v10581 = vpop.f32.mrf.mxu0
    %v10582 = vadd.f32 %v10478, %v10581
    %10583 = vmatmul.bf16.gmra.mxu0 %v6893
    %v10584 = vpop.f32.mrf.mxu0
    %v10585 = vadd.f32 %v10481, %v10584
    %v10586 = vpop.f32.mrf.mxu0
    %v10587 = vadd.f32 %v10483, %v10586
    %10588 = vmatmul.bf16.gmra.mxu0 %v6896
    %v10589 = vpop.f32.mrf.mxu0
    %v10590 = vadd.f32 %v10486, %v10589
    %v10591 = vpop.f32.mrf.mxu0
    %v10592 = vadd.f32 %v10488, %v10591
    %10593 = vmatmul.bf16.gmra.mxu0 %v6899
    %v10594 = vpop.f32.mrf.mxu0
    %v10595 = vadd.f32 %v10491, %v10594
    %v10596 = vpop.f32.mrf.mxu0
    %v10597 = vadd.f32 %v10493, %v10596
    %10598 = vmatmul.bf16.gmra.mxu0 %v6902
    %v10599 = vpop.f32.mrf.mxu0
    %v10600 = vadd.f32 %v10496, %v10599
    %v10601 = vpop.f32.mrf.mxu0
    %v10602 = vadd.f32 %v10498, %v10601
    %10603 = vmatmul.bf16.gmra.mxu0 %v6905
    %v10604 = vpop.f32.mrf.mxu0
    %v10605 = vadd.f32 %v10501, %v10604
    %v10606 = vpop.f32.mrf.mxu0
    %v10607 = vadd.f32 %v10503, %v10606
    %10608 = vdwg.mxu0
    %10609 = vmatpush.bf16.msra.mxu0 0
    %10610 = vmatpush.bf16.msra.mxu0 0
    %10611 = vmatpush.bf16.msra.mxu0 0
    %10612 = vmatpush.bf16.msra.mxu0 0
    %10613 = vmatpush.bf16.msra.mxu0 %v6247
    %10614 = vmatpush.bf16.msra.mxu0 %v6246
    %10615 = vmatpush.bf16.msra.mxu0 %v6245
    %10616 = vmatpush.bf16.msra.mxu0 %v6244
    %10617 = vmatmul.bf16.gmra.mxu0 %v6854
    %v10618 = vpop.f32.mrf.mxu0
    %v10619 = vadd.f32 0.0, %v10618
    %v10620 = vpop.f32.mrf.mxu0
    %v10621 = vadd.f32 0.0, %v10620
    %10622 = vmatmul.bf16.gmra.mxu0 %v6857
    %v10623 = vpop.f32.mrf.mxu0
    %v10624 = vadd.f32 0.0, %v10623
    %v10625 = vpop.f32.mrf.mxu0
    %v10626 = vadd.f32 0.0, %v10625
    %10627 = vmatmul.bf16.gmra.mxu0 %v6860
    %v10628 = vpop.f32.mrf.mxu0
    %v10629 = vadd.f32 0.0, %v10628
    %v10630 = vpop.f32.mrf.mxu0
    %v10631 = vadd.f32 0.0, %v10630
    %10632 = vmatmul.bf16.gmra.mxu0 %v6863
    %v10633 = vpop.f32.mrf.mxu0
    %v10634 = vadd.f32 0.0, %v10633
    %v10635 = vpop.f32.mrf.mxu0
    %v10636 = vadd.f32 0.0, %v10635
    %10637 = vmatmul.bf16.gmra.mxu0 %v6866
    %v10638 = vpop.f32.mrf.mxu0
    %v10639 = vadd.f32 0.0, %v10638
    %v10640 = vpop.f32.mrf.mxu0
    %v10641 = vadd.f32 0.0, %v10640
    %10642 = vmatmul.bf16.gmra.mxu0 %v6869
    %v10643 = vpop.f32.mrf.mxu0
    %v10644 = vadd.f32 0.0, %v10643
    %v10645 = vpop.f32.mrf.mxu0
    %v10646 = vadd.f32 0.0, %v10645
    %10647 = vmatmul.bf16.gmra.mxu0 %v6872
    %v10648 = vpop.f32.mrf.mxu0
    %v10649 = vadd.f32 0.0, %v10648
    %v10650 = vpop.f32.mrf.mxu0
    %v10651 = vadd.f32 0.0, %v10650
    %10652 = vmatmul.bf16.gmra.mxu0 %v6875
    %v10653 = vpop.f32.mrf.mxu0
    %v10654 = vadd.f32 0.0, %v10653
    %v10655 = vpop.f32.mrf.mxu0
    %v10656 = vadd.f32 0.0, %v10655
    %10657 = vmatmul.bf16.gmra.mxu0 %v6878
    %v10658 = vpop.f32.mrf.mxu0
    %v10659 = vadd.f32 0.0, %v10658
    %v10660 = vpop.f32.mrf.mxu0
    %v10661 = vadd.f32 0.0, %v10660
    %10662 = vmatmul.bf16.gmra.mxu0 %v6881
    %v10663 = vpop.f32.mrf.mxu0
    %v10664 = vadd.f32 0.0, %v10663
    %v10665 = vpop.f32.mrf.mxu0
    %v10666 = vadd.f32 0.0, %v10665
    %10667 = vmatmul.bf16.gmra.mxu0 %v6884
    %v10668 = vpop.f32.mrf.mxu0
    %v10669 = vadd.f32 0.0, %v10668
    %v10670 = vpop.f32.mrf.mxu0
    %v10671 = vadd.f32 0.0, %v10670
    %10672 = vmatmul.bf16.gmra.mxu0 %v6887
    %v10673 = vpop.f32.mrf.mxu0
    %v10674 = vadd.f32 0.0, %v10673
    %v10675 = vpop.f32.mrf.mxu0
    %v10676 = vadd.f32 0.0, %v10675
    %10677 = vmatmul.bf16.gmra.mxu0 %v6890
    %v10678 = vpop.f32.mrf.mxu0
    %v10679 = vadd.f32 0.0, %v10678
    %v10680 = vpop.f32.mrf.mxu0
    %v10681 = vadd.f32 0.0, %v10680
    %10682 = vmatmul.bf16.gmra.mxu0 %v6893
    %v10683 = vpop.f32.mrf.mxu0
    %v10684 = vadd.f32 0.0, %v10683
    %v10685 = vpop.f32.mrf.mxu0
    %v10686 = vadd.f32 0.0, %v10685
    %10687 = vmatmul.bf16.gmra.mxu0 %v6896
    %v10688 = vpop.f32.mrf.mxu0
    %v10689 = vadd.f32 0.0, %v10688
    %v10690 = vpop.f32.mrf.mxu0
    %v10691 = vadd.f32 0.0, %v10690
    %10692 = vmatmul.bf16.gmra.mxu0 %v6899
    %v10693 = vpop.f32.mrf.mxu0
    %v10694 = vadd.f32 0.0, %v10693
    %v10695 = vpop.f32.mrf.mxu0
    %v10696 = vadd.f32 0.0, %v10695
    %10697 = vmatmul.bf16.gmra.mxu0 %v6902
    %v10698 = vpop.f32.mrf.mxu0
    %v10699 = vadd.f32 0.0, %v10698
    %v10700 = vpop.f32.mrf.mxu0
    %v10701 = vadd.f32 0.0, %v10700
    %10702 = vmatmul.bf16.gmra.mxu0 %v6905
    %v10703 = vpop.f32.mrf.mxu0
    %v10704 = vadd.f32 0.0, %v10703
    %v10705 = vpop.f32.mrf.mxu0
    %v10706 = vadd.f32 0.0, %v10705
    %10707 = vmatmul.bf16.gmra.mxu0 %v8473
    %v10708 = vpop.f32.mrf.mxu0
    %v10709 = vadd.f32 0.0, %v10708
    %v10710 = vpop.f32.mrf.mxu0
    %v10711 = vadd.f32 0.0, %v10710
    %10712 = vdwg.mxu0
    %v10713 = vadd.f32 %v10515, %v10619
    %v10714 = vadd.f32 %v10517, %v10621
    %v10715 = vadd.f32 %v10520, %v10624
    %v10716 = vadd.f32 %v10522, %v10626
    %v10717 = vadd.f32 %v10525, %v10629
    %v10718 = vadd.f32 %v10527, %v10631
    %v10719 = vadd.f32 %v10530, %v10634
    %v10720 = vadd.f32 %v10532, %v10636
    %v10721 = vadd.f32 %v10535, %v10639
    %v10722 = vadd.f32 %v10537, %v10641
    %v10723 = vadd.f32 %v10540, %v10644
    %v10724 = vadd.f32 %v10542, %v10646
    %v10725 = vadd.f32 %v10545, %v10649
    %v10726 = vadd.f32 %v10547, %v10651
    %v10727 = vadd.f32 %v10550, %v10654
    %v10728 = vadd.f32 %v10552, %v10656
    %v10729 = vadd.f32 %v10555, %v10659
    %v10730 = vadd.f32 %v10557, %v10661
    %v10731 = vadd.f32 %v10560, %v10664
    %v10732 = vadd.f32 %v10562, %v10666
    %v10733 = vadd.f32 %v10565, %v10669
    %v10734 = vadd.f32 %v10567, %v10671
    %v10735 = vadd.f32 %v10570, %v10674
    %v10736 = vadd.f32 %v10572, %v10676
    %v10737 = vadd.f32 %v10575, %v10679
    %v10738 = vadd.f32 %v10577, %v10681
    %v10739 = vadd.f32 %v10580, %v10684
    %v10740 = vadd.f32 %v10582, %v10686
    %v10741 = vadd.f32 %v10585, %v10689
    %v10742 = vadd.f32 %v10587, %v10691
    %v10743 = vadd.f32 %v10590, %v10694
    %v10744 = vadd.f32 %v10592, %v10696
    %v10745 = vadd.f32 %v10595, %v10699
    %v10746 = vadd.f32 %v10597, %v10701
    %v10747 = vadd.f32 %v10600, %v10704
    %v10748 = vadd.f32 %v10602, %v10706
    %v10749 = vadd.f32 %v10605, %v10709
    %v10750 = vadd.f32 %v10607, %v10711
    %10751 = vmatpush.bf16.msra.mxu0 0
    %10752 = vmatpush.bf16.msra.mxu0 0
    %10753 = vmatpush.bf16.msra.mxu0 0
    %10754 = vmatpush.bf16.msra.mxu0 0
    %10755 = vmatpush.bf16.msra.mxu0 %v6519
    %10756 = vmatpush.bf16.msra.mxu0 %v6518
    %10757 = vmatpush.bf16.msra.mxu0 %v6517
    %10758 = vmatpush.bf16.msra.mxu0 %v6516
    %10759 = vmatmul.bf16.gmra.mxu0 %v5790
    %v10760 = vpop.f32.mrf.mxu0
    %v10761 = vadd.f32 0.0, %v10760
    %v10762 = vpop.f32.mrf.mxu0
    %v10763 = vadd.f32 0.0, %v10762
    %10764 = vmatmul.bf16.gmra.mxu0 %v5793
    %v10765 = vpop.f32.mrf.mxu0
    %v10766 = vadd.f32 0.0, %v10765
    %v10767 = vpop.f32.mrf.mxu0
    %v10768 = vadd.f32 0.0, %v10767
    %10769 = vmatmul.bf16.gmra.mxu0 %v5796
    %v10770 = vpop.f32.mrf.mxu0
    %v10771 = vadd.f32 0.0, %v10770
    %v10772 = vpop.f32.mrf.mxu0
    %v10773 = vadd.f32 0.0, %v10772
    %10774 = vmatmul.bf16.gmra.mxu0 %v5799
    %v10775 = vpop.f32.mrf.mxu0
    %v10776 = vadd.f32 0.0, %v10775
    %v10777 = vpop.f32.mrf.mxu0
    %v10778 = vadd.f32 0.0, %v10777
    %10779 = vmatmul.bf16.gmra.mxu0 %v5802
    %v10780 = vpop.f32.mrf.mxu0
    %v10781 = vadd.f32 0.0, %v10780
    %v10782 = vpop.f32.mrf.mxu0
    %v10783 = vadd.f32 0.0, %v10782
    %10784 = vmatmul.bf16.gmra.mxu0 %v5805
    %v10785 = vpop.f32.mrf.mxu0
    %v10786 = vadd.f32 0.0, %v10785
    %v10787 = vpop.f32.mrf.mxu0
    %v10788 = vadd.f32 0.0, %v10787
    %10789 = vmatmul.bf16.gmra.mxu0 %v5808
    %v10790 = vpop.f32.mrf.mxu0
    %v10791 = vadd.f32 0.0, %v10790
    %v10792 = vpop.f32.mrf.mxu0
    %v10793 = vadd.f32 0.0, %v10792
    %10794 = vmatmul.bf16.gmra.mxu0 %v5811
    %v10795 = vpop.f32.mrf.mxu0
    %v10796 = vadd.f32 0.0, %v10795
    %v10797 = vpop.f32.mrf.mxu0
    %v10798 = vadd.f32 0.0, %v10797
    %10799 = vmatmul.bf16.gmra.mxu0 %v5814
    %v10800 = vpop.f32.mrf.mxu0
    %v10801 = vadd.f32 0.0, %v10800
    %v10802 = vpop.f32.mrf.mxu0
    %v10803 = vadd.f32 0.0, %v10802
    %10804 = vmatmul.bf16.gmra.mxu0 %v5817
    %v10805 = vpop.f32.mrf.mxu0
    %v10806 = vadd.f32 0.0, %v10805
    %v10807 = vpop.f32.mrf.mxu0
    %v10808 = vadd.f32 0.0, %v10807
    %10809 = vmatmul.bf16.gmra.mxu0 %v5820
    %v10810 = vpop.f32.mrf.mxu0
    %v10811 = vadd.f32 0.0, %v10810
    %v10812 = vpop.f32.mrf.mxu0
    %v10813 = vadd.f32 0.0, %v10812
    %10814 = vmatmul.bf16.gmra.mxu0 %v5823
    %v10815 = vpop.f32.mrf.mxu0
    %v10816 = vadd.f32 0.0, %v10815
    %v10817 = vpop.f32.mrf.mxu0
    %v10818 = vadd.f32 0.0, %v10817
    %10819 = vmatmul.bf16.gmra.mxu0 %v5826
    %v10820 = vpop.f32.mrf.mxu0
    %v10821 = vadd.f32 0.0, %v10820
    %v10822 = vpop.f32.mrf.mxu0
    %v10823 = vadd.f32 0.0, %v10822
    %10824 = vmatmul.bf16.gmra.mxu0 %v5829
    %v10825 = vpop.f32.mrf.mxu0
    %v10826 = vadd.f32 0.0, %v10825
    %v10827 = vpop.f32.mrf.mxu0
    %v10828 = vadd.f32 0.0, %v10827
    %10829 = vmatmul.bf16.gmra.mxu0 %v7495
    %v10830 = vpop.f32.mrf.mxu0
    %v10831 = vadd.f32 0.0, %v10830
    %v10832 = vpop.f32.mrf.mxu0
    %v10833 = vadd.f32 0.0, %v10832
    %10834 = vmatmul.bf16.gmra.mxu0 %v7498
    %v10835 = vpop.f32.mrf.mxu0
    %v10836 = vadd.f32 0.0, %v10835
    %v10837 = vpop.f32.mrf.mxu0
    %v10838 = vadd.f32 0.0, %v10837
    %10839 = vmatmul.bf16.gmra.mxu0 %v7501
    %v10840 = vpop.f32.mrf.mxu0
    %v10841 = vadd.f32 0.0, %v10840
    %v10842 = vpop.f32.mrf.mxu0
    %v10843 = vadd.f32 0.0, %v10842
    %10844 = vmatmul.bf16.gmra.mxu0 %v7504
    %v10845 = vpop.f32.mrf.mxu0
    %v10846 = vadd.f32 0.0, %v10845
    %v10847 = vpop.f32.mrf.mxu0
    %v10848 = vadd.f32 0.0, %v10847
    %10849 = vmatmul.bf16.gmra.mxu0 %v7507
    %v10850 = vpop.f32.mrf.mxu0
    %v10851 = vadd.f32 0.0, %v10850
    %v10852 = vpop.f32.mrf.mxu0
    %v10853 = vadd.f32 0.0, %v10852
    %10854 = vdwg.mxu0
    %v10855 = vadd.f32 %v10713, %v10761
    %v10856 = vadd.f32 %v10714, %v10763
    %v10857 = vadd.f32 %v10715, %v10766
    %v10858 = vadd.f32 %v10716, %v10768
    %v10859 = vadd.f32 %v10717, %v10771
    %v10860 = vadd.f32 %v10718, %v10773
    %v10861 = vadd.f32 %v10719, %v10776
    %v10862 = vadd.f32 %v10720, %v10778
    %v10863 = vadd.f32 %v10721, %v10781
    %v10864 = vadd.f32 %v10722, %v10783
    %v10865 = vadd.f32 %v10723, %v10786
    %v10866 = vadd.f32 %v10724, %v10788
    %v10867 = vadd.f32 %v10725, %v10791
    %v10868 = vadd.f32 %v10726, %v10793
    %v10869 = vadd.f32 %v10727, %v10796
    %v10870 = vadd.f32 %v10728, %v10798
    %v10871 = vadd.f32 %v10729, %v10801
    %v10872 = vadd.f32 %v10730, %v10803
    %v10873 = vadd.f32 %v10731, %v10806
    %v10874 = vadd.f32 %v10732, %v10808
    %v10875 = vadd.f32 %v10733, %v10811
    %v10876 = vadd.f32 %v10734, %v10813
    %v10877 = vadd.f32 %v10735, %v10816
    %v10878 = vadd.f32 %v10736, %v10818
    %v10879 = vadd.f32 %v10737, %v10821
    %v10880 = vadd.f32 %v10738, %v10823
    %v10881 = vadd.f32 %v10739, %v10826
    %v10882 = vadd.f32 %v10740, %v10828
    %v10883 = vadd.f32 %v10741, %v10831
    %v10884 = vadd.f32 %v10742, %v10833
    %v10885 = vadd.f32 %v10743, %v10836
    %v10886 = vadd.f32 %v10744, %v10838
    %v10887 = vadd.f32 %v10745, %v10841
    %v10888 = vadd.f32 %v10746, %v10843
    %v10889 = vadd.f32 %v10747, %v10846
    %v10890 = vadd.f32 %v10748, %v10848
    %v10891 = vadd.f32 %v10749, %v10851
    %v10892 = vadd.f32 %v10750, %v10853
    %10893 = vmatpush.bf16.msra.mxu0 0
    %10894 = vmatpush.bf16.msra.mxu0 0
    %10895 = vmatpush.bf16.msra.mxu0 0
    %10896 = vmatpush.bf16.msra.mxu0 0
    %10897 = vmatpush.bf16.msra.mxu0 %v6845
    %10898 = vmatpush.bf16.msra.mxu0 %v6844
    %10899 = vmatpush.bf16.msra.mxu0 %v6843
    %10900 = vmatpush.bf16.msra.mxu0 %v6842
    %10901 = vmatmul.bf16.gmra.mxu0 %v6073
    %v10902 = vpop.f32.mrf.mxu0
    %v10903 = vadd.f32 0.0, %v10902
    %v10904 = vpop.f32.mrf.mxu0
    %v10905 = vadd.f32 0.0, %v10904
    %10906 = vmatmul.bf16.gmra.mxu0 %v6076
    %v10907 = vpop.f32.mrf.mxu0
    %v10908 = vadd.f32 0.0, %v10907
    %v10909 = vpop.f32.mrf.mxu0
    %v10910 = vadd.f32 0.0, %v10909
    %10911 = vmatmul.bf16.gmra.mxu0 %v6079
    %v10912 = vpop.f32.mrf.mxu0
    %v10913 = vadd.f32 0.0, %v10912
    %v10914 = vpop.f32.mrf.mxu0
    %v10915 = vadd.f32 0.0, %v10914
    %10916 = vmatmul.bf16.gmra.mxu0 %v6082
    %v10917 = vpop.f32.mrf.mxu0
    %v10918 = vadd.f32 0.0, %v10917
    %v10919 = vpop.f32.mrf.mxu0
    %v10920 = vadd.f32 0.0, %v10919
    %10921 = vmatmul.bf16.gmra.mxu0 %v6085
    %v10922 = vpop.f32.mrf.mxu0
    %v10923 = vadd.f32 0.0, %v10922
    %v10924 = vpop.f32.mrf.mxu0
    %v10925 = vadd.f32 0.0, %v10924
    %10926 = vmatmul.bf16.gmra.mxu0 %v6088
    %v10927 = vpop.f32.mrf.mxu0
    %v10928 = vadd.f32 0.0, %v10927
    %v10929 = vpop.f32.mrf.mxu0
    %v10930 = vadd.f32 0.0, %v10929
    %10931 = vmatmul.bf16.gmra.mxu0 %v6091
    %v10932 = vpop.f32.mrf.mxu0
    %v10933 = vadd.f32 0.0, %v10932
    %v10934 = vpop.f32.mrf.mxu0
    %v10935 = vadd.f32 0.0, %v10934
    %10936 = vmatmul.bf16.gmra.mxu0 %v6094
    %v10937 = vpop.f32.mrf.mxu0
    %v10938 = vadd.f32 0.0, %v10937
    %v10939 = vpop.f32.mrf.mxu0
    %v10940 = vadd.f32 0.0, %v10939
    %10941 = vmatmul.bf16.gmra.mxu0 %v6097
    %v10942 = vpop.f32.mrf.mxu0
    %v10943 = vadd.f32 0.0, %v10942
    %v10944 = vpop.f32.mrf.mxu0
    %v10945 = vadd.f32 0.0, %v10944
    %10946 = vmatmul.bf16.gmra.mxu0 %v6100
    %v10947 = vpop.f32.mrf.mxu0
    %v10948 = vadd.f32 0.0, %v10947
    %v10949 = vpop.f32.mrf.mxu0
    %v10950 = vadd.f32 0.0, %v10949
    %10951 = vmatmul.bf16.gmra.mxu0 %v6103
    %v10952 = vpop.f32.mrf.mxu0
    %v10953 = vadd.f32 0.0, %v10952
    %v10954 = vpop.f32.mrf.mxu0
    %v10955 = vadd.f32 0.0, %v10954
    %10956 = vmatmul.bf16.gmra.mxu0 %v6106
    %v10957 = vpop.f32.mrf.mxu0
    %v10958 = vadd.f32 0.0, %v10957
    %v10959 = vpop.f32.mrf.mxu0
    %v10960 = vadd.f32 0.0, %v10959
    %10961 = vmatmul.bf16.gmra.mxu0 %v6109
    %v10962 = vpop.f32.mrf.mxu0
    %v10963 = vadd.f32 0.0, %v10962
    %v10964 = vpop.f32.mrf.mxu0
    %v10965 = vadd.f32 0.0, %v10964
    %10966 = vmatmul.bf16.gmra.mxu0 %v6253
    %v10967 = vpop.f32.mrf.mxu0
    %v10968 = vadd.f32 0.0, %v10967
    %v10969 = vpop.f32.mrf.mxu0
    %v10970 = vadd.f32 0.0, %v10969
    %10971 = vmatmul.bf16.gmra.mxu0 %v7284
    %v10972 = vpop.f32.mrf.mxu0
    %v10973 = vadd.f32 0.0, %v10972
    %v10974 = vpop.f32.mrf.mxu0
    %v10975 = vadd.f32 0.0, %v10974
    %10976 = vmatmul.bf16.gmra.mxu0 %v7287
    %v10977 = vpop.f32.mrf.mxu0
    %v10978 = vadd.f32 0.0, %v10977
    %v10979 = vpop.f32.mrf.mxu0
    %v10980 = vadd.f32 0.0, %v10979
    %10981 = vmatmul.bf16.gmra.mxu0 %v7290
    %v10982 = vpop.f32.mrf.mxu0
    %v10983 = vadd.f32 0.0, %v10982
    %v10984 = vpop.f32.mrf.mxu0
    %v10985 = vadd.f32 0.0, %v10984
    %10986 = vmatmul.bf16.gmra.mxu0 %v7293
    %v10987 = vpop.f32.mrf.mxu0
    %v10988 = vadd.f32 0.0, %v10987
    %v10989 = vpop.f32.mrf.mxu0
    %v10990 = vadd.f32 0.0, %v10989
    %10991 = vmatmul.bf16.gmra.mxu0 %v7689
    %v10992 = vpop.f32.mrf.mxu0
    %v10993 = vadd.f32 0.0, %v10992
    %v10994 = vpop.f32.mrf.mxu0
    %v10995 = vadd.f32 0.0, %v10994
    %10996 = vdwg.mxu0
    %v10997 = vadd.f32 %v10855, %v10903
    %v10998 = vadd.f32 %v10856, %v10905
    %v10999 = vadd.f32 %v10857, %v10908
    %v11000 = vadd.f32 %v10858, %v10910
    %v11001 = vadd.f32 %v10859, %v10913
    %v11002 = vadd.f32 %v10860, %v10915
    %v11003 = vadd.f32 %v10861, %v10918
    %v11004 = vadd.f32 %v10862, %v10920
    %v11005 = vadd.f32 %v10863, %v10923
    %v11006 = vadd.f32 %v10864, %v10925
    %v11007 = vadd.f32 %v10865, %v10928
    %v11008 = vadd.f32 %v10866, %v10930
    %v11009 = vadd.f32 %v10867, %v10933
    %v11010 = vadd.f32 %v10868, %v10935
    %v11011 = vadd.f32 %v10869, %v10938
    %v11012 = vadd.f32 %v10870, %v10940
    %v11013 = vadd.f32 %v10871, %v10943
    %v11014 = vadd.f32 %v10872, %v10945
    %v11015 = vadd.f32 %v10873, %v10948
    %v11016 = vadd.f32 %v10874, %v10950
    %v11017 = vadd.f32 %v10875, %v10953
    %v11018 = vadd.f32 %v10876, %v10955
    %v11019 = vadd.f32 %v10877, %v10958
    %v11020 = vadd.f32 %v10878, %v10960
    %v11021 = vadd.f32 %v10879, %v10963
    %v11022 = vadd.f32 %v10880, %v10965
    %v11023 = vadd.f32 %v10881, %v10968
    %v11024 = vadd.f32 %v10882, %v10970
    %v11025 = vadd.f32 %v10883, %v10973
    %v11026 = vadd.f32 %v10884, %v10975
    %v11027 = vadd.f32 %v10885, %v10978
    %v11028 = vadd.f32 %v10886, %v10980
    %v11029 = vadd.f32 %v10887, %v10983
    %v11030 = vadd.f32 %v10888, %v10985
    %v11031 = vadd.f32 %v10889, %v10988
    %v11032 = vadd.f32 %v10890, %v10990
    %v11033 = vadd.f32 %v10891, %v10993
    %v11034 = vadd.f32 %v10892, %v10995
    %11035 = vmatpush.bf16.msra.mxu0 0
    %11036 = vmatpush.bf16.msra.mxu0 0
    %11037 = vmatpush.bf16.msra.mxu0 0
    %11038 = vmatpush.bf16.msra.mxu0 0
    %11039 = vmatpush.bf16.msra.mxu0 %v7081
    %11040 = vmatpush.bf16.msra.mxu0 %v7080
    %11041 = vmatpush.bf16.msra.mxu0 %v7079
    %11042 = vmatpush.bf16.msra.mxu0 %v7078
    %11043 = vmatmul.bf16.gmra.mxu0 %v5793
    %v11044 = vpop.f32.mrf.mxu0
    %v11045 = vadd.f32 0.0, %v11044
    %v11046 = vpop.f32.mrf.mxu0
    %v11047 = vadd.f32 0.0, %v11046
    %11048 = vmatmul.bf16.gmra.mxu0 %v5796
    %v11049 = vpop.f32.mrf.mxu0
    %v11050 = vadd.f32 0.0, %v11049
    %v11051 = vpop.f32.mrf.mxu0
    %v11052 = vadd.f32 0.0, %v11051
    %11053 = vmatmul.bf16.gmra.mxu0 %v5799
    %v11054 = vpop.f32.mrf.mxu0
    %v11055 = vadd.f32 0.0, %v11054
    %v11056 = vpop.f32.mrf.mxu0
    %v11057 = vadd.f32 0.0, %v11056
    %11058 = vmatmul.bf16.gmra.mxu0 %v5802
    %v11059 = vpop.f32.mrf.mxu0
    %v11060 = vadd.f32 0.0, %v11059
    %v11061 = vpop.f32.mrf.mxu0
    %v11062 = vadd.f32 0.0, %v11061
    %11063 = vmatmul.bf16.gmra.mxu0 %v5805
    %v11064 = vpop.f32.mrf.mxu0
    %v11065 = vadd.f32 0.0, %v11064
    %v11066 = vpop.f32.mrf.mxu0
    %v11067 = vadd.f32 0.0, %v11066
    %11068 = vmatmul.bf16.gmra.mxu0 %v5808
    %v11069 = vpop.f32.mrf.mxu0
    %v11070 = vadd.f32 0.0, %v11069
    %v11071 = vpop.f32.mrf.mxu0
    %v11072 = vadd.f32 0.0, %v11071
    %11073 = vmatmul.bf16.gmra.mxu0 %v5811
    %v11074 = vpop.f32.mrf.mxu0
    %v11075 = vadd.f32 0.0, %v11074
    %v11076 = vpop.f32.mrf.mxu0
    %v11077 = vadd.f32 0.0, %v11076
    %11078 = vmatmul.bf16.gmra.mxu0 %v5814
    %v11079 = vpop.f32.mrf.mxu0
    %v11080 = vadd.f32 0.0, %v11079
    %v11081 = vpop.f32.mrf.mxu0
    %v11082 = vadd.f32 0.0, %v11081
    %11083 = vmatmul.bf16.gmra.mxu0 %v5817
    %v11084 = vpop.f32.mrf.mxu0
    %v11085 = vadd.f32 0.0, %v11084
    %v11086 = vpop.f32.mrf.mxu0
    %v11087 = vadd.f32 0.0, %v11086
    %11088 = vmatmul.bf16.gmra.mxu0 %v5820
    %v11089 = vpop.f32.mrf.mxu0
    %v11090 = vadd.f32 0.0, %v11089
    %v11091 = vpop.f32.mrf.mxu0
    %v11092 = vadd.f32 0.0, %v11091
    %11093 = vmatmul.bf16.gmra.mxu0 %v5823
    %v11094 = vpop.f32.mrf.mxu0
    %v11095 = vadd.f32 0.0, %v11094
    %v11096 = vpop.f32.mrf.mxu0
    %v11097 = vadd.f32 0.0, %v11096
    %11098 = vmatmul.bf16.gmra.mxu0 %v5826
    %v11099 = vpop.f32.mrf.mxu0
    %v11100 = vadd.f32 0.0, %v11099
    %v11101 = vpop.f32.mrf.mxu0
    %v11102 = vadd.f32 0.0, %v11101
    %11103 = vmatmul.bf16.gmra.mxu0 %v5829
    %v11104 = vpop.f32.mrf.mxu0
    %v11105 = vadd.f32 0.0, %v11104
    %v11106 = vpop.f32.mrf.mxu0
    %v11107 = vadd.f32 0.0, %v11106
    %11108 = vmatmul.bf16.gmra.mxu0 %v7495
    %v11109 = vpop.f32.mrf.mxu0
    %v11110 = vadd.f32 0.0, %v11109
    %v11111 = vpop.f32.mrf.mxu0
    %v11112 = vadd.f32 0.0, %v11111
    %11113 = vmatmul.bf16.gmra.mxu0 %v7498
    %v11114 = vpop.f32.mrf.mxu0
    %v11115 = vadd.f32 0.0, %v11114
    %v11116 = vpop.f32.mrf.mxu0
    %v11117 = vadd.f32 0.0, %v11116
    %11118 = vmatmul.bf16.gmra.mxu0 %v7501
    %v11119 = vpop.f32.mrf.mxu0
    %v11120 = vadd.f32 0.0, %v11119
    %v11121 = vpop.f32.mrf.mxu0
    %v11122 = vadd.f32 0.0, %v11121
    %11123 = vmatmul.bf16.gmra.mxu0 %v7504
    %v11124 = vpop.f32.mrf.mxu0
    %v11125 = vadd.f32 0.0, %v11124
    %v11126 = vpop.f32.mrf.mxu0
    %v11127 = vadd.f32 0.0, %v11126
    %11128 = vmatmul.bf16.gmra.mxu0 %v7507
    %v11129 = vpop.f32.mrf.mxu0
    %v11130 = vadd.f32 0.0, %v11129
    %v11131 = vpop.f32.mrf.mxu0
    %v11132 = vadd.f32 0.0, %v11131
    %11133 = vmatmul.bf16.gmra.mxu0 %v8907
    %v11134 = vpop.f32.mrf.mxu0
    %v11135 = vadd.f32 0.0, %v11134
    %v11136 = vpop.f32.mrf.mxu0
    %v11137 = vadd.f32 0.0, %v11136
    %11138 = vdwg.mxu0
    %v11139 = vadd.f32 %v10997, %v11045
    %v11140 = vadd.f32 %v10998, %v11047
    %v11141 = vadd.f32 %v10999, %v11050
    %v11142 = vadd.f32 %v11000, %v11052
    %v11143 = vadd.f32 %v11001, %v11055
    %v11144 = vadd.f32 %v11002, %v11057
    %v11145 = vadd.f32 %v11003, %v11060
    %v11146 = vadd.f32 %v11004, %v11062
    %v11147 = vadd.f32 %v11005, %v11065
    %v11148 = vadd.f32 %v11006, %v11067
    %v11149 = vadd.f32 %v11007, %v11070
    %v11150 = vadd.f32 %v11008, %v11072
    %v11151 = vadd.f32 %v11009, %v11075
    %v11152 = vadd.f32 %v11010, %v11077
    %v11153 = vadd.f32 %v11011, %v11080
    %v11154 = vadd.f32 %v11012, %v11082
    %v11155 = vadd.f32 %v11013, %v11085
    %v11156 = vadd.f32 %v11014, %v11087
    %v11157 = vadd.f32 %v11015, %v11090
    %v11158 = vadd.f32 %v11016, %v11092
    %v11159 = vadd.f32 %v11017, %v11095
    %v11160 = vadd.f32 %v11018, %v11097
    %v11161 = vadd.f32 %v11019, %v11100
    %v11162 = vadd.f32 %v11020, %v11102
    %v11163 = vadd.f32 %v11021, %v11105
    %v11164 = vadd.f32 %v11022, %v11107
    %v11165 = vadd.f32 %v11023, %v11110
    %v11166 = vadd.f32 %v11024, %v11112
    %v11167 = vadd.f32 %v11025, %v11115
    %v11168 = vadd.f32 %v11026, %v11117
    %v11169 = vadd.f32 %v11027, %v11120
    %v11170 = vadd.f32 %v11028, %v11122
    %v11171 = vadd.f32 %v11029, %v11125
    %v11172 = vadd.f32 %v11030, %v11127
    %v11173 = vadd.f32 %v11031, %v11130
    %v11174 = vadd.f32 %v11032, %v11132
    %v11175 = vadd.f32 %v11033, %v11135
    %v11176 = vadd.f32 %v11034, %v11137
    %11177 = vmatpush.bf16.msra.mxu0 0
    %11178 = vmatpush.bf16.msra.mxu0 0
    %11179 = vmatpush.bf16.msra.mxu0 0
    %11180 = vmatpush.bf16.msra.mxu0 0
    %11181 = vmatpush.bf16.msra.mxu0 %v7278
    %11182 = vmatpush.bf16.msra.mxu0 %v7277
    %11183 = vmatpush.bf16.msra.mxu0 %v7276
    %11184 = vmatpush.bf16.msra.mxu0 %v7275
    %11185 = vmatmul.bf16.gmra.mxu0 %v6866
    %v11186 = vpop.f32.mrf.mxu0
    %v11187 = vadd.f32 0.0, %v11186
    %v11188 = vpop.f32.mrf.mxu0
    %v11189 = vadd.f32 0.0, %v11188
    %11190 = vmatmul.bf16.gmra.mxu0 %v6869
    %v11191 = vpop.f32.mrf.mxu0
    %v11192 = vadd.f32 0.0, %v11191
    %v11193 = vpop.f32.mrf.mxu0
    %v11194 = vadd.f32 0.0, %v11193
    %11195 = vmatmul.bf16.gmra.mxu0 %v6872
    %v11196 = vpop.f32.mrf.mxu0
    %v11197 = vadd.f32 0.0, %v11196
    %v11198 = vpop.f32.mrf.mxu0
    %v11199 = vadd.f32 0.0, %v11198
    %11200 = vmatmul.bf16.gmra.mxu0 %v6875
    %v11201 = vpop.f32.mrf.mxu0
    %v11202 = vadd.f32 0.0, %v11201
    %v11203 = vpop.f32.mrf.mxu0
    %v11204 = vadd.f32 0.0, %v11203
    %11205 = vmatmul.bf16.gmra.mxu0 %v6878
    %v11206 = vpop.f32.mrf.mxu0
    %v11207 = vadd.f32 0.0, %v11206
    %v11208 = vpop.f32.mrf.mxu0
    %v11209 = vadd.f32 0.0, %v11208
    %11210 = vmatmul.bf16.gmra.mxu0 %v6881
    %v11211 = vpop.f32.mrf.mxu0
    %v11212 = vadd.f32 0.0, %v11211
    %v11213 = vpop.f32.mrf.mxu0
    %v11214 = vadd.f32 0.0, %v11213
    %11215 = vmatmul.bf16.gmra.mxu0 %v6884
    %v11216 = vpop.f32.mrf.mxu0
    %v11217 = vadd.f32 0.0, %v11216
    %v11218 = vpop.f32.mrf.mxu0
    %v11219 = vadd.f32 0.0, %v11218
    %11220 = vmatmul.bf16.gmra.mxu0 %v6887
    %v11221 = vpop.f32.mrf.mxu0
    %v11222 = vadd.f32 0.0, %v11221
    %v11223 = vpop.f32.mrf.mxu0
    %v11224 = vadd.f32 0.0, %v11223
    %11225 = vmatmul.bf16.gmra.mxu0 %v6890
    %v11226 = vpop.f32.mrf.mxu0
    %v11227 = vadd.f32 0.0, %v11226
    %v11228 = vpop.f32.mrf.mxu0
    %v11229 = vadd.f32 0.0, %v11228
    %11230 = vmatmul.bf16.gmra.mxu0 %v6893
    %v11231 = vpop.f32.mrf.mxu0
    %v11232 = vadd.f32 0.0, %v11231
    %v11233 = vpop.f32.mrf.mxu0
    %v11234 = vadd.f32 0.0, %v11233
    %11235 = vmatmul.bf16.gmra.mxu0 %v6896
    %v11236 = vpop.f32.mrf.mxu0
    %v11237 = vadd.f32 0.0, %v11236
    %v11238 = vpop.f32.mrf.mxu0
    %v11239 = vadd.f32 0.0, %v11238
    %11240 = vmatmul.bf16.gmra.mxu0 %v6899
    %v11241 = vpop.f32.mrf.mxu0
    %v11242 = vadd.f32 0.0, %v11241
    %v11243 = vpop.f32.mrf.mxu0
    %v11244 = vadd.f32 0.0, %v11243
    %11245 = vmatmul.bf16.gmra.mxu0 %v6902
    %v11246 = vpop.f32.mrf.mxu0
    %v11247 = vadd.f32 0.0, %v11246
    %v11248 = vpop.f32.mrf.mxu0
    %v11249 = vadd.f32 0.0, %v11248
    %11250 = vmatmul.bf16.gmra.mxu0 %v6905
    %v11251 = vpop.f32.mrf.mxu0
    %v11252 = vadd.f32 0.0, %v11251
    %v11253 = vpop.f32.mrf.mxu0
    %v11254 = vadd.f32 0.0, %v11253
    %11255 = vmatmul.bf16.gmra.mxu0 %v8473
    %v11256 = vpop.f32.mrf.mxu0
    %v11257 = vadd.f32 0.0, %v11256
    %v11258 = vpop.f32.mrf.mxu0
    %v11259 = vadd.f32 0.0, %v11258
    %11260 = vmatmul.bf16.gmra.mxu0 %v10060
    %v11261 = vpop.f32.mrf.mxu0
    %v11262 = vadd.f32 0.0, %v11261
    %v11263 = vpop.f32.mrf.mxu0
    %v11264 = vadd.f32 0.0, %v11263
    %11265 = vmatmul.bf16.gmra.mxu0 %v10063
    %v11266 = vpop.f32.mrf.mxu0
    %v11267 = vadd.f32 0.0, %v11266
    %v11268 = vpop.f32.mrf.mxu0
    %v11269 = vadd.f32 0.0, %v11268
    %11270 = vmatmul.bf16.gmra.mxu0 %v10066
    %v11271 = vpop.f32.mrf.mxu0
    %v11272 = vadd.f32 0.0, %v11271
    %v11273 = vpop.f32.mrf.mxu0
    %v11274 = vadd.f32 0.0, %v11273
    %11275 = vmatmul.bf16.gmra.mxu0 %v10069
    %v11276 = vpop.f32.mrf.mxu0
    %v11277 = vadd.f32 0.0, %v11276
    %v11278 = vpop.f32.mrf.mxu0
    %v11279 = vadd.f32 0.0, %v11278
    %11280 = vdwg.mxu0
    %v11281 = vadd.f32 %v11139, %v11187
    %v11282 = vadd.f32 %v11140, %v11189
    %v11283 = vadd.f32 %v11141, %v11192
    %v11284 = vadd.f32 %v11142, %v11194
    %v11285 = vadd.f32 %v11143, %v11197
    %v11286 = vadd.f32 %v11144, %v11199
    %v11287 = vadd.f32 %v11145, %v11202
    %v11288 = vadd.f32 %v11146, %v11204
    %v11289 = vadd.f32 %v11147, %v11207
    %v11290 = vadd.f32 %v11148, %v11209
    %v11291 = vadd.f32 %v11149, %v11212
    %v11292 = vadd.f32 %v11150, %v11214
    %v11293 = vadd.f32 %v11151, %v11217
    %v11294 = vadd.f32 %v11152, %v11219
    %v11295 = vadd.f32 %v11153, %v11222
    %v11296 = vadd.f32 %v11154, %v11224
    %v11297 = vadd.f32 %v11155, %v11227
    %v11298 = vadd.f32 %v11156, %v11229
    %v11299 = vadd.f32 %v11157, %v11232
    %v11300 = vadd.f32 %v11158, %v11234
    %v11301 = vadd.f32 %v11159, %v11237
    %v11302 = vadd.f32 %v11160, %v11239
    %v11303 = vadd.f32 %v11161, %v11242
    %v11304 = vadd.f32 %v11162, %v11244
    %v11305 = vadd.f32 %v11163, %v11247
    %v11306 = vadd.f32 %v11164, %v11249
    %v11307 = vadd.f32 %v11165, %v11252
    %v11308 = vadd.f32 %v11166, %v11254
    %v11309 = vadd.f32 %v11167, %v11257
    %v11310 = vadd.f32 %v11168, %v11259
    %v11311 = vadd.f32 %v11169, %v11262
    %v11312 = vadd.f32 %v11170, %v11264
    %v11313 = vadd.f32 %v11171, %v11267
    %v11314 = vadd.f32 %v11172, %v11269
    %v11315 = vadd.f32 %v11173, %v11272
    %v11316 = vadd.f32 %v11174, %v11274
    %v11317 = vadd.f32 %v11175, %v11277
    %v11318 = vadd.f32 %v11176, %v11279
    %11319 = vmatpush.bf16.msra.mxu0 0
    %11320 = vmatpush.bf16.msra.mxu0 0
    %11321 = vmatpush.bf16.msra.mxu0 0
    %11322 = vmatpush.bf16.msra.mxu0 0
    %11323 = vmatpush.bf16.msra.mxu0 %v7489
    %11324 = vmatpush.bf16.msra.mxu0 %v7488
    %11325 = vmatpush.bf16.msra.mxu0 %v7487
    %11326 = vmatpush.bf16.msra.mxu0 %v7486
    %11327 = vmatmul.bf16.gmra.mxu0 %v6543
    %v11328 = vpop.f32.mrf.mxu0
    %v11329 = vadd.f32 0.0, %v11328
    %v11330 = vpop.f32.mrf.mxu0
    %v11331 = vadd.f32 0.0, %v11330
    %11332 = vmatmul.bf16.gmra.mxu0 %v6546
    %v11333 = vpop.f32.mrf.mxu0
    %v11334 = vadd.f32 0.0, %v11333
    %v11335 = vpop.f32.mrf.mxu0
    %v11336 = vadd.f32 0.0, %v11335
    %11337 = vmatmul.bf16.gmra.mxu0 %v6549
    %v11338 = vpop.f32.mrf.mxu0
    %v11339 = vadd.f32 0.0, %v11338
    %v11340 = vpop.f32.mrf.mxu0
    %v11341 = vadd.f32 0.0, %v11340
    %11342 = vmatmul.bf16.gmra.mxu0 %v6552
    %v11343 = vpop.f32.mrf.mxu0
    %v11344 = vadd.f32 0.0, %v11343
    %v11345 = vpop.f32.mrf.mxu0
    %v11346 = vadd.f32 0.0, %v11345
    %11347 = vmatmul.bf16.gmra.mxu0 %v6555
    %v11348 = vpop.f32.mrf.mxu0
    %v11349 = vadd.f32 0.0, %v11348
    %v11350 = vpop.f32.mrf.mxu0
    %v11351 = vadd.f32 0.0, %v11350
    %11352 = vmatmul.bf16.gmra.mxu0 %v6558
    %v11353 = vpop.f32.mrf.mxu0
    %v11354 = vadd.f32 0.0, %v11353
    %v11355 = vpop.f32.mrf.mxu0
    %v11356 = vadd.f32 0.0, %v11355
    %11357 = vmatmul.bf16.gmra.mxu0 %v6561
    %v11358 = vpop.f32.mrf.mxu0
    %v11359 = vadd.f32 0.0, %v11358
    %v11360 = vpop.f32.mrf.mxu0
    %v11361 = vadd.f32 0.0, %v11360
    %11362 = vmatmul.bf16.gmra.mxu0 %v6564
    %v11363 = vpop.f32.mrf.mxu0
    %v11364 = vadd.f32 0.0, %v11363
    %v11365 = vpop.f32.mrf.mxu0
    %v11366 = vadd.f32 0.0, %v11365
    %11367 = vmatmul.bf16.gmra.mxu0 %v6567
    %v11368 = vpop.f32.mrf.mxu0
    %v11369 = vadd.f32 0.0, %v11368
    %v11370 = vpop.f32.mrf.mxu0
    %v11371 = vadd.f32 0.0, %v11370
    %11372 = vmatmul.bf16.gmra.mxu0 %v6570
    %v11373 = vpop.f32.mrf.mxu0
    %v11374 = vadd.f32 0.0, %v11373
    %v11375 = vpop.f32.mrf.mxu0
    %v11376 = vadd.f32 0.0, %v11375
    %11377 = vmatmul.bf16.gmra.mxu0 %v6573
    %v11378 = vpop.f32.mrf.mxu0
    %v11379 = vadd.f32 0.0, %v11378
    %v11380 = vpop.f32.mrf.mxu0
    %v11381 = vadd.f32 0.0, %v11380
    %11382 = vmatmul.bf16.gmra.mxu0 %v6576
    %v11383 = vpop.f32.mrf.mxu0
    %v11384 = vadd.f32 0.0, %v11383
    %v11385 = vpop.f32.mrf.mxu0
    %v11386 = vadd.f32 0.0, %v11385
    %11387 = vmatmul.bf16.gmra.mxu0 %v6579
    %v11388 = vpop.f32.mrf.mxu0
    %v11389 = vadd.f32 0.0, %v11388
    %v11390 = vpop.f32.mrf.mxu0
    %v11391 = vadd.f32 0.0, %v11390
    %11392 = vmatmul.bf16.gmra.mxu0 %v7087
    %v11393 = vpop.f32.mrf.mxu0
    %v11394 = vadd.f32 0.0, %v11393
    %v11395 = vpop.f32.mrf.mxu0
    %v11396 = vadd.f32 0.0, %v11395
    %11397 = vmatmul.bf16.gmra.mxu0 %v9886
    %v11398 = vpop.f32.mrf.mxu0
    %v11399 = vadd.f32 0.0, %v11398
    %v11400 = vpop.f32.mrf.mxu0
    %v11401 = vadd.f32 0.0, %v11400
    %11402 = vmatmul.bf16.gmra.mxu0 %v9889
    %v11403 = vpop.f32.mrf.mxu0
    %v11404 = vadd.f32 0.0, %v11403
    %v11405 = vpop.f32.mrf.mxu0
    %v11406 = vadd.f32 0.0, %v11405
    %11407 = vmatmul.bf16.gmra.mxu0 %v9892
    %v11408 = vpop.f32.mrf.mxu0
    %v11409 = vadd.f32 0.0, %v11408
    %v11410 = vpop.f32.mrf.mxu0
    %v11411 = vadd.f32 0.0, %v11410
    %11412 = vmatmul.bf16.gmra.mxu0 %v9895
    %v11413 = vpop.f32.mrf.mxu0
    %v11414 = vadd.f32 0.0, %v11413
    %v11415 = vpop.f32.mrf.mxu0
    %v11416 = vadd.f32 0.0, %v11415
    %11417 = vmatmul.bf16.gmra.mxu0 %v10219
    %v11418 = vpop.f32.mrf.mxu0
    %v11419 = vadd.f32 0.0, %v11418
    %v11420 = vpop.f32.mrf.mxu0
    %v11421 = vadd.f32 0.0, %v11420
    %11422 = vdwg.mxu0
    %v11423 = vadd.f32 %v11281, %v11329
    %v11424 = vadd.f32 %v11282, %v11331
    %v11425 = vadd.f32 %v11283, %v11334
    %v11426 = vadd.f32 %v11284, %v11336
    %v11427 = vadd.f32 %v11285, %v11339
    %v11428 = vadd.f32 %v11286, %v11341
    %v11429 = vadd.f32 %v11287, %v11344
    %v11430 = vadd.f32 %v11288, %v11346
    %v11431 = vadd.f32 %v11289, %v11349
    %v11432 = vadd.f32 %v11290, %v11351
    %v11433 = vadd.f32 %v11291, %v11354
    %v11434 = vadd.f32 %v11292, %v11356
    %v11435 = vadd.f32 %v11293, %v11359
    %v11436 = vadd.f32 %v11294, %v11361
    %v11437 = vadd.f32 %v11295, %v11364
    %v11438 = vadd.f32 %v11296, %v11366
    %v11439 = vadd.f32 %v11297, %v11369
    %v11440 = vadd.f32 %v11298, %v11371
    %v11441 = vadd.f32 %v11299, %v11374
    %v11442 = vadd.f32 %v11300, %v11376
    %v11443 = vadd.f32 %v11301, %v11379
    %v11444 = vadd.f32 %v11302, %v11381
    %v11445 = vadd.f32 %v11303, %v11384
    %v11446 = vadd.f32 %v11304, %v11386
    %v11447 = vadd.f32 %v11305, %v11389
    %v11448 = vadd.f32 %v11306, %v11391
    %v11449 = vadd.f32 %v11307, %v11394
    %v11450 = vadd.f32 %v11308, %v11396
    %v11451 = vadd.f32 %v11309, %v11399
    %v11452 = vadd.f32 %v11310, %v11401
    %v11453 = vadd.f32 %v11311, %v11404
    %v11454 = vadd.f32 %v11312, %v11406
    %v11455 = vadd.f32 %v11313, %v11409
    %v11456 = vadd.f32 %v11314, %v11411
    %v11457 = vadd.f32 %v11315, %v11414
    %v11458 = vadd.f32 %v11316, %v11416
    %v11459 = vadd.f32 %v11317, %v11419
    %v11460 = vadd.f32 %v11318, %v11421
    %v11463 = vunpack.c.l.b16 %v5636
    %v11464 = vunpack.c.l.b16 %v5637
    %v11465 = vpack.c.b16 %v11464, %v11463
    %v11467 = vsel %vm5773, %v11465, 0
    %11469 = vmatpush.bf16.msra.mxu0 0
    %11470 = vmatpush.bf16.msra.mxu0 0
    %11471 = vmatpush.bf16.msra.mxu0 0
    %11472 = vmatpush.bf16.msra.mxu0 0
    %11473 = vmatpush.bf16.msra.mxu0 %v7683
    %11474 = vmatpush.bf16.msra.mxu0 %v7682
    %11475 = vmatpush.bf16.msra.mxu0 %v7681
    %11476 = vmatpush.bf16.msra.mxu0 %v7680
    %11477 = vmatmul.bf16.gmra.mxu0 %v6869
    %v11478 = vpop.f32.mrf.mxu0
    %v11479 = vadd.f32 0.0, %v11478
    %v11480 = vpop.f32.mrf.mxu0
    %v11481 = vadd.f32 0.0, %v11480
    %11482 = vmatmul.bf16.gmra.mxu0 %v6872
    %v11483 = vpop.f32.mrf.mxu0
    %v11484 = vadd.f32 0.0, %v11483
    %v11485 = vpop.f32.mrf.mxu0
    %v11486 = vadd.f32 0.0, %v11485
    %11487 = vmatmul.bf16.gmra.mxu0 %v6875
    %v11488 = vpop.f32.mrf.mxu0
    %v11489 = vadd.f32 0.0, %v11488
    %v11490 = vpop.f32.mrf.mxu0
    %v11491 = vadd.f32 0.0, %v11490
    %11492 = vmatmul.bf16.gmra.mxu0 %v6878
    %v11493 = vpop.f32.mrf.mxu0
    %v11494 = vadd.f32 0.0, %v11493
    %v11495 = vpop.f32.mrf.mxu0
    %v11496 = vadd.f32 0.0, %v11495
    %11497 = vmatmul.bf16.gmra.mxu0 %v6881
    %v11498 = vpop.f32.mrf.mxu0
    %v11499 = vadd.f32 0.0, %v11498
    %v11500 = vpop.f32.mrf.mxu0
    %v11501 = vadd.f32 0.0, %v11500
    %11502 = vmatmul.bf16.gmra.mxu0 %v6884
    %v11503 = vpop.f32.mrf.mxu0
    %v11504 = vadd.f32 0.0, %v11503
    %v11505 = vpop.f32.mrf.mxu0
    %v11506 = vadd.f32 0.0, %v11505
    %11507 = vmatmul.bf16.gmra.mxu0 %v6887
    %v11508 = vpop.f32.mrf.mxu0
    %v11509 = vadd.f32 0.0, %v11508
    %v11510 = vpop.f32.mrf.mxu0
    %v11511 = vadd.f32 0.0, %v11510
    %11512 = vmatmul.bf16.gmra.mxu0 %v6890
    %v11513 = vpop.f32.mrf.mxu0
    %v11514 = vadd.f32 0.0, %v11513
    %v11515 = vpop.f32.mrf.mxu0
    %v11516 = vadd.f32 0.0, %v11515
    %11517 = vmatmul.bf16.gmra.mxu0 %v6893
    %v11518 = vpop.f32.mrf.mxu0
    %v11519 = vadd.f32 0.0, %v11518
    %v11520 = vpop.f32.mrf.mxu0
    %v11521 = vadd.f32 0.0, %v11520
    %11522 = vmatmul.bf16.gmra.mxu0 %v6896
    %v11523 = vpop.f32.mrf.mxu0
    %v11524 = vadd.f32 0.0, %v11523
    %v11525 = vpop.f32.mrf.mxu0
    %v11526 = vadd.f32 0.0, %v11525
    %11527 = vmatmul.bf16.gmra.mxu0 %v6899
    %v11528 = vpop.f32.mrf.mxu0
    %v11529 = vadd.f32 0.0, %v11528
    %v11530 = vpop.f32.mrf.mxu0
    %v11531 = vadd.f32 0.0, %v11530
    %11532 = vmatmul.bf16.gmra.mxu0 %v6902
    %v11533 = vpop.f32.mrf.mxu0
    %v11534 = vadd.f32 0.0, %v11533
    %v11535 = vpop.f32.mrf.mxu0
    %v11536 = vadd.f32 0.0, %v11535
    %11537 = vmatmul.bf16.gmra.mxu0 %v6905
    %v11538 = vpop.f32.mrf.mxu0
    %v11539 = vadd.f32 0.0, %v11538
    %v11540 = vpop.f32.mrf.mxu0
    %v11541 = vadd.f32 0.0, %v11540
    %11542 = vmatmul.bf16.gmra.mxu0 %v8473
    %v11543 = vpop.f32.mrf.mxu0
    %v11544 = vadd.f32 0.0, %v11543
    %v11545 = vpop.f32.mrf.mxu0
    %v11546 = vadd.f32 0.0, %v11545
    %11547 = vmatmul.bf16.gmra.mxu0 %v10060
    %v11548 = vpop.f32.mrf.mxu0
    %v11549 = vadd.f32 0.0, %v11548
    %v11550 = vpop.f32.mrf.mxu0
    %v11551 = vadd.f32 0.0, %v11550
    %11552 = vmatmul.bf16.gmra.mxu0 %v10063
    %v11553 = vpop.f32.mrf.mxu0
    %v11554 = vadd.f32 0.0, %v11553
    %v11555 = vpop.f32.mrf.mxu0
    %v11556 = vadd.f32 0.0, %v11555
    %11557 = vmatmul.bf16.gmra.mxu0 %v10066
    %v11558 = vpop.f32.mrf.mxu0
    %v11559 = vadd.f32 0.0, %v11558
    %v11560 = vpop.f32.mrf.mxu0
    %v11561 = vadd.f32 0.0, %v11560
    %11562 = vmatmul.bf16.gmra.mxu0 %v10069
    %v11563 = vpop.f32.mrf.mxu0
    %v11564 = vadd.f32 0.0, %v11563
    %v11565 = vpop.f32.mrf.mxu0
    %v11566 = vadd.f32 0.0, %v11565
    %11567 = vmatmul.bf16.gmra.mxu0 %v11467
    %v11568 = vpop.f32.mrf.mxu0
    %v11569 = vadd.f32 0.0, %v11568
    %v11570 = vpop.f32.mrf.mxu0
    %v11571 = vadd.f32 0.0, %v11570
    %11572 = vdwg.mxu0
    %v11573 = vadd.f32 %v11423, %v11479
    %v11574 = vadd.f32 %v11424, %v11481
    %v11575 = vadd.f32 %v11425, %v11484
    %v11576 = vadd.f32 %v11426, %v11486
    %v11577 = vadd.f32 %v11427, %v11489
    %v11578 = vadd.f32 %v11428, %v11491
    %v11579 = vadd.f32 %v11429, %v11494
    %v11580 = vadd.f32 %v11430, %v11496
    %v11581 = vadd.f32 %v11431, %v11499
    %v11582 = vadd.f32 %v11432, %v11501
    %v11583 = vadd.f32 %v11433, %v11504
    %v11584 = vadd.f32 %v11434, %v11506
    %v11585 = vadd.f32 %v11435, %v11509
    %v11586 = vadd.f32 %v11436, %v11511
    %v11587 = vadd.f32 %v11437, %v11514
    %v11588 = vadd.f32 %v11438, %v11516
    %v11589 = vadd.f32 %v11439, %v11519
    %v11590 = vadd.f32 %v11440, %v11521
    %v11591 = vadd.f32 %v11441, %v11524
    %v11592 = vadd.f32 %v11442, %v11526
    %v11593 = vadd.f32 %v11443, %v11529
    %v11594 = vadd.f32 %v11444, %v11531
    %v11595 = vadd.f32 %v11445, %v11534
    %v11596 = vadd.f32 %v11446, %v11536
    %v11597 = vadd.f32 %v11447, %v11539
    %v11598 = vadd.f32 %v11448, %v11541
    %v11599 = vadd.f32 %v11449, %v11544
    %v11600 = vadd.f32 %v11450, %v11546
    %v11601 = vadd.f32 %v11451, %v11549
    %v11602 = vadd.f32 %v11452, %v11551
    %v11603 = vadd.f32 %v11453, %v11554
    %v11604 = vadd.f32 %v11454, %v11556
    %v11605 = vadd.f32 %v11455, %v11559
    %v11606 = vadd.f32 %v11456, %v11561
    %v11607 = vadd.f32 %v11457, %v11564
    %v11608 = vadd.f32 %v11458, %v11566
    %v11609 = vadd.f32 %v11459, %v11569
    %v11610 = vadd.f32 %v11460, %v11571
    %v11611 = vmax.f32 %v10363, %v11573
    %v11612 = vmax.f32 %v10364, %v11574
    %v11613 = vmax.f32 %v10365, %v11575
    %v11614 = vmax.f32 %v10366, %v11576
    %v11615 = vmax.f32 %v10367, %v11577
    %v11616 = vmax.f32 %v10368, %v11578
    %v11617 = vmax.f32 %v10369, %v11579
    %v11618 = vmax.f32 %v10370, %v11580
    %v11619 = vmax.f32 %v10371, %v11581
    %v11620 = vmax.f32 %v10372, %v11582
    %v11621 = vmax.f32 %v10373, %v11583
    %v11622 = vmax.f32 %v10374, %v11584
    %v11623 = vmax.f32 %v10375, %v11585
    %v11624 = vmax.f32 %v10376, %v11586
    %v11625 = vmax.f32 %v10377, %v11587
    %v11626 = vmax.f32 %v10378, %v11588
    %v11627 = vmax.f32 %v10379, %v11589
    %v11628 = vmax.f32 %v10380, %v11590
    %v11629 = vmax.f32 %v10381, %v11591
    %v11630 = vmax.f32 %v10382, %v11592
    %v11631 = vmax.f32 %v10383, %v11593
    %v11632 = vmax.f32 %v10384, %v11594
    %v11633 = vmax.f32 %v10385, %v11595
    %v11634 = vmax.f32 %v10386, %v11596
    %v11635 = vmax.f32 %v10387, %v11597
    %v11636 = vmax.f32 %v10388, %v11598
    %v11637 = vmax.f32 %v10389, %v11599
    %v11638 = vmax.f32 %v10390, %v11600
    %v11639 = vmax.f32 %v10391, %v11601
    %v11640 = vmax.f32 %v10392, %v11602
    %v11641 = vmax.f32 %v10393, %v11603
    %v11642 = vmax.f32 %v10394, %v11604
    %v11643 = vmax.f32 %v10395, %v11605
    %v11644 = vmax.f32 %v10396, %v11606
    %v11645 = vmax.f32 %v10397, %v11607
    %v11646 = vmax.f32 %v10398, %v11608
    %v11647 = vmax.f32 %v10399, %v11609
    %v11648 = vmax.f32 %v10400, %v11610
    %v11649 = vld [vmem:[%s2 + $0x5] sm:$0x1]
    %v11650 = vperm.slane %v11649, 0
    %v11651 = vadd.f32 %v11611, %v11650
    %v11652 = vadd.f32 %v11612, %v11650
    %v11653 = vadd.f32 %v11613, %v11650
    %v11654 = vadd.f32 %v11614, %v11650
    %v11655 = vadd.f32 %v11615, %v11650
    %v11656 = vadd.f32 %v11616, %v11650
    %v11657 = vadd.f32 %v11617, %v11650
    %v11658 = vadd.f32 %v11618, %v11650
    %v11659 = vadd.f32 %v11619, %v11650
    %v11660 = vadd.f32 %v11620, %v11650
    %v11661 = vadd.f32 %v11621, %v11650
    %v11662 = vadd.f32 %v11622, %v11650
    %v11663 = vadd.f32 %v11623, %v11650
    %v11664 = vadd.f32 %v11624, %v11650
    %v11665 = vadd.f32 %v11625, %v11650
    %v11666 = vadd.f32 %v11626, %v11650
    %v11667 = vadd.f32 %v11627, %v11650
    %v11668 = vadd.f32 %v11628, %v11650
    %v11669 = vadd.f32 %v11629, %v11650
    %v11670 = vadd.f32 %v11630, %v11650
    %v11671 = vadd.f32 %v11631, %v11650
    %v11672 = vadd.f32 %v11632, %v11650
    %v11673 = vadd.f32 %v11633, %v11650
    %v11674 = vadd.f32 %v11634, %v11650
    %v11675 = vadd.f32 %v11635, %v11650
    %v11676 = vadd.f32 %v11636, %v11650
    %v11677 = vadd.f32 %v11637, %v11650
    %v11678 = vadd.f32 %v11638, %v11650
    %v11679 = vadd.f32 %v11639, %v11650
    %v11680 = vadd.f32 %v11640, %v11650
    %v11681 = vadd.f32 %v11641, %v11650
    %v11682 = vadd.f32 %v11642, %v11650
    %v11683 = vadd.f32 %v11643, %v11650
    %v11684 = vadd.f32 %v11644, %v11650
    %v11685 = vadd.f32 %v11645, %v11650
    %v11686 = vadd.f32 %v11646, %v11650
    %v11687 = vadd.f32 %v11647, %v11650
    %v11688 = vadd.f32 %v11648, %v11650
    %v11689 = vmax.f32 %v11651, 0.0
    %v11690 = vmax.f32 %v11652, 0.0
    %v11691 = vmax.f32 %v11653, 0.0
    %v11692 = vmax.f32 %v11654, 0.0
    %v11693 = vmax.f32 %v11655, 0.0
    %v11694 = vmax.f32 %v11656, 0.0
    %v11695 = vmax.f32 %v11657, 0.0
    %v11696 = vmax.f32 %v11658, 0.0
    %v11697 = vmax.f32 %v11659, 0.0
    %v11698 = vmax.f32 %v11660, 0.0
    %v11699 = vmax.f32 %v11661, 0.0
    %v11700 = vmax.f32 %v11662, 0.0
    %v11701 = vmax.f32 %v11663, 0.0
    %v11702 = vmax.f32 %v11664, 0.0
    %v11703 = vmax.f32 %v11665, 0.0
    %v11704 = vmax.f32 %v11666, 0.0
    %v11705 = vmax.f32 %v11667, 0.0
    %v11706 = vmax.f32 %v11668, 0.0
    %v11707 = vmax.f32 %v11669, 0.0
    %v11708 = vmax.f32 %v11670, 0.0
    %v11709 = vmax.f32 %v11671, 0.0
    %v11710 = vmax.f32 %v11672, 0.0
    %v11711 = vmax.f32 %v11673, 0.0
    %v11712 = vmax.f32 %v11674, 0.0
    %v11713 = vmax.f32 %v11675, 0.0
    %v11714 = vmax.f32 %v11676, 0.0
    %v11715 = vmax.f32 %v11677, 0.0
    %v11716 = vmax.f32 %v11678, 0.0
    %v11717 = vmax.f32 %v11679, 0.0
    %v11718 = vmax.f32 %v11680, 0.0
    %v11719 = vmax.f32 %v11681, 0.0
    %v11720 = vmax.f32 %v11682, 0.0
    %v11721 = vmax.f32 %v11683, 0.0
    %v11722 = vmax.f32 %v11684, 0.0
    %v11723 = vmax.f32 %v11685, 0.0
    %v11724 = vmax.f32 %v11686, 0.0
    %v11725 = vmax.f32 %v11687, 0.0
    %v11726 = vmax.f32 %v11688, 0.0
    %v11727 = vpack.c.bf16 %v11689, %v11689
    %v11728 = vpack.c.bf16 %v11690, %v11690
    %v11729 = vpack.c.bf16 %v11691, %v11691
    %v11730 = vpack.c.bf16 %v11692, %v11692
    %v11731 = vpack.c.bf16 %v11693, %v11693
    %v11732 = vpack.c.bf16 %v11694, %v11694
    %v11733 = vpack.c.bf16 %v11695, %v11695
    %v11734 = vpack.c.bf16 %v11696, %v11696
    %v11735 = vpack.c.bf16 %v11697, %v11697
    %v11736 = vpack.c.bf16 %v11698, %v11698
    %v11737 = vpack.c.bf16 %v11699, %v11699
    %v11738 = vpack.c.bf16 %v11700, %v11700
    %v11739 = vpack.c.bf16 %v11701, %v11701
    %v11740 = vpack.c.bf16 %v11702, %v11702
    %v11741 = vpack.c.bf16 %v11703, %v11703
    %v11742 = vpack.c.bf16 %v11704, %v11704
    %v11743 = vpack.c.bf16 %v11705, %v11705
    %v11744 = vpack.c.bf16 %v11706, %v11706
    %v11745 = vpack.c.bf16 %v11707, %v11707
    %v11746 = vpack.c.bf16 %v11708, %v11708
    %v11747 = vpack.c.bf16 %v11709, %v11709
    %v11748 = vpack.c.bf16 %v11710, %v11710
    %v11749 = vpack.c.bf16 %v11711, %v11711
    %v11750 = vpack.c.bf16 %v11712, %v11712
    %v11751 = vpack.c.bf16 %v11713, %v11713
    %v11752 = vpack.c.bf16 %v11714, %v11714
    %v11753 = vpack.c.bf16 %v11715, %v11715
    %v11754 = vpack.c.bf16 %v11716, %v11716
    %v11755 = vpack.c.bf16 %v11717, %v11717
    %v11756 = vpack.c.bf16 %v11718, %v11718
    %v11757 = vpack.c.bf16 %v11719, %v11719
    %v11758 = vpack.c.bf16 %v11720, %v11720
    %v11759 = vpack.c.bf16 %v11721, %v11721
    %v11760 = vpack.c.bf16 %v11722, %v11722
    %v11761 = vpack.c.bf16 %v11723, %v11723
    %v11762 = vpack.c.bf16 %v11724, %v11724
    %v11763 = vpack.c.bf16 %v11725, %v11725
    %v11764 = vpack.c.bf16 %v11726, %v11726
    %v11765 = vld [vmem:[%s1 + $0x120] sm:$0xf]
    %v11766 = vld [vmem:[%s1 + $0x124] sm:$0xf]
    %v11767 = vld [vmem:[%s1 + $0x128] sm:$0xf]
    %v11768 = vld [vmem:[%s1 + $0x12c] sm:$0xf]
    %v11769 = vld [vmem:[%s1 + $0x130] sm:$0xf]
    %v11770 = vld [vmem:[%s1 + $0x134] sm:$0xf]
    %v11771 = vld [vmem:[%s1 + $0x138] sm:$0xf]
    %v11772 = vld [vmem:[%s1 + $0x13c] sm:$0xf]
    %v11773 = vld [vmem:[%s1 + $0x140] sm:$0xf]
    %v11774 = vld [vmem:[%s1 + $0x144] sm:$0xf]
    %v11775 = vld [vmem:[%s1 + $0x148] sm:$0xf]
    %v11776 = vld [vmem:[%s1 + $0x14c] sm:$0xf]
    %v11777 = vld [vmem:[%s1 + $0x150] sm:$0xf]
    %v11778 = vld [vmem:[%s1 + $0x154] sm:$0xf]
    %v11779 = vld [vmem:[%s1 + $0x158] sm:$0xf]
    %v11780 = vld [vmem:[%s1 + $0x15c] sm:$0xf]
    %v11795 = vunpack.c.l.b16 %v11729
    %v11796 = vunpack.c.l.b16 %v11730
    %v11797 = vunpack.c.l.b16 %v11731
    %v11798 = vunpack.c.l.b16 %v11732
    %v11799 = vunpack.c.l.b16 %v11733
    %v11800 = vunpack.c.l.b16 %v11734
    %v11801 = vunpack.c.l.b16 %v11735
    %v11802 = vunpack.c.l.b16 %v11736
    %v11803 = vunpack.c.l.b16 %v11737
    %v11804 = vunpack.c.l.b16 %v11738
    %v11805 = vunpack.c.l.b16 %v11739
    %v11806 = vunpack.c.l.b16 %v11740
    %v11807 = vunpack.c.l.b16 %v11741
    %v11808 = vunpack.c.l.b16 %v11742
    %v11809 = vpack.c.b16 %v11796, %v11795
    %v11810 = vpack.c.b16 %v11798, %v11797
    %v11811 = vpack.c.b16 %v11800, %v11799
    %v11812 = vpack.c.b16 %v11802, %v11801
    %v11813 = vpack.c.b16 %v11804, %v11803
    %v11814 = vpack.c.b16 %v11806, %v11805
    %v11815 = vpack.c.b16 %v11808, %v11807
    %v11824 = vunpack.c.l.b16 %v11773
    %v11825 = vunpack.c.l.b16 %v11774
    %v11826 = vunpack.c.l.b16 %v11775
    %v11827 = vunpack.c.l.b16 %v11776
    %v11828 = vunpack.c.l.b16 %v11777
    %v11829 = vunpack.c.l.b16 %v11778
    %v11830 = vunpack.c.l.b16 %v11779
    %v11831 = vunpack.c.l.b16 %v11780
    %v11832 = vpack.c.b16 %v11825, %v11824
    %v11833 = vpack.c.b16 %v11827, %v11826
    %v11834 = vpack.c.b16 %v11829, %v11828
    %v11835 = vpack.c.b16 %v11831, %v11830
    %v11841 = vsel %vm5773, %v11809, 0
    %v11844 = vsel %vm5773, %v11810, 0
    %v11847 = vsel %vm5773, %v11811, 0
    %v11850 = vsel %vm5773, %v11812, 0
    %v11853 = vsel %vm5773, %v11813, 0
    %v11856 = vsel %vm5773, %v11814, 0
    %v11859 = vsel %vm5773, %v11815, 0
    %11861 = vmatpush.bf16.msra.mxu0 0
    %11862 = vmatpush.bf16.msra.mxu0 0
    %11863 = vmatpush.bf16.msra.mxu0 0
    %11864 = vmatpush.bf16.msra.mxu0 0
    %11865 = vmatpush.bf16.msra.mxu0 %v11835
    %11866 = vmatpush.bf16.msra.mxu0 %v11834
    %11867 = vmatpush.bf16.msra.mxu0 %v11833
    %11868 = vmatpush.bf16.msra.mxu0 %v11832
    %11869 = vmatmul.bf16.gmra.mxu0 %v11841
    %v11870 = vpop.f32.mrf.mxu0
    %v11871 = vadd.f32 0.0, %v11870
    %v11872 = vpop.f32.mrf.mxu0
    %v11873 = vadd.f32 0.0, %v11872
    %11874 = vmatmul.bf16.gmra.mxu0 %v11844
    %v11875 = vpop.f32.mrf.mxu0
    %v11876 = vadd.f32 0.0, %v11875
    %v11877 = vpop.f32.mrf.mxu0
    %v11878 = vadd.f32 0.0, %v11877
    %11879 = vmatmul.bf16.gmra.mxu0 %v11847
    %v11880 = vpop.f32.mrf.mxu0
    %v11881 = vpop.f32.mrf.mxu0
    %11882 = vmatmul.bf16.gmra.mxu0 %v11850
    %v11883 = vpop.f32.mrf.mxu0
    %v11884 = vpop.f32.mrf.mxu0
    %11885 = vmatmul.bf16.gmra.mxu0 %v11853
    %v11886 = vpop.f32.mrf.mxu0
    %v11887 = vpop.f32.mrf.mxu0
    %11888 = vmatmul.bf16.gmra.mxu0 %v11856
    %v11889 = vpop.f32.mrf.mxu0
    %v11890 = vadd.f32 0.0, %v11889
    %v11891 = vpop.f32.mrf.mxu0
    %v11892 = vadd.f32 0.0, %v11891
    %11893 = vmatmul.bf16.gmra.mxu0 %v11859
    %v11894 = vpop.f32.mrf.mxu0
    %v11895 = vadd.f32 0.0, %v11894
    %v11896 = vpop.f32.mrf.mxu0
    %v11897 = vadd.f32 0.0, %v11896
    %11898 = vdwg.mxu0
    %v11901 = vunpack.c.l.b16 %v11727
    %v11902 = vunpack.c.l.b16 %v11728
    %v11903 = vpack.c.b16 %v11902, %v11901
    %v11912 = vunpack.c.l.b16 %v11765
    %v11913 = vunpack.c.l.b16 %v11766
    %v11914 = vunpack.c.l.b16 %v11767
    %v11915 = vunpack.c.l.b16 %v11768
    %v11916 = vunpack.c.l.b16 %v11769
    %v11917 = vunpack.c.l.b16 %v11770
    %v11918 = vunpack.c.l.b16 %v11771
    %v11919 = vunpack.c.l.b16 %v11772
    %v11920 = vpack.c.b16 %v11913, %v11912
    %v11921 = vpack.c.b16 %v11915, %v11914
    %v11922 = vpack.c.b16 %v11917, %v11916
    %v11923 = vpack.c.b16 %v11919, %v11918
    %v11929 = vsel %vm5773, %v11903, 0
    %11931 = vmatpush.bf16.msra.mxu0 0
    %11932 = vmatpush.bf16.msra.mxu0 0
    %11933 = vmatpush.bf16.msra.mxu0 0
    %11934 = vmatpush.bf16.msra.mxu0 0
    %11935 = vmatpush.bf16.msra.mxu0 %v11923
    %11936 = vmatpush.bf16.msra.mxu0 %v11922
    %11937 = vmatpush.bf16.msra.mxu0 %v11921
    %11938 = vmatpush.bf16.msra.mxu0 %v11920
    %11939 = vmatmul.bf16.gmra.mxu0 %v11929
    %v11940 = vpop.f32.mrf.mxu0
    %v11941 = vadd.f32 %v11871, %v11940
    %v11942 = vpop.f32.mrf.mxu0
    %v11943 = vadd.f32 %v11873, %v11942
    %11944 = vmatmul.bf16.gmra.mxu0 %v11841
    %v11945 = vpop.f32.mrf.mxu0
    %v11946 = vadd.f32 %v11876, %v11945
    %v11947 = vpop.f32.mrf.mxu0
    %v11948 = vadd.f32 %v11878, %v11947
    %11949 = vmatmul.bf16.gmra.mxu0 %v11844
    %v11950 = vpop.f32.mrf.mxu0
    %v11951 = vpop.f32.mrf.mxu0
    %11952 = vmatmul.bf16.gmra.mxu0 %v11847
    %v11953 = vpop.f32.mrf.mxu0
    %v11954 = vpop.f32.mrf.mxu0
    %11955 = vmatmul.bf16.gmra.mxu0 %v11850
    %v11956 = vpop.f32.mrf.mxu0
    %v11957 = vpop.f32.mrf.mxu0
    %11958 = vmatmul.bf16.gmra.mxu0 %v11853
    %v11959 = vpop.f32.mrf.mxu0
    %v11960 = vadd.f32 %v11890, %v11959
    %v11961 = vpop.f32.mrf.mxu0
    %v11962 = vadd.f32 %v11892, %v11961
    %11963 = vmatmul.bf16.gmra.mxu0 %v11856
    %v11964 = vpop.f32.mrf.mxu0
    %v11965 = vadd.f32 %v11895, %v11964
    %v11966 = vpop.f32.mrf.mxu0
    %v11967 = vadd.f32 %v11897, %v11966
    %11968 = vdwg.mxu0
    %v11969 = vld [vmem:[%s1 + $0x160] sm:$0xf]
    %v11970 = vld [vmem:[%s1 + $0x164] sm:$0xf]
    %v11971 = vld [vmem:[%s1 + $0x168] sm:$0xf]
    %v11972 = vld [vmem:[%s1 + $0x16c] sm:$0xf]
    %v11973 = vld [vmem:[%s1 + $0x170] sm:$0xf]
    %v11974 = vld [vmem:[%s1 + $0x174] sm:$0xf]
    %v11975 = vld [vmem:[%s1 + $0x178] sm:$0xf]
    %v11976 = vld [vmem:[%s1 + $0x17c] sm:$0xf]
    %v11979 = vunpack.c.l.b16 %v11743
    %v11980 = vunpack.c.l.b16 %v11744
    %v11981 = vpack.c.b16 %v11980, %v11979
    %v11990 = vunpack.c.l.b16 %v11969
    %v11991 = vunpack.c.l.b16 %v11970
    %v11992 = vunpack.c.l.b16 %v11971
    %v11993 = vunpack.c.l.b16 %v11972
    %v11994 = vunpack.c.l.b16 %v11973
    %v11995 = vunpack.c.l.b16 %v11974
    %v11996 = vunpack.c.l.b16 %v11975
    %v11997 = vunpack.c.l.b16 %v11976
    %v11998 = vpack.c.b16 %v11991, %v11990
    %v11999 = vpack.c.b16 %v11993, %v11992
    %v12000 = vpack.c.b16 %v11995, %v11994
    %v12001 = vpack.c.b16 %v11997, %v11996
    %v12007 = vsel %vm5773, %v11981, 0
    %12009 = vmatpush.bf16.msra.mxu0 0
    %12010 = vmatpush.bf16.msra.mxu0 0
    %12011 = vmatpush.bf16.msra.mxu0 0
    %12012 = vmatpush.bf16.msra.mxu0 0
    %12013 = vmatpush.bf16.msra.mxu0 %v12001
    %12014 = vmatpush.bf16.msra.mxu0 %v12000
    %12015 = vmatpush.bf16.msra.mxu0 %v11999
    %12016 = vmatpush.bf16.msra.mxu0 %v11998
    %12017 = vmatmul.bf16.gmra.mxu0 %v11844
    %v12018 = vpop.f32.mrf.mxu0
    %v12019 = vadd.f32 0.0, %v12018
    %v12020 = vpop.f32.mrf.mxu0
    %v12021 = vadd.f32 0.0, %v12020
    %12022 = vmatmul.bf16.gmra.mxu0 %v11847
    %v12023 = vpop.f32.mrf.mxu0
    %v12024 = vadd.f32 0.0, %v12023
    %v12025 = vpop.f32.mrf.mxu0
    %v12026 = vadd.f32 0.0, %v12025
    %12027 = vmatmul.bf16.gmra.mxu0 %v11850
    %v12028 = vpop.f32.mrf.mxu0
    %v12029 = vpop.f32.mrf.mxu0
    %12030 = vmatmul.bf16.gmra.mxu0 %v11853
    %v12031 = vpop.f32.mrf.mxu0
    %v12032 = vpop.f32.mrf.mxu0
    %12033 = vmatmul.bf16.gmra.mxu0 %v11856
    %v12034 = vpop.f32.mrf.mxu0
    %v12035 = vpop.f32.mrf.mxu0
    %12036 = vmatmul.bf16.gmra.mxu0 %v11859
    %v12037 = vpop.f32.mrf.mxu0
    %v12038 = vadd.f32 0.0, %v12037
    %v12039 = vpop.f32.mrf.mxu0
    %v12040 = vadd.f32 0.0, %v12039
    %12041 = vmatmul.bf16.gmra.mxu0 %v12007
    %v12042 = vpop.f32.mrf.mxu0
    %v12043 = vadd.f32 0.0, %v12042
    %v12044 = vpop.f32.mrf.mxu0
    %v12045 = vadd.f32 0.0, %v12044
    %12046 = vdwg.mxu0
    %v12047 = vadd.f32 %v11941, %v12019
    %v12048 = vadd.f32 %v11943, %v12021
    %v12049 = vadd.f32 %v11946, %v12024
    %v12050 = vadd.f32 %v11948, %v12026
    %v12051 = vadd.f32 %v11960, %v12038
    %v12052 = vadd.f32 %v11962, %v12040
    %v12053 = vadd.f32 %v11965, %v12043
    %v12054 = vadd.f32 %v11967, %v12045
    %v12055 = vld [vmem:[%s1 + $0x180] sm:$0xf]
    %v12056 = vld [vmem:[%s1 + $0x184] sm:$0xf]
    %v12057 = vld [vmem:[%s1 + $0x188] sm:$0xf]
    %v12058 = vld [vmem:[%s1 + $0x18c] sm:$0xf]
    %v12059 = vld [vmem:[%s1 + $0x190] sm:$0xf]
    %v12060 = vld [vmem:[%s1 + $0x194] sm:$0xf]
    %v12061 = vld [vmem:[%s1 + $0x198] sm:$0xf]
    %v12062 = vld [vmem:[%s1 + $0x19c] sm:$0xf]
    %v12069 = vunpack.c.l.b16 %v11745
    %v12070 = vunpack.c.l.b16 %v11746
    %v12071 = vunpack.c.l.b16 %v11747
    %v12072 = vunpack.c.l.b16 %v11748
    %v12073 = vunpack.c.l.b16 %v11749
    %v12074 = vunpack.c.l.b16 %v11750
    %v12075 = vpack.c.b16 %v12070, %v12069
    %v12076 = vpack.c.b16 %v12072, %v12071
    %v12077 = vpack.c.b16 %v12074, %v12073
    %v12086 = vunpack.c.l.b16 %v12055
    %v12087 = vunpack.c.l.b16 %v12056
    %v12088 = vunpack.c.l.b16 %v12057
    %v12089 = vunpack.c.l.b16 %v12058
    %v12090 = vunpack.c.l.b16 %v12059
    %v12091 = vunpack.c.l.b16 %v12060
    %v12092 = vunpack.c.l.b16 %v12061
    %v12093 = vunpack.c.l.b16 %v12062
    %v12094 = vpack.c.b16 %v12087, %v12086
    %v12095 = vpack.c.b16 %v12089, %v12088
    %v12096 = vpack.c.b16 %v12091, %v12090
    %v12097 = vpack.c.b16 %v12093, %v12092
    %v12103 = vsel %vm5773, %v12075, 0
    %v12106 = vsel %vm5773, %v12076, 0
    %v12109 = vsel %vm5773, %v12077, 0
    %12111 = vmatpush.bf16.msra.mxu0 0
    %12112 = vmatpush.bf16.msra.mxu0 0
    %12113 = vmatpush.bf16.msra.mxu0 0
    %12114 = vmatpush.bf16.msra.mxu0 0
    %12115 = vmatpush.bf16.msra.mxu0 %v12097
    %12116 = vmatpush.bf16.msra.mxu0 %v12096
    %12117 = vmatpush.bf16.msra.mxu0 %v12095
    %12118 = vmatpush.bf16.msra.mxu0 %v12094
    %12119 = vmatmul.bf16.gmra.mxu0 %v11853
    %v12120 = vpop.f32.mrf.mxu0
    %v12121 = vadd.f32 0.0, %v12120
    %v12122 = vpop.f32.mrf.mxu0
    %v12123 = vadd.f32 0.0, %v12122
    %12124 = vmatmul.bf16.gmra.mxu0 %v11856
    %v12125 = vpop.f32.mrf.mxu0
    %v12126 = vadd.f32 0.0, %v12125
    %v12127 = vpop.f32.mrf.mxu0
    %v12128 = vadd.f32 0.0, %v12127
    %12129 = vmatmul.bf16.gmra.mxu0 %v11859
    %v12130 = vpop.f32.mrf.mxu0
    %v12131 = vpop.f32.mrf.mxu0
    %12132 = vmatmul.bf16.gmra.mxu0 %v12007
    %v12133 = vpop.f32.mrf.mxu0
    %v12134 = vpop.f32.mrf.mxu0
    %12135 = vmatmul.bf16.gmra.mxu0 %v12103
    %v12136 = vpop.f32.mrf.mxu0
    %v12137 = vpop.f32.mrf.mxu0
    %12138 = vmatmul.bf16.gmra.mxu0 %v12106
    %v12139 = vpop.f32.mrf.mxu0
    %v12140 = vadd.f32 0.0, %v12139
    %v12141 = vpop.f32.mrf.mxu0
    %v12142 = vadd.f32 0.0, %v12141
    %12143 = vmatmul.bf16.gmra.mxu0 %v12109
    %v12144 = vpop.f32.mrf.mxu0
    %v12145 = vadd.f32 0.0, %v12144
    %v12146 = vpop.f32.mrf.mxu0
    %v12147 = vadd.f32 0.0, %v12146
    %12148 = vdwg.mxu0
    %v12149 = vadd.f32 %v12047, %v12121
    %v12150 = vadd.f32 %v12048, %v12123
    %v12151 = vadd.f32 %v12049, %v12126
    %v12152 = vadd.f32 %v12050, %v12128
    %v12153 = vadd.f32 %v12051, %v12140
    %v12154 = vadd.f32 %v12052, %v12142
    %v12155 = vadd.f32 %v12053, %v12145
    %v12156 = vadd.f32 %v12054, %v12147
    %v12157 = vld [vmem:[%s1 + $0x1a0] sm:$0xf]
    %v12158 = vld [vmem:[%s1 + $0x1a4] sm:$0xf]
    %v12159 = vld [vmem:[%s1 + $0x1a8] sm:$0xf]
    %v12160 = vld [vmem:[%s1 + $0x1ac] sm:$0xf]
    %v12161 = vld [vmem:[%s1 + $0x1b0] sm:$0xf]
    %v12162 = vld [vmem:[%s1 + $0x1b4] sm:$0xf]
    %v12163 = vld [vmem:[%s1 + $0x1b8] sm:$0xf]
    %v12164 = vld [vmem:[%s1 + $0x1bc] sm:$0xf]
    %v12167 = vunpack.c.l.b16 %v11751
    %v12168 = vunpack.c.l.b16 %v11752
    %v12169 = vpack.c.b16 %v12168, %v12167
    %v12178 = vunpack.c.l.b16 %v12157
    %v12179 = vunpack.c.l.b16 %v12158
    %v12180 = vunpack.c.l.b16 %v12159
    %v12181 = vunpack.c.l.b16 %v12160
    %v12182 = vunpack.c.l.b16 %v12161
    %v12183 = vunpack.c.l.b16 %v12162
    %v12184 = vunpack.c.l.b16 %v12163
    %v12185 = vunpack.c.l.b16 %v12164
    %v12186 = vpack.c.b16 %v12179, %v12178
    %v12187 = vpack.c.b16 %v12181, %v12180
    %v12188 = vpack.c.b16 %v12183, %v12182
    %v12189 = vpack.c.b16 %v12185, %v12184
    %v12195 = vsel %vm5773, %v12169, 0
    %12197 = vmatpush.bf16.msra.mxu0 0
    %12198 = vmatpush.bf16.msra.mxu0 0
    %12199 = vmatpush.bf16.msra.mxu0 0
    %12200 = vmatpush.bf16.msra.mxu0 0
    %12201 = vmatpush.bf16.msra.mxu0 %v12189
    %12202 = vmatpush.bf16.msra.mxu0 %v12188
    %12203 = vmatpush.bf16.msra.mxu0 %v12187
    %12204 = vmatpush.bf16.msra.mxu0 %v12186
    %12205 = vmatmul.bf16.gmra.mxu0 %v11856
    %v12206 = vpop.f32.mrf.mxu0
    %v12207 = vadd.f32 0.0, %v12206
    %v12208 = vpop.f32.mrf.mxu0
    %v12209 = vadd.f32 0.0, %v12208
    %12210 = vmatmul.bf16.gmra.mxu0 %v11859
    %v12211 = vpop.f32.mrf.mxu0
    %v12212 = vadd.f32 0.0, %v12211
    %v12213 = vpop.f32.mrf.mxu0
    %v12214 = vadd.f32 0.0, %v12213
    %12215 = vmatmul.bf16.gmra.mxu0 %v12007
    %v12216 = vpop.f32.mrf.mxu0
    %v12217 = vpop.f32.mrf.mxu0
    %12218 = vmatmul.bf16.gmra.mxu0 %v12103
    %v12219 = vpop.f32.mrf.mxu0
    %v12220 = vpop.f32.mrf.mxu0
    %12221 = vmatmul.bf16.gmra.mxu0 %v12106
    %v12222 = vpop.f32.mrf.mxu0
    %v12223 = vpop.f32.mrf.mxu0
    %12224 = vmatmul.bf16.gmra.mxu0 %v12109
    %v12225 = vpop.f32.mrf.mxu0
    %v12226 = vadd.f32 0.0, %v12225
    %v12227 = vpop.f32.mrf.mxu0
    %v12228 = vadd.f32 0.0, %v12227
    %12229 = vmatmul.bf16.gmra.mxu0 %v12195
    %v12230 = vpop.f32.mrf.mxu0
    %v12231 = vadd.f32 0.0, %v12230
    %v12232 = vpop.f32.mrf.mxu0
    %v12233 = vadd.f32 0.0, %v12232
    %12234 = vdwg.mxu0
    %v12235 = vadd.f32 %v12149, %v12207
    %v12236 = vadd.f32 %v12150, %v12209
    %v12237 = vadd.f32 %v12151, %v12212
    %v12238 = vadd.f32 %v12152, %v12214
    %v12239 = vadd.f32 %v12153, %v12226
    %v12240 = vadd.f32 %v12154, %v12228
    %v12241 = vadd.f32 %v12155, %v12231
    %v12242 = vadd.f32 %v12156, %v12233
    %v12243 = vld [vmem:[%s1 + $0x1c0] sm:$0xf]
    %v12244 = vld [vmem:[%s1 + $0x1c4] sm:$0xf]
    %v12245 = vld [vmem:[%s1 + $0x1c8] sm:$0xf]
    %v12246 = vld [vmem:[%s1 + $0x1cc] sm:$0xf]
    %v12247 = vld [vmem:[%s1 + $0x1d0] sm:$0xf]
    %v12248 = vld [vmem:[%s1 + $0x1d4] sm:$0xf]
    %v12249 = vld [vmem:[%s1 + $0x1d8] sm:$0xf]
    %v12250 = vld [vmem:[%s1 + $0x1dc] sm:$0xf]
    %v12253 = vunpack.c.l.b16 %v11753
    %v12254 = vunpack.c.l.b16 %v11754
    %v12255 = vpack.c.b16 %v12254, %v12253
    %v12264 = vunpack.c.l.b16 %v12243
    %v12265 = vunpack.c.l.b16 %v12244
    %v12266 = vunpack.c.l.b16 %v12245
    %v12267 = vunpack.c.l.b16 %v12246
    %v12268 = vunpack.c.l.b16 %v12247
    %v12269 = vunpack.c.l.b16 %v12248
    %v12270 = vunpack.c.l.b16 %v12249
    %v12271 = vunpack.c.l.b16 %v12250
    %v12272 = vpack.c.b16 %v12265, %v12264
    %v12273 = vpack.c.b16 %v12267, %v12266
    %v12274 = vpack.c.b16 %v12269, %v12268
    %v12275 = vpack.c.b16 %v12271, %v12270
    %v12281 = vsel %vm5773, %v12255, 0
    %12283 = vmatpush.bf16.msra.mxu0 0
    %12284 = vmatpush.bf16.msra.mxu0 0
    %12285 = vmatpush.bf16.msra.mxu0 0
    %12286 = vmatpush.bf16.msra.mxu0 0
    %12287 = vmatpush.bf16.msra.mxu0 %v12275
    %12288 = vmatpush.bf16.msra.mxu0 %v12274
    %12289 = vmatpush.bf16.msra.mxu0 %v12273
    %12290 = vmatpush.bf16.msra.mxu0 %v12272
    %12291 = vmatmul.bf16.gmra.mxu0 %v11859
    %v12292 = vpop.f32.mrf.mxu0
    %v12293 = vadd.f32 0.0, %v12292
    %v12294 = vpop.f32.mrf.mxu0
    %v12295 = vadd.f32 0.0, %v12294
    %12296 = vmatmul.bf16.gmra.mxu0 %v12007
    %v12297 = vpop.f32.mrf.mxu0
    %v12298 = vadd.f32 0.0, %v12297
    %v12299 = vpop.f32.mrf.mxu0
    %v12300 = vadd.f32 0.0, %v12299
    %12301 = vmatmul.bf16.gmra.mxu0 %v12103
    %v12302 = vpop.f32.mrf.mxu0
    %v12303 = vpop.f32.mrf.mxu0
    %12304 = vmatmul.bf16.gmra.mxu0 %v12106
    %v12305 = vpop.f32.mrf.mxu0
    %v12306 = vpop.f32.mrf.mxu0
    %12307 = vmatmul.bf16.gmra.mxu0 %v12109
    %v12308 = vpop.f32.mrf.mxu0
    %v12309 = vpop.f32.mrf.mxu0
    %12310 = vmatmul.bf16.gmra.mxu0 %v12195
    %v12311 = vpop.f32.mrf.mxu0
    %v12312 = vadd.f32 0.0, %v12311
    %v12313 = vpop.f32.mrf.mxu0
    %v12314 = vadd.f32 0.0, %v12313
    %12315 = vmatmul.bf16.gmra.mxu0 %v12281
    %v12316 = vpop.f32.mrf.mxu0
    %v12317 = vadd.f32 0.0, %v12316
    %v12318 = vpop.f32.mrf.mxu0
    %v12319 = vadd.f32 0.0, %v12318
    %12320 = vdwg.mxu0
    %v12321 = vadd.f32 %v12235, %v12293
    %v12322 = vadd.f32 %v12236, %v12295
    %v12323 = vadd.f32 %v12237, %v12298
    %v12324 = vadd.f32 %v12238, %v12300
    %v12325 = vadd.f32 %v12239, %v12312
    %v12326 = vadd.f32 %v12240, %v12314
    %v12327 = vadd.f32 %v12241, %v12317
    %v12328 = vadd.f32 %v12242, %v12319
    %v12329 = vld [vmem:[%s1 + $0x1e0] sm:$0xf]
    %v12330 = vld [vmem:[%s1 + $0x1e4] sm:$0xf]
    %v12331 = vld [vmem:[%s1 + $0x1e8] sm:$0xf]
    %v12332 = vld [vmem:[%s1 + $0x1ec] sm:$0xf]
    %v12333 = vld [vmem:[%s1 + $0x1f0] sm:$0xf]
    %v12334 = vld [vmem:[%s1 + $0x1f4] sm:$0xf]
    %v12335 = vld [vmem:[%s1 + $0x1f8] sm:$0xf]
    %v12336 = vld [vmem:[%s1 + $0x1fc] sm:$0xf]
    %v12343 = vunpack.c.l.b16 %v11755
    %v12344 = vunpack.c.l.b16 %v11756
    %v12345 = vunpack.c.l.b16 %v11757
    %v12346 = vunpack.c.l.b16 %v11758
    %v12347 = vunpack.c.l.b16 %v11759
    %v12348 = vunpack.c.l.b16 %v11760
    %v12349 = vpack.c.b16 %v12344, %v12343
    %v12350 = vpack.c.b16 %v12346, %v12345
    %v12351 = vpack.c.b16 %v12348, %v12347
    %v12360 = vunpack.c.l.b16 %v12329
    %v12361 = vunpack.c.l.b16 %v12330
    %v12362 = vunpack.c.l.b16 %v12331
    %v12363 = vunpack.c.l.b16 %v12332
    %v12364 = vunpack.c.l.b16 %v12333
    %v12365 = vunpack.c.l.b16 %v12334
    %v12366 = vunpack.c.l.b16 %v12335
    %v12367 = vunpack.c.l.b16 %v12336
    %v12368 = vpack.c.b16 %v12361, %v12360
    %v12369 = vpack.c.b16 %v12363, %v12362
    %v12370 = vpack.c.b16 %v12365, %v12364
    %v12371 = vpack.c.b16 %v12367, %v12366
    %v12377 = vsel %vm5773, %v12349, 0
    %v12380 = vsel %vm5773, %v12350, 0
    %v12383 = vsel %vm5773, %v12351, 0
    %12385 = vmatpush.bf16.msra.mxu0 0
    %12386 = vmatpush.bf16.msra.mxu0 0
    %12387 = vmatpush.bf16.msra.mxu0 0
    %12388 = vmatpush.bf16.msra.mxu0 0
    %12389 = vmatpush.bf16.msra.mxu0 %v12371
    %12390 = vmatpush.bf16.msra.mxu0 %v12370
    %12391 = vmatpush.bf16.msra.mxu0 %v12369
    %12392 = vmatpush.bf16.msra.mxu0 %v12368
    %12393 = vmatmul.bf16.gmra.mxu0 %v12106
    %v12394 = vpop.f32.mrf.mxu0
    %v12395 = vadd.f32 0.0, %v12394
    %v12396 = vpop.f32.mrf.mxu0
    %v12397 = vadd.f32 0.0, %v12396
    %12398 = vmatmul.bf16.gmra.mxu0 %v12109
    %v12399 = vpop.f32.mrf.mxu0
    %v12400 = vadd.f32 0.0, %v12399
    %v12401 = vpop.f32.mrf.mxu0
    %v12402 = vadd.f32 0.0, %v12401
    %12403 = vmatmul.bf16.gmra.mxu0 %v12195
    %v12404 = vpop.f32.mrf.mxu0
    %v12405 = vpop.f32.mrf.mxu0
    %12406 = vmatmul.bf16.gmra.mxu0 %v12281
    %v12407 = vpop.f32.mrf.mxu0
    %v12408 = vpop.f32.mrf.mxu0
    %12409 = vmatmul.bf16.gmra.mxu0 %v12377
    %v12410 = vpop.f32.mrf.mxu0
    %v12411 = vpop.f32.mrf.mxu0
    %12412 = vmatmul.bf16.gmra.mxu0 %v12380
    %v12413 = vpop.f32.mrf.mxu0
    %v12414 = vadd.f32 0.0, %v12413
    %v12415 = vpop.f32.mrf.mxu0
    %v12416 = vadd.f32 0.0, %v12415
    %12417 = vmatmul.bf16.gmra.mxu0 %v12383
    %v12418 = vpop.f32.mrf.mxu0
    %v12419 = vadd.f32 0.0, %v12418
    %v12420 = vpop.f32.mrf.mxu0
    %v12421 = vadd.f32 0.0, %v12420
    %12422 = vdwg.mxu0
    %v12423 = vadd.f32 %v12321, %v12395
    %v12424 = vadd.f32 %v12322, %v12397
    %v12425 = vadd.f32 %v12323, %v12400
    %v12426 = vadd.f32 %v12324, %v12402
    %v12427 = vadd.f32 %v12325, %v12414
    %v12428 = vadd.f32 %v12326, %v12416
    %v12429 = vadd.f32 %v12327, %v12419
    %v12430 = vadd.f32 %v12328, %v12421
    %v12431 = vld [vmem:[%s1 + $0x200] sm:$0xf]
    %v12432 = vld [vmem:[%s1 + $0x204] sm:$0xf]
    %v12433 = vld [vmem:[%s1 + $0x208] sm:$0xf]
    %v12434 = vld [vmem:[%s1 + $0x20c] sm:$0xf]
    %v12435 = vld [vmem:[%s1 + $0x210] sm:$0xf]
    %v12436 = vld [vmem:[%s1 + $0x214] sm:$0xf]
    %v12437 = vld [vmem:[%s1 + $0x218] sm:$0xf]
    %v12438 = vld [vmem:[%s1 + $0x21c] sm:$0xf]
    %v12441 = vunpack.c.l.b16 %v11761
    %v12442 = vunpack.c.l.b16 %v11762
    %v12443 = vpack.c.b16 %v12442, %v12441
    %v12452 = vunpack.c.l.b16 %v12431
    %v12453 = vunpack.c.l.b16 %v12432
    %v12454 = vunpack.c.l.b16 %v12433
    %v12455 = vunpack.c.l.b16 %v12434
    %v12456 = vunpack.c.l.b16 %v12435
    %v12457 = vunpack.c.l.b16 %v12436
    %v12458 = vunpack.c.l.b16 %v12437
    %v12459 = vunpack.c.l.b16 %v12438
    %v12460 = vpack.c.b16 %v12453, %v12452
    %v12461 = vpack.c.b16 %v12455, %v12454
    %v12462 = vpack.c.b16 %v12457, %v12456
    %v12463 = vpack.c.b16 %v12459, %v12458
    %v12469 = vsel %vm5773, %v12443, 0
    %12471 = vmatpush.bf16.msra.mxu0 0
    %12472 = vmatpush.bf16.msra.mxu0 0
    %12473 = vmatpush.bf16.msra.mxu0 0
    %12474 = vmatpush.bf16.msra.mxu0 0
    %12475 = vmatpush.bf16.msra.mxu0 %v12463
    %12476 = vmatpush.bf16.msra.mxu0 %v12462
    %12477 = vmatpush.bf16.msra.mxu0 %v12461
    %12478 = vmatpush.bf16.msra.mxu0 %v12460
    %12479 = vmatmul.bf16.gmra.mxu0 %v12109
    %v12480 = vpop.f32.mrf.mxu0
    %v12481 = vadd.f32 0.0, %v12480
    %v12482 = vpop.f32.mrf.mxu0
    %v12483 = vadd.f32 0.0, %v12482
    %12484 = vmatmul.bf16.gmra.mxu0 %v12195
    %v12485 = vpop.f32.mrf.mxu0
    %v12486 = vadd.f32 0.0, %v12485
    %v12487 = vpop.f32.mrf.mxu0
    %v12488 = vadd.f32 0.0, %v12487
    %12489 = vmatmul.bf16.gmra.mxu0 %v12281
    %v12490 = vpop.f32.mrf.mxu0
    %v12491 = vpop.f32.mrf.mxu0
    %12492 = vmatmul.bf16.gmra.mxu0 %v12377
    %v12493 = vpop.f32.mrf.mxu0
    %v12494 = vpop.f32.mrf.mxu0
    %12495 = vmatmul.bf16.gmra.mxu0 %v12380
    %v12496 = vpop.f32.mrf.mxu0
    %v12497 = vpop.f32.mrf.mxu0
    %12498 = vmatmul.bf16.gmra.mxu0 %v12383
    %v12499 = vpop.f32.mrf.mxu0
    %v12500 = vadd.f32 0.0, %v12499
    %v12501 = vpop.f32.mrf.mxu0
    %v12502 = vadd.f32 0.0, %v12501
    %12503 = vmatmul.bf16.gmra.mxu0 %v12469
    %v12504 = vpop.f32.mrf.mxu0
    %v12505 = vadd.f32 0.0, %v12504
    %v12506 = vpop.f32.mrf.mxu0
    %v12507 = vadd.f32 0.0, %v12506
    %12508 = vdwg.mxu0
    %v12509 = vadd.f32 %v12423, %v12481
    %v12510 = vadd.f32 %v12424, %v12483
    %v12511 = vadd.f32 %v12425, %v12486
    %v12512 = vadd.f32 %v12426, %v12488
    %v12513 = vadd.f32 %v12427, %v12500
    %v12514 = vadd.f32 %v12428, %v12502
    %v12515 = vadd.f32 %v12429, %v12505
    %v12516 = vadd.f32 %v12430, %v12507
    %v12517 = vld [vmem:[%s1 + $0x220] sm:$0xf]
    %v12518 = vld [vmem:[%s1 + $0x224] sm:$0xf]
    %v12519 = vld [vmem:[%s1 + $0x228] sm:$0xf]
    %v12520 = vld [vmem:[%s1 + $0x22c] sm:$0xf]
    %v12521 = vld [vmem:[%s1 + $0x230] sm:$0xf]
    %v12522 = vld [vmem:[%s1 + $0x234] sm:$0xf]
    %v12523 = vld [vmem:[%s1 + $0x238] sm:$0xf]
    %v12524 = vld [vmem:[%s1 + $0x23c] sm:$0xf]
    %v12527 = vunpack.c.l.b16 %v11763
    %v12528 = vunpack.c.l.b16 %v11764
    %v12529 = vpack.c.b16 %v12528, %v12527
    %v12538 = vunpack.c.l.b16 %v12517
    %v12539 = vunpack.c.l.b16 %v12518
    %v12540 = vunpack.c.l.b16 %v12519
    %v12541 = vunpack.c.l.b16 %v12520
    %v12542 = vunpack.c.l.b16 %v12521
    %v12543 = vunpack.c.l.b16 %v12522
    %v12544 = vunpack.c.l.b16 %v12523
    %v12545 = vunpack.c.l.b16 %v12524
    %v12546 = vpack.c.b16 %v12539, %v12538
    %v12547 = vpack.c.b16 %v12541, %v12540
    %v12548 = vpack.c.b16 %v12543, %v12542
    %v12549 = vpack.c.b16 %v12545, %v12544
    %v12555 = vsel %vm5773, %v12529, 0
    %12557 = vmatpush.bf16.msra.mxu0 0
    %12558 = vmatpush.bf16.msra.mxu0 0
    %12559 = vmatpush.bf16.msra.mxu0 0
    %12560 = vmatpush.bf16.msra.mxu0 0
    %12561 = vmatpush.bf16.msra.mxu0 %v12549
    %12562 = vmatpush.bf16.msra.mxu0 %v12548
    %12563 = vmatpush.bf16.msra.mxu0 %v12547
    %12564 = vmatpush.bf16.msra.mxu0 %v12546
    %12565 = vmatmul.bf16.gmra.mxu0 %v12195
    %v12566 = vpop.f32.mrf.mxu0
    %v12567 = vadd.f32 0.0, %v12566
    %v12568 = vpop.f32.mrf.mxu0
    %v12569 = vadd.f32 0.0, %v12568
    %12570 = vmatmul.bf16.gmra.mxu0 %v12281
    %v12571 = vpop.f32.mrf.mxu0
    %v12572 = vadd.f32 0.0, %v12571
    %v12573 = vpop.f32.mrf.mxu0
    %v12574 = vadd.f32 0.0, %v12573
    %12575 = vmatmul.bf16.gmra.mxu0 %v12377
    %v12576 = vpop.f32.mrf.mxu0
    %v12577 = vpop.f32.mrf.mxu0
    %12578 = vmatmul.bf16.gmra.mxu0 %v12380
    %v12579 = vpop.f32.mrf.mxu0
    %v12580 = vpop.f32.mrf.mxu0
    %12581 = vmatmul.bf16.gmra.mxu0 %v12383
    %v12582 = vpop.f32.mrf.mxu0
    %v12583 = vpop.f32.mrf.mxu0
    %12584 = vmatmul.bf16.gmra.mxu0 %v12469
    %v12585 = vpop.f32.mrf.mxu0
    %v12586 = vadd.f32 0.0, %v12585
    %v12587 = vpop.f32.mrf.mxu0
    %v12588 = vadd.f32 0.0, %v12587
    %12589 = vmatmul.bf16.gmra.mxu0 %v12555
    %v12590 = vpop.f32.mrf.mxu0
    %v12591 = vadd.f32 0.0, %v12590
    %v12592 = vpop.f32.mrf.mxu0
    %v12593 = vadd.f32 0.0, %v12592
    %12594 = vdwg.mxu0
    %v12595 = vadd.f32 %v12509, %v12567
    %v12596 = vadd.f32 %v12510, %v12569
    %v12597 = vadd.f32 %v12511, %v12572
    %v12598 = vadd.f32 %v12512, %v12574
    %v12599 = vadd.f32 %v12513, %v12586
    %v12600 = vadd.f32 %v12514, %v12588
    %v12601 = vadd.f32 %v12515, %v12591
    %v12602 = vadd.f32 %v12516, %v12593
    %v12603 = vld [vmem:[%s2 + $0x6] sm:$0x1]
    %v12604 = vperm.slane %v12603, 0
    %v12605 = vadd.f32 %v12595, %v12604
    %v12606 = vadd.f32 %v12596, %v12604
    %v12607 = vadd.f32 %v12597, %v12604
    %v12608 = vadd.f32 %v12598, %v12604
    %v12609 = vadd.f32 %v12599, %v12604
    %v12610 = vadd.f32 %v12600, %v12604
    %v12611 = vadd.f32 %v12601, %v12604
    %v12612 = vadd.f32 %v12602, %v12604
    %v12613 = vmax.f32 %v12605, 0.0
    %v12614 = vmax.f32 %v12606, 0.0
    %v12615 = vmax.f32 %v12607, 0.0
    %v12616 = vmax.f32 %v12608, 0.0
    %v12617 = vmax.f32 %v12609, 0.0
    %v12618 = vmax.f32 %v12610, 0.0
    %v12619 = vmax.f32 %v12611, 0.0
    %v12620 = vmax.f32 %v12612, 0.0
    %v12621 = vpack.c.bf16 %v12613, %v12613
    %v12622 = vpack.c.bf16 %v12614, %v12614
    %v12623 = vpack.c.bf16 %v12615, %v12615
    %v12624 = vpack.c.bf16 %v12616, %v12616
    %v12625 = vpack.c.bf16 %v12617, %v12617
    %v12626 = vpack.c.bf16 %v12618, %v12618
    %v12627 = vpack.c.bf16 %v12619, %v12619
    %v12628 = vpack.c.bf16 %v12620, %v12620
    %v12631 = vunpack.c.l.b16 %v12621
    %v12632 = vunpack.c.l.b16 %v12622
    %v12633 = vpack.c.b16 %v12632, %v12631
    %v12637 = vunpack.c.l.b16 %v12623
    %v12638 = vunpack.c.l.b16 %v12624
    %v12639 = vpack.c.b16 %v12638, %v12637
    %v12643 = vunpack.c.l.b16 %v12625
    %v12644 = vunpack.c.l.b16 %v12626
    %v12645 = vpack.c.b16 %v12644, %v12643
    %v12649 = vunpack.c.l.b16 %v12627
    %v12650 = vunpack.c.l.b16 %v12628
    %v12651 = vpack.c.b16 %v12650, %v12649
    %v12653 = vld [vmem:[%s1 + $0x240] sm:$0xf]
    %v12654 = vld [vmem:[%s1 + $0x244] sm:$0xf]
    %v12655 = vld [vmem:[%s1 + $0x248] sm:$0xf]
    %v12656 = vld [vmem:[%s1 + $0x24c] sm:$0xf]
    %v12657 = vld [vmem:[%s1 + $0x250] sm:$0xf]
    %v12658 = vld [vmem:[%s1 + $0x254] sm:$0xf]
    %v12659 = vld [vmem:[%s1 + $0x258] sm:$0xf]
    %v12660 = vld [vmem:[%s1 + $0x25c] sm:$0xf]
    %v12661 = vld [vmem:[%s1 + $0x260] sm:$0xf]
    %v12662 = vld [vmem:[%s1 + $0x264] sm:$0xf]
    %v12663 = vld [vmem:[%s1 + $0x268] sm:$0xf]
    %v12664 = vld [vmem:[%s1 + $0x26c] sm:$0xf]
    %v12665 = vld [vmem:[%s1 + $0x270] sm:$0xf]
    %v12666 = vld [vmem:[%s1 + $0x274] sm:$0xf]
    %v12667 = vld [vmem:[%s1 + $0x278] sm:$0xf]
    %v12668 = vld [vmem:[%s1 + $0x27c] sm:$0xf]
    %v12669 = vld [vmem:[%s1 + $0x280] sm:$0xf]
    %v12670 = vld [vmem:[%s1 + $0x284] sm:$0xf]
    %v12671 = vld [vmem:[%s1 + $0x288] sm:$0xf]
    %v12672 = vld [vmem:[%s1 + $0x28c] sm:$0xf]
    %v12673 = vld [vmem:[%s1 + $0x290] sm:$0xf]
    %v12674 = vld [vmem:[%s1 + $0x294] sm:$0xf]
    %v12675 = vld [vmem:[%s1 + $0x298] sm:$0xf]
    %v12676 = vld [vmem:[%s1 + $0x29c] sm:$0xf]
    %v12677 = vld [vmem:[%s1 + $0x2a0] sm:$0xf]
    %v12678 = vld [vmem:[%s1 + $0x2a4] sm:$0xf]
    %v12679 = vld [vmem:[%s1 + $0x2a8] sm:$0xf]
    %v12680 = vld [vmem:[%s1 + $0x2ac] sm:$0xf]
    %v12681 = vld [vmem:[%s1 + $0x2b0] sm:$0xf]
    %v12682 = vld [vmem:[%s1 + $0x2b4] sm:$0xf]
    %v12683 = vld [vmem:[%s1 + $0x2b8] sm:$0xf]
    %v12684 = vld [vmem:[%s1 + $0x2bc] sm:$0xf]
    %v12685 = vld [vmem:[%s1 + $0x2c0] sm:$0xf]
    %v12686 = vld [vmem:[%s1 + $0x2c4] sm:$0xf]
    %v12687 = vld [vmem:[%s1 + $0x2c8] sm:$0xf]
    %v12688 = vld [vmem:[%s1 + $0x2cc] sm:$0xf]
    %v12689 = vld [vmem:[%s1 + $0x2d0] sm:$0xf]
    %v12690 = vld [vmem:[%s1 + $0x2d4] sm:$0xf]
    %v12691 = vld [vmem:[%s1 + $0x2d8] sm:$0xf]
    %v12692 = vld [vmem:[%s1 + $0x2dc] sm:$0xf]
    %v12693 = vld [vmem:[%s1 + $0x2e0] sm:$0xf]
    %v12694 = vld [vmem:[%s1 + $0x2e4] sm:$0xf]
    %v12695 = vld [vmem:[%s1 + $0x2e8] sm:$0xf]
    %v12696 = vld [vmem:[%s1 + $0x2ec] sm:$0xf]
    %v12697 = vld [vmem:[%s1 + $0x2f0] sm:$0xf]
    %v12698 = vld [vmem:[%s1 + $0x2f4] sm:$0xf]
    %v12699 = vld [vmem:[%s1 + $0x2f8] sm:$0xf]
    %v12700 = vld [vmem:[%s1 + $0x2fc] sm:$0xf]
    %v12701 = vld [vmem:[%s1 + $0x300] sm:$0xf]
    %v12702 = vld [vmem:[%s1 + $0x304] sm:$0xf]
    %v12703 = vld [vmem:[%s1 + $0x308] sm:$0xf]
    %v12704 = vld [vmem:[%s1 + $0x30c] sm:$0xf]
    %v12705 = vld [vmem:[%s1 + $0x310] sm:$0xf]
    %v12706 = vld [vmem:[%s1 + $0x314] sm:$0xf]
    %v12707 = vld [vmem:[%s1 + $0x318] sm:$0xf]
    %v12708 = vld [vmem:[%s1 + $0x31c] sm:$0xf]
    %v12709 = vld [vmem:[%s1 + $0x320] sm:$0xf]
    %v12710 = vld [vmem:[%s1 + $0x324] sm:$0xf]
    %v12711 = vld [vmem:[%s1 + $0x328] sm:$0xf]
    %v12712 = vld [vmem:[%s1 + $0x32c] sm:$0xf]
    %v12713 = vld [vmem:[%s1 + $0x330] sm:$0xf]
    %v12714 = vld [vmem:[%s1 + $0x334] sm:$0xf]
    %v12715 = vld [vmem:[%s1 + $0x338] sm:$0xf]
    %v12716 = vld [vmem:[%s1 + $0x33c] sm:$0xf]
    %v12717 = vld [vmem:[%s2 + $0x7] sm:$0x1]
    %v12718 = vperm.slane %v12717, 0
    %v12783 = vunpack.c.l.b16 %v12653
    %v12784 = vunpack.c.l.b16 %v12654
    %v12785 = vunpack.c.l.b16 %v12655
    %v12786 = vunpack.c.l.b16 %v12656
    %v12787 = vunpack.c.l.b16 %v12657
    %v12788 = vunpack.c.l.b16 %v12658
    %v12789 = vunpack.c.l.b16 %v12659
    %v12790 = vunpack.c.l.b16 %v12660
    %v12791 = vunpack.c.l.b16 %v12661
    %v12792 = vunpack.c.l.b16 %v12662
    %v12793 = vunpack.c.l.b16 %v12663
    %v12794 = vunpack.c.l.b16 %v12664
    %v12795 = vunpack.c.l.b16 %v12665
    %v12796 = vunpack.c.l.b16 %v12666
    %v12797 = vunpack.c.l.b16 %v12667
    %v12798 = vunpack.c.l.b16 %v12668
    %v12799 = vunpack.c.l.b16 %v12669
    %v12800 = vunpack.c.l.b16 %v12670
    %v12801 = vunpack.c.l.b16 %v12671
    %v12802 = vunpack.c.l.b16 %v12672
    %v12803 = vunpack.c.l.b16 %v12673
    %v12804 = vunpack.c.l.b16 %v12674
    %v12805 = vunpack.c.l.b16 %v12675
    %v12806 = vunpack.c.l.b16 %v12676
    %v12807 = vunpack.c.l.b16 %v12677
    %v12808 = vunpack.c.l.b16 %v12678
    %v12809 = vunpack.c.l.b16 %v12679
    %v12810 = vunpack.c.l.b16 %v12680
    %v12811 = vunpack.c.l.b16 %v12681
    %v12812 = vunpack.c.l.b16 %v12682
    %v12813 = vunpack.c.l.b16 %v12683
    %v12814 = vunpack.c.l.b16 %v12684
    %v12815 = vunpack.c.l.b16 %v12685
    %v12816 = vunpack.c.l.b16 %v12686
    %v12817 = vunpack.c.l.b16 %v12687
    %v12818 = vunpack.c.l.b16 %v12688
    %v12819 = vunpack.c.l.b16 %v12689
    %v12820 = vunpack.c.l.b16 %v12690
    %v12821 = vunpack.c.l.b16 %v12691
    %v12822 = vunpack.c.l.b16 %v12692
    %v12823 = vunpack.c.l.b16 %v12693
    %v12824 = vunpack.c.l.b16 %v12694
    %v12825 = vunpack.c.l.b16 %v12695
    %v12826 = vunpack.c.l.b16 %v12696
    %v12827 = vunpack.c.l.b16 %v12697
    %v12828 = vunpack.c.l.b16 %v12698
    %v12829 = vunpack.c.l.b16 %v12699
    %v12830 = vunpack.c.l.b16 %v12700
    %v12831 = vunpack.c.l.b16 %v12701
    %v12832 = vunpack.c.l.b16 %v12702
    %v12833 = vunpack.c.l.b16 %v12703
    %v12834 = vunpack.c.l.b16 %v12704
    %v12835 = vunpack.c.l.b16 %v12705
    %v12836 = vunpack.c.l.b16 %v12706
    %v12837 = vunpack.c.l.b16 %v12707
    %v12838 = vunpack.c.l.b16 %v12708
    %v12839 = vunpack.c.l.b16 %v12709
    %v12840 = vunpack.c.l.b16 %v12710
    %v12841 = vunpack.c.l.b16 %v12711
    %v12842 = vunpack.c.l.b16 %v12712
    %v12843 = vunpack.c.l.b16 %v12713
    %v12844 = vunpack.c.l.b16 %v12714
    %v12845 = vunpack.c.l.b16 %v12715
    %v12846 = vunpack.c.l.b16 %v12716
    %v12847 = vpack.c.b16 %v12784, %v12783
    %v12848 = vpack.c.b16 %v12786, %v12785
    %v12849 = vpack.c.b16 %v12788, %v12787
    %v12850 = vpack.c.b16 %v12790, %v12789
    %v12851 = vpack.c.b16 %v12792, %v12791
    %v12852 = vpack.c.b16 %v12794, %v12793
    %v12853 = vpack.c.b16 %v12796, %v12795
    %v12854 = vpack.c.b16 %v12798, %v12797
    %v12855 = vpack.c.b16 %v12800, %v12799
    %v12856 = vpack.c.b16 %v12802, %v12801
    %v12857 = vpack.c.b16 %v12804, %v12803
    %v12858 = vpack.c.b16 %v12806, %v12805
    %v12859 = vpack.c.b16 %v12808, %v12807
    %v12860 = vpack.c.b16 %v12810, %v12809
    %v12861 = vpack.c.b16 %v12812, %v12811
    %v12862 = vpack.c.b16 %v12814, %v12813
    %v12863 = vpack.c.b16 %v12816, %v12815
    %v12864 = vpack.c.b16 %v12818, %v12817
    %v12865 = vpack.c.b16 %v12820, %v12819
    %v12866 = vpack.c.b16 %v12822, %v12821
    %v12867 = vpack.c.b16 %v12824, %v12823
    %v12868 = vpack.c.b16 %v12826, %v12825
    %v12869 = vpack.c.b16 %v12828, %v12827
    %v12870 = vpack.c.b16 %v12830, %v12829
    %v12871 = vpack.c.b16 %v12832, %v12831
    %v12872 = vpack.c.b16 %v12834, %v12833
    %v12873 = vpack.c.b16 %v12836, %v12835
    %v12874 = vpack.c.b16 %v12838, %v12837
    %v12875 = vpack.c.b16 %v12840, %v12839
    %v12876 = vpack.c.b16 %v12842, %v12841
    %v12877 = vpack.c.b16 %v12844, %v12843
    %v12878 = vpack.c.b16 %v12846, %v12845
    %12911 = vmatpush.bf16.msra.mxu0 %v12854
    %12912 = vmatpush.bf16.msra.mxu0 %v12853
    %12913 = vmatpush.bf16.msra.mxu0 %v12852
    %12914 = vmatpush.bf16.msra.mxu0 %v12851
    %12915 = vmatpush.bf16.msra.mxu0 %v12850
    %12916 = vmatpush.bf16.msra.mxu0 %v12849
    %12917 = vmatpush.bf16.msra.mxu0 %v12848
    %12918 = vmatpush.bf16.msra.mxu0 %v12847
    %12919 = vmatmul.bf16.gmra.mxu0 %v12633
    %v12920 = vpop.f32.mrf.mxu0
    %v12921 = vadd.f32 %v12718, %v12920
    %v12922 = vpop.f32.mrf.mxu0
    %v12923 = vadd.f32 %v12718, %v12922
    %12924 = vdwg.mxu0
    %12925 = vmatpush.bf16.msra.mxu0 %v12862
    %12926 = vmatpush.bf16.msra.mxu0 %v12861
    %12927 = vmatpush.bf16.msra.mxu0 %v12860
    %12928 = vmatpush.bf16.msra.mxu0 %v12859
    %12929 = vmatpush.bf16.msra.mxu0 %v12858
    %12930 = vmatpush.bf16.msra.mxu0 %v12857
    %12931 = vmatpush.bf16.msra.mxu0 %v12856
    %12932 = vmatpush.bf16.msra.mxu0 %v12855
    %12933 = vmatmul.bf16.gmra.mxu0 %v12639
    %v12934 = vpop.f32.mrf.mxu0
    %v12935 = vadd.f32 %v12921, %v12934
    %v12936 = vpop.f32.mrf.mxu0
    %v12937 = vadd.f32 %v12923, %v12936
    %12938 = vdwg.mxu0
    %12939 = vmatpush.bf16.msra.mxu0 %v12870
    %12940 = vmatpush.bf16.msra.mxu0 %v12869
    %12941 = vmatpush.bf16.msra.mxu0 %v12868
    %12942 = vmatpush.bf16.msra.mxu0 %v12867
    %12943 = vmatpush.bf16.msra.mxu0 %v12866
    %12944 = vmatpush.bf16.msra.mxu0 %v12865
    %12945 = vmatpush.bf16.msra.mxu0 %v12864
    %12946 = vmatpush.bf16.msra.mxu0 %v12863
    %12947 = vmatmul.bf16.gmra.mxu0 %v12645
    %v12948 = vpop.f32.mrf.mxu0
    %v12949 = vadd.f32 %v12935, %v12948
    %v12950 = vpop.f32.mrf.mxu0
    %v12951 = vadd.f32 %v12937, %v12950
    %12952 = vdwg.mxu0
    %12953 = vmatpush.bf16.msra.mxu0 %v12878
    %12954 = vmatpush.bf16.msra.mxu0 %v12877
    %12955 = vmatpush.bf16.msra.mxu0 %v12876
    %12956 = vmatpush.bf16.msra.mxu0 %v12875
    %12957 = vmatpush.bf16.msra.mxu0 %v12874
    %12958 = vmatpush.bf16.msra.mxu0 %v12873
    %12959 = vmatpush.bf16.msra.mxu0 %v12872
    %12960 = vmatpush.bf16.msra.mxu0 %v12871
    %12961 = vmatmul.bf16.gmra.mxu0 %v12651
    %v12962 = vpop.f32.mrf.mxu0
    %v12963 = vadd.f32 %v12949, %v12962
    %v12964 = vpop.f32.mrf.mxu0
    %v12965 = vadd.f32 %v12951, %v12964
    %12966 = vdwg.mxu0
    %v12967 = vmax.f32 %v12963, 0.0
    %v12968 = vmax.f32 %v12965, 0.0
    %v12969 = vpack.c.bf16 %v12968, %v12967
    %v12970 = vld [vmem:[%s1 + $0x340] sm:$0xf]
    %v12971 = vld [vmem:[%s1 + $0x344] sm:$0xf]
    %v12972 = vld [vmem:[%s1 + $0x348] sm:$0xf]
    %v12973 = vld [vmem:[%s1 + $0x34c] sm:$0xf]
    %v12974 = vld [vmem:[%s1 + $0x350] sm:$0xf]
    %v12975 = vld [vmem:[%s1 + $0x354] sm:$0xf]
    %v12976 = vld [vmem:[%s1 + $0x358] sm:$0xf]
    %v12977 = vld [vmem:[%s1 + $0x35c] sm:$0xf]
    %v12978 = vld [vmem:[%s1 + $0x360] sm:$0xf]
    %v12979 = vld [vmem:[%s1 + $0x364] sm:$0xf]
    %v12980 = vld [vmem:[%s1 + $0x368] sm:$0xf]
    %v12981 = vld [vmem:[%s1 + $0x36c] sm:$0xf]
    %v12982 = vld [vmem:[%s1 + $0x370] sm:$0xf]
    %v12983 = vld [vmem:[%s1 + $0x374] sm:$0xf]
    %v12984 = vld [vmem:[%s1 + $0x378] sm:$0xf]
    %v12985 = vld [vmem:[%s1 + $0x37c] sm:$0xf]
    %v12986 = vld [vmem:[%s2 + $0x8] sm:$0x1]
    %v12987 = vperm.slane %v12986, 0
    %v13004 = vunpack.c.l.b16 %v12970
    %v13005 = vunpack.c.l.b16 %v12971
    %v13006 = vunpack.c.l.b16 %v12972
    %v13007 = vunpack.c.l.b16 %v12973
    %v13008 = vunpack.c.l.b16 %v12974
    %v13009 = vunpack.c.l.b16 %v12975
    %v13010 = vunpack.c.l.b16 %v12976
    %v13011 = vunpack.c.l.b16 %v12977
    %v13012 = vunpack.c.l.b16 %v12978
    %v13013 = vunpack.c.l.b16 %v12979
    %v13014 = vunpack.c.l.b16 %v12980
    %v13015 = vunpack.c.l.b16 %v12981
    %v13016 = vunpack.c.l.b16 %v12982
    %v13017 = vunpack.c.l.b16 %v12983
    %v13018 = vunpack.c.l.b16 %v12984
    %v13019 = vunpack.c.l.b16 %v12985
    %v13020 = vpack.c.b16 %v13005, %v13004
    %v13021 = vpack.c.b16 %v13007, %v13006
    %v13022 = vpack.c.b16 %v13009, %v13008
    %v13023 = vpack.c.b16 %v13011, %v13010
    %v13024 = vpack.c.b16 %v13013, %v13012
    %v13025 = vpack.c.b16 %v13015, %v13014
    %v13026 = vpack.c.b16 %v13017, %v13016
    %v13027 = vpack.c.b16 %v13019, %v13018
    %13036 = vmatpush.bf16.msra.mxu0 %v13027
    %13037 = vmatpush.bf16.msra.mxu0 %v13026
    %13038 = vmatpush.bf16.msra.mxu0 %v13025
    %13039 = vmatpush.bf16.msra.mxu0 %v13024
    %13040 = vmatpush.bf16.msra.mxu0 %v13023
    %13041 = vmatpush.bf16.msra.mxu0 %v13022
    %13042 = vmatpush.bf16.msra.mxu0 %v13021
    %13043 = vmatpush.bf16.msra.mxu0 %v13020
    %13044 = vmatmul.bf16.gmra.mxu0 %v12969
    %v13045 = vpop.f32.mrf.mxu0
    %v13046 = vadd.f32 %v12987, %v13045
    %v13047 = vpop.f32.mrf.mxu0
    %v13048 = vadd.f32 %v12987, %v13047
    %13049 = vdwg.mxu0
    %v13050 = vmax.f32 %v13046, 0.0
    %v13051 = vmax.f32 %v13048, 0.0
    %v13052 = vpack.c.bf16 %v13051, %v13050
    %v13053 = vld [vmem:[%s1 + $0x380] sm:$0xf]
    %v13054 = vld [vmem:[%s1 + $0x384] sm:$0xf]
    %v13055 = vld [vmem:[%s1 + $0x388] sm:$0xf]
    %v13056 = vld [vmem:[%s1 + $0x38c] sm:$0xf]
    %v13057 = vld [vmem:[%s1 + $0x390] sm:$0xf]
    %v13058 = vld [vmem:[%s1 + $0x394] sm:$0xf]
    %v13059 = vld [vmem:[%s1 + $0x398] sm:$0xf]
    %v13060 = vld [vmem:[%s1 + $0x39c] sm:$0xf]
    %v13061 = vld [vmem:[%s1 + $0x3a0] sm:$0xf]
    %v13062 = vld [vmem:[%s1 + $0x3a4] sm:$0xf]
    %v13063 = vld [vmem:[%s1 + $0x3a8] sm:$0xf]
    %v13064 = vld [vmem:[%s1 + $0x3ac] sm:$0xf]
    %v13065 = vld [vmem:[%s1 + $0x3b0] sm:$0xf]
    %v13066 = vld [vmem:[%s1 + $0x3b4] sm:$0xf]
    %v13067 = vld [vmem:[%s1 + $0x3b8] sm:$0xf]
    %v13068 = vld [vmem:[%s1 + $0x3bc] sm:$0xf]
    %v13069 = vld [vmem:[%s2 + $0x9] sm:$0x1]
    %v13070 = vperm.slane %v13069, 0
    %v13087 = vunpack.c.l.b16 %v13053
    %v13088 = vunpack.c.l.b16 %v13054
    %v13089 = vunpack.c.l.b16 %v13055
    %v13090 = vunpack.c.l.b16 %v13056
    %v13091 = vunpack.c.l.b16 %v13057
    %v13092 = vunpack.c.l.b16 %v13058
    %v13093 = vunpack.c.l.b16 %v13059
    %v13094 = vunpack.c.l.b16 %v13060
    %v13095 = vunpack.c.l.b16 %v13061
    %v13096 = vunpack.c.l.b16 %v13062
    %v13097 = vunpack.c.l.b16 %v13063
    %v13098 = vunpack.c.l.b16 %v13064
    %v13099 = vunpack.c.l.b16 %v13065
    %v13100 = vunpack.c.l.b16 %v13066
    %v13101 = vunpack.c.l.b16 %v13067
    %v13102 = vunpack.c.l.b16 %v13068
    %v13103 = vpack.c.b16 %v13088, %v13087
    %v13104 = vpack.c.b16 %v13090, %v13089
    %v13105 = vpack.c.b16 %v13092, %v13091
    %v13106 = vpack.c.b16 %v13094, %v13093
    %v13107 = vpack.c.b16 %v13096, %v13095
    %v13108 = vpack.c.b16 %v13098, %v13097
    %v13109 = vpack.c.b16 %v13100, %v13099
    %v13110 = vpack.c.b16 %v13102, %v13101
    %13119 = vmatpush.bf16.msra.mxu0 %v13110
    %13120 = vmatpush.bf16.msra.mxu0 %v13109
    %13121 = vmatpush.bf16.msra.mxu0 %v13108
    %13122 = vmatpush.bf16.msra.mxu0 %v13107
    %13123 = vmatpush.bf16.msra.mxu0 %v13106
    %13124 = vmatpush.bf16.msra.mxu0 %v13105
    %13125 = vmatpush.bf16.msra.mxu0 %v13104
    %13126 = vmatpush.bf16.msra.mxu0 %v13103
    %13127 = vmatmul.bf16.gmra.mxu0 %v13052
    %v13128 = vpop.f32.mrf.mxu0
    %v13129 = vadd.f32 %v13070, %v13128
    %v13130 = vpop.f32.mrf.mxu0
    %v13131 = vadd.f32 %v13070, %v13130
    %13132 = vdwg.mxu0
    %13133 = vst [vmem:[%s4] sm:$0xff] %v13129
    %13134 = vst [vmem:[%s4 + $0x8] sm:$0xff] %v13131
    // Predicated region
    $region22: #{_lambda_.1} parent=1 // pred_check
      _
    $region23: #{_lambda_.1} parent=1 // pred_check_branch
      %13136 = sbr.rel (0) target = $region25
    $region24: #{_lambda_.1} parent=1 // pred_region
      _
    $region25: #{_lambda_.1} parent=1 // pred_fallthru
      _
    // Predicated region
    $region26: #{_lambda_.1} parent=1 // pred_check
      _
    $region27: #{_lambda_.1} parent=1 // pred_check_branch
      %13138 = sbr.rel (0) target = $region29
    $region28: #{_lambda_.1} parent=1 // pred_region
      _
    $region29: #{_lambda_.1} parent=1 // pred_fallthru
      _
    %13139 = vsyncpa [#allocation3], 1

</llo_original>
